<compile_context>
chip_gen: v7x
topology: tpu7x:2x2x1
jax: 0.10.0
libtpu: 0.0.40
codegen_flags: <defaults>
</compile_context>

<pallas_src>
import jax
import jax.numpy as jnp
from jax.experimental import pallas as pl
from jax.experimental.pallas import tpu as pltpu


# ---------------------------------------------------------------- kernels ----

def _eq_add_kernel(x_ref, t_ref, w_ref, b_ref, o_ref):
    # o = relu(x @ w + b) + t    (eaualization 1x1 conv + ReLU, then "+ t[i]")
    y = jnp.dot(x_ref[...], w_ref[...], preferred_element_type=jnp.float32)
    y = jnp.maximum(y + b_ref[...], 0.0) + t_ref[...].astype(jnp.float32)
    o_ref[...] = y.astype(o_ref.dtype)


def _conv_pool_kernel(xp_ref, w_ref, b_ref, pool_ref):
    # Per-image 3x3 conv (padding=1) + ReLU, immediately reduced to the global
    # average pool.  Only the pooled (1, Cout) vector is written to HBM.
    # xp_ref : (1, H+2, W+2, C)  padded NHWC feature map (bf16)
    # w_ref  : (9, C, Cout)      tap-major conv weights, resident in VMEM
    # b_ref  : (1, Cout)         bias (f32)
    # pool_ref: (1, 1, Cout)     mean over H*W of relu(conv)
    _, Hp, Wp, C = xp_ref.shape
    H, W = Hp - 2, Wp - 2
    Cout = pool_ref.shape[2]

    xpad = xp_ref[0]                                   # (H+2, W+2, C)
    acc = jnp.zeros((H * W, Cout), jnp.float32)
    for dy in range(3):                                # unrolled 9-tap reduction
        for dx in range(3):
            patch = xpad[dy:dy + H, dx:dx + W, :].reshape(H * W, C)
            acc = acc + jnp.dot(patch, w_ref[dy * 3 + dx],
                                preferred_element_type=jnp.float32)
    relu = jnp.maximum(acc + b_ref[...], 0.0)          # (H*W, Cout)
    pool_ref[0] = jnp.mean(relu, axis=0, keepdims=True)


def _ca_attn_kernel(p_ref, w1_ref, b1_ref, w2_ref, b2_ref, a_ref):
    # Linear(384,192) -> tanh -> Linear(192,384) -> tanh   (tiny; pooling was
    # already fused into the conv kernel epilogue).
    emb = jnp.tanh(jnp.dot(p_ref[...], w1_ref[...],
                           preferred_element_type=jnp.float32) + b1_ref[...])
    a_ref[...] = jnp.tanh(jnp.dot(emb, w2_ref[...],
                                  preferred_element_type=jnp.float32) + b2_ref[...])


def _fuse_kernel(x_ref, a_ref, w_ref, b_ref, o_ref):
    # y = A*x + x ; o = relu(y @ w + b)   (fusion 1x1 conv 384->256 + ReLU)
    # x_ref: (1, thw, Cin) bf16, a_ref: (1, 1, Cin) f32 (per-image attention)
    x = x_ref[0].astype(jnp.float32)                   # (thw, Cin)
    a = a_ref[0]                                       # (1, Cin)
    y = (a * x + x).astype(w_ref.dtype)
    o = jnp.dot(y, w_ref[...], preferred_element_type=jnp.float32)
    o_ref[0] = jnp.maximum(o + b_ref[...], 0.0)


# ------------------------------------------------------------- pallas glue ---

def _cp(*sem):
    # v7x has only 64 MiB VMEM/TC; keep the scoped limit well under it.
    return pltpu.CompilerParams(dimension_semantics=sem,
                                vmem_limit_bytes=48 * 1024 * 1024)


def _pick_row_tile(m, target):
    """Largest divisor of m that is <= target and a multiple of 16 (bf16 tile)."""
    if m <= target:
        return m
    t = (target // 16) * 16
    while t >= 16:
        if m % t == 0:
            return t
        t -= 16
    return m


def _eq_add(x, t, w, b):
    M, Cin = x.shape
    Cout = w.shape[1]
    tm = _pick_row_tile(M, 512)
    return pl.pallas_call(
        _eq_add_kernel,
        out_shape=jax.ShapeDtypeStruct((M, Cout), jnp.bfloat16),
        grid_spec=pltpu.PrefetchScalarGridSpec(
            num_scalar_prefetch=0,
            grid=(M // tm,),
            in_specs=[pl.BlockSpec((tm, Cin), lambda i: (i, 0)),
                      pl.BlockSpec((tm, Cout), lambda i: (i, 0)),
                      pl.BlockSpec((Cin, Cout), lambda i: (0, 0)),   # resident
                      pl.BlockSpec((1, Cout), lambda i: (0, 0))],    # resident
            out_specs=pl.BlockSpec((tm, Cout), lambda i: (i, 0))),
        compiler_params=_cp("parallel"),
        cost_estimate=pl.CostEstimate(
            flops=2 * M * Cin * Cout, transcendentals=0,
            bytes_accessed=2 * M * (Cin + 2 * Cout) + 2 * Cin * Cout),
    )(x, t, w, b)


def _conv3x3_relu_pool(xp, w9, b):
    N, Hp, Wp, C = xp.shape
    H, W = Hp - 2, Wp - 2
    Cout = w9.shape[2]
    # TODO(synk): for very large H*W the per-image block should additionally be
    # tiled spatially; whole-image blocks are fine at the sizes used here.
    return pl.pallas_call(
        _conv_pool_kernel,
        out_shape=jax.ShapeDtypeStruct((N, 1, Cout), jnp.float32),
        grid_spec=pltpu.PrefetchScalarGridSpec(
            num_scalar_prefetch=0,
            grid=(N,),
            in_specs=[pl.BlockSpec((1, Hp, Wp, C), lambda n: (n, 0, 0, 0)),
                      pl.BlockSpec((9, C, Cout), lambda n: (0, 0, 0)),  # resident
                      pl.BlockSpec((1, Cout), lambda n: (0, 0))],       # resident
            out_specs=pl.BlockSpec((1, 1, Cout), lambda n: (n, 0, 0))),
        compiler_params=_cp("parallel"),
        cost_estimate=pl.CostEstimate(
            flops=2 * N * H * W * 9 * C * Cout, transcendentals=0,
            bytes_accessed=xp.size * xp.dtype.itemsize + w9.size * 2 + N * Cout * 4),
    )(xp, w9, b)


def _ca_attention(pooled, w1, b1, w2, b2):
    N, C = pooled.shape
    Ch = w1.shape[1]

    def full2(a, b_):
        return pl.BlockSpec((a, b_), lambda i: (0, 0))

    return pl.pallas_call(
        _ca_attn_kernel,
        out_shape=jax.ShapeDtypeStruct((N, C), jnp.float32),
        grid=(1,),
        in_specs=[full2(N, C), full2(C, Ch), full2(1, Ch),
                  full2(Ch, C), full2(1, C)],
        out_specs=full2(N, C),
        compiler_params=_cp("arbitrary"),
    )(pooled, w1, b1, w2, b2)


def _fuse(total3, a3, w, b):
    N, HW, Cin = total3.shape
    Cout = w.shape[1]
    thw = _pick_row_tile(HW, 1024)
    return pl.pallas_call(
        _fuse_kernel,
        out_shape=jax.ShapeDtypeStruct((N, HW, Cout), jnp.float32),
        grid_spec=pltpu.PrefetchScalarGridSpec(
            num_scalar_prefetch=0,
            grid=(N, HW // thw),
            in_specs=[pl.BlockSpec((1, thw, Cin), lambda n, h: (n, h, 0)),
                      pl.BlockSpec((1, 1, Cin), lambda n, h: (n, 0, 0)),
                      pl.BlockSpec((Cin, Cout), lambda n, h: (0, 0)),   # resident
                      pl.BlockSpec((1, Cout), lambda n, h: (0, 0))],    # resident
            out_specs=pl.BlockSpec((1, thw, Cout), lambda n, h: (n, h, 0))),
        compiler_params=_cp("parallel", "parallel"),
        cost_estimate=pl.CostEstimate(
            flops=2 * N * HW * Cin * Cout, transcendentals=0,
            bytes_accessed=2 * N * HW * Cin + 4 * N * HW * Cout + 2 * Cin * Cout),
    )(total3, a3, w, b)


# -------------------------------------------------------------- STN forward --

def stn_forward(x, t, params):
    """x: (B, T, 256, H, W)  — stands in for SRRIN spatial features `s`
       t: (T, B, 384, H, W)  — stands in for RDCRNN temporal features
       returns: (T, B, 256, H, W) fused features (pre-reconstruction)."""
    x = jnp.swapaxes(x, 0, 1)                    # x.transpose(0, 1) -> (T, B, C, H, W)
    # TODO(synk): s = sptioCNN(x[i]) (SRRIN, checkpoint-loaded) is unavailable; use x as s.
    s = x
    # TODO(synk): t = temporalRNN(s) (RDCRNN) is unavailable; t is an explicit input.
    T_, B, Cs, H, W = s.shape
    Ce = params["w_eq"].shape[1]                 # 384
    Cf = params["w_fus"].shape[1]                # 256
    N = T_ * B
    M = N * H * W
    bf = jnp.bfloat16

    # NCHW -> NHWC rows (bf16 streams, f32 accumulation happens in-kernel)
    s_rows = jnp.transpose(s, (0, 1, 3, 4, 2)).reshape(M, Cs).astype(bf)
    t_rows = jnp.transpose(t, (0, 1, 3, 4, 2)).reshape(M, Ce).astype(bf)

    w_eq = params["w_eq"].astype(bf)
    w_ca1 = params["w_ca1"].astype(bf)
    w_fus = params["w_fus"].astype(bf)

    # eaualization (1x1 conv 256->384 + ReLU) fused with "+ t[i]" -> totalfeature
    total = _eq_add(s_rows, t_rows, w_eq, params["b_eq"])        # (M, 384) bf16

    # CA.W1 3x3 conv + ReLU, fused with the global average pool (no im2col,
    # no full conv output written back to HBM — only the pooled means).
    total_img = total.reshape(N, H, W, Ce)
    xp = jnp.pad(total_img, ((0, 0), (1, 1), (1, 1), (0, 0)))     # (N, H+2, W+2, 384)
    pooled = _conv3x3_relu_pool(xp, w_ca1, params["b_ca1"])       # (N, 1, 384)

    # CA attention MLP: Linear -> tanh -> Linear -> tanh
    A = _ca_attention(pooled.reshape(N, Ce),
                      params["w_emb"], params["b_emb"],
                      params["w_dec"], params["b_dec"])           # (N, 384)

    # totalfeature = A*totalfeature + totalfeature ; fusion 1x1 conv 384->256 + ReLU
    fused = _fuse(total.reshape(N, H * W, Ce), A[:, None, :],
                  w_fus, params["b_fus"])                         # (N, H*W, 256) f32

    out = fused.reshape(T_, B, H, W, Cf)
    out = jnp.transpose(out, (0, 1, 4, 2, 3))                     # back to NCHW
    # TODO(synk): sptioCNN.module.reconstructure(totalfeature) is not defined in the source.
    return out


# -------------------------------------------------------------------- setup --

def init_params(key):
    ks = jax.random.split(key, 10)

    def rnd(k, shape, scale):
        return scale * jax.random.normal(k, shape, dtype=jnp.float32)

    return {
        # eaualization: Conv2d(256, 384, 1) + ReLU
        "w_eq": rnd(ks[0], (256, 384), 0.05),
        "b_eq": rnd(ks[1], (1, 384), 0.05),
        # CA.W1: Conv2d(384, 384, 3, 1, 1) + ReLU  -> (ky*kx, Cin, Cout) tap-major
        "w_ca1": rnd(ks[2], (3, 3, 384, 384), 0.02).reshape(9, 384, 384),
        "b_ca1": rnd(ks[3], (1, 384), 0.05),
        # CA.ebed: Linear(384, 192)
        "w_emb": rnd(ks[4], (384, 192), 0.05),
        "b_emb": rnd(ks[5], (1, 192), 0.05),
        # CA.decode: Linear(192, 384)
        "w_dec": rnd(ks[6], (192, 384), 0.05),
        "b_dec": rnd(ks[7], (1, 384), 0.05),
        # fusion: Conv2d(384, 256, 1) + ReLU
        "w_fus": rnd(ks[8], (384, 256), 0.05),
        "b_fus": rnd(ks[9], (1, 256), 0.05),
    }


if __name__ == "__main__":
    key = jax.random.PRNGKey(0)
    kx, kt, kp = jax.random.split(key, 3)

    B, T, H, W = 2, 2, 8, 8          # relation (seq len) = 2
    x = jax.random.normal(kx, (B, T, 256, H, W), dtype=jnp.float32)
    t = jax.random.normal(kt, (T, B, 384, H, W), dtype=jnp.float32)
    params = init_params(kp)

    out = jax.jit(stn_forward)(x, t, params)
    jax.block_until_ready(out)
    assert out.shape == (T, B, 256, H, W), out.shape
    assert out.dtype == jnp.float32
    print("KERNEL_OK")
</pallas_src>

<mosaic_0001>
module attributes {stable_mosaic.version = 11 : i64} {
  func.func @_eq_add_kernel(%arg0: i32, %arg1: memref<256x256xbf16, #tpu.memory_space<vmem>>, %arg2: memref<256x384xbf16, #tpu.memory_space<vmem>>, %arg3: memref<256x384xbf16, #tpu.memory_space<vmem>>, %arg4: memref<1x384xf32, #tpu.memory_space<vmem>>, %arg5: memref<256x384xbf16, #tpu.memory_space<vmem>>) attributes {dimension_semantics = [#tpu.dimension_semantics<parallel>], iteration_bounds = array<i64: 1>, scalar_prefetch = 0 : i64, scratch_operands = 0 : i64, tpu.core_type = #tpu.core_type<tc>, window_params = [{transform_indices = @transform_0, window_bounds = array<i64: 256, 256>}, {transform_indices = @transform_1, window_bounds = array<i64: 256, 384>}, {pipeline_mode = #tpu.pipeline_mode<synchronous>, transform_indices = @transform_2, window_bounds = array<i64: 256, 384>}, {pipeline_mode = #tpu.pipeline_mode<synchronous>, transform_indices = @transform_3, window_bounds = array<i64: 1, 384>}, {transform_indices = @transform_4, window_bounds = array<i64: 256, 384>}]} {
    %c0 = arith.constant 0 : index
    %c0_0 = arith.constant 0 : index
    %0 = vector.load %arg1[%c0, %c0_0] : memref<256x256xbf16, #tpu.memory_space<vmem>>, vector<256x256xbf16>
    %c0_1 = arith.constant 0 : index
    %c0_2 = arith.constant 0 : index
    %1 = vector.load %arg3[%c0_1, %c0_2] : memref<256x384xbf16, #tpu.memory_space<vmem>>, vector<256x384xbf16>
    %cst = arith.constant dense<0.000000e+00> : vector<256x384xf32>
    %2 = tpu.matmul %0, %1, %cst {dimension_numbers = #tpu.dot_dimension_numbers<[1], [0], [0], [1], [0, 0, 1, 1], [], []>} : vector<256x256xbf16>, vector<256x384xbf16>, vector<256x384xf32> -> vector<256x384xf32>
    %c0_3 = arith.constant 0 : index
    %c0_4 = arith.constant 0 : index
    %3 = vector.load %arg4[%c0_3, %c0_4] : memref<1x384xf32, #tpu.memory_space<vmem>>, vector<1x384xf32>
    %4 = vector.broadcast %3 : vector<1x384xf32> to vector<256x384xf32>
    %5 = arith.addf %2, %4 : vector<256x384xf32>
    %cst_5 = arith.constant 0.000000e+00 : f32
    %6 = vector.broadcast %cst_5 : f32 to vector<256x384xf32>
    %7 = arith.maximumf %5, %6 : vector<256x384xf32>
    %c0_6 = arith.constant 0 : index
    %c0_7 = arith.constant 0 : index
    %8 = vector.load %arg2[%c0_6, %c0_7] : memref<256x384xbf16, #tpu.memory_space<vmem>>, vector<256x384xbf16>
    %9 = arith.extf %8 : vector<256x384xbf16> to vector<256x384xf32>
    %10 = arith.addf %7, %9 : vector<256x384xf32>
    %11 = arith.truncf %10 : vector<256x384xf32> to vector<256x384xbf16>
    %c0_8 = arith.constant 0 : index
    %c0_9 = arith.constant 0 : index
    %12 = vector.load %arg5[%c0_8, %c0_9] : memref<256x384xbf16, #tpu.memory_space<vmem>>, vector<256x384xbf16>
    tpu.vector_store %arg5[%c0_8, %c0_9], %11 {strides = array<i32>} : memref<256x384xbf16, #tpu.memory_space<vmem>>, vector<256x384xbf16>,
    return
  }
  func.func @transform_0(%arg0: i32) -> (i32, i32) {
    %c0_i32 = arith.constant 0 : i32
    %c0_i32_0 = arith.constant 0 : i32
    return %arg0, %c0_i32 : i32, i32
  }
  func.func @transform_1(%arg0: i32) -> (i32, i32) {
    %c0_i32 = arith.constant 0 : i32
    %c0_i32_0 = arith.constant 0 : i32
    return %arg0, %c0_i32 : i32, i32
  }
  func.func @transform_2(%arg0: i32) -> (i32, i32) {
    %c0_i32 = arith.constant 0 : i32
    %c0_i32_0 = arith.constant 0 : i32
    %c0_i32_1 = arith.constant 0 : i32
    return %c0_i32, %c0_i32_0 : i32, i32
  }
  func.func @transform_3(%arg0: i32) -> (i32, i32) {
    %c0_i32 = arith.constant 0 : i32
    %c0_i32_0 = arith.constant 0 : i32
    %c0_i32_1 = arith.constant 0 : i32
    return %c0_i32, %c0_i32_0 : i32, i32
  }
  func.func @transform_4(%arg0: i32) -> (i32, i32) {
    %c0_i32 = arith.constant 0 : i32
    %c0_i32_0 = arith.constant 0 : i32
    return %arg0, %c0_i32 : i32, i32
  }
}

module attributes {stable_mosaic.version = 11 : i64} {
  func.func @_conv_pool_kernel(%arg0: i32, %arg1: memref<1x10x10x384xbf16, #tpu.memory_space<vmem>>, %arg2: memref<9x384x384xbf16, #tpu.memory_space<vmem>>, %arg3: memref<1x384xf32, #tpu.memory_space<vmem>>, %arg4: memref<1x1x384xf32, #tpu.memory_space<vmem>>) attributes {dimension_semantics = [#tpu.dimension_semantics<parallel>], iteration_bounds = array<i64: 4>, scalar_prefetch = 0 : i64, scratch_operands = 0 : i64, tpu.core_type = #tpu.core_type<tc>, window_params = [{transform_indices = @transform_0, window_bounds = array<i64: 1, 10, 10, 384>}, {pipeline_mode = #tpu.pipeline_mode<synchronous>, transform_indices = @transform_1, window_bounds = array<i64: 9, 384, 384>}, {pipeline_mode = #tpu.pipeline_mode<synchronous>, transform_indices = @transform_2, window_bounds = array<i64: 1, 384>}, {transform_indices = @transform_3, window_bounds = array<i64: 1, 1, 384>}]} {
    %c0 = arith.constant 0 : index
    %c0_0 = arith.constant 0 : index
    %c0_1 = arith.constant 0 : index
    %c0_2 = arith.constant 0 : index
    %0 = vector.load %arg1[%c0, %c0_0, %c0_1, %c0_2] : memref<1x10x10x384xbf16, #tpu.memory_space<vmem>>, vector<1x10x10x384xbf16>
    %1 = vector.shape_cast %0 : vector<1x10x10x384xbf16> to vector<10x10x384xbf16>
    %cst = arith.constant 0.000000e+00 : f32
    %2 = vector.broadcast %cst : f32 to vector<64x384xf32>
    %3 = vector.extract_strided_slice %1 {offsets = [0, 0, 0], sizes = [8, 8, 384], strides = [1, 1, 1]} : vector<10x10x384xbf16> to vector<8x8x384xbf16>
    %4 = vector.shape_cast %3 : vector<8x8x384xbf16> to vector<64x384xbf16>
    %c0_3 = arith.constant 0 : index
    %c0_4 = arith.constant 0 : index
    %c0_5 = arith.constant 0 : index
    %5 = vector.load %arg2[%c0_3, %c0_4, %c0_5] : memref<9x384x384xbf16, #tpu.memory_space<vmem>>, vector<1x384x384xbf16>
    %6 = vector.shape_cast %5 : vector<1x384x384xbf16> to vector<384x384xbf16>
    %cst_6 = arith.constant dense<0.000000e+00> : vector<64x384xf32>
    %7 = tpu.matmul %4, %6, %cst_6 {dimension_numbers = #tpu.dot_dimension_numbers<[1], [0], [0], [1], [0, 0, 1, 1], [], []>} : vector<64x384xbf16>, vector<384x384xbf16>, vector<64x384xf32> -> vector<64x384xf32>
    %8 = arith.addf %2, %7 : vector<64x384xf32>
    %9 = vector.extract_strided_slice %1 {offsets = [0, 1, 0], sizes = [8, 8, 384], strides = [1, 1, 1]} : vector<10x10x384xbf16> to vector<8x8x384xbf16>
    %10 = vector.shape_cast %9 : vector<8x8x384xbf16> to vector<64x384xbf16>
    %c1 = arith.constant 1 : index
    %c0_7 = arith.constant 0 : index
    %c0_8 = arith.constant 0 : index
    %11 = vector.load %arg2[%c1, %c0_7, %c0_8] : memref<9x384x384xbf16, #tpu.memory_space<vmem>>, vector<1x384x384xbf16>
    %12 = vector.shape_cast %11 : vector<1x384x384xbf16> to vector<384x384xbf16>
    %cst_9 = arith.constant dense<0.000000e+00> : vector<64x384xf32>
    %13 = tpu.matmul %10, %12, %cst_9 {dimension_numbers = #tpu.dot_dimension_numbers<[1], [0], [0], [1], [0, 0, 1, 1], [], []>} : vector<64x384xbf16>, vector<384x384xbf16>, vector<64x384xf32> -> vector<64x384xf32>
    %14 = arith.addf %8, %13 : vector<64x384xf32>
    %15 = vector.extract_strided_slice %1 {offsets = [0, 2, 0], sizes = [8, 8, 384], strides = [1, 1, 1]} : vector<10x10x384xbf16> to vector<8x8x384xbf16>
    %16 = vector.shape_cast %15 : vector<8x8x384xbf16> to vector<64x384xbf16>
    %c2 = arith.constant 2 : index
    %c0_10 = arith.constant 0 : index
    %c0_11 = arith.constant 0 : index
    %17 = vector.load %arg2[%c2, %c0_10, %c0_11] : memref<9x384x384xbf16, #tpu.memory_space<vmem>>, vector<1x384x384xbf16>
    %18 = vector.shape_cast %17 : vector<1x384x384xbf16> to vector<384x384xbf16>
    %cst_12 = arith.constant dense<0.000000e+00> : vector<64x384xf32>
    %19 = tpu.matmul %16, %18, %cst_12 {dimension_numbers = #tpu.dot_dimension_numbers<[1], [0], [0], [1], [0, 0, 1, 1], [], []>} : vector<64x384xbf16>, vector<384x384xbf16>, vector<64x384xf32> -> vector<64x384xf32>
    %20 = arith.addf %14, %19 : vector<64x384xf32>
    %21 = vector.extract_strided_slice %1 {offsets = [1, 0, 0], sizes = [8, 8, 384], strides = [1, 1, 1]} : vector<10x10x384xbf16> to vector<8x8x384xbf16>
    %22 = vector.shape_cast %21 : vector<8x8x384xbf16> to vector<64x384xbf16>
    %c3 = arith.constant 3 : index
    %c0_13 = arith.constant 0 : index
    %c0_14 = arith.constant 0 : index
    %23 = vector.load %arg2[%c3, %c0_13, %c0_14] : memref<9x384x384xbf16, #tpu.memory_space<vmem>>, vector<1x384x384xbf16>
    %24 = vector.shape_cast %23 : vector<1x384x384xbf16> to vector<384x384xbf16>
    %cst_15 = arith.constant dense<0.000000e+00> : vector<64x384xf32>
    %25 = tpu.matmul %22, %24, %cst_15 {dimension_numbers = #tpu.dot_dimension_numbers<[1], [0], [0], [1], [0, 0, 1, 1], [], []>} : vector<64x384xbf16>, vector<384x384xbf16>, vector<64x384xf32> -> vector<64x384xf32>
    %26 = arith.addf %20, %25 : vector<64x384xf32>
    %27 = vector.extract_strided_slice %1 {offsets = [1, 1, 0], sizes = [8, 8, 384], strides = [1, 1, 1]} : vector<10x10x384xbf16> to vector<8x8x384xbf16>
    %28 = vector.shape_cast %27 : vector<8x8x384xbf16> to vector<64x384xbf16>
    %c4 = arith.constant 4 : index
    %c0_16 = arith.constant 0 : index
    %c0_17 = arith.constant 0 : index
    %29 = vector.load %arg2[%c4, %c0_16, %c0_17] : memref<9x384x384xbf16, #tpu.memory_space<vmem>>, vector<1x384x384xbf16>
    %30 = vector.shape_cast %29 : vector<1x384x384xbf16> to vector<384x384xbf16>
    %cst_18 = arith.constant dense<0.000000e+00> : vector<64x384xf32>
    %31 = tpu.matmul %28, %30, %cst_18 {dimension_numbers = #tpu.dot_dimension_numbers<[1], [0], [0], [1], [0, 0, 1, 1], [], []>} : vector<64x384xbf16>, vector<384x384xbf16>, vector<64x384xf32> -> vector<64x384xf32>
    %32 = arith.addf %26, %31 : vector<64x384xf32>
    %33 = vector.extract_strided_slice %1 {offsets = [1, 2, 0], sizes = [8, 8, 384], strides = [1, 1, 1]} : vector<10x10x384xbf16> to vector<8x8x384xbf16>
    %34 = vector.shape_cast %33 : vector<8x8x384xbf16> to vector<64x384xbf16>
    %c5 = arith.constant 5 : index
    %c0_19 = arith.constant 0 : index
    %c0_20 = arith.constant 0 : index
    %35 = vector.load %arg2[%c5, %c0_19, %c0_20] : memref<9x384x384xbf16, #tpu.memory_space<vmem>>, vector<1x384x384xbf16>
    %36 = vector.shape_cast %35 : vector<1x384x384xbf16> to vector<384x384xbf16>
    %cst_21 = arith.constant dense<0.000000e+00> : vector<64x384xf32>
    %37 = tpu.matmul %34, %36, %cst_21 {dimension_numbers = #tpu.dot_dimension_numbers<[1], [0], [0], [1], [0, 0, 1, 1], [], []>} : vector<64x384xbf16>, vector<384x384xbf16>, vector<64x384xf32> -> vector<64x384xf32>
    %38 = arith.addf %32, %37 : vector<64x384xf32>
    %39 = vector.extract_strided_slice %1 {offsets = [2, 0, 0], sizes = [8, 8, 384], strides = [1, 1, 1]} : vector<10x10x384xbf16> to vector<8x8x384xbf16>
    %40 = vector.shape_cast %39 : vector<8x8x384xbf16> to vector<64x384xbf16>
    %c6 = arith.constant 6 : index
    %c0_22 = arith.constant 0 : index
    %c0_23 = arith.constant 0 : index
    %41 = vector.load %arg2[%c6, %c0_22, %c0_23] : memref<9x384x384xbf16, #tpu.memory_space<vmem>>, vector<1x384x384xbf16>
    %42 = vector.shape_cast %41 : vector<1x384x384xbf16> to vector<384x384xbf16>
    %cst_24 = arith.constant dense<0.000000e+00> : vector<64x384xf32>
    %43 = tpu.matmul %40, %42, %cst_24 {dimension_numbers = #tpu.dot_dimension_numbers<[1], [0], [0], [1], [0, 0, 1, 1], [], []>} : vector<64x384xbf16>, vector<384x384xbf16>, vector<64x384xf32> -> vector<64x384xf32>
    %44 = arith.addf %38, %43 : vector<64x384xf32>
    %45 = vector.extract_strided_slice %1 {offsets = [2, 1, 0], sizes = [8, 8, 384], strides = [1, 1, 1]} : vector<10x10x384xbf16> to vector<8x8x384xbf16>
    %46 = vector.shape_cast %45 : vector<8x8x384xbf16> to vector<64x384xbf16>
    %c7 = arith.constant 7 : index
    %c0_25 = arith.constant 0 : index
    %c0_26 = arith.constant 0 : index
    %47 = vector.load %arg2[%c7, %c0_25, %c0_26] : memref<9x384x384xbf16, #tpu.memory_space<vmem>>, vector<1x384x384xbf16>
    %48 = vector.shape_cast %47 : vector<1x384x384xbf16> to vector<384x384xbf16>
    %cst_27 = arith.constant dense<0.000000e+00> : vector<64x384xf32>
    %49 = tpu.matmul %46, %48, %cst_27 {dimension_numbers = #tpu.dot_dimension_numbers<[1], [0], [0], [1], [0, 0, 1, 1], [], []>} : vector<64x384xbf16>, vector<384x384xbf16>, vector<64x384xf32> -> vector<64x384xf32>
    %50 = arith.addf %44, %49 : vector<64x384xf32>
    %51 = vector.extract_strided_slice %1 {offsets = [2, 2, 0], sizes = [8, 8, 384], strides = [1, 1, 1]} : vector<10x10x384xbf16> to vector<8x8x384xbf16>
    %52 = vector.shape_cast %51 : vector<8x8x384xbf16> to vector<64x384xbf16>
    %c8 = arith.constant 8 : index
    %c0_28 = arith.constant 0 : index
    %c0_29 = arith.constant 0 : index
    %53 = vector.load %arg2[%c8, %c0_28, %c0_29] : memref<9x384x384xbf16, #tpu.memory_space<vmem>>, vector<1x384x384xbf16>
    %54 = vector.shape_cast %53 : vector<1x384x384xbf16> to vector<384x384xbf16>
    %cst_30 = arith.constant dense<0.000000e+00> : vector<64x384xf32>
    %55 = tpu.matmul %52, %54, %cst_30 {dimension_numbers = #tpu.dot_dimension_numbers<[1], [0], [0], [1], [0, 0, 1, 1], [], []>} : vector<64x384xbf16>, vector<384x384xbf16>, vector<64x384xf32> -> vector<64x384xf32>
    %56 = arith.addf %50, %55 : vector<64x384xf32>
    %c0_31 = arith.constant 0 : index
    %c0_32 = arith.constant 0 : index
    %57 = vector.load %arg3[%c0_31, %c0_32] : memref<1x384xf32, #tpu.memory_space<vmem>>, vector<1x384xf32>
    %58 = vector.broadcast %57 : vector<1x384xf32> to vector<64x384xf32>
    %59 = arith.addf %56, %58 : vector<64x384xf32>
    %cst_33 = arith.constant 0.000000e+00 : f32
    %60 = vector.broadcast %cst_33 : f32 to vector<64x384xf32>
    %61 = arith.maximumf %59, %60 : vector<64x384xf32>
    %cst_34 = arith.constant dense<0.000000e+00> : vector<384xf32>
    %62 = vector.multi_reduction <add>, %61, %cst_34 [0] : vector<64x384xf32> to vector<384xf32>
    %63 = vector.shape_cast %62 : vector<384xf32> to vector<1x384xf32>
    %cst_35 = arith.constant 6.400000e+01 : f32
    %64 = vector.broadcast %cst_35 : f32 to vector<1x384xf32>
    %65 = arith.divf %63, %64 : vector<1x384xf32>
    %c0_36 = arith.constant 0 : index
    %c0_37 = arith.constant 0 : index
    %c0_38 = arith.constant 0 : index
    %66 = vector.load %arg4[%c0_36, %c0_37, %c0_38] : memref<1x1x384xf32, #tpu.memory_space<vmem>>, vector<1x1x384xf32>
    %67 = vector.shape_cast %66 : vector<1x1x384xf32> to vector<1x384xf32>
    %68 = vector.shape_cast %65 : vector<1x384xf32> to vector<1x1x384xf32>
    tpu.vector_store %arg4[%c0_36, %c0_37, %c0_38], %68 {strides = array<i32>} : memref<1x1x384xf32, #tpu.memory_space<vmem>>, vector<1x1x384xf32>,
    return
  }
  func.func @transform_0(%arg0: i32) -> (i32, i32, i32, i32) {
    %c0_i32 = arith.constant 0 : i32
    %c0_i32_0 = arith.constant 0 : i32
    %c0_i32_1 = arith.constant 0 : i32
    %c0_i32_2 = arith.constant 0 : i32
    return %arg0, %c0_i32, %c0_i32_0, %c0_i32_1 : i32, i32, i32, i32
  }
  func.func @transform_1(%arg0: i32) -> (i32, i32, i32) {
    %c0_i32 = arith.constant 0 : i32
    %c0_i32_0 = arith.constant 0 : i32
    %c0_i32_1 = arith.constant 0 : i32
    %c0_i32_2 = arith.constant 0 : i32
    return %c0_i32, %c0_i32_0, %c0_i32_1 : i32, i32, i32
  }
  func.func @transform_2(%arg0: i32) -> (i32, i32) {
    %c0_i32 = arith.constant 0 : i32
    %c0_i32_0 = arith.constant 0 : i32
    %c0_i32_1 = arith.constant 0 : i32
    return %c0_i32, %c0_i32_0 : i32, i32
  }
  func.func @transform_3(%arg0: i32) -> (i32, i32, i32) {
    %c0_i32 = arith.constant 0 : i32
    %c0_i32_0 = arith.constant 0 : i32
    %c0_i32_1 = arith.constant 0 : i32
    return %arg0, %c0_i32, %c0_i32_0 : i32, i32, i32
  }
}

module attributes {stable_mosaic.version = 11 : i64} {
  func.func @_ca_attn_kernel(%arg0: i32, %arg1: memref<4x384xf32, #tpu.memory_space<vmem>>, %arg2: memref<384x192xf32, #tpu.memory_space<vmem>>, %arg3: memref<1x192xf32, #tpu.memory_space<vmem>>, %arg4: memref<192x384xf32, #tpu.memory_space<vmem>>, %arg5: memref<1x384xf32, #tpu.memory_space<vmem>>, %arg6: memref<4x384xf32, #tpu.memory_space<vmem>>) attributes {dimension_semantics = [#tpu.dimension_semantics<arbitrary>], iteration_bounds = array<i64: 1>, scalar_prefetch = 0 : i64, scratch_operands = 0 : i64, tpu.core_type = #tpu.core_type<tc>, window_params = [{pipeline_mode = #tpu.pipeline_mode<synchronous>, transform_indices = @transform_0, window_bounds = array<i64: 4, 384>}, {pipeline_mode = #tpu.pipeline_mode<synchronous>, transform_indices = @transform_1, window_bounds = array<i64: 384, 192>}, {pipeline_mode = #tpu.pipeline_mode<synchronous>, transform_indices = @transform_2, window_bounds = array<i64: 1, 192>}, {pipeline_mode = #tpu.pipeline_mode<synchronous>, transform_indices = @transform_3, window_bounds = array<i64: 192, 384>}, {pipeline_mode = #tpu.pipeline_mode<synchronous>, transform_indices = @transform_4, window_bounds = array<i64: 1, 384>}, {pipeline_mode = #tpu.pipeline_mode<synchronous>, transform_indices = @transform_5, window_bounds = array<i64: 4, 384>}]} {
    %c0 = arith.constant 0 : index
    %c0_0 = arith.constant 0 : index
    %0 = vector.load %arg1[%c0, %c0_0] : memref<4x384xf32, #tpu.memory_space<vmem>>, vector<4x384xf32>
    %c0_1 = arith.constant 0 : index
    %c0_2 = arith.constant 0 : index
    %1 = vector.load %arg2[%c0_1, %c0_2] : memref<384x192xf32, #tpu.memory_space<vmem>>, vector<384x192xf32>
    %cst = arith.constant dense<0.000000e+00> : vector<4x192xf32>
    %2 = tpu.matmul %0, %1, %cst {dimension_numbers = #tpu.dot_dimension_numbers<[1], [0], [0], [1], [0, 0, 1, 1], [], []>} : vector<4x384xf32>, vector<384x192xf32>, vector<4x192xf32> -> vector<4x192xf32>
    %c0_3 = arith.constant 0 : index
    %c0_4 = arith.constant 0 : index
    %3 = vector.load %arg3[%c0_3, %c0_4] : memref<1x192xf32, #tpu.memory_space<vmem>>, vector<1x192xf32>
    %4 = vector.broadcast %3 : vector<1x192xf32> to vector<4x192xf32>
    %5 = arith.addf %2, %4 : vector<4x192xf32>
    %6 = math.tanh %5 : vector<4x192xf32>
    %c0_5 = arith.constant 0 : index
    %c0_6 = arith.constant 0 : index
    %7 = vector.load %arg4[%c0_5, %c0_6] : memref<192x384xf32, #tpu.memory_space<vmem>>, vector<192x384xf32>
    %cst_7 = arith.constant dense<0.000000e+00> : vector<4x384xf32>
    %8 = tpu.matmul %6, %7, %cst_7 {dimension_numbers = #tpu.dot_dimension_numbers<[1], [0], [0], [1], [0, 0, 1, 1], [], []>} : vector<4x192xf32>, vector<192x384xf32>, vector<4x384xf32> -> vector<4x384xf32>
    %c0_8 = arith.constant 0 : index
    %c0_9 = arith.constant 0 : index
    %9 = vector.load %arg5[%c0_8, %c0_9] : memref<1x384xf32, #tpu.memory_space<vmem>>, vector<1x384xf32>
    %10 = vector.broadcast %9 : vector<1x384xf32> to vector<4x384xf32>
    %11 = arith.addf %8, %10 : vector<4x384xf32>
    %12 = math.tanh %11 : vector<4x384xf32>
    %c0_10 = arith.constant 0 : index
    %c0_11 = arith.constant 0 : index
    %13 = vector.load %arg6[%c0_10, %c0_11] : memref<4x384xf32, #tpu.memory_space<vmem>>, vector<4x384xf32>
    tpu.vector_store %arg6[%c0_10, %c0_11], %12 {strides = array<i32>} : memref<4x384xf32, #tpu.memory_space<vmem>>, vector<4x384xf32>,
    return
  }
  func.func @transform_0(%arg0: i32) -> (i32, i32) {
    %c0_i32 = arith.constant 0 : i32
    %c0_i32_0 = arith.constant 0 : i32
    %c0_i32_1 = arith.constant 0 : i32
    return %c0_i32, %c0_i32_0 : i32, i32
  }
  func.func @transform_1(%arg0: i32) -> (i32, i32) {
    %c0_i32 = arith.constant 0 : i32
    %c0_i32_0 = arith.constant 0 : i32
    %c0_i32_1 = arith.constant 0 : i32
    return %c0_i32, %c0_i32_0 : i32, i32
  }
  func.func @transform_2(%arg0: i32) -> (i32, i32) {
    %c0_i32 = arith.constant 0 : i32
    %c0_i32_0 = arith.constant 0 : i32
    %c0_i32_1 = arith.constant 0 : i32
    return %c0_i32, %c0_i32_0 : i32, i32
  }
  func.func @transform_3(%arg0: i32) -> (i32, i32) {
    %c0_i32 = arith.constant 0 : i32
    %c0_i32_0 = arith.constant 0 : i32
    %c0_i32_1 = arith.constant 0 : i32
    return %c0_i32, %c0_i32_0 : i32, i32
  }
  func.func @transform_4(%arg0: i32) -> (i32, i32) {
    %c0_i32 = arith.constant 0 : i32
    %c0_i32_0 = arith.constant 0 : i32
    %c0_i32_1 = arith.constant 0 : i32
    return %c0_i32, %c0_i32_0 : i32, i32
  }
  func.func @transform_5(%arg0: i32) -> (i32, i32) {
    %c0_i32 = arith.constant 0 : i32
    %c0_i32_0 = arith.constant 0 : i32
    %c0_i32_1 = arith.constant 0 : i32
    return %c0_i32, %c0_i32_0 : i32, i32
  }
}

module attributes {stable_mosaic.version = 11 : i64} {
  func.func @_fuse_kernel(%arg0: i32, %arg1: i32, %arg2: memref<1x64x384xbf16, #tpu.memory_space<vmem>>, %arg3: memref<1x1x384xf32, #tpu.memory_space<vmem>>, %arg4: memref<384x256xbf16, #tpu.memory_space<vmem>>, %arg5: memref<1x256xf32, #tpu.memory_space<vmem>>, %arg6: memref<1x64x256xf32, #tpu.memory_space<vmem>>) attributes {dimension_semantics = [#tpu.dimension_semantics<parallel>, #tpu.dimension_semantics<parallel>], iteration_bounds = array<i64: 4, 1>, scalar_prefetch = 0 : i64, scratch_operands = 0 : i64, tpu.core_type = #tpu.core_type<tc>, window_params = [{transform_indices = @transform_0, window_bounds = array<i64: 1, 64, 384>}, {transform_indices = @transform_1, window_bounds = array<i64: 1, 1, 384>}, {pipeline_mode = #tpu.pipeline_mode<synchronous>, transform_indices = @transform_2, window_bounds = array<i64: 384, 256>}, {pipeline_mode = #tpu.pipeline_mode<synchronous>, transform_indices = @transform_3, window_bounds = array<i64: 1, 256>}, {transform_indices = @transform_4, window_bounds = array<i64: 1, 64, 256>}]} {
    %c0 = arith.constant 0 : index
    %c0_0 = arith.constant 0 : index
    %c0_1 = arith.constant 0 : index
    %0 = vector.load %arg2[%c0, %c0_0, %c0_1] : memref<1x64x384xbf16, #tpu.memory_space<vmem>>, vector<1x64x384xbf16>
    %1 = vector.shape_cast %0 : vector<1x64x384xbf16> to vector<64x384xbf16>
    %2 = arith.extf %1 : vector<64x384xbf16> to vector<64x384xf32>
    %c0_2 = arith.constant 0 : index
    %c0_3 = arith.constant 0 : index
    %c0_4 = arith.constant 0 : index
    %3 = vector.load %arg3[%c0_2, %c0_3, %c0_4] : memref<1x1x384xf32, #tpu.memory_space<vmem>>, vector<1x1x384xf32>
    %4 = vector.shape_cast %3 : vector<1x1x384xf32> to vector<1x384xf32>
    %5 = vector.broadcast %4 : vector<1x384xf32> to vector<64x384xf32>
    %6 = arith.mulf %5, %2 : vector<64x384xf32>
    %7 = arith.addf %6, %2 : vector<64x384xf32>
    %8 = arith.truncf %7 : vector<64x384xf32> to vector<64x384xbf16>
    %c0_5 = arith.constant 0 : index
    %c0_6 = arith.constant 0 : index
    %9 = vector.load %arg4[%c0_5, %c0_6] : memref<384x256xbf16, #tpu.memory_space<vmem>>, vector<384x256xbf16>
    %cst = arith.constant dense<0.000000e+00> : vector<64x256xf32>
    %10 = tpu.matmul %8, %9, %cst {dimension_numbers = #tpu.dot_dimension_numbers<[1], [0], [0], [1], [0, 0, 1, 1], [], []>} : vector<64x384xbf16>, vector<384x256xbf16>, vector<64x256xf32> -> vector<64x256xf32>
    %c0_7 = arith.constant 0 : index
    %c0_8 = arith.constant 0 : index
    %11 = vector.load %arg5[%c0_7, %c0_8] : memref<1x256xf32, #tpu.memory_space<vmem>>, vector<1x256xf32>
    %12 = vector.broadcast %11 : vector<1x256xf32> to vector<64x256xf32>
    %13 = arith.addf %10, %12 : vector<64x256xf32>
    %cst_9 = arith.constant 0.000000e+00 : f32
    %14 = vector.broadcast %cst_9 : f32 to vector<64x256xf32>
    %15 = arith.maximumf %13, %14 : vector<64x256xf32>
    %c0_10 = arith.constant 0 : index
    %c0_11 = arith.constant 0 : index
    %c0_12 = arith.constant 0 : index
    %16 = vector.load %arg6[%c0_10, %c0_11, %c0_12] : memref<1x64x256xf32, #tpu.memory_space<vmem>>, vector<1x64x256xf32>
    %17 = vector.shape_cast %16 : vector<1x64x256xf32> to vector<64x256xf32>
    %18 = vector.shape_cast %15 : vector<64x256xf32> to vector<1x64x256xf32>
    tpu.vector_store %arg6[%c0_10, %c0_11, %c0_12], %18 {strides = array<i32>} : memref<1x64x256xf32, #tpu.memory_space<vmem>>, vector<1x64x256xf32>,
    return
  }
  func.func @transform_0(%arg0: i32, %arg1: i32) -> (i32, i32, i32) {
    %c0_i32 = arith.constant 0 : i32
    %c0_i32_0 = arith.constant 0 : i32
    return %arg0, %arg1, %c0_i32 : i32, i32, i32
  }
  func.func @transform_1(%arg0: i32, %arg1: i32) -> (i32, i32, i32) {
    %c0_i32 = arith.constant 0 : i32
    %c0_i32_0 = arith.constant 0 : i32
    %c0_i32_1 = arith.constant 0 : i32
    return %arg0, %c0_i32, %c0_i32_0 : i32, i32, i32
  }
  func.func @transform_2(%arg0: i32, %arg1: i32) -> (i32, i32) {
    %c0_i32 = arith.constant 0 : i32
    %c0_i32_0 = arith.constant 0 : i32
    %c0_i32_1 = arith.constant 0 : i32
    return %c0_i32, %c0_i32_0 : i32, i32
  }
  func.func @transform_3(%arg0: i32, %arg1: i32) -> (i32, i32) {
    %c0_i32 = arith.constant 0 : i32
    %c0_i32_0 = arith.constant 0 : i32
    %c0_i32_1 = arith.constant 0 : i32
    return %c0_i32, %c0_i32_0 : i32, i32
  }
  func.func @transform_4(%arg0: i32, %arg1: i32) -> (i32, i32, i32) {
    %c0_i32 = arith.constant 0 : i32
    %c0_i32_0 = arith.constant 0 : i32
    return %arg0, %arg1, %c0_i32 : i32, i32, i32
  }
}

</mosaic_0001>

<llo_original>
// kernel: stn_forward.4
$region0: #{stn_forward.4}
  #allocation0 [shape = 'u32[]', space=smem, size = 0x4, offset = 0x4, fixed_abs, tag = 'smem constant byte address 0x4 - core index']
  #allocation1 [shape = 'u32[144,128]{1,0:T(1,128)}', space=vmem, size = 0x12000, scoped, tag = 'internal scratch']
  %s0 = inlined_call_operand.vmem [shape: bf16[256,256], index: 0, kind: input, shape index: {}]
  %s1 = inlined_call_operand.vmem [shape: bf16[256,384], index: 1, kind: input, shape index: {}]
  %s2 = inlined_call_operand.vmem [shape: bf16[256,384], index: 2, kind: input, shape index: {}]
  %s3 = inlined_call_operand.hbm [shape: f32[1,384], index: 3, kind: input, shape index: {}]
  %s4 = inlined_call_operand.vmem [shape: bf16[256,384], index: 4, kind: output, shape index: {}]
  %s5 = sld [smem:[#allocation0]]
  $region30: #{stn_forward.4} parent=0
    _
  %s7 = ssub.s32 1, %s5
  %s8 = scalar_select 0, %s7, %s5
  $region1: #{stn_forward.4} parent=0
    #allocation2 [shape = 'u8[1536]{0}', space=vmem, size = 0x800, scoped, tag = 'input window, operand 3, single buffered']
    #allocation3 [shape = 's32[1]{0}', space=sflag, size = 0x4, scoped, tag = 'scoped memory for stn_forward.4']
    %9 = vsyncpa [#allocation3], 0
    // Predicated region
    $region2: #{stn_forward.4} parent=1 // pred_check
      _
    $region3: #{stn_forward.4} parent=1 // pred_check_branch
      %11 = sbr.rel (0) target = $region5
    $region4: #{stn_forward.4} parent=1 // pred_region
      _
    $region5: #{stn_forward.4} parent=1 // pred_fallthru
      _
    // Predicated region
    $region6: #{stn_forward.4} parent=1 // pred_check
      _
    $region7: #{stn_forward.4} parent=1 // pred_check_branch
      %13 = sbr.rel (0) target = $region9
    $region8: #{stn_forward.4} parent=1 // pred_region
      _
    $region9: #{stn_forward.4} parent=1 // pred_fallthru
      _
    // Predicated region
    $region10: #{stn_forward.4} parent=1 // pred_check
      _
    $region11: #{stn_forward.4} parent=1 // pred_check_branch
      %15 = sbr.rel (0) target = $region13
    $region12: #{stn_forward.4} parent=1 // pred_region
      _
    $region13: #{stn_forward.4} parent=1 // pred_fallthru
      _
    // Predicated region
    $region14: #{stn_forward.4} parent=1 // pred_check
      _
    $region15: #{stn_forward.4} parent=1 // pred_check_branch
      %17 = sbr.rel (0) target = $region17
    $region16: #{stn_forward.4} parent=1 // pred_region
      %s19 = ssub.s32 48, 48
      %20 = vsyncadd [#allocation3], %s19
      %s22 = sshll.u32 [#allocation2], 4
      %s23 = int_to_ptr.vmem [resolvable:$true] %s22
      %25 = dma.hbm_to_vmem [thread:$0]  %s3, 48, %s23, [#allocation3]
    $region17: #{stn_forward.4} parent=1 // pred_fallthru
      _
    // Predicated region
    $region18: #{stn_forward.4} parent=1 // pred_check
      _
    $region19: #{stn_forward.4} parent=1 // pred_check_branch
      %27 = sbr.rel (0) target = $region21
    $region20: #{stn_forward.4} parent=1 // pred_region
      %28 = dma.done [#allocation3], 48
    $region21: #{stn_forward.4} parent=1 // pred_fallthru
      _
    %v30 = vld [vmem:[%s0] sm:$0xff]
    %v31 = vld [vmem:[%s0 + $0x8] sm:$0xff]
    %v32 = vld [vmem:[%s0 + $0x10] sm:$0xff]
    %v33 = vld [vmem:[%s0 + $0x18] sm:$0xff]
    %v34 = vld [vmem:[%s0 + $0x20] sm:$0xff]
    %v35 = vld [vmem:[%s0 + $0x28] sm:$0xff]
    %v36 = vld [vmem:[%s0 + $0x30] sm:$0xff]
    %v37 = vld [vmem:[%s0 + $0x38] sm:$0xff]
    %v38 = vld [vmem:[%s0 + $0x40] sm:$0xff]
    %v39 = vld [vmem:[%s0 + $0x48] sm:$0xff]
    %v40 = vld [vmem:[%s0 + $0x50] sm:$0xff]
    %v41 = vld [vmem:[%s0 + $0x58] sm:$0xff]
    %v42 = vld [vmem:[%s0 + $0x60] sm:$0xff]
    %v43 = vld [vmem:[%s0 + $0x68] sm:$0xff]
    %v44 = vld [vmem:[%s0 + $0x70] sm:$0xff]
    %v45 = vld [vmem:[%s0 + $0x78] sm:$0xff]
    %v46 = vld [vmem:[%s0 + $0x80] sm:$0xff]
    %v47 = vld [vmem:[%s0 + $0x88] sm:$0xff]
    %v48 = vld [vmem:[%s0 + $0x90] sm:$0xff]
    %v49 = vld [vmem:[%s0 + $0x98] sm:$0xff]
    %v50 = vld [vmem:[%s0 + $0xa0] sm:$0xff]
    %v51 = vld [vmem:[%s0 + $0xa8] sm:$0xff]
    %v52 = vld [vmem:[%s0 + $0xb0] sm:$0xff]
    %v53 = vld [vmem:[%s0 + $0xb8] sm:$0xff]
    %v54 = vld [vmem:[%s0 + $0xc0] sm:$0xff]
    %v55 = vld [vmem:[%s0 + $0xc8] sm:$0xff]
    %v56 = vld [vmem:[%s0 + $0xd0] sm:$0xff]
    %v57 = vld [vmem:[%s0 + $0xd8] sm:$0xff]
    %v58 = vld [vmem:[%s0 + $0xe0] sm:$0xff]
    %v59 = vld [vmem:[%s0 + $0xe8] sm:$0xff]
    %v60 = vld [vmem:[%s0 + $0xf0] sm:$0xff]
    %v61 = vld [vmem:[%s0 + $0xf8] sm:$0xff]
    %v62 = vld [vmem:[%s2] sm:$0xff]
    %v63 = vld [vmem:[%s2 + $0x8] sm:$0xf]
    %v64 = vld [vmem:[%s2 + $0xc] sm:$0xff]
    %v65 = vld [vmem:[%s2 + $0x14] sm:$0xf]
    %v66 = vld [vmem:[%s2 + $0x18] sm:$0xff]
    %v67 = vld [vmem:[%s2 + $0x20] sm:$0xf]
    %v68 = vld [vmem:[%s2 + $0x24] sm:$0xff]
    %v69 = vld [vmem:[%s2 + $0x2c] sm:$0xf]
    %v70 = vld [vmem:[%s2 + $0x30] sm:$0xff]
    %v71 = vld [vmem:[%s2 + $0x38] sm:$0xf]
    %v72 = vld [vmem:[%s2 + $0x3c] sm:$0xff]
    %v73 = vld [vmem:[%s2 + $0x44] sm:$0xf]
    %v74 = vld [vmem:[%s2 + $0x48] sm:$0xff]
    %v75 = vld [vmem:[%s2 + $0x50] sm:$0xf]
    %v76 = vld [vmem:[%s2 + $0x54] sm:$0xff]
    %v77 = vld [vmem:[%s2 + $0x5c] sm:$0xf]
    %v78 = vld [vmem:[%s2 + $0x60] sm:$0xff]
    %v79 = vld [vmem:[%s2 + $0x68] sm:$0xf]
    %v80 = vld [vmem:[%s2 + $0x6c] sm:$0xff]
    %v81 = vld [vmem:[%s2 + $0x74] sm:$0xf]
    %v82 = vld [vmem:[%s2 + $0x78] sm:$0xff]
    %v83 = vld [vmem:[%s2 + $0x80] sm:$0xf]
    %v84 = vld [vmem:[%s2 + $0x84] sm:$0xff]
    %v85 = vld [vmem:[%s2 + $0x8c] sm:$0xf]
    %v86 = vld [vmem:[%s2 + $0x90] sm:$0xff]
    %v87 = vld [vmem:[%s2 + $0x98] sm:$0xf]
    %v88 = vld [vmem:[%s2 + $0x9c] sm:$0xff]
    %v89 = vld [vmem:[%s2 + $0xa4] sm:$0xf]
    %v90 = vld [vmem:[%s2 + $0xa8] sm:$0xff]
    %v91 = vld [vmem:[%s2 + $0xb0] sm:$0xf]
    %v92 = vld [vmem:[%s2 + $0xb4] sm:$0xff]
    %v93 = vld [vmem:[%s2 + $0xbc] sm:$0xf]
    %v94 = vld [vmem:[%s2 + $0xc0] sm:$0xff]
    %v95 = vld [vmem:[%s2 + $0xc8] sm:$0xf]
    %v96 = vld [vmem:[%s2 + $0xcc] sm:$0xff]
    %v97 = vld [vmem:[%s2 + $0xd4] sm:$0xf]
    %v98 = vld [vmem:[%s2 + $0xd8] sm:$0xff]
    %v99 = vld [vmem:[%s2 + $0xe0] sm:$0xf]
    %v100 = vld [vmem:[%s2 + $0xe4] sm:$0xff]
    %v101 = vld [vmem:[%s2 + $0xec] sm:$0xf]
    %v102 = vld [vmem:[%s2 + $0xf0] sm:$0xff]
    %v103 = vld [vmem:[%s2 + $0xf8] sm:$0xf]
    %v104 = vld [vmem:[%s2 + $0xfc] sm:$0xff]
    %v105 = vld [vmem:[%s2 + $0x104] sm:$0xf]
    %v106 = vld [vmem:[%s2 + $0x108] sm:$0xff]
    %v107 = vld [vmem:[%s2 + $0x110] sm:$0xf]
    %v108 = vld [vmem:[%s2 + $0x114] sm:$0xff]
    %v109 = vld [vmem:[%s2 + $0x11c] sm:$0xf]
    %v110 = vld [vmem:[%s2 + $0x120] sm:$0xff]
    %v111 = vld [vmem:[%s2 + $0x128] sm:$0xf]
    %v112 = vld [vmem:[%s2 + $0x12c] sm:$0xff]
    %v113 = vld [vmem:[%s2 + $0x134] sm:$0xf]
    %v114 = vld [vmem:[%s2 + $0x138] sm:$0xff]
    %v115 = vld [vmem:[%s2 + $0x140] sm:$0xf]
    %v116 = vld [vmem:[%s2 + $0x144] sm:$0xff]
    %v117 = vld [vmem:[%s2 + $0x14c] sm:$0xf]
    %v118 = vld [vmem:[%s2 + $0x150] sm:$0xff]
    %v119 = vld [vmem:[%s2 + $0x158] sm:$0xf]
    %v120 = vld [vmem:[%s2 + $0x15c] sm:$0xff]
    %v121 = vld [vmem:[%s2 + $0x164] sm:$0xf]
    %v122 = vld [vmem:[%s2 + $0x168] sm:$0xff]
    %v123 = vld [vmem:[%s2 + $0x170] sm:$0xf]
    %v124 = vld [vmem:[%s2 + $0x174] sm:$0xff]
    %v125 = vld [vmem:[%s2 + $0x17c] sm:$0xf]
    %v126 = vld [vmem:[#allocation2] sm:$0x7]
    %v128 = vlaneseq
    %v129 = vshrl.u32 %v128, 7
    %v130 = vsub.s32 0, %v129
    %v131 = vrot.slane %v126, %v130
    %v132 = vlaneseq
    %v133 = vshrl.u32 %v132, 7
    %v134 = vsub.s32 1, %v133
    %v135 = vrot.slane %v126, %v134
    %v136 = vlaneseq
    %v137 = vshrl.u32 %v136, 7
    %v138 = vsub.s32 2, %v137
    %v139 = vrot.slane %v126, %v138
    %v175 = vunpack.c.l.b16 %v30
    %v176 = vunpack.c.h.b16 %v30
    %v177 = vunpack.c.l.b16 %v31
    %v178 = vunpack.c.h.b16 %v31
    %v179 = vunpack.c.l.b16 %v32
    %v180 = vunpack.c.h.b16 %v32
    %v181 = vunpack.c.l.b16 %v33
    %v182 = vunpack.c.h.b16 %v33
    %v183 = vunpack.c.l.b16 %v34
    %v184 = vunpack.c.h.b16 %v34
    %v185 = vunpack.c.l.b16 %v35
    %v186 = vunpack.c.h.b16 %v35
    %v187 = vunpack.c.l.b16 %v36
    %v188 = vunpack.c.h.b16 %v36
    %v189 = vunpack.c.l.b16 %v37
    %v190 = vunpack.c.h.b16 %v37
    %v191 = vunpack.c.l.b16 %v38
    %v192 = vunpack.c.h.b16 %v38
    %v193 = vunpack.c.l.b16 %v39
    %v194 = vunpack.c.h.b16 %v39
    %v195 = vunpack.c.l.b16 %v40
    %v196 = vunpack.c.h.b16 %v40
    %v197 = vunpack.c.l.b16 %v41
    %v198 = vunpack.c.h.b16 %v41
    %v199 = vunpack.c.l.b16 %v42
    %v200 = vunpack.c.h.b16 %v42
    %v201 = vunpack.c.l.b16 %v43
    %v202 = vunpack.c.h.b16 %v43
    %v203 = vunpack.c.l.b16 %v44
    %v204 = vunpack.c.h.b16 %v44
    %v205 = vunpack.c.l.b16 %v45
    %v206 = vunpack.c.h.b16 %v45
    %v207 = vunpack.c.l.b16 %v46
    %v208 = vunpack.c.h.b16 %v46
    %v209 = vunpack.c.l.b16 %v47
    %v210 = vunpack.c.h.b16 %v47
    %v211 = vunpack.c.l.b16 %v48
    %v212 = vunpack.c.h.b16 %v48
    %v213 = vunpack.c.l.b16 %v49
    %v214 = vunpack.c.h.b16 %v49
    %v215 = vunpack.c.l.b16 %v50
    %v216 = vunpack.c.h.b16 %v50
    %v217 = vunpack.c.l.b16 %v51
    %v218 = vunpack.c.h.b16 %v51
    %v219 = vunpack.c.l.b16 %v52
    %v220 = vunpack.c.h.b16 %v52
    %v221 = vunpack.c.l.b16 %v53
    %v222 = vunpack.c.h.b16 %v53
    %v223 = vunpack.c.l.b16 %v54
    %v224 = vunpack.c.h.b16 %v54
    %v225 = vunpack.c.l.b16 %v55
    %v226 = vunpack.c.h.b16 %v55
    %v227 = vunpack.c.l.b16 %v56
    %v228 = vunpack.c.h.b16 %v56
    %v229 = vunpack.c.l.b16 %v57
    %v230 = vunpack.c.h.b16 %v57
    %v231 = vunpack.c.l.b16 %v58
    %v232 = vunpack.c.h.b16 %v58
    %v233 = vunpack.c.l.b16 %v59
    %v234 = vunpack.c.h.b16 %v59
    %v235 = vunpack.c.l.b16 %v60
    %v236 = vunpack.c.h.b16 %v60
    %v237 = vunpack.c.l.b16 %v61
    %v238 = vunpack.c.h.b16 %v61
    %v239 = vpack.c.b16 %v177, %v175
    %v240 = vpack.c.b16 %v178, %v176
    %v241 = vpack.c.b16 %v181, %v179
    %v242 = vpack.c.b16 %v182, %v180
    %v243 = vpack.c.b16 %v185, %v183
    %v244 = vpack.c.b16 %v186, %v184
    %v245 = vpack.c.b16 %v189, %v187
    %v246 = vpack.c.b16 %v190, %v188
    %v247 = vpack.c.b16 %v193, %v191
    %v248 = vpack.c.b16 %v194, %v192
    %v249 = vpack.c.b16 %v197, %v195
    %v250 = vpack.c.b16 %v198, %v196
    %v251 = vpack.c.b16 %v201, %v199
    %v252 = vpack.c.b16 %v202, %v200
    %v253 = vpack.c.b16 %v205, %v203
    %v254 = vpack.c.b16 %v206, %v204
    %v255 = vpack.c.b16 %v209, %v207
    %v256 = vpack.c.b16 %v210, %v208
    %v257 = vpack.c.b16 %v213, %v211
    %v258 = vpack.c.b16 %v214, %v212
    %v259 = vpack.c.b16 %v217, %v215
    %v260 = vpack.c.b16 %v218, %v216
    %v261 = vpack.c.b16 %v221, %v219
    %v262 = vpack.c.b16 %v222, %v220
    %v263 = vpack.c.b16 %v225, %v223
    %v264 = vpack.c.b16 %v226, %v224
    %v265 = vpack.c.b16 %v229, %v227
    %v266 = vpack.c.b16 %v230, %v228
    %v267 = vpack.c.b16 %v233, %v231
    %v268 = vpack.c.b16 %v234, %v232
    %v269 = vpack.c.b16 %v237, %v235
    %v270 = vpack.c.b16 %v238, %v236
    %v367 = vunpack.c.l.b16 %v62
    %v368 = vunpack.c.h.b16 %v62
    %v369 = vunpack.c.l.b16 %v63
    %v370 = vunpack.c.l.b16 %v64
    %v371 = vunpack.c.h.b16 %v64
    %v372 = vunpack.c.l.b16 %v65
    %v373 = vunpack.c.l.b16 %v66
    %v374 = vunpack.c.h.b16 %v66
    %v375 = vunpack.c.l.b16 %v67
    %v376 = vunpack.c.l.b16 %v68
    %v377 = vunpack.c.h.b16 %v68
    %v378 = vunpack.c.l.b16 %v69
    %v379 = vunpack.c.l.b16 %v70
    %v380 = vunpack.c.h.b16 %v70
    %v381 = vunpack.c.l.b16 %v71
    %v382 = vunpack.c.l.b16 %v72
    %v383 = vunpack.c.h.b16 %v72
    %v384 = vunpack.c.l.b16 %v73
    %v385 = vunpack.c.l.b16 %v74
    %v386 = vunpack.c.h.b16 %v74
    %v387 = vunpack.c.l.b16 %v75
    %v388 = vunpack.c.l.b16 %v76
    %v389 = vunpack.c.h.b16 %v76
    %v390 = vunpack.c.l.b16 %v77
    %v391 = vunpack.c.l.b16 %v78
    %v392 = vunpack.c.h.b16 %v78
    %v393 = vunpack.c.l.b16 %v79
    %v394 = vunpack.c.l.b16 %v80
    %v395 = vunpack.c.h.b16 %v80
    %v396 = vunpack.c.l.b16 %v81
    %v397 = vunpack.c.l.b16 %v82
    %v398 = vunpack.c.h.b16 %v82
    %v399 = vunpack.c.l.b16 %v83
    %v400 = vunpack.c.l.b16 %v84
    %v401 = vunpack.c.h.b16 %v84
    %v402 = vunpack.c.l.b16 %v85
    %v403 = vunpack.c.l.b16 %v86
    %v404 = vunpack.c.h.b16 %v86
    %v405 = vunpack.c.l.b16 %v87
    %v406 = vunpack.c.l.b16 %v88
    %v407 = vunpack.c.h.b16 %v88
    %v408 = vunpack.c.l.b16 %v89
    %v409 = vunpack.c.l.b16 %v90
    %v410 = vunpack.c.h.b16 %v90
    %v411 = vunpack.c.l.b16 %v91
    %v412 = vunpack.c.l.b16 %v92
    %v413 = vunpack.c.h.b16 %v92
    %v414 = vunpack.c.l.b16 %v93
    %v415 = vunpack.c.l.b16 %v94
    %v416 = vunpack.c.h.b16 %v94
    %v417 = vunpack.c.l.b16 %v95
    %v418 = vunpack.c.l.b16 %v96
    %v419 = vunpack.c.h.b16 %v96
    %v420 = vunpack.c.l.b16 %v97
    %v421 = vunpack.c.l.b16 %v98
    %v422 = vunpack.c.h.b16 %v98
    %v423 = vunpack.c.l.b16 %v99
    %v424 = vunpack.c.l.b16 %v100
    %v425 = vunpack.c.h.b16 %v100
    %v426 = vunpack.c.l.b16 %v101
    %v427 = vunpack.c.l.b16 %v102
    %v428 = vunpack.c.h.b16 %v102
    %v429 = vunpack.c.l.b16 %v103
    %v430 = vunpack.c.l.b16 %v104
    %v431 = vunpack.c.h.b16 %v104
    %v432 = vunpack.c.l.b16 %v105
    %v433 = vunpack.c.l.b16 %v106
    %v434 = vunpack.c.h.b16 %v106
    %v435 = vunpack.c.l.b16 %v107
    %v436 = vunpack.c.l.b16 %v108
    %v437 = vunpack.c.h.b16 %v108
    %v438 = vunpack.c.l.b16 %v109
    %v439 = vunpack.c.l.b16 %v110
    %v440 = vunpack.c.h.b16 %v110
    %v441 = vunpack.c.l.b16 %v111
    %v442 = vunpack.c.l.b16 %v112
    %v443 = vunpack.c.h.b16 %v112
    %v444 = vunpack.c.l.b16 %v113
    %v445 = vunpack.c.l.b16 %v114
    %v446 = vunpack.c.h.b16 %v114
    %v447 = vunpack.c.l.b16 %v115
    %v448 = vunpack.c.l.b16 %v116
    %v449 = vunpack.c.h.b16 %v116
    %v450 = vunpack.c.l.b16 %v117
    %v451 = vunpack.c.l.b16 %v118
    %v452 = vunpack.c.h.b16 %v118
    %v453 = vunpack.c.l.b16 %v119
    %v454 = vunpack.c.l.b16 %v120
    %v455 = vunpack.c.h.b16 %v120
    %v456 = vunpack.c.l.b16 %v121
    %v457 = vunpack.c.l.b16 %v122
    %v458 = vunpack.c.h.b16 %v122
    %v459 = vunpack.c.l.b16 %v123
    %v460 = vunpack.c.l.b16 %v124
    %v461 = vunpack.c.h.b16 %v124
    %v462 = vunpack.c.l.b16 %v125
    %v463 = vpack.c.b16 %v370, %v367
    %v464 = vpack.c.b16 %v371, %v368
    %v465 = vpack.c.b16 %v372, %v369
    %v466 = vpack.c.b16 %v376, %v373
    %v467 = vpack.c.b16 %v377, %v374
    %v468 = vpack.c.b16 %v378, %v375
    %v469 = vpack.c.b16 %v382, %v379
    %v470 = vpack.c.b16 %v383, %v380
    %v471 = vpack.c.b16 %v384, %v381
    %v472 = vpack.c.b16 %v388, %v385
    %v473 = vpack.c.b16 %v389, %v386
    %v474 = vpack.c.b16 %v390, %v387
    %v475 = vpack.c.b16 %v394, %v391
    %v476 = vpack.c.b16 %v395, %v392
    %v477 = vpack.c.b16 %v396, %v393
    %v478 = vpack.c.b16 %v400, %v397
    %v479 = vpack.c.b16 %v401, %v398
    %v480 = vpack.c.b16 %v402, %v399
    %v481 = vpack.c.b16 %v406, %v403
    %v482 = vpack.c.b16 %v407, %v404
    %v483 = vpack.c.b16 %v408, %v405
    %v484 = vpack.c.b16 %v412, %v409
    %v485 = vpack.c.b16 %v413, %v410
    %v486 = vpack.c.b16 %v414, %v411
    %v487 = vpack.c.b16 %v418, %v415
    %v488 = vpack.c.b16 %v419, %v416
    %v489 = vpack.c.b16 %v420, %v417
    %v490 = vpack.c.b16 %v424, %v421
    %v491 = vpack.c.b16 %v425, %v422
    %v492 = vpack.c.b16 %v426, %v423
    %v493 = vpack.c.b16 %v430, %v427
    %v494 = vpack.c.b16 %v431, %v428
    %v495 = vpack.c.b16 %v432, %v429
    %v496 = vpack.c.b16 %v436, %v433
    %v497 = vpack.c.b16 %v437, %v434
    %v498 = vpack.c.b16 %v438, %v435
    %v499 = vpack.c.b16 %v442, %v439
    %v500 = vpack.c.b16 %v443, %v440
    %v501 = vpack.c.b16 %v444, %v441
    %v502 = vpack.c.b16 %v448, %v445
    %v503 = vpack.c.b16 %v449, %v446
    %v504 = vpack.c.b16 %v450, %v447
    %v505 = vpack.c.b16 %v454, %v451
    %v506 = vpack.c.b16 %v455, %v452
    %v507 = vpack.c.b16 %v456, %v453
    %v508 = vpack.c.b16 %v460, %v457
    %v509 = vpack.c.b16 %v461, %v458
    %v510 = vpack.c.b16 %v462, %v459
    %559 = vmatprep.subr.bf16.mxu0 %v464
    %560 = vmatpush1.bf16.msra.mxu0 %v463
    %561 = vmatprep.subr.bf16.mxu0 %v467
    %562 = vmatpush1.bf16.msra.mxu0 %v466
    %563 = vmatprep.subr.bf16.mxu0 %v470
    %564 = vmatpush1.bf16.msra.mxu0 %v469
    %565 = vmatprep.subr.bf16.mxu0 %v473
    %566 = vmatpush1.bf16.msra.mxu0 %v472
    %567 = vmatprep.subr.bf16.mxu0 %v476
    %568 = vmatpush1.bf16.msra.mxu0 %v475
    %569 = vmatprep.subr.bf16.mxu0 %v479
    %570 = vmatpush1.bf16.msra.mxu0 %v478
    %571 = vmatprep.subr.bf16.mxu0 %v482
    %572 = vmatpush1.bf16.msra.mxu0 %v481
    %573 = vmatprep.subr.bf16.mxu0 %v485
    %574 = vmatpush1.bf16.msra.mxu0 %v484
    %575 = vmatprep.subr.bf16.mxu0 %v488
    %576 = vmatpush1.bf16.msra.mxu0 %v487
    %577 = vmatprep.subr.bf16.mxu0 %v491
    %578 = vmatpush1.bf16.msra.mxu0 %v490
    %579 = vmatprep.subr.bf16.mxu0 %v494
    %580 = vmatpush1.bf16.msra.mxu0 %v493
    %581 = vmatprep.subr.bf16.mxu0 %v497
    %582 = vmatpush1.bf16.msra.mxu0 %v496
    %583 = vmatprep.subr.bf16.mxu0 %v500
    %584 = vmatpush1.bf16.msra.mxu0 %v499
    %585 = vmatprep.subr.bf16.mxu0 %v503
    %586 = vmatpush1.bf16.msra.mxu0 %v502
    %587 = vmatprep.subr.bf16.mxu0 %v506
    %588 = vmatpush1.bf16.msra.mxu0 %v505
    %589 = vmatprep.subr.bf16.mxu0 %v509
    %590 = vmatpush1.bf16.msra.mxu0 %v508
    %591 = vmatprep.mubr.bf16.mxu0 %v240
    %592 = vmatmul.mubr.bf16.gmra.mrb[0].mxu0 %v239
    %v593 = vpop.f32.mrb[0].mxu0
    %v594 = vadd.f32 %v131, %v593
    %v595 = vpop.f32.mrb[0].mxu0
    %v596 = vadd.f32 %v135, %v595
    %v597 = vpop.f32.mrb[0].mxu0
    %v598 = vadd.f32 %v131, %v597
    %v599 = vpop.f32.mrb[0].mxu0
    %v600 = vadd.f32 %v135, %v599
    %601 = vmatprep.mubr.bf16.mxu0 %v242
    %602 = vmatmul.mubr.bf16.gmra.mrb[0].mxu0 %v241
    %v603 = vpop.f32.mrb[0].mxu0
    %v604 = vadd.f32 %v131, %v603
    %v605 = vpop.f32.mrb[0].mxu0
    %v606 = vadd.f32 %v135, %v605
    %v607 = vpop.f32.mrb[0].mxu0
    %v608 = vadd.f32 %v131, %v607
    %v609 = vpop.f32.mrb[0].mxu0
    %v610 = vadd.f32 %v135, %v609
    %611 = vmatprep.mubr.bf16.mxu0 %v244
    %612 = vmatmul.mubr.bf16.gmra.mrb[0].mxu0 %v243
    %v613 = vpop.f32.mrb[0].mxu0
    %v614 = vadd.f32 %v131, %v613
    %v615 = vpop.f32.mrb[0].mxu0
    %v616 = vadd.f32 %v135, %v615
    %v617 = vpop.f32.mrb[0].mxu0
    %v618 = vadd.f32 %v131, %v617
    %v619 = vpop.f32.mrb[0].mxu0
    %v620 = vadd.f32 %v135, %v619
    %621 = vmatprep.mubr.bf16.mxu0 %v246
    %622 = vmatmul.mubr.bf16.gmra.mrb[0].mxu0 %v245
    %v623 = vpop.f32.mrb[0].mxu0
    %v624 = vadd.f32 %v131, %v623
    %v625 = vpop.f32.mrb[0].mxu0
    %v626 = vadd.f32 %v135, %v625
    %v627 = vpop.f32.mrb[0].mxu0
    %v628 = vadd.f32 %v131, %v627
    %v629 = vpop.f32.mrb[0].mxu0
    %v630 = vadd.f32 %v135, %v629
    %631 = vmatprep.mubr.bf16.mxu0 %v248
    %632 = vmatmul.mubr.bf16.gmra.mrb[0].mxu0 %v247
    %v633 = vpop.f32.mrb[0].mxu0
    %v634 = vadd.f32 %v131, %v633
    %v635 = vpop.f32.mrb[0].mxu0
    %v636 = vadd.f32 %v135, %v635
    %v637 = vpop.f32.mrb[0].mxu0
    %v638 = vadd.f32 %v131, %v637
    %v639 = vpop.f32.mrb[0].mxu0
    %v640 = vadd.f32 %v135, %v639
    %641 = vmatprep.mubr.bf16.mxu0 %v250
    %642 = vmatmul.mubr.bf16.gmra.mrb[0].mxu0 %v249
    %v643 = vpop.f32.mrb[0].mxu0
    %v644 = vadd.f32 %v131, %v643
    %v645 = vpop.f32.mrb[0].mxu0
    %v646 = vadd.f32 %v135, %v645
    %v647 = vpop.f32.mrb[0].mxu0
    %v648 = vadd.f32 %v131, %v647
    %v649 = vpop.f32.mrb[0].mxu0
    %v650 = vadd.f32 %v135, %v649
    %651 = vmatprep.mubr.bf16.mxu0 %v252
    %652 = vmatmul.mubr.bf16.gmra.mrb[0].mxu0 %v251
    %v653 = vpop.f32.mrb[0].mxu0
    %v654 = vadd.f32 %v131, %v653
    %v655 = vpop.f32.mrb[0].mxu0
    %v656 = vadd.f32 %v135, %v655
    %v657 = vpop.f32.mrb[0].mxu0
    %v658 = vadd.f32 %v131, %v657
    %v659 = vpop.f32.mrb[0].mxu0
    %v660 = vadd.f32 %v135, %v659
    %661 = vmatprep.mubr.bf16.mxu0 %v254
    %662 = vmatmul.mubr.bf16.gmra.mrb[0].mxu0 %v253
    %v663 = vpop.f32.mrb[0].mxu0
    %v664 = vadd.f32 %v131, %v663
    %v665 = vpop.f32.mrb[0].mxu0
    %v666 = vadd.f32 %v135, %v665
    %v667 = vpop.f32.mrb[0].mxu0
    %v668 = vadd.f32 %v131, %v667
    %v669 = vpop.f32.mrb[0].mxu0
    %v670 = vadd.f32 %v135, %v669
    %671 = vmatprep.mubr.bf16.mxu0 %v256
    %672 = vmatmul.mubr.bf16.gmra.mrb[0].mxu0 %v255
    %v673 = vpop.f32.mrb[0].mxu0
    %v674 = vadd.f32 %v131, %v673
    %v675 = vpop.f32.mrb[0].mxu0
    %v676 = vadd.f32 %v135, %v675
    %v677 = vpop.f32.mrb[0].mxu0
    %v678 = vadd.f32 %v131, %v677
    %v679 = vpop.f32.mrb[0].mxu0
    %v680 = vadd.f32 %v135, %v679
    %681 = vmatprep.mubr.bf16.mxu0 %v258
    %682 = vmatmul.mubr.bf16.gmra.mrb[0].mxu0 %v257
    %v683 = vpop.f32.mrb[0].mxu0
    %v684 = vadd.f32 %v131, %v683
    %v685 = vpop.f32.mrb[0].mxu0
    %v686 = vadd.f32 %v135, %v685
    %v687 = vpop.f32.mrb[0].mxu0
    %v688 = vadd.f32 %v131, %v687
    %v689 = vpop.f32.mrb[0].mxu0
    %v690 = vadd.f32 %v135, %v689
    %691 = vmatprep.mubr.bf16.mxu0 %v260
    %692 = vmatmul.mubr.bf16.gmra.mrb[0].mxu0 %v259
    %v693 = vpop.f32.mrb[0].mxu0
    %v694 = vadd.f32 %v131, %v693
    %v695 = vpop.f32.mrb[0].mxu0
    %v696 = vadd.f32 %v135, %v695
    %v697 = vpop.f32.mrb[0].mxu0
    %v698 = vadd.f32 %v131, %v697
    %v699 = vpop.f32.mrb[0].mxu0
    %v700 = vadd.f32 %v135, %v699
    %701 = vmatprep.mubr.bf16.mxu0 %v262
    %702 = vmatmul.mubr.bf16.gmra.mrb[0].mxu0 %v261
    %v703 = vpop.f32.mrb[0].mxu0
    %v704 = vadd.f32 %v131, %v703
    %v705 = vpop.f32.mrb[0].mxu0
    %v706 = vadd.f32 %v135, %v705
    %v707 = vpop.f32.mrb[0].mxu0
    %v708 = vadd.f32 %v131, %v707
    %v709 = vpop.f32.mrb[0].mxu0
    %v710 = vadd.f32 %v135, %v709
    %711 = vmatprep.mubr.bf16.mxu0 %v264
    %712 = vmatmul.mubr.bf16.gmra.mrb[0].mxu0 %v263
    %v713 = vpop.f32.mrb[0].mxu0
    %v714 = vadd.f32 %v131, %v713
    %v715 = vpop.f32.mrb[0].mxu0
    %v716 = vadd.f32 %v135, %v715
    %v717 = vpop.f32.mrb[0].mxu0
    %v718 = vadd.f32 %v131, %v717
    %v719 = vpop.f32.mrb[0].mxu0
    %v720 = vadd.f32 %v135, %v719
    %721 = vmatprep.mubr.bf16.mxu0 %v266
    %722 = vmatmul.mubr.bf16.gmra.mrb[0].mxu0 %v265
    %v723 = vpop.f32.mrb[0].mxu0
    %v724 = vadd.f32 %v131, %v723
    %v725 = vpop.f32.mrb[0].mxu0
    %v726 = vadd.f32 %v135, %v725
    %v727 = vpop.f32.mrb[0].mxu0
    %v728 = vadd.f32 %v131, %v727
    %v729 = vpop.f32.mrb[0].mxu0
    %v730 = vadd.f32 %v135, %v729
    %731 = vmatprep.mubr.bf16.mxu0 %v268
    %732 = vmatmul.mubr.bf16.gmra.mrb[0].mxu0 %v267
    %v733 = vpop.f32.mrb[0].mxu0
    %v734 = vadd.f32 %v131, %v733
    %v735 = vpop.f32.mrb[0].mxu0
    %v736 = vadd.f32 %v135, %v735
    %v737 = vpop.f32.mrb[0].mxu0
    %v738 = vadd.f32 %v131, %v737
    %v739 = vpop.f32.mrb[0].mxu0
    %v740 = vadd.f32 %v135, %v739
    %741 = vmatprep.mubr.bf16.mxu0 %v270
    %742 = vmatmul.mubr.bf16.gmra.mrb[0].mxu0 %v269
    %v743 = vpop.f32.mrb[0].mxu0
    %v744 = vadd.f32 %v131, %v743
    %v745 = vpop.f32.mrb[0].mxu0
    %v746 = vadd.f32 %v135, %v745
    %v747 = vpop.f32.mrb[0].mxu0
    %v748 = vadd.f32 %v131, %v747
    %v749 = vpop.f32.mrb[0].mxu0
    %v750 = vadd.f32 %v135, %v749
    %751 = vdwg.mxu0
    %752 = vmatprep.subr.bf16.mxu0 0
    %753 = vmatpush1.bf16.msra.mxu0 %v465
    %754 = vmatprep.subr.bf16.mxu0 0
    %755 = vmatpush1.bf16.msra.mxu0 %v468
    %756 = vmatprep.subr.bf16.mxu0 0
    %757 = vmatpush1.bf16.msra.mxu0 %v471
    %758 = vmatprep.subr.bf16.mxu0 0
    %759 = vmatpush1.bf16.msra.mxu0 %v474
    %760 = vmatprep.subr.bf16.mxu0 0
    %761 = vmatpush1.bf16.msra.mxu0 %v477
    %762 = vmatprep.subr.bf16.mxu0 0
    %763 = vmatpush1.bf16.msra.mxu0 %v480
    %764 = vmatprep.subr.bf16.mxu0 0
    %765 = vmatpush1.bf16.msra.mxu0 %v483
    %766 = vmatprep.subr.bf16.mxu0 0
    %767 = vmatpush1.bf16.msra.mxu0 %v486
    %768 = vmatprep.subr.bf16.mxu0 0
    %769 = vmatpush1.bf16.msra.mxu0 %v489
    %770 = vmatprep.subr.bf16.mxu0 0
    %771 = vmatpush1.bf16.msra.mxu0 %v492
    %772 = vmatprep.subr.bf16.mxu0 0
    %773 = vmatpush1.bf16.msra.mxu0 %v495
    %774 = vmatprep.subr.bf16.mxu0 0
    %775 = vmatpush1.bf16.msra.mxu0 %v498
    %776 = vmatprep.subr.bf16.mxu0 0
    %777 = vmatpush1.bf16.msra.mxu0 %v501
    %778 = vmatprep.subr.bf16.mxu0 0
    %779 = vmatpush1.bf16.msra.mxu0 %v504
    %780 = vmatprep.subr.bf16.mxu0 0
    %781 = vmatpush1.bf16.msra.mxu0 %v507
    %782 = vmatprep.subr.bf16.mxu0 0
    %783 = vmatpush1.bf16.msra.mxu0 %v510
    %784 = vmatprep.mubr.bf16.mxu0 %v240
    %785 = vmatmul.mubr.bf16.gmra.mrb[0].mxu0 %v239
    %v786 = vpop.f32.mrb[0].mxu0
    %v787 = vadd.f32 %v139, %v786
    %v788 = vpop.f32.mrb[0].mxu0
    %v789 = vpop.f32.mrb[0].mxu0
    %v790 = vadd.f32 %v139, %v789
    %v791 = vpop.f32.mrb[0].mxu0
    %792 = vmatprep.mubr.bf16.mxu0 %v242
    %793 = vmatmul.mubr.bf16.gmra.mrb[0].mxu0 %v241
    %v794 = vpop.f32.mrb[0].mxu0
    %v795 = vadd.f32 %v139, %v794
    %v796 = vpop.f32.mrb[0].mxu0
    %v797 = vpop.f32.mrb[0].mxu0
    %v798 = vadd.f32 %v139, %v797
    %v799 = vpop.f32.mrb[0].mxu0
    %800 = vmatprep.mubr.bf16.mxu0 %v244
    %801 = vmatmul.mubr.bf16.gmra.mrb[0].mxu0 %v243
    %v802 = vpop.f32.mrb[0].mxu0
    %v803 = vadd.f32 %v139, %v802
    %v804 = vpop.f32.mrb[0].mxu0
    %v805 = vpop.f32.mrb[0].mxu0
    %v806 = vadd.f32 %v139, %v805
    %v807 = vpop.f32.mrb[0].mxu0
    %808 = vmatprep.mubr.bf16.mxu0 %v246
    %809 = vmatmul.mubr.bf16.gmra.mrb[0].mxu0 %v245
    %v810 = vpop.f32.mrb[0].mxu0
    %v811 = vadd.f32 %v139, %v810
    %v812 = vpop.f32.mrb[0].mxu0
    %v813 = vpop.f32.mrb[0].mxu0
    %v814 = vadd.f32 %v139, %v813
    %v815 = vpop.f32.mrb[0].mxu0
    %816 = vmatprep.mubr.bf16.mxu0 %v248
    %817 = vmatmul.mubr.bf16.gmra.mrb[0].mxu0 %v247
    %v818 = vpop.f32.mrb[0].mxu0
    %v819 = vadd.f32 %v139, %v818
    %v820 = vpop.f32.mrb[0].mxu0
    %v821 = vpop.f32.mrb[0].mxu0
    %v822 = vadd.f32 %v139, %v821
    %v823 = vpop.f32.mrb[0].mxu0
    %824 = vmatprep.mubr.bf16.mxu0 %v250
    %825 = vmatmul.mubr.bf16.gmra.mrb[0].mxu0 %v249
    %v826 = vpop.f32.mrb[0].mxu0
    %v827 = vadd.f32 %v139, %v826
    %v828 = vpop.f32.mrb[0].mxu0
    %v829 = vpop.f32.mrb[0].mxu0
    %v830 = vadd.f32 %v139, %v829
    %v831 = vpop.f32.mrb[0].mxu0
    %832 = vmatprep.mubr.bf16.mxu0 %v252
    %833 = vmatmul.mubr.bf16.gmra.mrb[0].mxu0 %v251
    %v834 = vpop.f32.mrb[0].mxu0
    %v835 = vadd.f32 %v139, %v834
    %v836 = vpop.f32.mrb[0].mxu0
    %v837 = vpop.f32.mrb[0].mxu0
    %v838 = vadd.f32 %v139, %v837
    %v839 = vpop.f32.mrb[0].mxu0
    %840 = vmatprep.mubr.bf16.mxu0 %v254
    %841 = vmatmul.mubr.bf16.gmra.mrb[0].mxu0 %v253
    %v842 = vpop.f32.mrb[0].mxu0
    %v843 = vadd.f32 %v139, %v842
    %v844 = vpop.f32.mrb[0].mxu0
    %v845 = vpop.f32.mrb[0].mxu0
    %v846 = vadd.f32 %v139, %v845
    %v847 = vpop.f32.mrb[0].mxu0
    %848 = vmatprep.mubr.bf16.mxu0 %v256
    %849 = vmatmul.mubr.bf16.gmra.mrb[0].mxu0 %v255
    %v850 = vpop.f32.mrb[0].mxu0
    %v851 = vadd.f32 %v139, %v850
    %v852 = vpop.f32.mrb[0].mxu0
    %v853 = vpop.f32.mrb[0].mxu0
    %v854 = vadd.f32 %v139, %v853
    %v855 = vpop.f32.mrb[0].mxu0
    %856 = vmatprep.mubr.bf16.mxu0 %v258
    %857 = vmatmul.mubr.bf16.gmra.mrb[0].mxu0 %v257
    %v858 = vpop.f32.mrb[0].mxu0
    %v859 = vadd.f32 %v139, %v858
    %v860 = vpop.f32.mrb[0].mxu0
    %v861 = vpop.f32.mrb[0].mxu0
    %v862 = vadd.f32 %v139, %v861
    %v863 = vpop.f32.mrb[0].mxu0
    %864 = vmatprep.mubr.bf16.mxu0 %v260
    %865 = vmatmul.mubr.bf16.gmra.mrb[0].mxu0 %v259
    %v866 = vpop.f32.mrb[0].mxu0
    %v867 = vadd.f32 %v139, %v866
    %v868 = vpop.f32.mrb[0].mxu0
    %v869 = vpop.f32.mrb[0].mxu0
    %v870 = vadd.f32 %v139, %v869
    %v871 = vpop.f32.mrb[0].mxu0
    %872 = vmatprep.mubr.bf16.mxu0 %v262
    %873 = vmatmul.mubr.bf16.gmra.mrb[0].mxu0 %v261
    %v874 = vpop.f32.mrb[0].mxu0
    %v875 = vadd.f32 %v139, %v874
    %v876 = vpop.f32.mrb[0].mxu0
    %v877 = vpop.f32.mrb[0].mxu0
    %v878 = vadd.f32 %v139, %v877
    %v879 = vpop.f32.mrb[0].mxu0
    %880 = vmatprep.mubr.bf16.mxu0 %v264
    %881 = vmatmul.mubr.bf16.gmra.mrb[0].mxu0 %v263
    %v882 = vpop.f32.mrb[0].mxu0
    %v883 = vadd.f32 %v139, %v882
    %v884 = vpop.f32.mrb[0].mxu0
    %v885 = vpop.f32.mrb[0].mxu0
    %v886 = vadd.f32 %v139, %v885
    %v887 = vpop.f32.mrb[0].mxu0
    %888 = vmatprep.mubr.bf16.mxu0 %v266
    %889 = vmatmul.mubr.bf16.gmra.mrb[0].mxu0 %v265
    %v890 = vpop.f32.mrb[0].mxu0
    %v891 = vadd.f32 %v139, %v890
    %v892 = vpop.f32.mrb[0].mxu0
    %v893 = vpop.f32.mrb[0].mxu0
    %v894 = vadd.f32 %v139, %v893
    %v895 = vpop.f32.mrb[0].mxu0
    %896 = vmatprep.mubr.bf16.mxu0 %v268
    %897 = vmatmul.mubr.bf16.gmra.mrb[0].mxu0 %v267
    %v898 = vpop.f32.mrb[0].mxu0
    %v899 = vadd.f32 %v139, %v898
    %v900 = vpop.f32.mrb[0].mxu0
    %v901 = vpop.f32.mrb[0].mxu0
    %v902 = vadd.f32 %v139, %v901
    %v903 = vpop.f32.mrb[0].mxu0
    %904 = vmatprep.mubr.bf16.mxu0 %v270
    %905 = vmatmul.mubr.bf16.gmra.mrb[0].mxu0 %v269
    %v906 = vpop.f32.mrb[0].mxu0
    %v907 = vadd.f32 %v139, %v906
    %v908 = vpop.f32.mrb[0].mxu0
    %v909 = vpop.f32.mrb[0].mxu0
    %v910 = vadd.f32 %v139, %v909
    %v911 = vpop.f32.mrb[0].mxu0
    %912 = vdwg.mxu0
    %v913 = vmax.f32 %v594, 0.0
    %v914 = vmax.f32 %v596, 0.0
    %v915 = vmax.f32 %v787, 0.0
    %v916 = vmax.f32 %v598, 0.0
    %v917 = vmax.f32 %v600, 0.0
    %v918 = vmax.f32 %v790, 0.0
    %v919 = vmax.f32 %v604, 0.0
    %v920 = vmax.f32 %v606, 0.0
    %v921 = vmax.f32 %v795, 0.0
    %v922 = vmax.f32 %v608, 0.0
    %v923 = vmax.f32 %v610, 0.0
    %v924 = vmax.f32 %v798, 0.0
    %v925 = vmax.f32 %v614, 0.0
    %v926 = vmax.f32 %v616, 0.0
    %v927 = vmax.f32 %v803, 0.0
    %v928 = vmax.f32 %v618, 0.0
    %v929 = vmax.f32 %v620, 0.0
    %v930 = vmax.f32 %v806, 0.0
    %v931 = vmax.f32 %v624, 0.0
    %v932 = vmax.f32 %v626, 0.0
    %v933 = vmax.f32 %v811, 0.0
    %v934 = vmax.f32 %v628, 0.0
    %v935 = vmax.f32 %v630, 0.0
    %v936 = vmax.f32 %v814, 0.0
    %v937 = vmax.f32 %v634, 0.0
    %v938 = vmax.f32 %v636, 0.0
    %v939 = vmax.f32 %v819, 0.0
    %v940 = vmax.f32 %v638, 0.0
    %v941 = vmax.f32 %v640, 0.0
    %v942 = vmax.f32 %v822, 0.0
    %v943 = vmax.f32 %v644, 0.0
    %v944 = vmax.f32 %v646, 0.0
    %v945 = vmax.f32 %v827, 0.0
    %v946 = vmax.f32 %v648, 0.0
    %v947 = vmax.f32 %v650, 0.0
    %v948 = vmax.f32 %v830, 0.0
    %v949 = vmax.f32 %v654, 0.0
    %v950 = vmax.f32 %v656, 0.0
    %v951 = vmax.f32 %v835, 0.0
    %v952 = vmax.f32 %v658, 0.0
    %v953 = vmax.f32 %v660, 0.0
    %v954 = vmax.f32 %v838, 0.0
    %v955 = vmax.f32 %v664, 0.0
    %v956 = vmax.f32 %v666, 0.0
    %v957 = vmax.f32 %v843, 0.0
    %v958 = vmax.f32 %v668, 0.0
    %v959 = vmax.f32 %v670, 0.0
    %v960 = vmax.f32 %v846, 0.0
    %v961 = vmax.f32 %v674, 0.0
    %v962 = vmax.f32 %v676, 0.0
    %v963 = vmax.f32 %v851, 0.0
    %v964 = vmax.f32 %v678, 0.0
    %v965 = vmax.f32 %v680, 0.0
    %v966 = vmax.f32 %v854, 0.0
    %v967 = vmax.f32 %v684, 0.0
    %v968 = vmax.f32 %v686, 0.0
    %v969 = vmax.f32 %v859, 0.0
    %v970 = vmax.f32 %v688, 0.0
    %v971 = vmax.f32 %v690, 0.0
    %v972 = vmax.f32 %v862, 0.0
    %v973 = vmax.f32 %v694, 0.0
    %v974 = vmax.f32 %v696, 0.0
    %v975 = vmax.f32 %v867, 0.0
    %v976 = vmax.f32 %v698, 0.0
    %v977 = vmax.f32 %v700, 0.0
    %v978 = vmax.f32 %v870, 0.0
    %v979 = vmax.f32 %v704, 0.0
    %v980 = vmax.f32 %v706, 0.0
    %v981 = vmax.f32 %v875, 0.0
    %v982 = vmax.f32 %v708, 0.0
    %v983 = vmax.f32 %v710, 0.0
    %v984 = vmax.f32 %v878, 0.0
    %v985 = vmax.f32 %v714, 0.0
    %v986 = vmax.f32 %v716, 0.0
    %v987 = vmax.f32 %v883, 0.0
    %v988 = vmax.f32 %v718, 0.0
    %v989 = vmax.f32 %v720, 0.0
    %v990 = vmax.f32 %v886, 0.0
    %v991 = vmax.f32 %v724, 0.0
    %v992 = vmax.f32 %v726, 0.0
    %v993 = vmax.f32 %v891, 0.0
    %v994 = vmax.f32 %v728, 0.0
    %v995 = vmax.f32 %v730, 0.0
    %v996 = vmax.f32 %v894, 0.0
    %v997 = vmax.f32 %v734, 0.0
    %v998 = vmax.f32 %v736, 0.0
    %v999 = vmax.f32 %v899, 0.0
    %v1000 = vmax.f32 %v738, 0.0
    %v1001 = vmax.f32 %v740, 0.0
    %v1002 = vmax.f32 %v902, 0.0
    %v1003 = vmax.f32 %v744, 0.0
    %v1004 = vmax.f32 %v746, 0.0
    %v1005 = vmax.f32 %v907, 0.0
    %v1006 = vmax.f32 %v748, 0.0
    %v1007 = vmax.f32 %v750, 0.0
    %v1008 = vmax.f32 %v910, 0.0
    %v1009 = vld [vmem:[%s1] sm:$0xff]
    %v1010 = vld [vmem:[%s1 + $0x8] sm:$0xf]
    %v1011 = vld [vmem:[%s1 + $0xc] sm:$0xff]
    %v1012 = vld [vmem:[%s1 + $0x14] sm:$0xf]
    %v1013 = vld [vmem:[%s1 + $0x18] sm:$0xff]
    %v1014 = vld [vmem:[%s1 + $0x20] sm:$0xf]
    %v1015 = vld [vmem:[%s1 + $0x24] sm:$0xff]
    %v1016 = vld [vmem:[%s1 + $0x2c] sm:$0xf]
    %v1017 = vld [vmem:[%s1 + $0x30] sm:$0xff]
    %v1018 = vld [vmem:[%s1 + $0x38] sm:$0xf]
    %v1019 = vld [vmem:[%s1 + $0x3c] sm:$0xff]
    %v1020 = vld [vmem:[%s1 + $0x44] sm:$0xf]
    %v1021 = vld [vmem:[%s1 + $0x48] sm:$0xff]
    %v1022 = vld [vmem:[%s1 + $0x50] sm:$0xf]
    %v1023 = vld [vmem:[%s1 + $0x54] sm:$0xff]
    %v1024 = vld [vmem:[%s1 + $0x5c] sm:$0xf]
    %v1025 = vld [vmem:[%s1 + $0x60] sm:$0xff]
    %v1026 = vld [vmem:[%s1 + $0x68] sm:$0xf]
    %v1027 = vld [vmem:[%s1 + $0x6c] sm:$0xff]
    %v1028 = vld [vmem:[%s1 + $0x74] sm:$0xf]
    %v1029 = vld [vmem:[%s1 + $0x78] sm:$0xff]
    %v1030 = vld [vmem:[%s1 + $0x80] sm:$0xf]
    %v1031 = vld [vmem:[%s1 + $0x84] sm:$0xff]
    %v1032 = vld [vmem:[%s1 + $0x8c] sm:$0xf]
    %v1033 = vld [vmem:[%s1 + $0x90] sm:$0xff]
    %v1034 = vld [vmem:[%s1 + $0x98] sm:$0xf]
    %v1035 = vld [vmem:[%s1 + $0x9c] sm:$0xff]
    %v1036 = vld [vmem:[%s1 + $0xa4] sm:$0xf]
    %v1037 = vld [vmem:[%s1 + $0xa8] sm:$0xff]
    %v1038 = vld [vmem:[%s1 + $0xb0] sm:$0xf]
    %v1039 = vld [vmem:[%s1 + $0xb4] sm:$0xff]
    %v1040 = vld [vmem:[%s1 + $0xbc] sm:$0xf]
    %v1041 = vld [vmem:[%s1 + $0xc0] sm:$0xff]
    %v1042 = vld [vmem:[%s1 + $0xc8] sm:$0xf]
    %v1043 = vld [vmem:[%s1 + $0xcc] sm:$0xff]
    %v1044 = vld [vmem:[%s1 + $0xd4] sm:$0xf]
    %v1045 = vld [vmem:[%s1 + $0xd8] sm:$0xff]
    %v1046 = vld [vmem:[%s1 + $0xe0] sm:$0xf]
    %v1047 = vld [vmem:[%s1 + $0xe4] sm:$0xff]
    %v1048 = vld [vmem:[%s1 + $0xec] sm:$0xf]
    %v1049 = vld [vmem:[%s1 + $0xf0] sm:$0xff]
    %v1050 = vld [vmem:[%s1 + $0xf8] sm:$0xf]
    %v1051 = vld [vmem:[%s1 + $0xfc] sm:$0xff]
    %v1052 = vld [vmem:[%s1 + $0x104] sm:$0xf]
    %v1053 = vld [vmem:[%s1 + $0x108] sm:$0xff]
    %v1054 = vld [vmem:[%s1 + $0x110] sm:$0xf]
    %v1055 = vld [vmem:[%s1 + $0x114] sm:$0xff]
    %v1056 = vld [vmem:[%s1 + $0x11c] sm:$0xf]
    %v1057 = vld [vmem:[%s1 + $0x120] sm:$0xff]
    %v1058 = vld [vmem:[%s1 + $0x128] sm:$0xf]
    %v1059 = vld [vmem:[%s1 + $0x12c] sm:$0xff]
    %v1060 = vld [vmem:[%s1 + $0x134] sm:$0xf]
    %v1061 = vld [vmem:[%s1 + $0x138] sm:$0xff]
    %v1062 = vld [vmem:[%s1 + $0x140] sm:$0xf]
    %v1063 = vld [vmem:[%s1 + $0x144] sm:$0xff]
    %v1064 = vld [vmem:[%s1 + $0x14c] sm:$0xf]
    %v1065 = vld [vmem:[%s1 + $0x150] sm:$0xff]
    %v1066 = vld [vmem:[%s1 + $0x158] sm:$0xf]
    %v1067 = vld [vmem:[%s1 + $0x15c] sm:$0xff]
    %v1068 = vld [vmem:[%s1 + $0x164] sm:$0xf]
    %v1069 = vld [vmem:[%s1 + $0x168] sm:$0xff]
    %v1070 = vld [vmem:[%s1 + $0x170] sm:$0xf]
    %v1071 = vld [vmem:[%s1 + $0x174] sm:$0xff]
    %v1072 = vld [vmem:[%s1 + $0x17c] sm:$0xf]
    %v1073 = vunpack.c.l.bf16 %v1009
    %v1074 = vunpack.c.h.bf16 %v1009
    %v1075 = vunpack.c.l.bf16 %v1010
    %v1076 = vunpack.c.l.bf16 %v1011
    %v1077 = vunpack.c.h.bf16 %v1011
    %v1078 = vunpack.c.l.bf16 %v1012
    %v1079 = vunpack.c.l.bf16 %v1013
    %v1080 = vunpack.c.h.bf16 %v1013
    %v1081 = vunpack.c.l.bf16 %v1014
    %v1082 = vunpack.c.l.bf16 %v1015
    %v1083 = vunpack.c.h.bf16 %v1015
    %v1084 = vunpack.c.l.bf16 %v1016
    %v1085 = vunpack.c.l.bf16 %v1017
    %v1086 = vunpack.c.h.bf16 %v1017
    %v1087 = vunpack.c.l.bf16 %v1018
    %v1088 = vunpack.c.l.bf16 %v1019
    %v1089 = vunpack.c.h.bf16 %v1019
    %v1090 = vunpack.c.l.bf16 %v1020
    %v1091 = vunpack.c.l.bf16 %v1021
    %v1092 = vunpack.c.h.bf16 %v1021
    %v1093 = vunpack.c.l.bf16 %v1022
    %v1094 = vunpack.c.l.bf16 %v1023
    %v1095 = vunpack.c.h.bf16 %v1023
    %v1096 = vunpack.c.l.bf16 %v1024
    %v1097 = vunpack.c.l.bf16 %v1025
    %v1098 = vunpack.c.h.bf16 %v1025
    %v1099 = vunpack.c.l.bf16 %v1026
    %v1100 = vunpack.c.l.bf16 %v1027
    %v1101 = vunpack.c.h.bf16 %v1027
    %v1102 = vunpack.c.l.bf16 %v1028
    %v1103 = vunpack.c.l.bf16 %v1029
    %v1104 = vunpack.c.h.bf16 %v1029
    %v1105 = vunpack.c.l.bf16 %v1030
    %v1106 = vunpack.c.l.bf16 %v1031
    %v1107 = vunpack.c.h.bf16 %v1031
    %v1108 = vunpack.c.l.bf16 %v1032
    %v1109 = vunpack.c.l.bf16 %v1033
    %v1110 = vunpack.c.h.bf16 %v1033
    %v1111 = vunpack.c.l.bf16 %v1034
    %v1112 = vunpack.c.l.bf16 %v1035
    %v1113 = vunpack.c.h.bf16 %v1035
    %v1114 = vunpack.c.l.bf16 %v1036
    %v1115 = vunpack.c.l.bf16 %v1037
    %v1116 = vunpack.c.h.bf16 %v1037
    %v1117 = vunpack.c.l.bf16 %v1038
    %v1118 = vunpack.c.l.bf16 %v1039
    %v1119 = vunpack.c.h.bf16 %v1039
    %v1120 = vunpack.c.l.bf16 %v1040
    %v1121 = vunpack.c.l.bf16 %v1041
    %v1122 = vunpack.c.h.bf16 %v1041
    %v1123 = vunpack.c.l.bf16 %v1042
    %v1124 = vunpack.c.l.bf16 %v1043
    %v1125 = vunpack.c.h.bf16 %v1043
    %v1126 = vunpack.c.l.bf16 %v1044
    %v1127 = vunpack.c.l.bf16 %v1045
    %v1128 = vunpack.c.h.bf16 %v1045
    %v1129 = vunpack.c.l.bf16 %v1046
    %v1130 = vunpack.c.l.bf16 %v1047
    %v1131 = vunpack.c.h.bf16 %v1047
    %v1132 = vunpack.c.l.bf16 %v1048
    %v1133 = vunpack.c.l.bf16 %v1049
    %v1134 = vunpack.c.h.bf16 %v1049
    %v1135 = vunpack.c.l.bf16 %v1050
    %v1136 = vunpack.c.l.bf16 %v1051
    %v1137 = vunpack.c.h.bf16 %v1051
    %v1138 = vunpack.c.l.bf16 %v1052
    %v1139 = vunpack.c.l.bf16 %v1053
    %v1140 = vunpack.c.h.bf16 %v1053
    %v1141 = vunpack.c.l.bf16 %v1054
    %v1142 = vunpack.c.l.bf16 %v1055
    %v1143 = vunpack.c.h.bf16 %v1055
    %v1144 = vunpack.c.l.bf16 %v1056
    %v1145 = vunpack.c.l.bf16 %v1057
    %v1146 = vunpack.c.h.bf16 %v1057
    %v1147 = vunpack.c.l.bf16 %v1058
    %v1148 = vunpack.c.l.bf16 %v1059
    %v1149 = vunpack.c.h.bf16 %v1059
    %v1150 = vunpack.c.l.bf16 %v1060
    %v1151 = vunpack.c.l.bf16 %v1061
    %v1152 = vunpack.c.h.bf16 %v1061
    %v1153 = vunpack.c.l.bf16 %v1062
    %v1154 = vunpack.c.l.bf16 %v1063
    %v1155 = vunpack.c.h.bf16 %v1063
    %v1156 = vunpack.c.l.bf16 %v1064
    %v1157 = vunpack.c.l.bf16 %v1065
    %v1158 = vunpack.c.h.bf16 %v1065
    %v1159 = vunpack.c.l.bf16 %v1066
    %v1160 = vunpack.c.l.bf16 %v1067
    %v1161 = vunpack.c.h.bf16 %v1067
    %v1162 = vunpack.c.l.bf16 %v1068
    %v1163 = vunpack.c.l.bf16 %v1069
    %v1164 = vunpack.c.h.bf16 %v1069
    %v1165 = vunpack.c.l.bf16 %v1070
    %v1166 = vunpack.c.l.bf16 %v1071
    %v1167 = vunpack.c.h.bf16 %v1071
    %v1168 = vunpack.c.l.bf16 %v1072
    %v1169 = vadd.f32 %v913, %v1073
    %v1170 = vadd.f32 %v914, %v1074
    %v1171 = vadd.f32 %v915, %v1075
    %v1172 = vadd.f32 %v916, %v1076
    %v1173 = vadd.f32 %v917, %v1077
    %v1174 = vadd.f32 %v918, %v1078
    %v1175 = vadd.f32 %v919, %v1079
    %v1176 = vadd.f32 %v920, %v1080
    %v1177 = vadd.f32 %v921, %v1081
    %v1178 = vadd.f32 %v922, %v1082
    %v1179 = vadd.f32 %v923, %v1083
    %v1180 = vadd.f32 %v924, %v1084
    %v1181 = vadd.f32 %v925, %v1085
    %v1182 = vadd.f32 %v926, %v1086
    %v1183 = vadd.f32 %v927, %v1087
    %v1184 = vadd.f32 %v928, %v1088
    %v1185 = vadd.f32 %v929, %v1089
    %v1186 = vadd.f32 %v930, %v1090
    %v1187 = vadd.f32 %v931, %v1091
    %v1188 = vadd.f32 %v932, %v1092
    %v1189 = vadd.f32 %v933, %v1093
    %v1190 = vadd.f32 %v934, %v1094
    %v1191 = vadd.f32 %v935, %v1095
    %v1192 = vadd.f32 %v936, %v1096
    %v1193 = vadd.f32 %v937, %v1097
    %v1194 = vadd.f32 %v938, %v1098
    %v1195 = vadd.f32 %v939, %v1099
    %v1196 = vadd.f32 %v940, %v1100
    %v1197 = vadd.f32 %v941, %v1101
    %v1198 = vadd.f32 %v942, %v1102
    %v1199 = vadd.f32 %v943, %v1103
    %v1200 = vadd.f32 %v944, %v1104
    %v1201 = vadd.f32 %v945, %v1105
    %v1202 = vadd.f32 %v946, %v1106
    %v1203 = vadd.f32 %v947, %v1107
    %v1204 = vadd.f32 %v948, %v1108
    %v1205 = vadd.f32 %v949, %v1109
    %v1206 = vadd.f32 %v950, %v1110
    %v1207 = vadd.f32 %v951, %v1111
    %v1208 = vadd.f32 %v952, %v1112
    %v1209 = vadd.f32 %v953, %v1113
    %v1210 = vadd.f32 %v954, %v1114
    %v1211 = vadd.f32 %v955, %v1115
    %v1212 = vadd.f32 %v956, %v1116
    %v1213 = vadd.f32 %v957, %v1117
    %v1214 = vadd.f32 %v958, %v1118
    %v1215 = vadd.f32 %v959, %v1119
    %v1216 = vadd.f32 %v960, %v1120
    %v1217 = vadd.f32 %v961, %v1121
    %v1218 = vadd.f32 %v962, %v1122
    %v1219 = vadd.f32 %v963, %v1123
    %v1220 = vadd.f32 %v964, %v1124
    %v1221 = vadd.f32 %v965, %v1125
    %v1222 = vadd.f32 %v966, %v1126
    %v1223 = vadd.f32 %v967, %v1127
    %v1224 = vadd.f32 %v968, %v1128
    %v1225 = vadd.f32 %v969, %v1129
    %v1226 = vadd.f32 %v970, %v1130
    %v1227 = vadd.f32 %v971, %v1131
    %v1228 = vadd.f32 %v972, %v1132
    %v1229 = vadd.f32 %v973, %v1133
    %v1230 = vadd.f32 %v974, %v1134
    %v1231 = vadd.f32 %v975, %v1135
    %v1232 = vadd.f32 %v976, %v1136
    %v1233 = vadd.f32 %v977, %v1137
    %v1234 = vadd.f32 %v978, %v1138
    %v1235 = vadd.f32 %v979, %v1139
    %v1236 = vadd.f32 %v980, %v1140
    %v1237 = vadd.f32 %v981, %v1141
    %v1238 = vadd.f32 %v982, %v1142
    %v1239 = vadd.f32 %v983, %v1143
    %v1240 = vadd.f32 %v984, %v1144
    %v1241 = vadd.f32 %v985, %v1145
    %v1242 = vadd.f32 %v986, %v1146
    %v1243 = vadd.f32 %v987, %v1147
    %v1244 = vadd.f32 %v988, %v1148
    %v1245 = vadd.f32 %v989, %v1149
    %v1246 = vadd.f32 %v990, %v1150
    %v1247 = vadd.f32 %v991, %v1151
    %v1248 = vadd.f32 %v992, %v1152
    %v1249 = vadd.f32 %v993, %v1153
    %v1250 = vadd.f32 %v994, %v1154
    %v1251 = vadd.f32 %v995, %v1155
    %v1252 = vadd.f32 %v996, %v1156
    %v1253 = vadd.f32 %v997, %v1157
    %v1254 = vadd.f32 %v998, %v1158
    %v1255 = vadd.f32 %v999, %v1159
    %v1256 = vadd.f32 %v1000, %v1160
    %v1257 = vadd.f32 %v1001, %v1161
    %v1258 = vadd.f32 %v1002, %v1162
    %v1259 = vadd.f32 %v1003, %v1163
    %v1260 = vadd.f32 %v1004, %v1164
    %v1261 = vadd.f32 %v1005, %v1165
    %v1262 = vadd.f32 %v1006, %v1166
    %v1263 = vadd.f32 %v1007, %v1167
    %v1264 = vadd.f32 %v1008, %v1168
    %v1265 = vpack.c.bf16 %v1172, %v1169
    %v1266 = vpack.c.bf16 %v1173, %v1170
    %v1267 = vpack.c.bf16 %v1174, %v1171
    %v1268 = vpack.c.bf16 %v1178, %v1175
    %v1269 = vpack.c.bf16 %v1179, %v1176
    %v1270 = vpack.c.bf16 %v1180, %v1177
    %v1271 = vpack.c.bf16 %v1184, %v1181
    %v1272 = vpack.c.bf16 %v1185, %v1182
    %v1273 = vpack.c.bf16 %v1186, %v1183
    %v1274 = vpack.c.bf16 %v1190, %v1187
    %v1275 = vpack.c.bf16 %v1191, %v1188
    %v1276 = vpack.c.bf16 %v1192, %v1189
    %v1277 = vpack.c.bf16 %v1196, %v1193
    %v1278 = vpack.c.bf16 %v1197, %v1194
    %v1279 = vpack.c.bf16 %v1198, %v1195
    %v1280 = vpack.c.bf16 %v1202, %v1199
    %v1281 = vpack.c.bf16 %v1203, %v1200
    %v1282 = vpack.c.bf16 %v1204, %v1201
    %v1283 = vpack.c.bf16 %v1208, %v1205
    %v1284 = vpack.c.bf16 %v1209, %v1206
    %v1285 = vpack.c.bf16 %v1210, %v1207
    %v1286 = vpack.c.bf16 %v1214, %v1211
    %v1287 = vpack.c.bf16 %v1215, %v1212
    %v1288 = vpack.c.bf16 %v1216, %v1213
    %v1289 = vpack.c.bf16 %v1220, %v1217
    %v1290 = vpack.c.bf16 %v1221, %v1218
    %v1291 = vpack.c.bf16 %v1222, %v1219
    %v1292 = vpack.c.bf16 %v1226, %v1223
    %v1293 = vpack.c.bf16 %v1227, %v1224
    %v1294 = vpack.c.bf16 %v1228, %v1225
    %v1295 = vpack.c.bf16 %v1232, %v1229
    %v1296 = vpack.c.bf16 %v1233, %v1230
    %v1297 = vpack.c.bf16 %v1234, %v1231
    %v1298 = vpack.c.bf16 %v1238, %v1235
    %v1299 = vpack.c.bf16 %v1239, %v1236
    %v1300 = vpack.c.bf16 %v1240, %v1237
    %v1301 = vpack.c.bf16 %v1244, %v1241
    %v1302 = vpack.c.bf16 %v1245, %v1242
    %v1303 = vpack.c.bf16 %v1246, %v1243
    %v1304 = vpack.c.bf16 %v1250, %v1247
    %v1305 = vpack.c.bf16 %v1251, %v1248
    %v1306 = vpack.c.bf16 %v1252, %v1249
    %v1307 = vpack.c.bf16 %v1256, %v1253
    %v1308 = vpack.c.bf16 %v1257, %v1254
    %v1309 = vpack.c.bf16 %v1258, %v1255
    %v1310 = vpack.c.bf16 %v1262, %v1259
    %v1311 = vpack.c.bf16 %v1263, %v1260
    %v1312 = vpack.c.bf16 %v1264, %v1261
    %v1361 = vunpack.c.l.b16 %v1265
    %v1362 = vunpack.c.l.b16 %v1266
    %v1363 = vunpack.c.l.b16 %v1267
    %v1364 = vunpack.c.h.b16 %v1265
    %v1365 = vunpack.c.h.b16 %v1266
    %v1366 = vunpack.c.h.b16 %v1267
    %v1367 = vunpack.c.l.b16 %v1268
    %v1368 = vunpack.c.l.b16 %v1269
    %v1369 = vunpack.c.l.b16 %v1270
    %v1370 = vunpack.c.h.b16 %v1268
    %v1371 = vunpack.c.h.b16 %v1269
    %v1372 = vunpack.c.h.b16 %v1270
    %v1373 = vunpack.c.l.b16 %v1271
    %v1374 = vunpack.c.l.b16 %v1272
    %v1375 = vunpack.c.l.b16 %v1273
    %v1376 = vunpack.c.h.b16 %v1271
    %v1377 = vunpack.c.h.b16 %v1272
    %v1378 = vunpack.c.h.b16 %v1273
    %v1379 = vunpack.c.l.b16 %v1274
    %v1380 = vunpack.c.l.b16 %v1275
    %v1381 = vunpack.c.l.b16 %v1276
    %v1382 = vunpack.c.h.b16 %v1274
    %v1383 = vunpack.c.h.b16 %v1275
    %v1384 = vunpack.c.h.b16 %v1276
    %v1385 = vunpack.c.l.b16 %v1277
    %v1386 = vunpack.c.l.b16 %v1278
    %v1387 = vunpack.c.l.b16 %v1279
    %v1388 = vunpack.c.h.b16 %v1277
    %v1389 = vunpack.c.h.b16 %v1278
    %v1390 = vunpack.c.h.b16 %v1279
    %v1391 = vunpack.c.l.b16 %v1280
    %v1392 = vunpack.c.l.b16 %v1281
    %v1393 = vunpack.c.l.b16 %v1282
    %v1394 = vunpack.c.h.b16 %v1280
    %v1395 = vunpack.c.h.b16 %v1281
    %v1396 = vunpack.c.h.b16 %v1282
    %v1397 = vunpack.c.l.b16 %v1283
    %v1398 = vunpack.c.l.b16 %v1284
    %v1399 = vunpack.c.l.b16 %v1285
    %v1400 = vunpack.c.h.b16 %v1283
    %v1401 = vunpack.c.h.b16 %v1284
    %v1402 = vunpack.c.h.b16 %v1285
    %v1403 = vunpack.c.l.b16 %v1286
    %v1404 = vunpack.c.l.b16 %v1287
    %v1405 = vunpack.c.l.b16 %v1288
    %v1406 = vunpack.c.h.b16 %v1286
    %v1407 = vunpack.c.h.b16 %v1287
    %v1408 = vunpack.c.h.b16 %v1288
    %v1409 = vunpack.c.l.b16 %v1289
    %v1410 = vunpack.c.l.b16 %v1290
    %v1411 = vunpack.c.l.b16 %v1291
    %v1412 = vunpack.c.h.b16 %v1289
    %v1413 = vunpack.c.h.b16 %v1290
    %v1414 = vunpack.c.h.b16 %v1291
    %v1415 = vunpack.c.l.b16 %v1292
    %v1416 = vunpack.c.l.b16 %v1293
    %v1417 = vunpack.c.l.b16 %v1294
    %v1418 = vunpack.c.h.b16 %v1292
    %v1419 = vunpack.c.h.b16 %v1293
    %v1420 = vunpack.c.h.b16 %v1294
    %v1421 = vunpack.c.l.b16 %v1295
    %v1422 = vunpack.c.l.b16 %v1296
    %v1423 = vunpack.c.l.b16 %v1297
    %v1424 = vunpack.c.h.b16 %v1295
    %v1425 = vunpack.c.h.b16 %v1296
    %v1426 = vunpack.c.h.b16 %v1297
    %v1427 = vunpack.c.l.b16 %v1298
    %v1428 = vunpack.c.l.b16 %v1299
    %v1429 = vunpack.c.l.b16 %v1300
    %v1430 = vunpack.c.h.b16 %v1298
    %v1431 = vunpack.c.h.b16 %v1299
    %v1432 = vunpack.c.h.b16 %v1300
    %v1433 = vunpack.c.l.b16 %v1301
    %v1434 = vunpack.c.l.b16 %v1302
    %v1435 = vunpack.c.l.b16 %v1303
    %v1436 = vunpack.c.h.b16 %v1301
    %v1437 = vunpack.c.h.b16 %v1302
    %v1438 = vunpack.c.h.b16 %v1303
    %v1439 = vunpack.c.l.b16 %v1304
    %v1440 = vunpack.c.l.b16 %v1305
    %v1441 = vunpack.c.l.b16 %v1306
    %v1442 = vunpack.c.h.b16 %v1304
    %v1443 = vunpack.c.h.b16 %v1305
    %v1444 = vunpack.c.h.b16 %v1306
    %v1445 = vunpack.c.l.b16 %v1307
    %v1446 = vunpack.c.l.b16 %v1308
    %v1447 = vunpack.c.l.b16 %v1309
    %v1448 = vunpack.c.h.b16 %v1307
    %v1449 = vunpack.c.h.b16 %v1308
    %v1450 = vunpack.c.h.b16 %v1309
    %v1451 = vunpack.c.l.b16 %v1310
    %v1452 = vunpack.c.l.b16 %v1311
    %v1453 = vunpack.c.l.b16 %v1312
    %v1454 = vunpack.c.h.b16 %v1310
    %v1455 = vunpack.c.h.b16 %v1311
    %v1456 = vunpack.c.h.b16 %v1312
    %v1457 = vpack.c.b16 %v1362, %v1361
    %v1458 = vpack.c.b16 %v1363, %v1363
    %v1459 = vpack.c.b16 %v1365, %v1364
    %v1460 = vpack.c.b16 %v1366, %v1366
    %v1461 = vpack.c.b16 %v1368, %v1367
    %v1462 = vpack.c.b16 %v1369, %v1369
    %v1463 = vpack.c.b16 %v1371, %v1370
    %v1464 = vpack.c.b16 %v1372, %v1372
    %v1465 = vpack.c.b16 %v1374, %v1373
    %v1466 = vpack.c.b16 %v1375, %v1375
    %v1467 = vpack.c.b16 %v1377, %v1376
    %v1468 = vpack.c.b16 %v1378, %v1378
    %v1469 = vpack.c.b16 %v1380, %v1379
    %v1470 = vpack.c.b16 %v1381, %v1381
    %v1471 = vpack.c.b16 %v1383, %v1382
    %v1472 = vpack.c.b16 %v1384, %v1384
    %v1473 = vpack.c.b16 %v1386, %v1385
    %v1474 = vpack.c.b16 %v1387, %v1387
    %v1475 = vpack.c.b16 %v1389, %v1388
    %v1476 = vpack.c.b16 %v1390, %v1390
    %v1477 = vpack.c.b16 %v1392, %v1391
    %v1478 = vpack.c.b16 %v1393, %v1393
    %v1479 = vpack.c.b16 %v1395, %v1394
    %v1480 = vpack.c.b16 %v1396, %v1396
    %v1481 = vpack.c.b16 %v1398, %v1397
    %v1482 = vpack.c.b16 %v1399, %v1399
    %v1483 = vpack.c.b16 %v1401, %v1400
    %v1484 = vpack.c.b16 %v1402, %v1402
    %v1485 = vpack.c.b16 %v1404, %v1403
    %v1486 = vpack.c.b16 %v1405, %v1405
    %v1487 = vpack.c.b16 %v1407, %v1406
    %v1488 = vpack.c.b16 %v1408, %v1408
    %v1489 = vpack.c.b16 %v1410, %v1409
    %v1490 = vpack.c.b16 %v1411, %v1411
    %v1491 = vpack.c.b16 %v1413, %v1412
    %v1492 = vpack.c.b16 %v1414, %v1414
    %v1493 = vpack.c.b16 %v1416, %v1415
    %v1494 = vpack.c.b16 %v1417, %v1417
    %v1495 = vpack.c.b16 %v1419, %v1418
    %v1496 = vpack.c.b16 %v1420, %v1420
    %v1497 = vpack.c.b16 %v1422, %v1421
    %v1498 = vpack.c.b16 %v1423, %v1423
    %v1499 = vpack.c.b16 %v1425, %v1424
    %v1500 = vpack.c.b16 %v1426, %v1426
    %v1501 = vpack.c.b16 %v1428, %v1427
    %v1502 = vpack.c.b16 %v1429, %v1429
    %v1503 = vpack.c.b16 %v1431, %v1430
    %v1504 = vpack.c.b16 %v1432, %v1432
    %v1505 = vpack.c.b16 %v1434, %v1433
    %v1506 = vpack.c.b16 %v1435, %v1435
    %v1507 = vpack.c.b16 %v1437, %v1436
    %v1508 = vpack.c.b16 %v1438, %v1438
    %v1509 = vpack.c.b16 %v1440, %v1439
    %v1510 = vpack.c.b16 %v1441, %v1441
    %v1511 = vpack.c.b16 %v1443, %v1442
    %v1512 = vpack.c.b16 %v1444, %v1444
    %v1513 = vpack.c.b16 %v1446, %v1445
    %v1514 = vpack.c.b16 %v1447, %v1447
    %v1515 = vpack.c.b16 %v1449, %v1448
    %v1516 = vpack.c.b16 %v1450, %v1450
    %v1517 = vpack.c.b16 %v1452, %v1451
    %v1518 = vpack.c.b16 %v1453, %v1453
    %v1519 = vpack.c.b16 %v1455, %v1454
    %v1520 = vpack.c.b16 %v1456, %v1456
    %1585 = vst [vmem:[%s4] sm:$0xff] %v1457
    %1586 = vst [vmem:[%s4 + $0x8] sm:$0xf] %v1458
    %1587 = vst [vmem:[%s4 + $0xc] sm:$0xff] %v1459
    %1588 = vst [vmem:[%s4 + $0x14] sm:$0xf] %v1460
    %1589 = vst [vmem:[%s4 + $0x18] sm:$0xff] %v1461
    %1590 = vst [vmem:[%s4 + $0x20] sm:$0xf] %v1462
    %1591 = vst [vmem:[%s4 + $0x24] sm:$0xff] %v1463
    %1592 = vst [vmem:[%s4 + $0x2c] sm:$0xf] %v1464
    %1593 = vst [vmem:[%s4 + $0x30] sm:$0xff] %v1465
    %1594 = vst [vmem:[%s4 + $0x38] sm:$0xf] %v1466
    %1595 = vst [vmem:[%s4 + $0x3c] sm:$0xff] %v1467
    %1596 = vst [vmem:[%s4 + $0x44] sm:$0xf] %v1468
    %1597 = vst [vmem:[%s4 + $0x48] sm:$0xff] %v1469
    %1598 = vst [vmem:[%s4 + $0x50] sm:$0xf] %v1470
    %1599 = vst [vmem:[%s4 + $0x54] sm:$0xff] %v1471
    %1600 = vst [vmem:[%s4 + $0x5c] sm:$0xf] %v1472
    %1601 = vst [vmem:[%s4 + $0x60] sm:$0xff] %v1473
    %1602 = vst [vmem:[%s4 + $0x68] sm:$0xf] %v1474
    %1603 = vst [vmem:[%s4 + $0x6c] sm:$0xff] %v1475
    %1604 = vst [vmem:[%s4 + $0x74] sm:$0xf] %v1476
    %1605 = vst [vmem:[%s4 + $0x78] sm:$0xff] %v1477
    %1606 = vst [vmem:[%s4 + $0x80] sm:$0xf] %v1478
    %1607 = vst [vmem:[%s4 + $0x84] sm:$0xff] %v1479
    %1608 = vst [vmem:[%s4 + $0x8c] sm:$0xf] %v1480
    %1609 = vst [vmem:[%s4 + $0x90] sm:$0xff] %v1481
    %1610 = vst [vmem:[%s4 + $0x98] sm:$0xf] %v1482
    %1611 = vst [vmem:[%s4 + $0x9c] sm:$0xff] %v1483
    %1612 = vst [vmem:[%s4 + $0xa4] sm:$0xf] %v1484
    %1613 = vst [vmem:[%s4 + $0xa8] sm:$0xff] %v1485
    %1614 = vst [vmem:[%s4 + $0xb0] sm:$0xf] %v1486
    %1615 = vst [vmem:[%s4 + $0xb4] sm:$0xff] %v1487
    %1616 = vst [vmem:[%s4 + $0xbc] sm:$0xf] %v1488
    %1617 = vst [vmem:[%s4 + $0xc0] sm:$0xff] %v1489
    %1618 = vst [vmem:[%s4 + $0xc8] sm:$0xf] %v1490
    %1619 = vst [vmem:[%s4 + $0xcc] sm:$0xff] %v1491
    %1620 = vst [vmem:[%s4 + $0xd4] sm:$0xf] %v1492
    %1621 = vst [vmem:[%s4 + $0xd8] sm:$0xff] %v1493
    %1622 = vst [vmem:[%s4 + $0xe0] sm:$0xf] %v1494
    %1623 = vst [vmem:[%s4 + $0xe4] sm:$0xff] %v1495
    %1624 = vst [vmem:[%s4 + $0xec] sm:$0xf] %v1496
    %1625 = vst [vmem:[%s4 + $0xf0] sm:$0xff] %v1497
    %1626 = vst [vmem:[%s4 + $0xf8] sm:$0xf] %v1498
    %1627 = vst [vmem:[%s4 + $0xfc] sm:$0xff] %v1499
    %1628 = vst [vmem:[%s4 + $0x104] sm:$0xf] %v1500
    %1629 = vst [vmem:[%s4 + $0x108] sm:$0xff] %v1501
    %1630 = vst [vmem:[%s4 + $0x110] sm:$0xf] %v1502
    %1631 = vst [vmem:[%s4 + $0x114] sm:$0xff] %v1503
    %1632 = vst [vmem:[%s4 + $0x11c] sm:$0xf] %v1504
    %1633 = vst [vmem:[%s4 + $0x120] sm:$0xff] %v1505
    %1634 = vst [vmem:[%s4 + $0x128] sm:$0xf] %v1506
    %1635 = vst [vmem:[%s4 + $0x12c] sm:$0xff] %v1507
    %1636 = vst [vmem:[%s4 + $0x134] sm:$0xf] %v1508
    %1637 = vst [vmem:[%s4 + $0x138] sm:$0xff] %v1509
    %1638 = vst [vmem:[%s4 + $0x140] sm:$0xf] %v1510
    %1639 = vst [vmem:[%s4 + $0x144] sm:$0xff] %v1511
    %1640 = vst [vmem:[%s4 + $0x14c] sm:$0xf] %v1512
    %1641 = vst [vmem:[%s4 + $0x150] sm:$0xff] %v1513
    %1642 = vst [vmem:[%s4 + $0x158] sm:$0xf] %v1514
    %1643 = vst [vmem:[%s4 + $0x15c] sm:$0xff] %v1515
    %1644 = vst [vmem:[%s4 + $0x164] sm:$0xf] %v1516
    %1645 = vst [vmem:[%s4 + $0x168] sm:$0xff] %v1517
    %1646 = vst [vmem:[%s4 + $0x170] sm:$0xf] %v1518
    %1647 = vst [vmem:[%s4 + $0x174] sm:$0xff] %v1519
    %1648 = vst [vmem:[%s4 + $0x17c] sm:$0xf] %v1520
    // Predicated region
    $region22: #{stn_forward.4} parent=1 // pred_check
      _
    $region23: #{stn_forward.4} parent=1 // pred_check_branch
      %1650 = sbr.rel (0) target = $region25
    $region24: #{stn_forward.4} parent=1 // pred_region
      _
    $region25: #{stn_forward.4} parent=1 // pred_fallthru
      _
    // Predicated region
    $region26: #{stn_forward.4} parent=1 // pred_check
      _
    $region27: #{stn_forward.4} parent=1 // pred_check_branch
      %1652 = sbr.rel (0) target = $region29
    $region28: #{stn_forward.4} parent=1 // pred_region
      _
    $region29: #{stn_forward.4} parent=1 // pred_fallthru
      _
    %1653 = vsyncpa [#allocation3], 1

// kernel: stn_forward.6
$region0: #{stn_forward.6}
  #allocation0 [shape = 'u32[]', space=smem, size = 0x4, offset = 0x4, fixed_abs, tag = 'smem constant byte address 0x4 - core index']
  #allocation1 [shape = 'u32[144,128]{1,0:T(1,128)}', space=vmem, size = 0x12000, scoped, tag = 'internal scratch']
  %s0 = inlined_call_operand.vmem [shape: f32[4,384], index: 0, kind: input, shape index: {}]
  %s1 = inlined_call_operand.vmem [shape: f32[384,192], index: 1, kind: input, shape index: {}]
  %s2 = inlined_call_operand.vmem [shape: f32[1,192], index: 2, kind: input, shape index: {}]
  %s3 = inlined_call_operand.vmem [shape: f32[192,384], index: 3, kind: input, shape index: {}]
  %s4 = inlined_call_operand.vmem [shape: f32[1,384], index: 4, kind: input, shape index: {}]
  %s5 = inlined_call_operand.vmem [shape: f32[4,384], index: 5, kind: output, shape index: {}]
  %s6 = sld [smem:[#allocation0]]
  $region30: #{stn_forward.6} parent=0
    _
  %s8 = ssub.s32 1, %s6
  %s9 = scalar_select 0, %s8, %s6
  // Predicated region
  $region2: #{stn_forward.6} parent=0 // pred_check
    _
  $region3: #{stn_forward.6} parent=0 // pred_check_branch
    %11 = sbr.rel (0) target = $region5
  $region4: #{stn_forward.6} parent=0 // pred_region
    _
  $region5: #{stn_forward.6} parent=0 // pred_fallthru
    _
  // Predicated region
  $region6: #{stn_forward.6} parent=0 // pred_check
    _
  $region7: #{stn_forward.6} parent=0 // pred_check_branch
    %13 = sbr.rel (0) target = $region9
  $region8: #{stn_forward.6} parent=0 // pred_region
    _
  $region9: #{stn_forward.6} parent=0 // pred_fallthru
    _
  // Predicated region
  $region10: #{stn_forward.6} parent=0 // pred_check
    _
  $region11: #{stn_forward.6} parent=0 // pred_check_branch
    %15 = sbr.rel (0) target = $region13
  $region12: #{stn_forward.6} parent=0 // pred_region
    _
  $region13: #{stn_forward.6} parent=0 // pred_fallthru
    _
  // Predicated region
  $region14: #{stn_forward.6} parent=0 // pred_check
    _
  $region15: #{stn_forward.6} parent=0 // pred_check_branch
    %17 = sbr.rel (0) target = $region17
  $region16: #{stn_forward.6} parent=0 // pred_region
    _
  $region17: #{stn_forward.6} parent=0 // pred_fallthru
    _
  // Predicated region
  $region18: #{stn_forward.6} parent=0 // pred_check
    _
  $region19: #{stn_forward.6} parent=0 // pred_check_branch
    %19 = sbr.rel (0) target = $region21
  $region20: #{stn_forward.6} parent=0 // pred_region
    _
  $region21: #{stn_forward.6} parent=0 // pred_fallthru
    _
  %v20 = vld [vmem:[%s0] sm:$0xff]
  %v21 = vld [vmem:[%s0 + $0x8] sm:$0xf]
  %v22 = vld [vmem:[%s1] sm:$0xff]
  %v23 = vld [vmem:[%s1 + $0x8] sm:$0xff]
  %v24 = vld [vmem:[%s1 + $0x10] sm:$0xff]
  %v25 = vld [vmem:[%s1 + $0x18] sm:$0xff]
  %v26 = vld [vmem:[%s1 + $0x20] sm:$0xff]
  %v27 = vld [vmem:[%s1 + $0x28] sm:$0xff]
  %v28 = vld [vmem:[%s1 + $0x30] sm:$0xff]
  %v29 = vld [vmem:[%s1 + $0x38] sm:$0xff]
  %v30 = vld [vmem:[%s1 + $0x40] sm:$0xff]
  %v31 = vld [vmem:[%s1 + $0x48] sm:$0xff]
  %v32 = vld [vmem:[%s1 + $0x50] sm:$0xff]
  %v33 = vld [vmem:[%s1 + $0x58] sm:$0xff]
  %v34 = vld [vmem:[%s1 + $0x60] sm:$0xff]
  %v35 = vld [vmem:[%s1 + $0x68] sm:$0xff]
  %v36 = vld [vmem:[%s1 + $0x70] sm:$0xff]
  %v37 = vld [vmem:[%s1 + $0x78] sm:$0xff]
  %v38 = vld [vmem:[%s1 + $0x80] sm:$0xff]
  %v39 = vld [vmem:[%s1 + $0x88] sm:$0xff]
  %v40 = vld [vmem:[%s1 + $0x90] sm:$0xff]
  %v41 = vld [vmem:[%s1 + $0x98] sm:$0xff]
  %v42 = vld [vmem:[%s1 + $0xa0] sm:$0xff]
  %v43 = vld [vmem:[%s1 + $0xa8] sm:$0xff]
  %v44 = vld [vmem:[%s1 + $0xb0] sm:$0xff]
  %v45 = vld [vmem:[%s1 + $0xb8] sm:$0xff]
  %v46 = vld [vmem:[%s1 + $0xc0] sm:$0xff]
  %v47 = vld [vmem:[%s1 + $0xc8] sm:$0xff]
  %v48 = vld [vmem:[%s1 + $0xd0] sm:$0xff]
  %v49 = vld [vmem:[%s1 + $0xd8] sm:$0xff]
  %v50 = vld [vmem:[%s1 + $0xe0] sm:$0xff]
  %v51 = vld [vmem:[%s1 + $0xe8] sm:$0xff]
  %v52 = vld [vmem:[%s1 + $0xf0] sm:$0xff]
  %v53 = vld [vmem:[%s1 + $0xf8] sm:$0xff]
  %v54 = vld [vmem:[%s1 + $0x100] sm:$0xff]
  %v55 = vld [vmem:[%s1 + $0x108] sm:$0xff]
  %v56 = vld [vmem:[%s1 + $0x110] sm:$0xff]
  %v57 = vld [vmem:[%s1 + $0x118] sm:$0xff]
  %v58 = vld [vmem:[%s1 + $0x120] sm:$0xff]
  %v59 = vld [vmem:[%s1 + $0x128] sm:$0xff]
  %v60 = vld [vmem:[%s1 + $0x130] sm:$0xff]
  %v61 = vld [vmem:[%s1 + $0x138] sm:$0xff]
  %v62 = vld [vmem:[%s1 + $0x140] sm:$0xff]
  %v63 = vld [vmem:[%s1 + $0x148] sm:$0xff]
  %v64 = vld [vmem:[%s1 + $0x150] sm:$0xff]
  %v65 = vld [vmem:[%s1 + $0x158] sm:$0xff]
  %v66 = vld [vmem:[%s1 + $0x160] sm:$0xff]
  %v67 = vld [vmem:[%s1 + $0x168] sm:$0xff]
  %v68 = vld [vmem:[%s1 + $0x170] sm:$0xff]
  %v69 = vld [vmem:[%s1 + $0x178] sm:$0xff]
  %v70 = vld [vmem:[%s1 + $0x180] sm:$0xff]
  %v71 = vld [vmem:[%s1 + $0x188] sm:$0xff]
  %v72 = vld [vmem:[%s1 + $0x190] sm:$0xff]
  %v73 = vld [vmem:[%s1 + $0x198] sm:$0xff]
  %v74 = vld [vmem:[%s1 + $0x1a0] sm:$0xff]
  %v75 = vld [vmem:[%s1 + $0x1a8] sm:$0xff]
  %v76 = vld [vmem:[%s1 + $0x1b0] sm:$0xff]
  %v77 = vld [vmem:[%s1 + $0x1b8] sm:$0xff]
  %v78 = vld [vmem:[%s1 + $0x1c0] sm:$0xff]
  %v79 = vld [vmem:[%s1 + $0x1c8] sm:$0xff]
  %v80 = vld [vmem:[%s1 + $0x1d0] sm:$0xff]
  %v81 = vld [vmem:[%s1 + $0x1d8] sm:$0xff]
  %v82 = vld [vmem:[%s1 + $0x1e0] sm:$0xff]
  %v83 = vld [vmem:[%s1 + $0x1e8] sm:$0xff]
  %v84 = vld [vmem:[%s1 + $0x1f0] sm:$0xff]
  %v85 = vld [vmem:[%s1 + $0x1f8] sm:$0xff]
  %v86 = vld [vmem:[%s1 + $0x200] sm:$0xff]
  %v87 = vld [vmem:[%s1 + $0x208] sm:$0xff]
  %v88 = vld [vmem:[%s1 + $0x210] sm:$0xff]
  %v89 = vld [vmem:[%s1 + $0x218] sm:$0xff]
  %v90 = vld [vmem:[%s1 + $0x220] sm:$0xff]
  %v91 = vld [vmem:[%s1 + $0x228] sm:$0xff]
  %v92 = vld [vmem:[%s1 + $0x230] sm:$0xff]
  %v93 = vld [vmem:[%s1 + $0x238] sm:$0xff]
  %v94 = vld [vmem:[%s1 + $0x240] sm:$0xff]
  %v95 = vld [vmem:[%s1 + $0x248] sm:$0xff]
  %v96 = vld [vmem:[%s1 + $0x250] sm:$0xff]
  %v97 = vld [vmem:[%s1 + $0x258] sm:$0xff]
  %v98 = vld [vmem:[%s1 + $0x260] sm:$0xff]
  %v99 = vld [vmem:[%s1 + $0x268] sm:$0xff]
  %v100 = vld [vmem:[%s1 + $0x270] sm:$0xff]
  %v101 = vld [vmem:[%s1 + $0x278] sm:$0xff]
  %v102 = vld [vmem:[%s1 + $0x280] sm:$0xff]
  %v103 = vld [vmem:[%s1 + $0x288] sm:$0xff]
  %v104 = vld [vmem:[%s1 + $0x290] sm:$0xff]
  %v105 = vld [vmem:[%s1 + $0x298] sm:$0xff]
  %v106 = vld [vmem:[%s1 + $0x2a0] sm:$0xff]
  %v107 = vld [vmem:[%s1 + $0x2a8] sm:$0xff]
  %v108 = vld [vmem:[%s1 + $0x2b0] sm:$0xff]
  %v109 = vld [vmem:[%s1 + $0x2b8] sm:$0xff]
  %v110 = vld [vmem:[%s1 + $0x2c0] sm:$0xff]
  %v111 = vld [vmem:[%s1 + $0x2c8] sm:$0xff]
  %v112 = vld [vmem:[%s1 + $0x2d0] sm:$0xff]
  %v113 = vld [vmem:[%s1 + $0x2d8] sm:$0xff]
  %v114 = vld [vmem:[%s1 + $0x2e0] sm:$0xff]
  %v115 = vld [vmem:[%s1 + $0x2e8] sm:$0xff]
  %v116 = vld [vmem:[%s1 + $0x2f0] sm:$0xff]
  %v117 = vld [vmem:[%s1 + $0x2f8] sm:$0xff]
  %v118 = vld [vmem:[%s2] sm:$0x3]
  %v120 = vlaneseq
  %v121 = vshrl.u32 %v120, 7
  %v122 = vsub.s32 0, %v121
  %v123 = vrot.slane %v118, %v122
  %v124 = vlaneseq
  %v125 = vshrl.u32 %v124, 7
  %v126 = vsub.s32 1, %v125
  %v127 = vrot.slane %v118, %v126
  %v131 = vcombine.high %v20, %v20
  %133 = vmatprep.subr.mxu0 %v23
  %134 = vmatpush1.msra.mxu0 %v22
  %135 = vmatprep.subr.mxu0 %v25
  %136 = vmatpush1.msra.mxu0 %v24
  %137 = vmatprep.subr.mxu0 %v27
  %138 = vmatpush1.msra.mxu0 %v26
  %139 = vmatprep.subr.mxu0 %v29
  %140 = vmatpush1.msra.mxu0 %v28
  %141 = vmatprep.subr.mxu0 %v31
  %142 = vmatpush1.msra.mxu0 %v30
  %143 = vmatprep.subr.mxu0 %v33
  %144 = vmatpush1.msra.mxu0 %v32
  %145 = vmatprep.subr.mxu0 %v35
  %146 = vmatpush1.msra.mxu0 %v34
  %147 = vmatprep.subr.mxu0 %v37
  %148 = vmatpush1.msra.mxu0 %v36
  %149 = vmatprep.subr.mxu0 %v39
  %150 = vmatpush1.msra.mxu0 %v38
  %151 = vmatprep.subr.mxu0 %v41
  %152 = vmatpush1.msra.mxu0 %v40
  %153 = vmatprep.subr.mxu0 %v43
  %154 = vmatpush1.msra.mxu0 %v42
  %155 = vmatprep.subr.mxu0 %v45
  %156 = vmatpush1.msra.mxu0 %v44
  %157 = vmatprep.subr.mxu0 %v47
  %158 = vmatpush1.msra.mxu0 %v46
  %159 = vmatprep.subr.mxu0 %v49
  %160 = vmatpush1.msra.mxu0 %v48
  %161 = vmatprep.subr.mxu0 %v51
  %162 = vmatpush1.msra.mxu0 %v50
  %163 = vmatprep.subr.mxu0 %v53
  %164 = vmatpush1.msra.mxu0 %v52
  %165 = vmatprep.subr.mxu0 %v55
  %166 = vmatpush1.msra.mxu0 %v54
  %167 = vmatprep.subr.mxu0 %v57
  %168 = vmatpush1.msra.mxu0 %v56
  %169 = vmatprep.subr.mxu0 %v59
  %170 = vmatpush1.msra.mxu0 %v58
  %171 = vmatprep.subr.mxu0 %v61
  %172 = vmatpush1.msra.mxu0 %v60
  %173 = vmatprep.subr.mxu0 %v63
  %174 = vmatpush1.msra.mxu0 %v62
  %175 = vmatprep.subr.mxu0 %v65
  %176 = vmatpush1.msra.mxu0 %v64
  %177 = vmatprep.subr.mxu0 %v67
  %178 = vmatpush1.msra.mxu0 %v66
  %179 = vmatprep.subr.mxu0 %v69
  %180 = vmatpush1.msra.mxu0 %v68
  %181 = vmatprep.subr.mxu0 %v71
  %182 = vmatpush1.msra.mxu0 %v70
  %183 = vmatprep.subr.mxu0 %v73
  %184 = vmatpush1.msra.mxu0 %v72
  %185 = vmatprep.subr.mxu0 %v75
  %186 = vmatpush1.msra.mxu0 %v74
  %187 = vmatprep.subr.mxu0 %v77
  %188 = vmatpush1.msra.mxu0 %v76
  %189 = vmatprep.subr.mxu0 %v79
  %190 = vmatpush1.msra.mxu0 %v78
  %191 = vmatprep.subr.mxu0 %v81
  %192 = vmatpush1.msra.mxu0 %v80
  %193 = vmatprep.subr.mxu0 %v83
  %194 = vmatpush1.msra.mxu0 %v82
  %195 = vmatprep.subr.mxu0 %v85
  %196 = vmatpush1.msra.mxu0 %v84
  %197 = vmatprep.mubr.f32.mxu0 %v131
  %198 = vmatmul.mubr.f32.gmra.mrb[0].mxu0 %v20
  %v199 = vpop.f32.mrb[0].mxu0
  %v200 = vadd.f32 %v123, %v199
  %v201 = vpop.f32.mrb[0].mxu0
  %v202 = vadd.f32 %v127, %v201
  %203 = vdwg.mxu0
  %204 = vmatprep.subr.mxu0 %v87
  %205 = vmatpush1.msra.mxu0 %v86
  %206 = vmatprep.subr.mxu0 %v89
  %207 = vmatpush1.msra.mxu0 %v88
  %208 = vmatprep.subr.mxu0 %v91
  %209 = vmatpush1.msra.mxu0 %v90
  %210 = vmatprep.subr.mxu0 %v93
  %211 = vmatpush1.msra.mxu0 %v92
  %212 = vmatprep.subr.mxu0 %v95
  %213 = vmatpush1.msra.mxu0 %v94
  %214 = vmatprep.subr.mxu0 %v97
  %215 = vmatpush1.msra.mxu0 %v96
  %216 = vmatprep.subr.mxu0 %v99
  %217 = vmatpush1.msra.mxu0 %v98
  %218 = vmatprep.subr.mxu0 %v101
  %219 = vmatpush1.msra.mxu0 %v100
  %220 = vmatprep.subr.mxu0 %v103
  %221 = vmatpush1.msra.mxu0 %v102
  %222 = vmatprep.subr.mxu0 %v105
  %223 = vmatpush1.msra.mxu0 %v104
  %224 = vmatprep.subr.mxu0 %v107
  %225 = vmatpush1.msra.mxu0 %v106
  %226 = vmatprep.subr.mxu0 %v109
  %227 = vmatpush1.msra.mxu0 %v108
  %228 = vmatprep.subr.mxu0 %v111
  %229 = vmatpush1.msra.mxu0 %v110
  %230 = vmatprep.subr.mxu0 %v113
  %231 = vmatpush1.msra.mxu0 %v112
  %232 = vmatprep.subr.mxu0 %v115
  %233 = vmatpush1.msra.mxu0 %v114
  %234 = vmatprep.subr.mxu0 %v117
  %235 = vmatpush1.msra.mxu0 %v116
  %236 = vmatprep.subr.mxu0 0.0
  %237 = vmatpush1.msra.mxu0 0.0
  %238 = vmatprep.subr.mxu0 0.0
  %239 = vmatpush1.msra.mxu0 0.0
  %240 = vmatprep.subr.mxu0 0.0
  %241 = vmatpush1.msra.mxu0 0.0
  %242 = vmatprep.subr.mxu0 0.0
  %243 = vmatpush1.msra.mxu0 0.0
  %244 = vmatprep.subr.mxu0 0.0
  %245 = vmatpush1.msra.mxu0 0.0
  %246 = vmatprep.subr.mxu0 0.0
  %247 = vmatpush1.msra.mxu0 0.0
  %248 = vmatprep.subr.mxu0 0.0
  %249 = vmatpush1.msra.mxu0 0.0
  %250 = vmatprep.subr.mxu0 0.0
  %251 = vmatpush1.msra.mxu0 0.0
  %252 = vmatprep.subr.mxu0 0.0
  %253 = vmatpush1.msra.mxu0 0.0
  %254 = vmatprep.subr.mxu0 0.0
  %255 = vmatpush1.msra.mxu0 0.0
  %256 = vmatprep.subr.mxu0 0.0
  %257 = vmatpush1.msra.mxu0 0.0
  %258 = vmatprep.subr.mxu0 0.0
  %259 = vmatpush1.msra.mxu0 0.0
  %260 = vmatprep.subr.mxu0 0.0
  %261 = vmatpush1.msra.mxu0 0.0
  %262 = vmatprep.subr.mxu0 0.0
  %263 = vmatpush1.msra.mxu0 0.0
  %264 = vmatprep.subr.mxu0 0.0
  %265 = vmatpush1.msra.mxu0 0.0
  %266 = vmatprep.subr.mxu0 0.0
  %267 = vmatpush1.msra.mxu0 0.0
  %268 = vmatprep.mubr.f32.mxu0 0.0
  %269 = vmatmul.mubr.f32.gmra.mrb[0].mxu0 %v21
  %v270 = vpop.f32.mrb[0].mxu0
  %v271 = vadd.f32 %v200, %v270
  %v272 = vpop.f32.mrb[0].mxu0
  %v273 = vadd.f32 %v202, %v272
  %274 = vdwg.mxu0
  %v275 = vtanh.pop %v271
  %v276 = vtanh.pop %v273
  %v277 = vld [vmem:[%s3] sm:$0xff]
  %v278 = vld [vmem:[%s3 + $0x8] sm:$0xff]
  %v279 = vld [vmem:[%s3 + $0x10] sm:$0xff]
  %v280 = vld [vmem:[%s3 + $0x18] sm:$0xff]
  %v281 = vld [vmem:[%s3 + $0x20] sm:$0xff]
  %v282 = vld [vmem:[%s3 + $0x28] sm:$0xff]
  %v283 = vld [vmem:[%s3 + $0x30] sm:$0xff]
  %v284 = vld [vmem:[%s3 + $0x38] sm:$0xff]
  %v285 = vld [vmem:[%s3 + $0x40] sm:$0xff]
  %v286 = vld [vmem:[%s3 + $0x48] sm:$0xff]
  %v287 = vld [vmem:[%s3 + $0x50] sm:$0xff]
  %v288 = vld [vmem:[%s3 + $0x58] sm:$0xff]
  %v289 = vld [vmem:[%s3 + $0x60] sm:$0xff]
  %v290 = vld [vmem:[%s3 + $0x68] sm:$0xff]
  %v291 = vld [vmem:[%s3 + $0x70] sm:$0xff]
  %v292 = vld [vmem:[%s3 + $0x78] sm:$0xff]
  %v293 = vld [vmem:[%s3 + $0x80] sm:$0xff]
  %v294 = vld [vmem:[%s3 + $0x88] sm:$0xff]
  %v295 = vld [vmem:[%s3 + $0x90] sm:$0xff]
  %v296 = vld [vmem:[%s3 + $0x98] sm:$0xff]
  %v297 = vld [vmem:[%s3 + $0xa0] sm:$0xff]
  %v298 = vld [vmem:[%s3 + $0xa8] sm:$0xff]
  %v299 = vld [vmem:[%s3 + $0xb0] sm:$0xff]
  %v300 = vld [vmem:[%s3 + $0xb8] sm:$0xff]
  %v301 = vld [vmem:[%s3 + $0xc0] sm:$0xff]
  %v302 = vld [vmem:[%s3 + $0xc8] sm:$0xff]
  %v303 = vld [vmem:[%s3 + $0xd0] sm:$0xff]
  %v304 = vld [vmem:[%s3 + $0xd8] sm:$0xff]
  %v305 = vld [vmem:[%s3 + $0xe0] sm:$0xff]
  %v306 = vld [vmem:[%s3 + $0xe8] sm:$0xff]
  %v307 = vld [vmem:[%s3 + $0xf0] sm:$0xff]
  %v308 = vld [vmem:[%s3 + $0xf8] sm:$0xff]
  %v309 = vld [vmem:[%s3 + $0x100] sm:$0xff]
  %v310 = vld [vmem:[%s3 + $0x108] sm:$0xff]
  %v311 = vld [vmem:[%s3 + $0x110] sm:$0xff]
  %v312 = vld [vmem:[%s3 + $0x118] sm:$0xff]
  %v313 = vld [vmem:[%s3 + $0x120] sm:$0xff]
  %v314 = vld [vmem:[%s3 + $0x128] sm:$0xff]
  %v315 = vld [vmem:[%s3 + $0x130] sm:$0xff]
  %v316 = vld [vmem:[%s3 + $0x138] sm:$0xff]
  %v317 = vld [vmem:[%s3 + $0x140] sm:$0xff]
  %v318 = vld [vmem:[%s3 + $0x148] sm:$0xff]
  %v319 = vld [vmem:[%s3 + $0x150] sm:$0xff]
  %v320 = vld [vmem:[%s3 + $0x158] sm:$0xff]
  %v321 = vld [vmem:[%s3 + $0x160] sm:$0xff]
  %v322 = vld [vmem:[%s3 + $0x168] sm:$0xff]
  %v323 = vld [vmem:[%s3 + $0x170] sm:$0xff]
  %v324 = vld [vmem:[%s3 + $0x178] sm:$0xff]
  %v325 = vld [vmem:[%s3 + $0x180] sm:$0xff]
  %v326 = vld [vmem:[%s3 + $0x188] sm:$0xff]
  %v327 = vld [vmem:[%s3 + $0x190] sm:$0xff]
  %v328 = vld [vmem:[%s3 + $0x198] sm:$0xff]
  %v329 = vld [vmem:[%s3 + $0x1a0] sm:$0xff]
  %v330 = vld [vmem:[%s3 + $0x1a8] sm:$0xff]
  %v331 = vld [vmem:[%s3 + $0x1b0] sm:$0xff]
  %v332 = vld [vmem:[%s3 + $0x1b8] sm:$0xff]
  %v333 = vld [vmem:[%s3 + $0x1c0] sm:$0xff]
  %v334 = vld [vmem:[%s3 + $0x1c8] sm:$0xff]
  %v335 = vld [vmem:[%s3 + $0x1d0] sm:$0xff]
  %v336 = vld [vmem:[%s3 + $0x1d8] sm:$0xff]
  %v337 = vld [vmem:[%s3 + $0x1e0] sm:$0xff]
  %v338 = vld [vmem:[%s3 + $0x1e8] sm:$0xff]
  %v339 = vld [vmem:[%s3 + $0x1f0] sm:$0xff]
  %v340 = vld [vmem:[%s3 + $0x1f8] sm:$0xff]
  %v341 = vld [vmem:[%s3 + $0x200] sm:$0xff]
  %v342 = vld [vmem:[%s3 + $0x208] sm:$0xff]
  %v343 = vld [vmem:[%s3 + $0x210] sm:$0xff]
  %v344 = vld [vmem:[%s3 + $0x218] sm:$0xff]
  %v345 = vld [vmem:[%s3 + $0x220] sm:$0xff]
  %v346 = vld [vmem:[%s3 + $0x228] sm:$0xff]
  %v347 = vld [vmem:[%s3 + $0x230] sm:$0xff]
  %v348 = vld [vmem:[%s3 + $0x238] sm:$0xff]
  %v349 = vld [vmem:[%s4] sm:$0x7]
  %v351 = vlaneseq
  %v352 = vshrl.u32 %v351, 7
  %v353 = vsub.s32 0, %v352
  %v354 = vrot.slane %v349, %v353
  %v355 = vlaneseq
  %v356 = vshrl.u32 %v355, 7
  %v357 = vsub.s32 1, %v356
  %v358 = vrot.slane %v349, %v357
  %v359 = vlaneseq
  %v360 = vshrl.u32 %v359, 7
  %v361 = vsub.s32 2, %v360
  %v362 = vrot.slane %v349, %v361
  %vm366 = vcmask 523264
  %v368 = vsel %vm366, %v276, 0
  %370 = vmatprep.subr.mxu0 %v278
  %371 = vmatpush1.msra.mxu0 %v277
  %372 = vmatprep.subr.mxu0 %v281
  %373 = vmatpush1.msra.mxu0 %v280
  %374 = vmatprep.subr.mxu0 %v284
  %375 = vmatpush1.msra.mxu0 %v283
  %376 = vmatprep.subr.mxu0 %v287
  %377 = vmatpush1.msra.mxu0 %v286
  %378 = vmatprep.subr.mxu0 %v290
  %379 = vmatpush1.msra.mxu0 %v289
  %380 = vmatprep.subr.mxu0 %v293
  %381 = vmatpush1.msra.mxu0 %v292
  %382 = vmatprep.subr.mxu0 %v296
  %383 = vmatpush1.msra.mxu0 %v295
  %384 = vmatprep.subr.mxu0 %v299
  %385 = vmatpush1.msra.mxu0 %v298
  %386 = vmatprep.subr.mxu0 %v302
  %387 = vmatpush1.msra.mxu0 %v301
  %388 = vmatprep.subr.mxu0 %v305
  %389 = vmatpush1.msra.mxu0 %v304
  %390 = vmatprep.subr.mxu0 %v308
  %391 = vmatpush1.msra.mxu0 %v307
  %392 = vmatprep.subr.mxu0 %v311
  %393 = vmatpush1.msra.mxu0 %v310
  %394 = vmatprep.subr.mxu0 %v314
  %395 = vmatpush1.msra.mxu0 %v313
  %396 = vmatprep.subr.mxu0 %v317
  %397 = vmatpush1.msra.mxu0 %v316
  %398 = vmatprep.subr.mxu0 %v320
  %399 = vmatpush1.msra.mxu0 %v319
  %400 = vmatprep.subr.mxu0 %v323
  %401 = vmatpush1.msra.mxu0 %v322
  %402 = vmatprep.subr.mxu0 %v326
  %403 = vmatpush1.msra.mxu0 %v325
  %404 = vmatprep.subr.mxu0 %v329
  %405 = vmatpush1.msra.mxu0 %v328
  %406 = vmatprep.subr.mxu0 %v332
  %407 = vmatpush1.msra.mxu0 %v331
  %408 = vmatprep.subr.mxu0 %v335
  %409 = vmatpush1.msra.mxu0 %v334
  %410 = vmatprep.subr.mxu0 %v338
  %411 = vmatpush1.msra.mxu0 %v337
  %412 = vmatprep.subr.mxu0 %v341
  %413 = vmatpush1.msra.mxu0 %v340
  %414 = vmatprep.subr.mxu0 %v344
  %415 = vmatpush1.msra.mxu0 %v343
  %416 = vmatprep.subr.mxu0 %v347
  %417 = vmatpush1.msra.mxu0 %v346
  %418 = vmatprep.subr.mxu0 0.0
  %419 = vmatpush1.msra.mxu0 0.0
  %420 = vmatprep.subr.mxu0 0.0
  %421 = vmatpush1.msra.mxu0 0.0
  %422 = vmatprep.subr.mxu0 0.0
  %423 = vmatpush1.msra.mxu0 0.0
  %424 = vmatprep.subr.mxu0 0.0
  %425 = vmatpush1.msra.mxu0 0.0
  %426 = vmatprep.subr.mxu0 0.0
  %427 = vmatpush1.msra.mxu0 0.0
  %428 = vmatprep.subr.mxu0 0.0
  %429 = vmatpush1.msra.mxu0 0.0
  %430 = vmatprep.subr.mxu0 0.0
  %431 = vmatpush1.msra.mxu0 0.0
  %432 = vmatprep.subr.mxu0 0.0
  %433 = vmatpush1.msra.mxu0 0.0
  %434 = vmatprep.mubr.f32.mxu0 %v368
  %435 = vmatmul.mubr.f32.gmra.mrb[0].mxu0 %v275
  %v436 = vpop.f32.mrb[0].mxu0
  %v437 = vadd.f32 %v354, %v436
  %v438 = vpop.f32.mrb[0].mxu0
  %v439 = vadd.f32 %v358, %v438
  %440 = vdwg.mxu0
  %441 = vmatprep.subr.mxu0 0.0
  %442 = vmatpush1.msra.mxu0 %v279
  %443 = vmatprep.subr.mxu0 0.0
  %444 = vmatpush1.msra.mxu0 %v282
  %445 = vmatprep.subr.mxu0 0.0
  %446 = vmatpush1.msra.mxu0 %v285
  %447 = vmatprep.subr.mxu0 0.0
  %448 = vmatpush1.msra.mxu0 %v288
  %449 = vmatprep.subr.mxu0 0.0
  %450 = vmatpush1.msra.mxu0 %v291
  %451 = vmatprep.subr.mxu0 0.0
  %452 = vmatpush1.msra.mxu0 %v294
  %453 = vmatprep.subr.mxu0 0.0
  %454 = vmatpush1.msra.mxu0 %v297
  %455 = vmatprep.subr.mxu0 0.0
  %456 = vmatpush1.msra.mxu0 %v300
  %457 = vmatprep.subr.mxu0 0.0
  %458 = vmatpush1.msra.mxu0 %v303
  %459 = vmatprep.subr.mxu0 0.0
  %460 = vmatpush1.msra.mxu0 %v306
  %461 = vmatprep.subr.mxu0 0.0
  %462 = vmatpush1.msra.mxu0 %v309
  %463 = vmatprep.subr.mxu0 0.0
  %464 = vmatpush1.msra.mxu0 %v312
  %465 = vmatprep.subr.mxu0 0.0
  %466 = vmatpush1.msra.mxu0 %v315
  %467 = vmatprep.subr.mxu0 0.0
  %468 = vmatpush1.msra.mxu0 %v318
  %469 = vmatprep.subr.mxu0 0.0
  %470 = vmatpush1.msra.mxu0 %v321
  %471 = vmatprep.subr.mxu0 0.0
  %472 = vmatpush1.msra.mxu0 %v324
  %473 = vmatprep.subr.mxu0 0.0
  %474 = vmatpush1.msra.mxu0 %v327
  %475 = vmatprep.subr.mxu0 0.0
  %476 = vmatpush1.msra.mxu0 %v330
  %477 = vmatprep.subr.mxu0 0.0
  %478 = vmatpush1.msra.mxu0 %v333
  %479 = vmatprep.subr.mxu0 0.0
  %480 = vmatpush1.msra.mxu0 %v336
  %481 = vmatprep.subr.mxu0 0.0
  %482 = vmatpush1.msra.mxu0 %v339
  %483 = vmatprep.subr.mxu0 0.0
  %484 = vmatpush1.msra.mxu0 %v342
  %485 = vmatprep.subr.mxu0 0.0
  %486 = vmatpush1.msra.mxu0 %v345
  %487 = vmatprep.subr.mxu0 0.0
  %488 = vmatpush1.msra.mxu0 %v348
  %489 = vmatprep.subr.mxu0 0.0
  %490 = vmatpush1.msra.mxu0 0.0
  %491 = vmatprep.subr.mxu0 0.0
  %492 = vmatpush1.msra.mxu0 0.0
  %493 = vmatprep.subr.mxu0 0.0
  %494 = vmatpush1.msra.mxu0 0.0
  %495 = vmatprep.subr.mxu0 0.0
  %496 = vmatpush1.msra.mxu0 0.0
  %497 = vmatprep.subr.mxu0 0.0
  %498 = vmatpush1.msra.mxu0 0.0
  %499 = vmatprep.subr.mxu0 0.0
  %500 = vmatpush1.msra.mxu0 0.0
  %501 = vmatprep.subr.mxu0 0.0
  %502 = vmatpush1.msra.mxu0 0.0
  %503 = vmatprep.subr.mxu0 0.0
  %504 = vmatpush1.msra.mxu0 0.0
  %505 = vmatprep.mubr.f32.mxu0 %v368
  %506 = vmatmul.mubr.f32.gmra.mrb[0].mxu0 %v275
  %v507 = vpop.f32.mrb[0].mxu0
  %v508 = vadd.f32 %v362, %v507
  %v509 = vpop.f32.mrb[0].mxu0
  %510 = vdwg.mxu0
  %v511 = vtanh.pop %v437
  %v512 = vtanh.pop %v439
  %v513 = vtanh.pop %v508
  %v516 = vcombine.low %v511, %v512
  %518 = vst [vmem:[%s5] sm:$0xff] %v516
  %519 = vst [vmem:[%s5 + $0x8] sm:$0xf] %v513
  // Predicated region
  $region22: #{stn_forward.6} parent=0 // pred_check
    _
  $region23: #{stn_forward.6} parent=0 // pred_check_branch
    %521 = sbr.rel (0) target = $region25
  $region24: #{stn_forward.6} parent=0 // pred_region
    _
  $region25: #{stn_forward.6} parent=0 // pred_fallthru
    _
  // Predicated region
  $region26: #{stn_forward.6} parent=0 // pred_check
    _
  $region27: #{stn_forward.6} parent=0 // pred_check_branch
    %523 = sbr.rel (0) target = $region29
  $region28: #{stn_forward.6} parent=0 // pred_region
    _
  $region29: #{stn_forward.6} parent=0 // pred_fallthru
    _

// kernel: stn_forward.7
$region0: #{stn_forward.7}
  #allocation0 [shape = 'u32[]', space=smem, size = 0x4, offset = 0x4, fixed_abs, tag = 'smem constant byte address 0x4 - core index']
  #allocation1 [shape = 'u32[144,128]{1,0:T(1,128)}', space=vmem, size = 0x12000, scoped, tag = 'internal scratch']
  %s0 = inlined_call_operand.vmem [shape: bf16[4,64,384], index: 0, kind: input, shape index: {}]
  %s1 = inlined_call_operand.vmem [shape: f32[4,1,384], index: 1, kind: input, shape index: {}]
  %s2 = inlined_call_operand.vmem [shape: bf16[384,256], index: 2, kind: input, shape index: {}]
  %s3 = inlined_call_operand.vmem [shape: f32[1,256], index: 3, kind: input, shape index: {}]
  %s4 = inlined_call_operand.hbm [shape: f32[4,64,256], index: 4, kind: output, shape index: {}]
  %s5 = sld [smem:[#allocation0]]
  $region49: #{stn_forward.7} parent=0
    _
  %s7 = ssub.s32 1, %s5
  %s8 = scalar_select 0, %s7, %s5
  $region1: #{stn_forward.7} parent=0
    #allocation2 [shape = 'u8[131072]{0}', space=vmem, size = 0x20000, scoped, tag = 'output window, operand 0']
    #allocation3 [shape = 's32[2]{0}', space=sflag, size = 0x8, scoped, tag = 'scoped memory for stn_forward.7']
    %9 = vsyncpa [#allocation3], 0
    %s10 = scalar_lea.sflag [#allocation3], 1
    %11 = vsyncpa %s10, 0
    loop: start=0, step=1, limit=6
    $region2: #{stn_forward.7} parent=1 // loop_pre_header
      _
    $region3: #{stn_forward.7} parent=1 // loop_header
      %s13 = sphi 0, %s17
      %p14 = scmp.ge.s32.totalorder %s13, 6
      %s20 = sphi 0, %s32
      %s21 = sphi 0, %s28
      %s22 = sphi 0, %s20
      %s23 = sphi 0, %s21
      %s24 = sphi 0, %s22
      %s25 = sphi 0, %s23
      %s37 = sphi 0, %s39
      %s40 = sphi 0, %s37
      %s41 = sphi 0, %s40
      %s57 = sphi 0, %s41
      %s63 = sphi 0, %s65
      %s66 = sphi 0, %s63
      %s67 = sphi 0, %s66
      %s83 = sphi 0, %s67
      %s87 = sphi 0, %s87
      %s89 = sphi 0, %s87
      %s90 = sphi 0, %s89
      %s104 = sphi 0, %s90
      %s108 = sphi 0, %s108
      %s110 = sphi 0, %s108
      %s111 = sphi 0, %s110
      %s125 = sphi 0, %s111
      %s133 = sphi 0, %s135
      %s136 = sphi 0, %s133
      %s137 = sphi 0, %s136
      %s153 = sphi 0, %s137
    $region4: #{stn_forward.7} parent=1 // loop_header_branch
      %16 = sbr.rel (%p14) target = $region8
    $region5: #{stn_forward.7} parent=1 // loop_body
      %s18 = ssub.s32 %s13, 1
      %s19 = ssub.s32 %s13, 2
      %s26 = sadd.s32 1, %s21
      %p27 = scmp.ge.s32.totalorder %s26, 1
      %s28 = scalar_select %p27, 0, %s26
      %s29 = sadd.s32 1, %s20
      %s30 = scalar_select %p27, %s29, %s20
      %p31 = scmp.ge.s32.totalorder %s30, 4
      %s32 = scalar_select %p31, 0, %s30
      %s33 = ssub.s32 %s20, %s32
      %s34 = ssub.s32 %s21, %s28
      %s35 = sor.u32 %s33, %s34
      %p36 = scmp.eq.s32.totalorder %s35, 0
      %s38 = sadd.s32 %s37, 1
      %s39 = scalar_select %p36, %s37, %s38
      %p42 = pneg %p36
      %p43 = scmp.eq.s32.totalorder %s13, 3
      %p44 = por %p42, %p43
      %p45 = scmp.ne.s32.totalorder %s37, %s40
      %p46 = scmp.eq.s32.totalorder %s13, 0
      %p47 = por %p45, %p46
      %p48 = scmp.ne.s32.totalorder %s37, %s40
      %p49 = scmp.eq.s32.totalorder %s18, 3
      %p50 = por %p48, %p49
      %p51 = scmp.ne.s32.totalorder %s40, %s41
      %p52 = scmp.eq.s32.totalorder %s18, 0
      %p53 = por %p51, %p52
      %p54 = scmp.ne.s32.totalorder %s40, %s41
      %p55 = scmp.eq.s32.totalorder %s19, 3
      %p56 = por %p54, %p55
      %p58 = scmp.ne.s32.totalorder %s41, %s57
      %p59 = scmp.eq.s32.totalorder %s19, 0
      %p60 = por %p58, %p59
      %s61 = ssub.s32 %s20, %s32
      %p62 = scmp.eq.s32.totalorder %s61, 0
      %s64 = sadd.s32 %s63, 1
      %s65 = scalar_select %p62, %s63, %s64
      %p68 = pneg %p62
      %p69 = scmp.eq.s32.totalorder %s13, 3
      %p70 = por %p68, %p69
      %p71 = scmp.ne.s32.totalorder %s63, %s66
      %p72 = scmp.eq.s32.totalorder %s13, 0
      %p73 = por %p71, %p72
      %p74 = scmp.ne.s32.totalorder %s63, %s66
      %p75 = scmp.eq.s32.totalorder %s18, 3
      %p76 = por %p74, %p75
      %p77 = scmp.ne.s32.totalorder %s66, %s67
      %p78 = scmp.eq.s32.totalorder %s18, 0
      %p79 = por %p77, %p78
      %p80 = scmp.ne.s32.totalorder %s66, %s67
      %p81 = scmp.eq.s32.totalorder %s19, 3
      %p82 = por %p80, %p81
      %p84 = scmp.ne.s32.totalorder %s67, %s83
      %p85 = scmp.eq.s32.totalorder %s19, 0
      %p86 = por %p84, %p85
      %s88 = sadd.s32 %s87, 1
      %p91 = scmp.eq.s32.totalorder %s13, 3
      %p92 = scmp.ne.s32.totalorder %s87, %s89
      %p93 = scmp.eq.s32.totalorder %s13, 0
      %p94 = por %p92, %p93
      %p95 = scmp.ne.s32.totalorder %s87, %s89
      %p96 = scmp.eq.s32.totalorder %s18, 3
      %p97 = por %p95, %p96
      %p98 = scmp.ne.s32.totalorder %s89, %s90
      %p99 = scmp.eq.s32.totalorder %s18, 0
      %p100 = por %p98, %p99
      %p101 = scmp.ne.s32.totalorder %s89, %s90
      %p102 = scmp.eq.s32.totalorder %s19, 3
      %p103 = por %p101, %p102
      %p105 = scmp.ne.s32.totalorder %s90, %s104
      %p106 = scmp.eq.s32.totalorder %s19, 0
      %p107 = por %p105, %p106
      %s109 = sadd.s32 %s108, 1
      %p112 = scmp.eq.s32.totalorder %s13, 3
      %p113 = scmp.ne.s32.totalorder %s108, %s110
      %p114 = scmp.eq.s32.totalorder %s13, 0
      %p115 = por %p113, %p114
      %p116 = scmp.ne.s32.totalorder %s108, %s110
      %p117 = scmp.eq.s32.totalorder %s18, 3
      %p118 = por %p116, %p117
      %p119 = scmp.ne.s32.totalorder %s110, %s111
      %p120 = scmp.eq.s32.totalorder %s18, 0
      %p121 = por %p119, %p120
      %p122 = scmp.ne.s32.totalorder %s110, %s111
      %p123 = scmp.eq.s32.totalorder %s19, 3
      %p124 = por %p122, %p123
      %p126 = scmp.ne.s32.totalorder %s111, %s125
      %p127 = scmp.eq.s32.totalorder %s19, 0
      %p128 = por %p126, %p127
      %s129 = ssub.s32 %s20, %s32
      %s130 = ssub.s32 %s21, %s28
      %s131 = sor.u32 %s129, %s130
      %p132 = scmp.eq.s32.totalorder %s131, 0
      %s134 = sadd.s32 %s133, 1
      %s135 = scalar_select %p132, %s133, %s134
      %p138 = pneg %p132
      %p139 = scmp.eq.s32.totalorder %s13, 3
      %p140 = por %p138, %p139
      %p141 = scmp.ne.s32.totalorder %s133, %s136
      %p142 = scmp.eq.s32.totalorder %s13, 0
      %p143 = por %p141, %p142
      %p144 = scmp.ne.s32.totalorder %s133, %s136
      %p145 = scmp.eq.s32.totalorder %s18, 3
      %p146 = por %p144, %p145
      %p147 = scmp.ne.s32.totalorder %s136, %s137
      %p148 = scmp.eq.s32.totalorder %s18, 0
      %p149 = por %p147, %p148
      %p150 = scmp.ne.s32.totalorder %s136, %s137
      %p151 = scmp.eq.s32.totalorder %s19, 3
      %p152 = por %p150, %p151
      %p154 = scmp.ne.s32.totalorder %s137, %s153
      %p155 = scmp.eq.s32.totalorder %s19, 0
      %p156 = por %p154, %p155
      %p157 = scmp.le.s32.totalorder 1, %s13
      %p158 = scmp.lt.s32.totalorder %s13, 5
      %p159 = pnand %p157, %p158
      %p160 = pneg %p159
      // Predicated region
      $region9: #{stn_forward.7} parent=5 // pred_check
        _
      $region10: #{stn_forward.7} parent=5 // pred_check_branch
        %162 = sbr.rel (%p159) target = $region12
      $region11: #{stn_forward.7} parent=5 // pred_region
        %s163 = ssub.s32 %s13, 1
        // Predicated region
        $region13: #{stn_forward.7} parent=11 // pred_check
          %p164 = pneg %p100
        $region14: #{stn_forward.7} parent=11 // pred_check_branch
          %166 = sbr.rel (%p164) target = $region16
        $region15: #{stn_forward.7} parent=11 // pred_region
          _
        $region16: #{stn_forward.7} parent=11 // pred_fallthru
          _
        // Predicated region
        $region17: #{stn_forward.7} parent=11 // pred_check
          %p167 = pneg %p121
        $region18: #{stn_forward.7} parent=11 // pred_check_branch
          %169 = sbr.rel (%p167) target = $region20
        $region19: #{stn_forward.7} parent=11 // pred_region
          _
        $region20: #{stn_forward.7} parent=11 // pred_fallthru
          _
      $region12: #{stn_forward.7} parent=5 // pred_fallthru
        _
      %p170 = scmp.lt.s32.totalorder %s13, 4
      // Predicated region
      $region21: #{stn_forward.7} parent=5 // pred_check
        %p171 = pneg %p170
      $region22: #{stn_forward.7} parent=5 // pred_check_branch
        %173 = sbr.rel (%p171) target = $region24
      $region23: #{stn_forward.7} parent=5 // pred_region
        // Predicated region
        $region25: #{stn_forward.7} parent=23 // pred_check
          %p174 = pneg %p47
        $region26: #{stn_forward.7} parent=23 // pred_check_branch
          %176 = sbr.rel (%p174) target = $region28
        $region27: #{stn_forward.7} parent=23 // pred_region
          %s177 = smul.u32 8, %s21
          %p178 = scmp.lt.s32.totalorder %s20, 3
          %s179 = scalar_select %p178, %s20, 3
          %p180 = scmp.lt.s32.totalorder %s177, 7
          %s181 = scalar_select %p180, %s177, 7
          %s182 = smul.addr %s181, 3
          %s183 = smul.addr %s179, 24
          %s184 = sadd.s32 %s182, %s183
          %s185 = smul.addr %s184, 4
          %s186 = scalar_lea.vmem %s0, %s185
          %s187 = smul.u32 8, %s21
        $region28: #{stn_forward.7} parent=23 // pred_fallthru
          _
        // Predicated region
        $region29: #{stn_forward.7} parent=23 // pred_check
          %p188 = pneg %p73
        $region30: #{stn_forward.7} parent=23 // pred_check_branch
          %190 = sbr.rel (%p188) target = $region32
        $region31: #{stn_forward.7} parent=23 // pred_region
          %p191 = scmp.lt.s32.totalorder %s20, 3
          %s192 = scalar_select %p191, %s20, 3
          %s193 = smul.addr %s192, 3
          %s194 = scalar_lea.vmem %s1, %s193
        $region32: #{stn_forward.7} parent=23 // pred_fallthru
          _
      $region24: #{stn_forward.7} parent=5 // pred_fallthru
        _
      %p195 = scmp.le.s32.totalorder 1, %s13
      %p196 = scmp.lt.s32.totalorder %s13, 5
      %p197 = pnand %p195, %p196
      %p198 = pneg %p197
      // Predicated region
      $region33: #{stn_forward.7} parent=5 // pred_check
        _
      $region34: #{stn_forward.7} parent=5 // pred_check_branch
        %200 = sbr.rel (%p197) target = $region36
      $region35: #{stn_forward.7} parent=5 // pred_region
        %s201 = ssub.s32 %s13, 1
        %s202 = smul.u32 8, %s23
        %p203 = scmp.lt.s32.totalorder %s22, 3
        %s204 = scalar_select %p203, %s22, 3
        %p205 = scmp.lt.s32.totalorder %s202, 7
        %s206 = scalar_select %p205, %s202, 7
        %s207 = smul.addr %s206, 3
        %s208 = smul.addr %s204, 24
        %s209 = sadd.s32 %s207, %s208
        %s210 = smul.addr %s209, 4
        %s211 = scalar_lea.vmem %s0, %s210
        %p212 = pneg %p53
        %p213 = pneg %p50
        %p214 = scmp.lt.s32.totalorder %s22, 3
        %s215 = scalar_select %p214, %s22, 3
        %s216 = smul.addr %s215, 3
        %s217 = scalar_lea.vmem %s1, %s216
        %p218 = pneg %p79
        %p219 = pneg %p76
        %p220 = pneg %p100
        %p221 = pneg %p97
        %p222 = pneg %p121
        %p223 = pneg %p118
        %p224 = pneg %p149
        %p225 = pneg %p146
        %s226 = sand.u32 %s136, 1
        %s227 = scalar_lea.sflag [#allocation3], %s226
        %s228 = sand.u32 %s136, 1
        %s229 = smul.addr %s228, 128
        %s230 = scalar_lea.vmem [#allocation2], %s229
        %s231 = smul.u32 8, %s23
        %p232 = scmp.lt.s32.totalorder %s22, 3
        %s233 = scalar_select %p232, %s22, 3
        %p234 = scmp.lt.s32.totalorder %s231, 7
        %s235 = scalar_select %p234, %s231, 7
        %s236 = smul.addr %s235, 3
        %s237 = smul.addr %s233, 24
        %s238 = sadd.s32 %s236, %s237
        %s239 = smul.addr %s238, 4
        %s240 = scalar_lea.vmem %s0, %s239
        %s241 = smul.u32 8, %s23
        %p242 = scmp.lt.s32.totalorder %s22, 3
        %s243 = scalar_select %p242, %s22, 3
        %s244 = smul.addr %s243, 3
        %s245 = scalar_lea.vmem %s1, %s244
        %s246 = smul.u32 8, %s23
        %v248 = vld [vmem:[%s240] sm:$0xff]
        %v249 = vld [vmem:[%s240 + $0x8] sm:$0xf]
        %v250 = vld [vmem:[%s240 + $0xc] sm:$0xff]
        %v251 = vld [vmem:[%s240 + $0x14] sm:$0xf]
        %v252 = vld [vmem:[%s240 + $0x18] sm:$0xff]
        %v253 = vld [vmem:[%s240 + $0x20] sm:$0xf]
        %v254 = vld [vmem:[%s240 + $0x24] sm:$0xff]
        %v255 = vld [vmem:[%s240 + $0x2c] sm:$0xf]
        %v256 = vld [vmem:[%s240 + $0x30] sm:$0xff]
        %v257 = vld [vmem:[%s240 + $0x38] sm:$0xf]
        %v258 = vld [vmem:[%s240 + $0x3c] sm:$0xff]
        %v259 = vld [vmem:[%s240 + $0x44] sm:$0xf]
        %v260 = vld [vmem:[%s240 + $0x48] sm:$0xff]
        %v261 = vld [vmem:[%s240 + $0x50] sm:$0xf]
        %v262 = vld [vmem:[%s240 + $0x54] sm:$0xff]
        %v263 = vld [vmem:[%s240 + $0x5c] sm:$0xf]
        %v264 = vunpack.c.l.bf16 %v248
        %v265 = vunpack.c.h.bf16 %v248
        %v266 = vunpack.c.l.bf16 %v249
        %v267 = vunpack.c.l.bf16 %v250
        %v268 = vunpack.c.h.bf16 %v250
        %v269 = vunpack.c.l.bf16 %v251
        %v270 = vunpack.c.l.bf16 %v252
        %v271 = vunpack.c.h.bf16 %v252
        %v272 = vunpack.c.l.bf16 %v253
        %v273 = vunpack.c.l.bf16 %v254
        %v274 = vunpack.c.h.bf16 %v254
        %v275 = vunpack.c.l.bf16 %v255
        %v276 = vunpack.c.l.bf16 %v256
        %v277 = vunpack.c.h.bf16 %v256
        %v278 = vunpack.c.l.bf16 %v257
        %v279 = vunpack.c.l.bf16 %v258
        %v280 = vunpack.c.h.bf16 %v258
        %v281 = vunpack.c.l.bf16 %v259
        %v282 = vunpack.c.l.bf16 %v260
        %v283 = vunpack.c.h.bf16 %v260
        %v284 = vunpack.c.l.bf16 %v261
        %v285 = vunpack.c.l.bf16 %v262
        %v286 = vunpack.c.h.bf16 %v262
        %v287 = vunpack.c.l.bf16 %v263
        %v288 = vld [vmem:[%s245] sm:$0x7]
        %v290 = vlaneseq
        %v291 = vshrl.u32 %v290, 7
        %v292 = vsub.s32 0, %v291
        %v293 = vrot.slane %v288, %v292
        %v294 = vlaneseq
        %v295 = vshrl.u32 %v294, 7
        %v296 = vsub.s32 1, %v295
        %v297 = vrot.slane %v288, %v296
        %v298 = vlaneseq
        %v299 = vshrl.u32 %v298, 7
        %v300 = vsub.s32 2, %v299
        %v301 = vrot.slane %v288, %v300
        %v305 = vmul.f32 %v293, %v264
        %v306 = vmul.f32 %v297, %v265
        %v307 = vmul.f32 %v301, %v266
        %v308 = vmul.f32 %v293, %v267
        %v309 = vmul.f32 %v297, %v268
        %v310 = vmul.f32 %v301, %v269
        %v311 = vmul.f32 %v293, %v270
        %v312 = vmul.f32 %v297, %v271
        %v313 = vmul.f32 %v301, %v272
        %v314 = vmul.f32 %v293, %v273
        %v315 = vmul.f32 %v297, %v274
        %v316 = vmul.f32 %v301, %v275
        %v317 = vmul.f32 %v293, %v276
        %v318 = vmul.f32 %v297, %v277
        %v319 = vmul.f32 %v301, %v278
        %v320 = vmul.f32 %v293, %v279
        %v321 = vmul.f32 %v297, %v280
        %v322 = vmul.f32 %v301, %v281
        %v323 = vmul.f32 %v293, %v282
        %v324 = vmul.f32 %v297, %v283
        %v325 = vmul.f32 %v301, %v284
        %v326 = vmul.f32 %v293, %v285
        %v327 = vmul.f32 %v297, %v286
        %v328 = vmul.f32 %v301, %v287
        %v329 = vadd.f32 %v305, %v264
        %v330 = vadd.f32 %v306, %v265
        %v331 = vadd.f32 %v307, %v266
        %v332 = vadd.f32 %v308, %v267
        %v333 = vadd.f32 %v309, %v268
        %v334 = vadd.f32 %v310, %v269
        %v335 = vadd.f32 %v311, %v270
        %v336 = vadd.f32 %v312, %v271
        %v337 = vadd.f32 %v313, %v272
        %v338 = vadd.f32 %v314, %v273
        %v339 = vadd.f32 %v315, %v274
        %v340 = vadd.f32 %v316, %v275
        %v341 = vadd.f32 %v317, %v276
        %v342 = vadd.f32 %v318, %v277
        %v343 = vadd.f32 %v319, %v278
        %v344 = vadd.f32 %v320, %v279
        %v345 = vadd.f32 %v321, %v280
        %v346 = vadd.f32 %v322, %v281
        %v347 = vadd.f32 %v323, %v282
        %v348 = vadd.f32 %v324, %v283
        %v349 = vadd.f32 %v325, %v284
        %v350 = vadd.f32 %v326, %v285
        %v351 = vadd.f32 %v327, %v286
        %v352 = vadd.f32 %v328, %v287
        %v353 = vpack.c.bf16 %v332, %v329
        %v354 = vpack.c.bf16 %v333, %v330
        %v355 = vpack.c.bf16 %v334, %v331
        %v356 = vpack.c.bf16 %v338, %v335
        %v357 = vpack.c.bf16 %v339, %v336
        %v358 = vpack.c.bf16 %v340, %v337
        %v359 = vpack.c.bf16 %v344, %v341
        %v360 = vpack.c.bf16 %v345, %v342
        %v361 = vpack.c.bf16 %v346, %v343
        %v362 = vpack.c.bf16 %v350, %v347
        %v363 = vpack.c.bf16 %v351, %v348
        %v364 = vpack.c.bf16 %v352, %v349
        %v365 = vld [vmem:[%s2] sm:$0xff]
        %v366 = vld [vmem:[%s2 + $0x8] sm:$0xff]
        %v367 = vld [vmem:[%s2 + $0x10] sm:$0xff]
        %v368 = vld [vmem:[%s2 + $0x18] sm:$0xff]
        %v369 = vld [vmem:[%s2 + $0x20] sm:$0xff]
        %v370 = vld [vmem:[%s2 + $0x28] sm:$0xff]
        %v371 = vld [vmem:[%s2 + $0x30] sm:$0xff]
        %v372 = vld [vmem:[%s2 + $0x38] sm:$0xff]
        %v373 = vld [vmem:[%s2 + $0x40] sm:$0xff]
        %v374 = vld [vmem:[%s2 + $0x48] sm:$0xff]
        %v375 = vld [vmem:[%s2 + $0x50] sm:$0xff]
        %v376 = vld [vmem:[%s2 + $0x58] sm:$0xff]
        %v377 = vld [vmem:[%s2 + $0x60] sm:$0xff]
        %v378 = vld [vmem:[%s2 + $0x68] sm:$0xff]
        %v379 = vld [vmem:[%s2 + $0x70] sm:$0xff]
        %v380 = vld [vmem:[%s2 + $0x78] sm:$0xff]
        %v381 = vld [vmem:[%s2 + $0x80] sm:$0xff]
        %v382 = vld [vmem:[%s2 + $0x88] sm:$0xff]
        %v383 = vld [vmem:[%s2 + $0x90] sm:$0xff]
        %v384 = vld [vmem:[%s2 + $0x98] sm:$0xff]
        %v385 = vld [vmem:[%s2 + $0xa0] sm:$0xff]
        %v386 = vld [vmem:[%s2 + $0xa8] sm:$0xff]
        %v387 = vld [vmem:[%s2 + $0xb0] sm:$0xff]
        %v388 = vld [vmem:[%s2 + $0xb8] sm:$0xff]
        %v389 = vld [vmem:[%s2 + $0xc0] sm:$0xff]
        %v390 = vld [vmem:[%s2 + $0xc8] sm:$0xff]
        %v391 = vld [vmem:[%s2 + $0xd0] sm:$0xff]
        %v392 = vld [vmem:[%s2 + $0xd8] sm:$0xff]
        %v393 = vld [vmem:[%s2 + $0xe0] sm:$0xff]
        %v394 = vld [vmem:[%s2 + $0xe8] sm:$0xff]
        %v395 = vld [vmem:[%s2 + $0xf0] sm:$0xff]
        %v396 = vld [vmem:[%s2 + $0xf8] sm:$0xff]
        %v397 = vld [vmem:[%s2 + $0x100] sm:$0xff]
        %v398 = vld [vmem:[%s2 + $0x108] sm:$0xff]
        %v399 = vld [vmem:[%s2 + $0x110] sm:$0xff]
        %v400 = vld [vmem:[%s2 + $0x118] sm:$0xff]
        %v401 = vld [vmem:[%s2 + $0x120] sm:$0xff]
        %v402 = vld [vmem:[%s2 + $0x128] sm:$0xff]
        %v403 = vld [vmem:[%s2 + $0x130] sm:$0xff]
        %v404 = vld [vmem:[%s2 + $0x138] sm:$0xff]
        %v405 = vld [vmem:[%s2 + $0x140] sm:$0xff]
        %v406 = vld [vmem:[%s2 + $0x148] sm:$0xff]
        %v407 = vld [vmem:[%s2 + $0x150] sm:$0xff]
        %v408 = vld [vmem:[%s2 + $0x158] sm:$0xff]
        %v409 = vld [vmem:[%s2 + $0x160] sm:$0xff]
        %v410 = vld [vmem:[%s2 + $0x168] sm:$0xff]
        %v411 = vld [vmem:[%s2 + $0x170] sm:$0xff]
        %v412 = vld [vmem:[%s2 + $0x178] sm:$0xff]
        %v413 = vld [vmem:[%s3] sm:$0x3]
        %v415 = vlaneseq
        %v416 = vshrl.u32 %v415, 7
        %v417 = vsub.s32 0, %v416
        %v418 = vrot.slane %v413, %v417
        %v419 = vlaneseq
        %v420 = vshrl.u32 %v419, 7
        %v421 = vsub.s32 1, %v420
        %v422 = vrot.slane %v413, %v421
        %v473 = vunpack.c.l.b16 %v365
        %v474 = vunpack.c.h.b16 %v365
        %v475 = vunpack.c.l.b16 %v366
        %v476 = vunpack.c.h.b16 %v366
        %v477 = vunpack.c.l.b16 %v367
        %v478 = vunpack.c.h.b16 %v367
        %v479 = vunpack.c.l.b16 %v368
        %v480 = vunpack.c.h.b16 %v368
        %v481 = vunpack.c.l.b16 %v369
        %v482 = vunpack.c.h.b16 %v369
        %v483 = vunpack.c.l.b16 %v370
        %v484 = vunpack.c.h.b16 %v370
        %v485 = vunpack.c.l.b16 %v371
        %v486 = vunpack.c.h.b16 %v371
        %v487 = vunpack.c.l.b16 %v372
        %v488 = vunpack.c.h.b16 %v372
        %v489 = vunpack.c.l.b16 %v373
        %v490 = vunpack.c.h.b16 %v373
        %v491 = vunpack.c.l.b16 %v374
        %v492 = vunpack.c.h.b16 %v374
        %v493 = vunpack.c.l.b16 %v375
        %v494 = vunpack.c.h.b16 %v375
        %v495 = vunpack.c.l.b16 %v376
        %v496 = vunpack.c.h.b16 %v376
        %v497 = vunpack.c.l.b16 %v377
        %v498 = vunpack.c.h.b16 %v377
        %v499 = vunpack.c.l.b16 %v378
        %v500 = vunpack.c.h.b16 %v378
        %v501 = vunpack.c.l.b16 %v379
        %v502 = vunpack.c.h.b16 %v379
        %v503 = vunpack.c.l.b16 %v380
        %v504 = vunpack.c.h.b16 %v380
        %v505 = vunpack.c.l.b16 %v381
        %v506 = vunpack.c.h.b16 %v381
        %v507 = vunpack.c.l.b16 %v382
        %v508 = vunpack.c.h.b16 %v382
        %v509 = vunpack.c.l.b16 %v383
        %v510 = vunpack.c.h.b16 %v383
        %v511 = vunpack.c.l.b16 %v384
        %v512 = vunpack.c.h.b16 %v384
        %v513 = vunpack.c.l.b16 %v385
        %v514 = vunpack.c.h.b16 %v385
        %v515 = vunpack.c.l.b16 %v386
        %v516 = vunpack.c.h.b16 %v386
        %v517 = vunpack.c.l.b16 %v387
        %v518 = vunpack.c.h.b16 %v387
        %v519 = vunpack.c.l.b16 %v388
        %v520 = vunpack.c.h.b16 %v388
        %v521 = vunpack.c.l.b16 %v389
        %v522 = vunpack.c.h.b16 %v389
        %v523 = vunpack.c.l.b16 %v390
        %v524 = vunpack.c.h.b16 %v390
        %v525 = vunpack.c.l.b16 %v391
        %v526 = vunpack.c.h.b16 %v391
        %v527 = vunpack.c.l.b16 %v392
        %v528 = vunpack.c.h.b16 %v392
        %v529 = vunpack.c.l.b16 %v393
        %v530 = vunpack.c.h.b16 %v393
        %v531 = vunpack.c.l.b16 %v394
        %v532 = vunpack.c.h.b16 %v394
        %v533 = vunpack.c.l.b16 %v395
        %v534 = vunpack.c.h.b16 %v395
        %v535 = vunpack.c.l.b16 %v396
        %v536 = vunpack.c.h.b16 %v396
        %v537 = vunpack.c.l.b16 %v397
        %v538 = vunpack.c.h.b16 %v397
        %v539 = vunpack.c.l.b16 %v398
        %v540 = vunpack.c.h.b16 %v398
        %v541 = vunpack.c.l.b16 %v399
        %v542 = vunpack.c.h.b16 %v399
        %v543 = vunpack.c.l.b16 %v400
        %v544 = vunpack.c.h.b16 %v400
        %v545 = vunpack.c.l.b16 %v401
        %v546 = vunpack.c.h.b16 %v401
        %v547 = vunpack.c.l.b16 %v402
        %v548 = vunpack.c.h.b16 %v402
        %v549 = vunpack.c.l.b16 %v403
        %v550 = vunpack.c.h.b16 %v403
        %v551 = vunpack.c.l.b16 %v404
        %v552 = vunpack.c.h.b16 %v404
        %v553 = vunpack.c.l.b16 %v405
        %v554 = vunpack.c.h.b16 %v405
        %v555 = vunpack.c.l.b16 %v406
        %v556 = vunpack.c.h.b16 %v406
        %v557 = vunpack.c.l.b16 %v407
        %v558 = vunpack.c.h.b16 %v407
        %v559 = vunpack.c.l.b16 %v408
        %v560 = vunpack.c.h.b16 %v408
        %v561 = vunpack.c.l.b16 %v409
        %v562 = vunpack.c.h.b16 %v409
        %v563 = vunpack.c.l.b16 %v410
        %v564 = vunpack.c.h.b16 %v410
        %v565 = vunpack.c.l.b16 %v411
        %v566 = vunpack.c.h.b16 %v411
        %v567 = vunpack.c.l.b16 %v412
        %v568 = vunpack.c.h.b16 %v412
        %v569 = vpack.c.b16 %v475, %v473
        %v570 = vpack.c.b16 %v476, %v474
        %v571 = vpack.c.b16 %v479, %v477
        %v572 = vpack.c.b16 %v480, %v478
        %v573 = vpack.c.b16 %v483, %v481
        %v574 = vpack.c.b16 %v484, %v482
        %v575 = vpack.c.b16 %v487, %v485
        %v576 = vpack.c.b16 %v488, %v486
        %v577 = vpack.c.b16 %v491, %v489
        %v578 = vpack.c.b16 %v492, %v490
        %v579 = vpack.c.b16 %v495, %v493
        %v580 = vpack.c.b16 %v496, %v494
        %v581 = vpack.c.b16 %v499, %v497
        %v582 = vpack.c.b16 %v500, %v498
        %v583 = vpack.c.b16 %v503, %v501
        %v584 = vpack.c.b16 %v504, %v502
        %v585 = vpack.c.b16 %v507, %v505
        %v586 = vpack.c.b16 %v508, %v506
        %v587 = vpack.c.b16 %v511, %v509
        %v588 = vpack.c.b16 %v512, %v510
        %v589 = vpack.c.b16 %v515, %v513
        %v590 = vpack.c.b16 %v516, %v514
        %v591 = vpack.c.b16 %v519, %v517
        %v592 = vpack.c.b16 %v520, %v518
        %v593 = vpack.c.b16 %v523, %v521
        %v594 = vpack.c.b16 %v524, %v522
        %v595 = vpack.c.b16 %v527, %v525
        %v596 = vpack.c.b16 %v528, %v526
        %v597 = vpack.c.b16 %v531, %v529
        %v598 = vpack.c.b16 %v532, %v530
        %v599 = vpack.c.b16 %v535, %v533
        %v600 = vpack.c.b16 %v536, %v534
        %v601 = vpack.c.b16 %v539, %v537
        %v602 = vpack.c.b16 %v540, %v538
        %v603 = vpack.c.b16 %v543, %v541
        %v604 = vpack.c.b16 %v544, %v542
        %v605 = vpack.c.b16 %v547, %v545
        %v606 = vpack.c.b16 %v548, %v546
        %v607 = vpack.c.b16 %v551, %v549
        %v608 = vpack.c.b16 %v552, %v550
        %v609 = vpack.c.b16 %v555, %v553
        %v610 = vpack.c.b16 %v556, %v554
        %v611 = vpack.c.b16 %v559, %v557
        %v612 = vpack.c.b16 %v560, %v558
        %v613 = vpack.c.b16 %v563, %v561
        %v614 = vpack.c.b16 %v564, %v562
        %v615 = vpack.c.b16 %v567, %v565
        %v616 = vpack.c.b16 %v568, %v566
        %665 = vmatprep.subr.bf16.mxu0 %v570
        %666 = vmatpush1.bf16.msra.mxu0 %v569
        %667 = vmatprep.subr.bf16.mxu0 %v572
        %668 = vmatpush1.bf16.msra.mxu0 %v571
        %669 = vmatprep.subr.bf16.mxu0 %v574
        %670 = vmatpush1.bf16.msra.mxu0 %v573
        %671 = vmatprep.subr.bf16.mxu0 %v576
        %672 = vmatpush1.bf16.msra.mxu0 %v575
        %673 = vmatprep.subr.bf16.mxu0 %v578
        %674 = vmatpush1.bf16.msra.mxu0 %v577
        %675 = vmatprep.subr.bf16.mxu0 %v580
        %676 = vmatpush1.bf16.msra.mxu0 %v579
        %677 = vmatprep.subr.bf16.mxu0 %v582
        %678 = vmatpush1.bf16.msra.mxu0 %v581
        %679 = vmatprep.subr.bf16.mxu0 %v584
        %680 = vmatpush1.bf16.msra.mxu0 %v583
        %681 = vmatprep.subr.bf16.mxu0 %v586
        %682 = vmatpush1.bf16.msra.mxu0 %v585
        %683 = vmatprep.subr.bf16.mxu0 %v588
        %684 = vmatpush1.bf16.msra.mxu0 %v587
        %685 = vmatprep.subr.bf16.mxu0 %v590
        %686 = vmatpush1.bf16.msra.mxu0 %v589
        %687 = vmatprep.subr.bf16.mxu0 %v592
        %688 = vmatpush1.bf16.msra.mxu0 %v591
        %689 = vmatprep.subr.bf16.mxu0 %v594
        %690 = vmatpush1.bf16.msra.mxu0 %v593
        %691 = vmatprep.subr.bf16.mxu0 %v596
        %692 = vmatpush1.bf16.msra.mxu0 %v595
        %693 = vmatprep.subr.bf16.mxu0 %v598
        %694 = vmatpush1.bf16.msra.mxu0 %v597
        %695 = vmatprep.subr.bf16.mxu0 %v600
        %696 = vmatpush1.bf16.msra.mxu0 %v599
        %697 = vmatprep.mubr.bf16.mxu0 %v354
        %698 = vmatmul.mubr.bf16.gmra.mrb[0].mxu0 %v353
        %v699 = vpop.f32.mrb[0].mxu0
        %v700 = vadd.f32 %v418, %v699
        %v701 = vpop.f32.mrb[0].mxu0
        %v702 = vadd.f32 %v422, %v701
        %v703 = vpop.f32.mrb[0].mxu0
        %v704 = vadd.f32 %v418, %v703
        %v705 = vpop.f32.mrb[0].mxu0
        %v706 = vadd.f32 %v422, %v705
        %707 = vmatprep.mubr.bf16.mxu0 %v357
        %708 = vmatmul.mubr.bf16.gmra.mrb[0].mxu0 %v356
        %v709 = vpop.f32.mrb[0].mxu0
        %v710 = vadd.f32 %v418, %v709
        %v711 = vpop.f32.mrb[0].mxu0
        %v712 = vadd.f32 %v422, %v711
        %v713 = vpop.f32.mrb[0].mxu0
        %v714 = vadd.f32 %v418, %v713
        %v715 = vpop.f32.mrb[0].mxu0
        %v716 = vadd.f32 %v422, %v715
        %717 = vmatprep.mubr.bf16.mxu0 %v360
        %718 = vmatmul.mubr.bf16.gmra.mrb[0].mxu0 %v359
        %v719 = vpop.f32.mrb[0].mxu0
        %v720 = vadd.f32 %v418, %v719
        %v721 = vpop.f32.mrb[0].mxu0
        %v722 = vadd.f32 %v422, %v721
        %v723 = vpop.f32.mrb[0].mxu0
        %v724 = vadd.f32 %v418, %v723
        %v725 = vpop.f32.mrb[0].mxu0
        %v726 = vadd.f32 %v422, %v725
        %727 = vmatprep.mubr.bf16.mxu0 %v363
        %728 = vmatmul.mubr.bf16.gmra.mrb[0].mxu0 %v362
        %v729 = vpop.f32.mrb[0].mxu0
        %v730 = vadd.f32 %v418, %v729
        %v731 = vpop.f32.mrb[0].mxu0
        %v732 = vadd.f32 %v422, %v731
        %v733 = vpop.f32.mrb[0].mxu0
        %v734 = vadd.f32 %v418, %v733
        %v735 = vpop.f32.mrb[0].mxu0
        %v736 = vadd.f32 %v422, %v735
        %737 = vdwg.mxu0
        %738 = vmatprep.subr.bf16.mxu0 %v602
        %739 = vmatpush1.bf16.msra.mxu0 %v601
        %740 = vmatprep.subr.bf16.mxu0 %v604
        %741 = vmatpush1.bf16.msra.mxu0 %v603
        %742 = vmatprep.subr.bf16.mxu0 %v606
        %743 = vmatpush1.bf16.msra.mxu0 %v605
        %744 = vmatprep.subr.bf16.mxu0 %v608
        %745 = vmatpush1.bf16.msra.mxu0 %v607
        %746 = vmatprep.subr.bf16.mxu0 %v610
        %747 = vmatpush1.bf16.msra.mxu0 %v609
        %748 = vmatprep.subr.bf16.mxu0 %v612
        %749 = vmatpush1.bf16.msra.mxu0 %v611
        %750 = vmatprep.subr.bf16.mxu0 %v614
        %751 = vmatpush1.bf16.msra.mxu0 %v613
        %752 = vmatprep.subr.bf16.mxu0 %v616
        %753 = vmatpush1.bf16.msra.mxu0 %v615
        %754 = vmatprep.subr.bf16.mxu0 0
        %755 = vmatpush1.bf16.msra.mxu0 0
        %756 = vmatprep.subr.bf16.mxu0 0
        %757 = vmatpush1.bf16.msra.mxu0 0
        %758 = vmatprep.subr.bf16.mxu0 0
        %759 = vmatpush1.bf16.msra.mxu0 0
        %760 = vmatprep.subr.bf16.mxu0 0
        %761 = vmatpush1.bf16.msra.mxu0 0
        %762 = vmatprep.subr.bf16.mxu0 0
        %763 = vmatpush1.bf16.msra.mxu0 0
        %764 = vmatprep.subr.bf16.mxu0 0
        %765 = vmatpush1.bf16.msra.mxu0 0
        %766 = vmatprep.subr.bf16.mxu0 0
        %767 = vmatpush1.bf16.msra.mxu0 0
        %768 = vmatprep.subr.bf16.mxu0 0
        %769 = vmatpush1.bf16.msra.mxu0 0
        %770 = vmatprep.mubr.bf16.mxu0 0
        %771 = vmatmul.mubr.bf16.gmra.mrb[0].mxu0 %v355
        %v772 = vpop.f32.mrb[0].mxu0
        %v773 = vadd.f32 %v700, %v772
        %v774 = vpop.f32.mrb[0].mxu0
        %v775 = vadd.f32 %v702, %v774
        %v776 = vpop.f32.mrb[0].mxu0
        %v777 = vadd.f32 %v704, %v776
        %v778 = vpop.f32.mrb[0].mxu0
        %v779 = vadd.f32 %v706, %v778
        %780 = vmatprep.mubr.bf16.mxu0 0
        %781 = vmatmul.mubr.bf16.gmra.mrb[0].mxu0 %v358
        %v782 = vpop.f32.mrb[0].mxu0
        %v783 = vadd.f32 %v710, %v782
        %v784 = vpop.f32.mrb[0].mxu0
        %v785 = vadd.f32 %v712, %v784
        %v786 = vpop.f32.mrb[0].mxu0
        %v787 = vadd.f32 %v714, %v786
        %v788 = vpop.f32.mrb[0].mxu0
        %v789 = vadd.f32 %v716, %v788
        %790 = vmatprep.mubr.bf16.mxu0 0
        %791 = vmatmul.mubr.bf16.gmra.mrb[0].mxu0 %v361
        %v792 = vpop.f32.mrb[0].mxu0
        %v793 = vadd.f32 %v720, %v792
        %v794 = vpop.f32.mrb[0].mxu0
        %v795 = vadd.f32 %v722, %v794
        %v796 = vpop.f32.mrb[0].mxu0
        %v797 = vadd.f32 %v724, %v796
        %v798 = vpop.f32.mrb[0].mxu0
        %v799 = vadd.f32 %v726, %v798
        %800 = vmatprep.mubr.bf16.mxu0 0
        %801 = vmatmul.mubr.bf16.gmra.mrb[0].mxu0 %v364
        %v802 = vpop.f32.mrb[0].mxu0
        %v803 = vadd.f32 %v730, %v802
        %v804 = vpop.f32.mrb[0].mxu0
        %v805 = vadd.f32 %v732, %v804
        %v806 = vpop.f32.mrb[0].mxu0
        %v807 = vadd.f32 %v734, %v806
        %v808 = vpop.f32.mrb[0].mxu0
        %v809 = vadd.f32 %v736, %v808
        %810 = vdwg.mxu0
        %v811 = vmax.f32 %v773, 0.0
        %v812 = vmax.f32 %v775, 0.0
        %v813 = vmax.f32 %v777, 0.0
        %v814 = vmax.f32 %v779, 0.0
        %v815 = vmax.f32 %v783, 0.0
        %v816 = vmax.f32 %v785, 0.0
        %v817 = vmax.f32 %v787, 0.0
        %v818 = vmax.f32 %v789, 0.0
        %v819 = vmax.f32 %v793, 0.0
        %v820 = vmax.f32 %v795, 0.0
        %v821 = vmax.f32 %v797, 0.0
        %v822 = vmax.f32 %v799, 0.0
        %v823 = vmax.f32 %v803, 0.0
        %v824 = vmax.f32 %v805, 0.0
        %v825 = vmax.f32 %v807, 0.0
        %v826 = vmax.f32 %v809, 0.0
        %827 = vst [vmem:[%s230] sm:$0xff] %v811
        %828 = vst [vmem:[%s230 + $0x8] sm:$0xff] %v812
        %829 = vst [vmem:[%s230 + $0x10] sm:$0xff] %v813
        %830 = vst [vmem:[%s230 + $0x18] sm:$0xff] %v814
        %831 = vst [vmem:[%s230 + $0x20] sm:$0xff] %v815
        %832 = vst [vmem:[%s230 + $0x28] sm:$0xff] %v816
        %833 = vst [vmem:[%s230 + $0x30] sm:$0xff] %v817
        %834 = vst [vmem:[%s230 + $0x38] sm:$0xff] %v818
        %835 = vst [vmem:[%s230 + $0x40] sm:$0xff] %v819
        %836 = vst [vmem:[%s230 + $0x48] sm:$0xff] %v820
        %837 = vst [vmem:[%s230 + $0x50] sm:$0xff] %v821
        %838 = vst [vmem:[%s230 + $0x58] sm:$0xff] %v822
        %839 = vst [vmem:[%s230 + $0x60] sm:$0xff] %v823
        %840 = vst [vmem:[%s230 + $0x68] sm:$0xff] %v824
        %841 = vst [vmem:[%s230 + $0x70] sm:$0xff] %v825
        %842 = vst [vmem:[%s230 + $0x78] sm:$0xff] %v826
        %s843 = sand.u32 %s136, 1
        %s844 = scalar_lea.sflag [#allocation3], %s843
        %s845 = sand.u32 %s136, 1
        %s846 = smul.addr %s845, 128
        %s847 = scalar_lea.vmem [#allocation2], %s846
        // Predicated region
        $region37: #{stn_forward.7} parent=35 // pred_check
          %p848 = pneg %p146
        $region38: #{stn_forward.7} parent=35 // pred_check_branch
          %850 = sbr.rel (%p848) target = $region40
        $region39: #{stn_forward.7} parent=35 // pred_region
          %s851 = smul.u32 8, %s23
          %s853 = ssub.s32 2048, 2048
          %854 = vsyncadd %s844, %s853
          %s855 = smul.addr %s851, 2
          %s856 = smul.addr %s22, 16
          %s857 = sadd.s32 %s855, %s856
          %s858 = smul.addr %s857, 128
          %s859 = scalar_lea.hbm %s4, %s858
          %s860 = sshll.u32 %s847, 4
          %s861 = int_to_ptr.vmem [resolvable:$true] %s860
          %866 = dma.vmem_to_hbm [thread:$0]  %s861, 2048, %s859, %s844, 256, 256, 16
        $region40: #{stn_forward.7} parent=35 // pred_fallthru
          _
      $region36: #{stn_forward.7} parent=5 // pred_fallthru
        _
      %p867 = scmp.le.s32.totalorder 2, %s13
      // Predicated region
      $region41: #{stn_forward.7} parent=5 // pred_check
        %p868 = pneg %p867
      $region42: #{stn_forward.7} parent=5 // pred_check_branch
        %870 = sbr.rel (%p868) target = $region44
      $region43: #{stn_forward.7} parent=5 // pred_region
        %s871 = ssub.s32 %s13, 2
        // Predicated region
        $region45: #{stn_forward.7} parent=43 // pred_check
          %p872 = pneg %p152
        $region46: #{stn_forward.7} parent=43 // pred_check_branch
          %874 = sbr.rel (%p872) target = $region48
        $region47: #{stn_forward.7} parent=43 // pred_region
          %s875 = sand.u32 %s137, 1
          %s876 = scalar_lea.sflag [#allocation3], %s875
          %s877 = sand.u32 %s137, 1
          %s878 = smul.addr %s877, 128
          %s879 = scalar_lea.vmem [#allocation2], %s878
          %880 = dma.done %s876, 2048
        $region48: #{stn_forward.7} parent=43 // pred_fallthru
          _
      $region44: #{stn_forward.7} parent=5 // pred_fallthru
        _
    $region6: #{stn_forward.7} parent=1 // loop_footer
      %s17 = sadd.s32 1, %s13
    $region7: #{stn_forward.7} parent=1 // loop_footer_branch
      %12 = sbr.rel target = $region3
    $region8: #{stn_forward.7} parent=1 // loop_exit
      _
    %881 = vsyncpa [#allocation3], 1
    %s882 = scalar_lea.sflag [#allocation3], 1
    %883 = vsyncpa %s882, 1

// kernel: stn_forward.5
$region0: #{stn_forward.5}
  #allocation0 [shape = 'u32[]', space=smem, size = 0x4, offset = 0x4, fixed_abs, tag = 'smem constant byte address 0x4 - core index']
  #allocation1 [shape = 'u32[144,128]{1,0:T(1,128)}', space=vmem, size = 0x12000, scoped, tag = 'internal scratch']
  %s0 = inlined_call_operand.vmem [shape: bf16[4,10,10,384], index: 0, kind: input, shape index: {}]
  %s1 = inlined_call_operand.vmem [shape: bf16[9,384,384], index: 1, kind: input, shape index: {}]
  %s2 = inlined_call_operand.vmem [shape: f32[1,384], index: 2, kind: input, shape index: {}]
  %s3 = inlined_call_operand.vmem [shape: f32[4,1,384], index: 3, kind: output, shape index: {}]
  %s4 = sld [smem:[#allocation0]]
  $region45: #{stn_forward.5} parent=0
    _
  %s6 = ssub.s32 1, %s4
  %s7 = scalar_select 0, %s6, %s4
  loop: start=0, step=1, limit=6
  $region2: #{stn_forward.5} parent=0 // loop_pre_header
    _
  $region3: #{stn_forward.5} parent=0 // loop_header
    %s9 = sphi 0, %s13
    %p10 = scmp.ge.s32.totalorder %s9, 6
    %s19 = sphi 0, %s21
    %s22 = sphi 0, %s19
    %s23 = sphi 0, %s22
    %s39 = sphi 0, %s23
    %s43 = sphi 0, %s43
    %s45 = sphi 0, %s43
    %s46 = sphi 0, %s45
    %s60 = sphi 0, %s46
    %s64 = sphi 0, %s64
    %s66 = sphi 0, %s64
    %s67 = sphi 0, %s66
    %s81 = sphi 0, %s67
    %s87 = sphi 0, %s89
    %s90 = sphi 0, %s87
    %s91 = sphi 0, %s90
    %s107 = sphi 0, %s91
  $region4: #{stn_forward.5} parent=0 // loop_header_branch
    %12 = sbr.rel (%p10) target = $region8
  $region5: #{stn_forward.5} parent=0 // loop_body
    %s14 = ssub.s32 %s9, 1
    %s15 = ssub.s32 %s9, 2
    %s16 = sadd.s32 %s9, 1
    %s17 = ssub.s32 %s9, %s16
    %p18 = scmp.eq.s32.totalorder %s17, 0
    %s20 = sadd.s32 %s19, 1
    %s21 = scalar_select %p18, %s19, %s20
    %p24 = pneg %p18
    %p25 = scmp.eq.s32.totalorder %s9, 3
    %p26 = por %p24, %p25
    %p27 = scmp.ne.s32.totalorder %s19, %s22
    %p28 = scmp.eq.s32.totalorder %s9, 0
    %p29 = por %p27, %p28
    %p30 = scmp.ne.s32.totalorder %s19, %s22
    %p31 = scmp.eq.s32.totalorder %s14, 3
    %p32 = por %p30, %p31
    %p33 = scmp.ne.s32.totalorder %s22, %s23
    %p34 = scmp.eq.s32.totalorder %s14, 0
    %p35 = por %p33, %p34
    %p36 = scmp.ne.s32.totalorder %s22, %s23
    %p37 = scmp.eq.s32.totalorder %s15, 3
    %p38 = por %p36, %p37
    %p40 = scmp.ne.s32.totalorder %s23, %s39
    %p41 = scmp.eq.s32.totalorder %s15, 0
    %p42 = por %p40, %p41
    %s44 = sadd.s32 %s43, 1
    %p47 = scmp.eq.s32.totalorder %s9, 3
    %p48 = scmp.ne.s32.totalorder %s43, %s45
    %p49 = scmp.eq.s32.totalorder %s9, 0
    %p50 = por %p48, %p49
    %p51 = scmp.ne.s32.totalorder %s43, %s45
    %p52 = scmp.eq.s32.totalorder %s14, 3
    %p53 = por %p51, %p52
    %p54 = scmp.ne.s32.totalorder %s45, %s46
    %p55 = scmp.eq.s32.totalorder %s14, 0
    %p56 = por %p54, %p55
    %p57 = scmp.ne.s32.totalorder %s45, %s46
    %p58 = scmp.eq.s32.totalorder %s15, 3
    %p59 = por %p57, %p58
    %p61 = scmp.ne.s32.totalorder %s46, %s60
    %p62 = scmp.eq.s32.totalorder %s15, 0
    %p63 = por %p61, %p62
    %s65 = sadd.s32 %s64, 1
    %p68 = scmp.eq.s32.totalorder %s9, 3
    %p69 = scmp.ne.s32.totalorder %s64, %s66
    %p70 = scmp.eq.s32.totalorder %s9, 0
    %p71 = por %p69, %p70
    %p72 = scmp.ne.s32.totalorder %s64, %s66
    %p73 = scmp.eq.s32.totalorder %s14, 3
    %p74 = por %p72, %p73
    %p75 = scmp.ne.s32.totalorder %s66, %s67
    %p76 = scmp.eq.s32.totalorder %s14, 0
    %p77 = por %p75, %p76
    %p78 = scmp.ne.s32.totalorder %s66, %s67
    %p79 = scmp.eq.s32.totalorder %s15, 3
    %p80 = por %p78, %p79
    %p82 = scmp.ne.s32.totalorder %s67, %s81
    %p83 = scmp.eq.s32.totalorder %s15, 0
    %p84 = por %p82, %p83
    %s85 = ssub.s32 %s9, %s16
    %p86 = scmp.eq.s32.totalorder %s85, 0
    %s88 = sadd.s32 %s87, 1
    %s89 = scalar_select %p86, %s87, %s88
    %p92 = pneg %p86
    %p93 = scmp.eq.s32.totalorder %s9, 3
    %p94 = por %p92, %p93
    %p95 = scmp.ne.s32.totalorder %s87, %s90
    %p96 = scmp.eq.s32.totalorder %s9, 0
    %p97 = por %p95, %p96
    %p98 = scmp.ne.s32.totalorder %s87, %s90
    %p99 = scmp.eq.s32.totalorder %s14, 3
    %p100 = por %p98, %p99
    %p101 = scmp.ne.s32.totalorder %s90, %s91
    %p102 = scmp.eq.s32.totalorder %s14, 0
    %p103 = por %p101, %p102
    %p104 = scmp.ne.s32.totalorder %s90, %s91
    %p105 = scmp.eq.s32.totalorder %s15, 3
    %p106 = por %p104, %p105
    %p108 = scmp.ne.s32.totalorder %s91, %s107
    %p109 = scmp.eq.s32.totalorder %s15, 0
    %p110 = por %p108, %p109
    %p111 = scmp.le.s32.totalorder 1, %s9
    %p112 = scmp.lt.s32.totalorder %s9, 5
    %p113 = pnand %p111, %p112
    %p114 = pneg %p113
    // Predicated region
    $region9: #{stn_forward.5} parent=5 // pred_check
      _
    $region10: #{stn_forward.5} parent=5 // pred_check_branch
      %116 = sbr.rel (%p113) target = $region12
    $region11: #{stn_forward.5} parent=5 // pred_region
      %s117 = ssub.s32 %s9, 1
      // Predicated region
      $region13: #{stn_forward.5} parent=11 // pred_check
        %p118 = pneg %p56
      $region14: #{stn_forward.5} parent=11 // pred_check_branch
        %120 = sbr.rel (%p118) target = $region16
      $region15: #{stn_forward.5} parent=11 // pred_region
        _
      $region16: #{stn_forward.5} parent=11 // pred_fallthru
        _
      // Predicated region
      $region17: #{stn_forward.5} parent=11 // pred_check
        %p121 = pneg %p77
      $region18: #{stn_forward.5} parent=11 // pred_check_branch
        %123 = sbr.rel (%p121) target = $region20
      $region19: #{stn_forward.5} parent=11 // pred_region
        _
      $region20: #{stn_forward.5} parent=11 // pred_fallthru
        _
    $region12: #{stn_forward.5} parent=5 // pred_fallthru
      _
    %p124 = scmp.lt.s32.totalorder %s9, 4
    // Predicated region
    $region21: #{stn_forward.5} parent=5 // pred_check
      %p125 = pneg %p124
    $region22: #{stn_forward.5} parent=5 // pred_check_branch
      %127 = sbr.rel (%p125) target = $region24
    $region23: #{stn_forward.5} parent=5 // pred_region
      // Predicated region
      $region25: #{stn_forward.5} parent=23 // pred_check
        %p128 = pneg %p29
      $region26: #{stn_forward.5} parent=23 // pred_check_branch
        %130 = sbr.rel (%p128) target = $region28
      $region27: #{stn_forward.5} parent=23 // pred_region
        %p131 = scmp.lt.s32.totalorder %s9, 3
        %s132 = scalar_select %p131, %s9, 3
        %s133 = smul.addr %s132, 60
        %s134 = smul.addr %s133, 4
        %s135 = scalar_lea.vmem %s0, %s134
      $region28: #{stn_forward.5} parent=23 // pred_fallthru
        _
    $region24: #{stn_forward.5} parent=5 // pred_fallthru
      _
    %p136 = scmp.le.s32.totalorder 1, %s9
    %p137 = scmp.lt.s32.totalorder %s9, 5
    %p138 = pnand %p136, %p137
    %p139 = pneg %p138
    // Predicated region
    $region29: #{stn_forward.5} parent=5 // pred_check
      _
    $region30: #{stn_forward.5} parent=5 // pred_check_branch
      %141 = sbr.rel (%p138) target = $region32
    $region31: #{stn_forward.5} parent=5 // pred_region
      %s142 = ssub.s32 %s9, 1
      %p143 = scmp.lt.s32.totalorder %s14, 3
      %s144 = scalar_select %p143, %s14, 3
      %s145 = smul.addr %s144, 60
      %s146 = smul.addr %s145, 4
      %s147 = scalar_lea.vmem %s0, %s146
      %p148 = pneg %p35
      %p149 = pneg %p32
      %p150 = pneg %p56
      %p151 = pneg %p53
      %p152 = pneg %p77
      %p153 = pneg %p74
      %p154 = pneg %p103
      %p155 = pneg %p100
      %p156 = scmp.lt.s32.totalorder %s14, 3
      %s157 = scalar_select %p156, %s14, 3
      %s158 = smul.addr %s157, 3
      %s159 = scalar_lea.vmem %s3, %s158
      %p160 = scmp.lt.s32.totalorder %s14, 3
      %s161 = scalar_select %p160, %s14, 3
      %s162 = smul.addr %s161, 60
      %s163 = smul.addr %s162, 4
      %s164 = scalar_lea.vmem %s0, %s163
      %p165 = scmp.lt.s32.totalorder %s14, 3
      %s166 = scalar_select %p165, %s14, 3
      %s167 = smul.addr %s166, 3
      %s168 = scalar_lea.vmem %s3, %s167
      %v170 = vld [vmem:[%s164] sm:$0xff]
      %v171 = vld [vmem:[%s164 + $0x8] sm:$0xf]
      %v172 = vld [vmem:[%s164 + $0xc] sm:$0x11]
      %v173 = vld [vmem:[%s164 + $0x14] sm:$0x1]
      %v174 = vld [vmem:[%s164 + $0x18] sm:$0xff]
      %v175 = vld [vmem:[%s164 + $0x20] sm:$0xf]
      %v176 = vld [vmem:[%s164 + $0x24] sm:$0x11]
      %v177 = vld [vmem:[%s164 + $0x2c] sm:$0x1]
      %v178 = vld [vmem:[%s164 + $0x30] sm:$0xff]
      %v179 = vld [vmem:[%s164 + $0x38] sm:$0xf]
      %v180 = vld [vmem:[%s164 + $0x3c] sm:$0x11]
      %v181 = vld [vmem:[%s164 + $0x44] sm:$0x1]
      %v182 = vld [vmem:[%s164 + $0x48] sm:$0xff]
      %v183 = vld [vmem:[%s164 + $0x50] sm:$0xf]
      %v184 = vld [vmem:[%s164 + $0x54] sm:$0x11]
      %v185 = vld [vmem:[%s164 + $0x5c] sm:$0x1]
      %v186 = vld [vmem:[%s164 + $0x60] sm:$0xff]
      %v187 = vld [vmem:[%s164 + $0x68] sm:$0xf]
      %v188 = vld [vmem:[%s164 + $0x6c] sm:$0x11]
      %v189 = vld [vmem:[%s164 + $0x74] sm:$0x1]
      %v190 = vld [vmem:[%s164 + $0x78] sm:$0xff]
      %v191 = vld [vmem:[%s164 + $0x80] sm:$0xf]
      %v192 = vld [vmem:[%s164 + $0x84] sm:$0x11]
      %v193 = vld [vmem:[%s164 + $0x8c] sm:$0x1]
      %v194 = vld [vmem:[%s164 + $0x90] sm:$0xff]
      %v195 = vld [vmem:[%s164 + $0x98] sm:$0xf]
      %v196 = vld [vmem:[%s164 + $0x9c] sm:$0x11]
      %v197 = vld [vmem:[%s164 + $0xa4] sm:$0x1]
      %v198 = vld [vmem:[%s164 + $0xa8] sm:$0xff]
      %v199 = vld [vmem:[%s164 + $0xb0] sm:$0xf]
      %v200 = vld [vmem:[%s164 + $0xb4] sm:$0x11]
      %v201 = vld [vmem:[%s164 + $0xbc] sm:$0x1]
      %v202 = vld [vmem:[%s164 + $0xc0] sm:$0xff]
      %v203 = vld [vmem:[%s164 + $0xc8] sm:$0xf]
      %v204 = vld [vmem:[%s164 + $0xcc] sm:$0x11]
      %v205 = vld [vmem:[%s164 + $0xd4] sm:$0x1]
      %v206 = vld [vmem:[%s164 + $0xd8] sm:$0xff]
      %v207 = vld [vmem:[%s164 + $0xe0] sm:$0xf]
      %v208 = vld [vmem:[%s164 + $0xe4] sm:$0x11]
      %v209 = vld [vmem:[%s164 + $0xec] sm:$0x1]
      %v210 = vld [vmem:[%s1] sm:$0xff]
      %v211 = vld [vmem:[%s1 + $0x8] sm:$0xf]
      %v212 = vld [vmem:[%s1 + $0xc] sm:$0xff]
      %v213 = vld [vmem:[%s1 + $0x14] sm:$0xf]
      %v214 = vld [vmem:[%s1 + $0x18] sm:$0xff]
      %v215 = vld [vmem:[%s1 + $0x20] sm:$0xf]
      %v216 = vld [vmem:[%s1 + $0x24] sm:$0xff]
      %v217 = vld [vmem:[%s1 + $0x2c] sm:$0xf]
      %v218 = vld [vmem:[%s1 + $0x30] sm:$0xff]
      %v219 = vld [vmem:[%s1 + $0x38] sm:$0xf]
      %v220 = vld [vmem:[%s1 + $0x3c] sm:$0xff]
      %v221 = vld [vmem:[%s1 + $0x44] sm:$0xf]
      %v222 = vld [vmem:[%s1 + $0x48] sm:$0xff]
      %v223 = vld [vmem:[%s1 + $0x50] sm:$0xf]
      %v224 = vld [vmem:[%s1 + $0x54] sm:$0xff]
      %v225 = vld [vmem:[%s1 + $0x5c] sm:$0xf]
      %v226 = vld [vmem:[%s1 + $0x60] sm:$0xff]
      %v227 = vld [vmem:[%s1 + $0x68] sm:$0xf]
      %v228 = vld [vmem:[%s1 + $0x6c] sm:$0xff]
      %v229 = vld [vmem:[%s1 + $0x74] sm:$0xf]
      %v230 = vld [vmem:[%s1 + $0x78] sm:$0xff]
      %v231 = vld [vmem:[%s1 + $0x80] sm:$0xf]
      %v232 = vld [vmem:[%s1 + $0x84] sm:$0xff]
      %v233 = vld [vmem:[%s1 + $0x8c] sm:$0xf]
      %v234 = vld [vmem:[%s1 + $0x90] sm:$0xff]
      %v235 = vld [vmem:[%s1 + $0x98] sm:$0xf]
      %v236 = vld [vmem:[%s1 + $0x9c] sm:$0xff]
      %v237 = vld [vmem:[%s1 + $0xa4] sm:$0xf]
      %v238 = vld [vmem:[%s1 + $0xa8] sm:$0xff]
      %v239 = vld [vmem:[%s1 + $0xb0] sm:$0xf]
      %v240 = vld [vmem:[%s1 + $0xb4] sm:$0xff]
      %v241 = vld [vmem:[%s1 + $0xbc] sm:$0xf]
      %v242 = vld [vmem:[%s1 + $0xc0] sm:$0xff]
      %v243 = vld [vmem:[%s1 + $0xc8] sm:$0xf]
      %v244 = vld [vmem:[%s1 + $0xcc] sm:$0xff]
      %v245 = vld [vmem:[%s1 + $0xd4] sm:$0xf]
      %v246 = vld [vmem:[%s1 + $0xd8] sm:$0xff]
      %v247 = vld [vmem:[%s1 + $0xe0] sm:$0xf]
      %v248 = vld [vmem:[%s1 + $0xe4] sm:$0xff]
      %v249 = vld [vmem:[%s1 + $0xec] sm:$0xf]
      %v250 = vld [vmem:[%s1 + $0xf0] sm:$0xff]
      %v251 = vld [vmem:[%s1 + $0xf8] sm:$0xf]
      %v252 = vld [vmem:[%s1 + $0xfc] sm:$0xff]
      %v253 = vld [vmem:[%s1 + $0x104] sm:$0xf]
      %v254 = vld [vmem:[%s1 + $0x108] sm:$0xff]
      %v255 = vld [vmem:[%s1 + $0x110] sm:$0xf]
      %v256 = vld [vmem:[%s1 + $0x114] sm:$0xff]
      %v257 = vld [vmem:[%s1 + $0x11c] sm:$0xf]
      %v258 = vld [vmem:[%s1 + $0x120] sm:$0xff]
      %v259 = vld [vmem:[%s1 + $0x128] sm:$0xf]
      %v260 = vld [vmem:[%s1 + $0x12c] sm:$0xff]
      %v261 = vld [vmem:[%s1 + $0x134] sm:$0xf]
      %v262 = vld [vmem:[%s1 + $0x138] sm:$0xff]
      %v263 = vld [vmem:[%s1 + $0x140] sm:$0xf]
      %v264 = vld [vmem:[%s1 + $0x144] sm:$0xff]
      %v265 = vld [vmem:[%s1 + $0x14c] sm:$0xf]
      %v266 = vld [vmem:[%s1 + $0x150] sm:$0xff]
      %v267 = vld [vmem:[%s1 + $0x158] sm:$0xf]
      %v268 = vld [vmem:[%s1 + $0x15c] sm:$0xff]
      %v269 = vld [vmem:[%s1 + $0x164] sm:$0xf]
      %v270 = vld [vmem:[%s1 + $0x168] sm:$0xff]
      %v271 = vld [vmem:[%s1 + $0x170] sm:$0xf]
      %v272 = vld [vmem:[%s1 + $0x174] sm:$0xff]
      %v273 = vld [vmem:[%s1 + $0x17c] sm:$0xf]
      %v274 = vld [vmem:[%s1 + $0x180] sm:$0xff]
      %v275 = vld [vmem:[%s1 + $0x188] sm:$0xf]
      %v276 = vld [vmem:[%s1 + $0x18c] sm:$0xff]
      %v277 = vld [vmem:[%s1 + $0x194] sm:$0xf]
      %v278 = vld [vmem:[%s1 + $0x198] sm:$0xff]
      %v279 = vld [vmem:[%s1 + $0x1a0] sm:$0xf]
      %v280 = vld [vmem:[%s1 + $0x1a4] sm:$0xff]
      %v281 = vld [vmem:[%s1 + $0x1ac] sm:$0xf]
      %v282 = vld [vmem:[%s1 + $0x1b0] sm:$0xff]
      %v283 = vld [vmem:[%s1 + $0x1b8] sm:$0xf]
      %v284 = vld [vmem:[%s1 + $0x1bc] sm:$0xff]
      %v285 = vld [vmem:[%s1 + $0x1c4] sm:$0xf]
      %v286 = vld [vmem:[%s1 + $0x1c8] sm:$0xff]
      %v287 = vld [vmem:[%s1 + $0x1d0] sm:$0xf]
      %v288 = vld [vmem:[%s1 + $0x1d4] sm:$0xff]
      %v289 = vld [vmem:[%s1 + $0x1dc] sm:$0xf]
      %v290 = vld [vmem:[%s1 + $0x1e0] sm:$0xff]
      %v291 = vld [vmem:[%s1 + $0x1e8] sm:$0xf]
      %v292 = vld [vmem:[%s1 + $0x1ec] sm:$0xff]
      %v293 = vld [vmem:[%s1 + $0x1f4] sm:$0xf]
      %v294 = vld [vmem:[%s1 + $0x1f8] sm:$0xff]
      %v295 = vld [vmem:[%s1 + $0x200] sm:$0xf]
      %v296 = vld [vmem:[%s1 + $0x204] sm:$0xff]
      %v297 = vld [vmem:[%s1 + $0x20c] sm:$0xf]
      %v298 = vld [vmem:[%s1 + $0x210] sm:$0xff]
      %v299 = vld [vmem:[%s1 + $0x218] sm:$0xf]
      %v300 = vld [vmem:[%s1 + $0x21c] sm:$0xff]
      %v301 = vld [vmem:[%s1 + $0x224] sm:$0xf]
      %v302 = vld [vmem:[%s1 + $0x228] sm:$0xff]
      %v303 = vld [vmem:[%s1 + $0x230] sm:$0xf]
      %v304 = vld [vmem:[%s1 + $0x234] sm:$0xff]
      %v305 = vld [vmem:[%s1 + $0x23c] sm:$0xf]
      %vm306 = vsmask.f32 3328
      %vm307 = vsmask.f32 7440
      %vm308 = vmor %vm306, %vm307
      %v310 = vshrl.u32 %v170, 16
      %v312 = vrot.slane %v310, 4
      %v313 = vshll.u32 %v170, 16
      %v315 = vrot.slane %v313, 5
      %v316 = vor.u32 %v312, %v315
      %v317 = vrot.slane %v316, 4
      %v319 = vshll.u32 %v172, 16
      %v321 = vrot.slane %v319, 5
      %v322 = vsel %vm308, %v317, %v321
      %v324 = vshrl.u32 %v171, 16
      %v326 = vrot.slane %v324, 4
      %v327 = vshll.u32 %v171, 16
      %v329 = vrot.slane %v327, 5
      %v330 = vor.u32 %v326, %v329
      %v331 = vrot.slane %v330, 4
      %v333 = vshll.u32 %v173, 16
      %v335 = vrot.slane %v333, 5
      %v336 = vsel %vm308, %v331, %v335
      %v338 = vshrl.u32 %v174, 16
      %v340 = vrot.slane %v338, 4
      %v341 = vshll.u32 %v174, 16
      %v343 = vrot.slane %v341, 5
      %v344 = vor.u32 %v340, %v343
      %v345 = vrot.slane %v344, 4
      %v347 = vshll.u32 %v176, 16
      %v349 = vrot.slane %v347, 5
      %v350 = vsel %vm308, %v345, %v349
      %v352 = vshrl.u32 %v175, 16
      %v354 = vrot.slane %v352, 4
      %v355 = vshll.u32 %v175, 16
      %v357 = vrot.slane %v355, 5
      %v358 = vor.u32 %v354, %v357
      %v359 = vrot.slane %v358, 4
      %v361 = vshll.u32 %v177, 16
      %v363 = vrot.slane %v361, 5
      %v364 = vsel %vm308, %v359, %v363
      %v366 = vshrl.u32 %v178, 16
      %v368 = vrot.slane %v366, 4
      %v369 = vshll.u32 %v178, 16
      %v371 = vrot.slane %v369, 5
      %v372 = vor.u32 %v368, %v371
      %v373 = vrot.slane %v372, 4
      %v375 = vshll.u32 %v180, 16
      %v377 = vrot.slane %v375, 5
      %v378 = vsel %vm308, %v373, %v377
      %v380 = vshrl.u32 %v179, 16
      %v382 = vrot.slane %v380, 4
      %v383 = vshll.u32 %v179, 16
      %v385 = vrot.slane %v383, 5
      %v386 = vor.u32 %v382, %v385
      %v387 = vrot.slane %v386, 4
      %v389 = vshll.u32 %v181, 16
      %v391 = vrot.slane %v389, 5
      %v392 = vsel %vm308, %v387, %v391
      %v394 = vshrl.u32 %v182, 16
      %v396 = vrot.slane %v394, 4
      %v397 = vshll.u32 %v182, 16
      %v399 = vrot.slane %v397, 5
      %v400 = vor.u32 %v396, %v399
      %v401 = vrot.slane %v400, 4
      %v403 = vshll.u32 %v184, 16
      %v405 = vrot.slane %v403, 5
      %v406 = vsel %vm308, %v401, %v405
      %v408 = vshrl.u32 %v183, 16
      %v410 = vrot.slane %v408, 4
      %v411 = vshll.u32 %v183, 16
      %v413 = vrot.slane %v411, 5
      %v414 = vor.u32 %v410, %v413
      %v415 = vrot.slane %v414, 4
      %v417 = vshll.u32 %v185, 16
      %v419 = vrot.slane %v417, 5
      %v420 = vsel %vm308, %v415, %v419
      %v422 = vshrl.u32 %v186, 16
      %v424 = vrot.slane %v422, 4
      %v425 = vshll.u32 %v186, 16
      %v427 = vrot.slane %v425, 5
      %v428 = vor.u32 %v424, %v427
      %v429 = vrot.slane %v428, 4
      %v431 = vshll.u32 %v188, 16
      %v433 = vrot.slane %v431, 5
      %v434 = vsel %vm308, %v429, %v433
      %v436 = vshrl.u32 %v187, 16
      %v438 = vrot.slane %v436, 4
      %v439 = vshll.u32 %v187, 16
      %v441 = vrot.slane %v439, 5
      %v442 = vor.u32 %v438, %v441
      %v443 = vrot.slane %v442, 4
      %v445 = vshll.u32 %v189, 16
      %v447 = vrot.slane %v445, 5
      %v448 = vsel %vm308, %v443, %v447
      %v450 = vshrl.u32 %v190, 16
      %v452 = vrot.slane %v450, 4
      %v453 = vshll.u32 %v190, 16
      %v455 = vrot.slane %v453, 5
      %v456 = vor.u32 %v452, %v455
      %v457 = vrot.slane %v456, 4
      %v459 = vshll.u32 %v192, 16
      %v461 = vrot.slane %v459, 5
      %v462 = vsel %vm308, %v457, %v461
      %v464 = vshrl.u32 %v191, 16
      %v466 = vrot.slane %v464, 4
      %v467 = vshll.u32 %v191, 16
      %v469 = vrot.slane %v467, 5
      %v470 = vor.u32 %v466, %v469
      %v471 = vrot.slane %v470, 4
      %v473 = vshll.u32 %v193, 16
      %v475 = vrot.slane %v473, 5
      %v476 = vsel %vm308, %v471, %v475
      %v478 = vshrl.u32 %v194, 16
      %v480 = vrot.slane %v478, 4
      %v481 = vshll.u32 %v194, 16
      %v483 = vrot.slane %v481, 5
      %v484 = vor.u32 %v480, %v483
      %v485 = vrot.slane %v484, 4
      %v487 = vshll.u32 %v196, 16
      %v489 = vrot.slane %v487, 5
      %v490 = vsel %vm308, %v485, %v489
      %v492 = vshrl.u32 %v195, 16
      %v494 = vrot.slane %v492, 4
      %v495 = vshll.u32 %v195, 16
      %v497 = vrot.slane %v495, 5
      %v498 = vor.u32 %v494, %v497
      %v499 = vrot.slane %v498, 4
      %v501 = vshll.u32 %v197, 16
      %v503 = vrot.slane %v501, 5
      %v504 = vsel %vm308, %v499, %v503
      %v506 = vshrl.u32 %v198, 16
      %v508 = vrot.slane %v506, 4
      %v509 = vshll.u32 %v198, 16
      %v511 = vrot.slane %v509, 5
      %v512 = vor.u32 %v508, %v511
      %v513 = vrot.slane %v512, 4
      %v515 = vshll.u32 %v200, 16
      %v517 = vrot.slane %v515, 5
      %v518 = vsel %vm308, %v513, %v517
      %v520 = vshrl.u32 %v199, 16
      %v522 = vrot.slane %v520, 4
      %v523 = vshll.u32 %v199, 16
      %v525 = vrot.slane %v523, 5
      %v526 = vor.u32 %v522, %v525
      %v527 = vrot.slane %v526, 4
      %v529 = vshll.u32 %v201, 16
      %v531 = vrot.slane %v529, 5
      %v532 = vsel %vm308, %v527, %v531
      %s533 = scalar_lea.vmem %s1, 576
      %v534 = vld [vmem:[%s533] sm:$0xff]
      %v535 = vld [vmem:[%s533 + $0x8] sm:$0xf]
      %v536 = vld [vmem:[%s533 + $0xc] sm:$0xff]
      %v537 = vld [vmem:[%s533 + $0x14] sm:$0xf]
      %v538 = vld [vmem:[%s533 + $0x18] sm:$0xff]
      %v539 = vld [vmem:[%s533 + $0x20] sm:$0xf]
      %v540 = vld [vmem:[%s533 + $0x24] sm:$0xff]
      %v541 = vld [vmem:[%s533 + $0x2c] sm:$0xf]
      %v542 = vld [vmem:[%s533 + $0x30] sm:$0xff]
      %v543 = vld [vmem:[%s533 + $0x38] sm:$0xf]
      %v544 = vld [vmem:[%s533 + $0x3c] sm:$0xff]
      %v545 = vld [vmem:[%s533 + $0x44] sm:$0xf]
      %v546 = vld [vmem:[%s533 + $0x48] sm:$0xff]
      %v547 = vld [vmem:[%s533 + $0x50] sm:$0xf]
      %v548 = vld [vmem:[%s533 + $0x54] sm:$0xff]
      %v549 = vld [vmem:[%s533 + $0x5c] sm:$0xf]
      %v550 = vld [vmem:[%s533 + $0x60] sm:$0xff]
      %v551 = vld [vmem:[%s533 + $0x68] sm:$0xf]
      %v552 = vld [vmem:[%s533 + $0x6c] sm:$0xff]
      %v553 = vld [vmem:[%s533 + $0x74] sm:$0xf]
      %v554 = vld [vmem:[%s533 + $0x78] sm:$0xff]
      %v555 = vld [vmem:[%s533 + $0x80] sm:$0xf]
      %v556 = vld [vmem:[%s533 + $0x84] sm:$0xff]
      %v557 = vld [vmem:[%s533 + $0x8c] sm:$0xf]
      %v558 = vld [vmem:[%s533 + $0x90] sm:$0xff]
      %v559 = vld [vmem:[%s533 + $0x98] sm:$0xf]
      %v560 = vld [vmem:[%s533 + $0x9c] sm:$0xff]
      %v561 = vld [vmem:[%s533 + $0xa4] sm:$0xf]
      %v562 = vld [vmem:[%s533 + $0xa8] sm:$0xff]
      %v563 = vld [vmem:[%s533 + $0xb0] sm:$0xf]
      %v564 = vld [vmem:[%s533 + $0xb4] sm:$0xff]
      %v565 = vld [vmem:[%s533 + $0xbc] sm:$0xf]
      %v566 = vld [vmem:[%s533 + $0xc0] sm:$0xff]
      %v567 = vld [vmem:[%s533 + $0xc8] sm:$0xf]
      %v568 = vld [vmem:[%s533 + $0xcc] sm:$0xff]
      %v569 = vld [vmem:[%s533 + $0xd4] sm:$0xf]
      %v570 = vld [vmem:[%s533 + $0xd8] sm:$0xff]
      %v571 = vld [vmem:[%s533 + $0xe0] sm:$0xf]
      %v572 = vld [vmem:[%s533 + $0xe4] sm:$0xff]
      %v573 = vld [vmem:[%s533 + $0xec] sm:$0xf]
      %v574 = vld [vmem:[%s533 + $0xf0] sm:$0xff]
      %v575 = vld [vmem:[%s533 + $0xf8] sm:$0xf]
      %v576 = vld [vmem:[%s533 + $0xfc] sm:$0xff]
      %v577 = vld [vmem:[%s533 + $0x104] sm:$0xf]
      %v578 = vld [vmem:[%s533 + $0x108] sm:$0xff]
      %v579 = vld [vmem:[%s533 + $0x110] sm:$0xf]
      %v580 = vld [vmem:[%s533 + $0x114] sm:$0xff]
      %v581 = vld [vmem:[%s533 + $0x11c] sm:$0xf]
      %v582 = vld [vmem:[%s533 + $0x120] sm:$0xff]
      %v583 = vld [vmem:[%s533 + $0x128] sm:$0xf]
      %v584 = vld [vmem:[%s533 + $0x12c] sm:$0xff]
      %v585 = vld [vmem:[%s533 + $0x134] sm:$0xf]
      %v586 = vld [vmem:[%s533 + $0x138] sm:$0xff]
      %v587 = vld [vmem:[%s533 + $0x140] sm:$0xf]
      %v588 = vld [vmem:[%s533 + $0x144] sm:$0xff]
      %v589 = vld [vmem:[%s533 + $0x14c] sm:$0xf]
      %v590 = vld [vmem:[%s533 + $0x150] sm:$0xff]
      %v591 = vld [vmem:[%s533 + $0x158] sm:$0xf]
      %v592 = vld [vmem:[%s533 + $0x15c] sm:$0xff]
      %v593 = vld [vmem:[%s533 + $0x164] sm:$0xf]
      %v594 = vld [vmem:[%s533 + $0x168] sm:$0xff]
      %v595 = vld [vmem:[%s533 + $0x170] sm:$0xf]
      %v596 = vld [vmem:[%s533 + $0x174] sm:$0xff]
      %v597 = vld [vmem:[%s533 + $0x17c] sm:$0xf]
      %v598 = vld [vmem:[%s533 + $0x180] sm:$0xff]
      %v599 = vld [vmem:[%s533 + $0x188] sm:$0xf]
      %v600 = vld [vmem:[%s533 + $0x18c] sm:$0xff]
      %v601 = vld [vmem:[%s533 + $0x194] sm:$0xf]
      %v602 = vld [vmem:[%s533 + $0x198] sm:$0xff]
      %v603 = vld [vmem:[%s533 + $0x1a0] sm:$0xf]
      %v604 = vld [vmem:[%s533 + $0x1a4] sm:$0xff]
      %v605 = vld [vmem:[%s533 + $0x1ac] sm:$0xf]
      %v606 = vld [vmem:[%s533 + $0x1b0] sm:$0xff]
      %v607 = vld [vmem:[%s533 + $0x1b8] sm:$0xf]
      %v608 = vld [vmem:[%s533 + $0x1bc] sm:$0xff]
      %v609 = vld [vmem:[%s533 + $0x1c4] sm:$0xf]
      %v610 = vld [vmem:[%s533 + $0x1c8] sm:$0xff]
      %v611 = vld [vmem:[%s533 + $0x1d0] sm:$0xf]
      %v612 = vld [vmem:[%s533 + $0x1d4] sm:$0xff]
      %v613 = vld [vmem:[%s533 + $0x1dc] sm:$0xf]
      %v614 = vld [vmem:[%s533 + $0x1e0] sm:$0xff]
      %v615 = vld [vmem:[%s533 + $0x1e8] sm:$0xf]
      %v616 = vld [vmem:[%s533 + $0x1ec] sm:$0xff]
      %v617 = vld [vmem:[%s533 + $0x1f4] sm:$0xf]
      %v618 = vld [vmem:[%s533 + $0x1f8] sm:$0xff]
      %v619 = vld [vmem:[%s533 + $0x200] sm:$0xf]
      %v620 = vld [vmem:[%s533 + $0x204] sm:$0xff]
      %v621 = vld [vmem:[%s533 + $0x20c] sm:$0xf]
      %v622 = vld [vmem:[%s533 + $0x210] sm:$0xff]
      %v623 = vld [vmem:[%s533 + $0x218] sm:$0xf]
      %v624 = vld [vmem:[%s533 + $0x21c] sm:$0xff]
      %v625 = vld [vmem:[%s533 + $0x224] sm:$0xf]
      %v626 = vld [vmem:[%s533 + $0x228] sm:$0xff]
      %v627 = vld [vmem:[%s533 + $0x230] sm:$0xf]
      %v628 = vld [vmem:[%s533 + $0x234] sm:$0xff]
      %v629 = vld [vmem:[%s533 + $0x23c] sm:$0xf]
      %v630 = vunpack.c.l.b16 %v322
      %v631 = vunpack.c.h.b16 %v322
      %v632 = vunpack.c.l.b16 %v336
      %v633 = vunpack.c.l.b16 %v350
      %v634 = vunpack.c.h.b16 %v350
      %v635 = vunpack.c.l.b16 %v364
      %v636 = vunpack.c.l.b16 %v378
      %v637 = vunpack.c.h.b16 %v378
      %v638 = vunpack.c.l.b16 %v392
      %v639 = vunpack.c.l.b16 %v406
      %v640 = vunpack.c.h.b16 %v406
      %v641 = vunpack.c.l.b16 %v420
      %v642 = vunpack.c.l.b16 %v434
      %v643 = vunpack.c.h.b16 %v434
      %v644 = vunpack.c.l.b16 %v448
      %v645 = vunpack.c.l.b16 %v462
      %v646 = vunpack.c.h.b16 %v462
      %v647 = vunpack.c.l.b16 %v476
      %v648 = vunpack.c.l.b16 %v490
      %v649 = vunpack.c.h.b16 %v490
      %v650 = vunpack.c.l.b16 %v504
      %v651 = vunpack.c.l.b16 %v518
      %v652 = vunpack.c.h.b16 %v518
      %v653 = vunpack.c.l.b16 %v532
      %v654 = vpack.c.b16 %v633, %v630
      %v655 = vpack.c.b16 %v634, %v631
      %v656 = vpack.c.b16 %v635, %v632
      %v657 = vpack.c.b16 %v639, %v636
      %v658 = vpack.c.b16 %v640, %v637
      %v659 = vpack.c.b16 %v641, %v638
      %v660 = vpack.c.b16 %v645, %v642
      %v661 = vpack.c.b16 %v646, %v643
      %v662 = vpack.c.b16 %v647, %v644
      %v663 = vpack.c.b16 %v651, %v648
      %v664 = vpack.c.b16 %v652, %v649
      %v665 = vpack.c.b16 %v653, %v650
      %v774 = vunpack.c.l.b16 %v534
      %v775 = vunpack.c.h.b16 %v534
      %v776 = vunpack.c.l.b16 %v535
      %v777 = vunpack.c.l.b16 %v536
      %v778 = vunpack.c.h.b16 %v536
      %v779 = vunpack.c.l.b16 %v537
      %v780 = vunpack.c.l.b16 %v538
      %v781 = vunpack.c.h.b16 %v538
      %v782 = vunpack.c.l.b16 %v539
      %v783 = vunpack.c.l.b16 %v540
      %v784 = vunpack.c.h.b16 %v540
      %v785 = vunpack.c.l.b16 %v541
      %v786 = vunpack.c.l.b16 %v542
      %v787 = vunpack.c.h.b16 %v542
      %v788 = vunpack.c.l.b16 %v543
      %v789 = vunpack.c.l.b16 %v544
      %v790 = vunpack.c.h.b16 %v544
      %v791 = vunpack.c.l.b16 %v545
      %v792 = vunpack.c.l.b16 %v546
      %v793 = vunpack.c.h.b16 %v546
      %v794 = vunpack.c.l.b16 %v547
      %v795 = vunpack.c.l.b16 %v548
      %v796 = vunpack.c.h.b16 %v548
      %v797 = vunpack.c.l.b16 %v549
      %v798 = vunpack.c.l.b16 %v550
      %v799 = vunpack.c.h.b16 %v550
      %v800 = vunpack.c.l.b16 %v551
      %v801 = vunpack.c.l.b16 %v552
      %v802 = vunpack.c.h.b16 %v552
      %v803 = vunpack.c.l.b16 %v553
      %v804 = vunpack.c.l.b16 %v554
      %v805 = vunpack.c.h.b16 %v554
      %v806 = vunpack.c.l.b16 %v555
      %v807 = vunpack.c.l.b16 %v556
      %v808 = vunpack.c.h.b16 %v556
      %v809 = vunpack.c.l.b16 %v557
      %v810 = vunpack.c.l.b16 %v558
      %v811 = vunpack.c.h.b16 %v558
      %v812 = vunpack.c.l.b16 %v559
      %v813 = vunpack.c.l.b16 %v560
      %v814 = vunpack.c.h.b16 %v560
      %v815 = vunpack.c.l.b16 %v561
      %v816 = vunpack.c.l.b16 %v562
      %v817 = vunpack.c.h.b16 %v562
      %v818 = vunpack.c.l.b16 %v563
      %v819 = vunpack.c.l.b16 %v564
      %v820 = vunpack.c.h.b16 %v564
      %v821 = vunpack.c.l.b16 %v565
      %v822 = vunpack.c.l.b16 %v566
      %v823 = vunpack.c.h.b16 %v566
      %v824 = vunpack.c.l.b16 %v567
      %v825 = vunpack.c.l.b16 %v568
      %v826 = vunpack.c.h.b16 %v568
      %v827 = vunpack.c.l.b16 %v569
      %v828 = vunpack.c.l.b16 %v570
      %v829 = vunpack.c.h.b16 %v570
      %v830 = vunpack.c.l.b16 %v571
      %v831 = vunpack.c.l.b16 %v572
      %v832 = vunpack.c.h.b16 %v572
      %v833 = vunpack.c.l.b16 %v573
      %v834 = vunpack.c.l.b16 %v574
      %v835 = vunpack.c.h.b16 %v574
      %v836 = vunpack.c.l.b16 %v575
      %v837 = vunpack.c.l.b16 %v576
      %v838 = vunpack.c.h.b16 %v576
      %v839 = vunpack.c.l.b16 %v577
      %v840 = vunpack.c.l.b16 %v578
      %v841 = vunpack.c.h.b16 %v578
      %v842 = vunpack.c.l.b16 %v579
      %v843 = vunpack.c.l.b16 %v580
      %v844 = vunpack.c.h.b16 %v580
      %v845 = vunpack.c.l.b16 %v581
      %v846 = vunpack.c.l.b16 %v582
      %v847 = vunpack.c.h.b16 %v582
      %v848 = vunpack.c.l.b16 %v583
      %v849 = vunpack.c.l.b16 %v584
      %v850 = vunpack.c.h.b16 %v584
      %v851 = vunpack.c.l.b16 %v585
      %v852 = vunpack.c.l.b16 %v586
      %v853 = vunpack.c.h.b16 %v586
      %v854 = vunpack.c.l.b16 %v587
      %v855 = vunpack.c.l.b16 %v588
      %v856 = vunpack.c.h.b16 %v588
      %v857 = vunpack.c.l.b16 %v589
      %v858 = vunpack.c.l.b16 %v590
      %v859 = vunpack.c.h.b16 %v590
      %v860 = vunpack.c.l.b16 %v591
      %v861 = vunpack.c.l.b16 %v592
      %v862 = vunpack.c.h.b16 %v592
      %v863 = vunpack.c.l.b16 %v593
      %v864 = vunpack.c.l.b16 %v594
      %v865 = vunpack.c.h.b16 %v594
      %v866 = vunpack.c.l.b16 %v595
      %v867 = vunpack.c.l.b16 %v596
      %v868 = vunpack.c.h.b16 %v596
      %v869 = vunpack.c.l.b16 %v597
      %v870 = vunpack.c.l.b16 %v598
      %v871 = vunpack.c.h.b16 %v598
      %v872 = vunpack.c.l.b16 %v599
      %v873 = vunpack.c.l.b16 %v600
      %v874 = vunpack.c.h.b16 %v600
      %v875 = vunpack.c.l.b16 %v601
      %v876 = vunpack.c.l.b16 %v602
      %v877 = vunpack.c.h.b16 %v602
      %v878 = vunpack.c.l.b16 %v603
      %v879 = vunpack.c.l.b16 %v604
      %v880 = vunpack.c.h.b16 %v604
      %v881 = vunpack.c.l.b16 %v605
      %v882 = vunpack.c.l.b16 %v606
      %v883 = vunpack.c.h.b16 %v606
      %v884 = vunpack.c.l.b16 %v607
      %v885 = vunpack.c.l.b16 %v608
      %v886 = vunpack.c.h.b16 %v608
      %v887 = vunpack.c.l.b16 %v609
      %v888 = vunpack.c.l.b16 %v610
      %v889 = vunpack.c.h.b16 %v610
      %v890 = vunpack.c.l.b16 %v611
      %v891 = vunpack.c.l.b16 %v612
      %v892 = vunpack.c.h.b16 %v612
      %v893 = vunpack.c.l.b16 %v613
      %v894 = vunpack.c.l.b16 %v614
      %v895 = vunpack.c.h.b16 %v614
      %v896 = vunpack.c.l.b16 %v615
      %v897 = vunpack.c.l.b16 %v616
      %v898 = vunpack.c.h.b16 %v616
      %v899 = vunpack.c.l.b16 %v617
      %v900 = vunpack.c.l.b16 %v618
      %v901 = vunpack.c.h.b16 %v618
      %v902 = vunpack.c.l.b16 %v619
      %v903 = vunpack.c.l.b16 %v620
      %v904 = vunpack.c.h.b16 %v620
      %v905 = vunpack.c.l.b16 %v621
      %v906 = vunpack.c.l.b16 %v622
      %v907 = vunpack.c.h.b16 %v622
      %v908 = vunpack.c.l.b16 %v623
      %v909 = vunpack.c.l.b16 %v624
      %v910 = vunpack.c.h.b16 %v624
      %v911 = vunpack.c.l.b16 %v625
      %v912 = vunpack.c.l.b16 %v626
      %v913 = vunpack.c.h.b16 %v626
      %v914 = vunpack.c.l.b16 %v627
      %v915 = vunpack.c.l.b16 %v628
      %v916 = vunpack.c.h.b16 %v628
      %v917 = vunpack.c.l.b16 %v629
      %v918 = vpack.c.b16 %v777, %v774
      %v919 = vpack.c.b16 %v778, %v775
      %v920 = vpack.c.b16 %v779, %v776
      %v921 = vpack.c.b16 %v783, %v780
      %v922 = vpack.c.b16 %v784, %v781
      %v923 = vpack.c.b16 %v785, %v782
      %v924 = vpack.c.b16 %v789, %v786
      %v925 = vpack.c.b16 %v790, %v787
      %v926 = vpack.c.b16 %v791, %v788
      %v927 = vpack.c.b16 %v795, %v792
      %v928 = vpack.c.b16 %v796, %v793
      %v929 = vpack.c.b16 %v797, %v794
      %v930 = vpack.c.b16 %v801, %v798
      %v931 = vpack.c.b16 %v802, %v799
      %v932 = vpack.c.b16 %v803, %v800
      %v933 = vpack.c.b16 %v807, %v804
      %v934 = vpack.c.b16 %v808, %v805
      %v935 = vpack.c.b16 %v809, %v806
      %v936 = vpack.c.b16 %v813, %v810
      %v937 = vpack.c.b16 %v814, %v811
      %v938 = vpack.c.b16 %v815, %v812
      %v939 = vpack.c.b16 %v819, %v816
      %v940 = vpack.c.b16 %v820, %v817
      %v941 = vpack.c.b16 %v821, %v818
      %v942 = vpack.c.b16 %v825, %v822
      %v943 = vpack.c.b16 %v826, %v823
      %v944 = vpack.c.b16 %v827, %v824
      %v945 = vpack.c.b16 %v831, %v828
      %v946 = vpack.c.b16 %v832, %v829
      %v947 = vpack.c.b16 %v833, %v830
      %v948 = vpack.c.b16 %v837, %v834
      %v949 = vpack.c.b16 %v838, %v835
      %v950 = vpack.c.b16 %v839, %v836
      %v951 = vpack.c.b16 %v843, %v840
      %v952 = vpack.c.b16 %v844, %v841
      %v953 = vpack.c.b16 %v845, %v842
      %v954 = vpack.c.b16 %v849, %v846
      %v955 = vpack.c.b16 %v850, %v847
      %v956 = vpack.c.b16 %v851, %v848
      %v957 = vpack.c.b16 %v855, %v852
      %v958 = vpack.c.b16 %v856, %v853
      %v959 = vpack.c.b16 %v857, %v854
      %v960 = vpack.c.b16 %v861, %v858
      %v961 = vpack.c.b16 %v862, %v859
      %v962 = vpack.c.b16 %v863, %v860
      %v963 = vpack.c.b16 %v867, %v864
      %v964 = vpack.c.b16 %v868, %v865
      %v965 = vpack.c.b16 %v869, %v866
      %v966 = vpack.c.b16 %v873, %v870
      %v967 = vpack.c.b16 %v874, %v871
      %v968 = vpack.c.b16 %v875, %v872
      %v969 = vpack.c.b16 %v879, %v876
      %v970 = vpack.c.b16 %v880, %v877
      %v971 = vpack.c.b16 %v881, %v878
      %v972 = vpack.c.b16 %v885, %v882
      %v973 = vpack.c.b16 %v886, %v883
      %v974 = vpack.c.b16 %v887, %v884
      %v975 = vpack.c.b16 %v891, %v888
      %v976 = vpack.c.b16 %v892, %v889
      %v977 = vpack.c.b16 %v893, %v890
      %v978 = vpack.c.b16 %v897, %v894
      %v979 = vpack.c.b16 %v898, %v895
      %v980 = vpack.c.b16 %v899, %v896
      %v981 = vpack.c.b16 %v903, %v900
      %v982 = vpack.c.b16 %v904, %v901
      %v983 = vpack.c.b16 %v905, %v902
      %v984 = vpack.c.b16 %v909, %v906
      %v985 = vpack.c.b16 %v910, %v907
      %v986 = vpack.c.b16 %v911, %v908
      %v987 = vpack.c.b16 %v915, %v912
      %v988 = vpack.c.b16 %v916, %v913
      %v989 = vpack.c.b16 %v917, %v914
      %1062 = vmatprep.subr.bf16.mxu0 %v919
      %1063 = vmatpush1.bf16.msra.mxu0 %v918
      %1064 = vmatprep.subr.bf16.mxu0 %v922
      %1065 = vmatpush1.bf16.msra.mxu0 %v921
      %1066 = vmatprep.subr.bf16.mxu0 %v925
      %1067 = vmatpush1.bf16.msra.mxu0 %v924
      %1068 = vmatprep.subr.bf16.mxu0 %v928
      %1069 = vmatpush1.bf16.msra.mxu0 %v927
      %1070 = vmatprep.subr.bf16.mxu0 %v931
      %1071 = vmatpush1.bf16.msra.mxu0 %v930
      %1072 = vmatprep.subr.bf16.mxu0 %v934
      %1073 = vmatpush1.bf16.msra.mxu0 %v933
      %1074 = vmatprep.subr.bf16.mxu0 %v937
      %1075 = vmatpush1.bf16.msra.mxu0 %v936
      %1076 = vmatprep.subr.bf16.mxu0 %v940
      %1077 = vmatpush1.bf16.msra.mxu0 %v939
      %1078 = vmatprep.subr.bf16.mxu0 %v943
      %1079 = vmatpush1.bf16.msra.mxu0 %v942
      %1080 = vmatprep.subr.bf16.mxu0 %v946
      %1081 = vmatpush1.bf16.msra.mxu0 %v945
      %1082 = vmatprep.subr.bf16.mxu0 %v949
      %1083 = vmatpush1.bf16.msra.mxu0 %v948
      %1084 = vmatprep.subr.bf16.mxu0 %v952
      %1085 = vmatpush1.bf16.msra.mxu0 %v951
      %1086 = vmatprep.subr.bf16.mxu0 %v955
      %1087 = vmatpush1.bf16.msra.mxu0 %v954
      %1088 = vmatprep.subr.bf16.mxu0 %v958
      %1089 = vmatpush1.bf16.msra.mxu0 %v957
      %1090 = vmatprep.subr.bf16.mxu0 %v961
      %1091 = vmatpush1.bf16.msra.mxu0 %v960
      %1092 = vmatprep.subr.bf16.mxu0 %v964
      %1093 = vmatpush1.bf16.msra.mxu0 %v963
      %1094 = vmatprep.mubr.bf16.mxu0 %v655
      %1095 = vmatmul.mubr.bf16.gmra.mrb[0].mxu0 %v654
      %v1096 = vpop.f32.mrb[0].mxu0
      %v1097 = vadd.f32 0.0, %v1096
      %v1098 = vpop.f32.mrb[0].mxu0
      %v1099 = vadd.f32 0.0, %v1098
      %v1100 = vpop.f32.mrb[0].mxu0
      %v1101 = vadd.f32 0.0, %v1100
      %v1102 = vpop.f32.mrb[0].mxu0
      %v1103 = vadd.f32 0.0, %v1102
      %1104 = vmatprep.mubr.bf16.mxu0 %v658
      %1105 = vmatmul.mubr.bf16.gmra.mrb[0].mxu0 %v657
      %v1106 = vpop.f32.mrb[0].mxu0
      %v1107 = vadd.f32 0.0, %v1106
      %v1108 = vpop.f32.mrb[0].mxu0
      %v1109 = vadd.f32 0.0, %v1108
      %v1110 = vpop.f32.mrb[0].mxu0
      %v1111 = vadd.f32 0.0, %v1110
      %v1112 = vpop.f32.mrb[0].mxu0
      %v1113 = vadd.f32 0.0, %v1112
      %1114 = vmatprep.mubr.bf16.mxu0 %v661
      %1115 = vmatmul.mubr.bf16.gmra.mrb[0].mxu0 %v660
      %v1116 = vpop.f32.mrb[0].mxu0
      %v1117 = vadd.f32 0.0, %v1116
      %v1118 = vpop.f32.mrb[0].mxu0
      %v1119 = vadd.f32 0.0, %v1118
      %v1120 = vpop.f32.mrb[0].mxu0
      %v1121 = vadd.f32 0.0, %v1120
      %v1122 = vpop.f32.mrb[0].mxu0
      %v1123 = vadd.f32 0.0, %v1122
      %1124 = vmatprep.mubr.bf16.mxu0 %v664
      %1125 = vmatmul.mubr.bf16.gmra.mrb[0].mxu0 %v663
      %v1126 = vpop.f32.mrb[0].mxu0
      %v1127 = vadd.f32 0.0, %v1126
      %v1128 = vpop.f32.mrb[0].mxu0
      %v1129 = vadd.f32 0.0, %v1128
      %v1130 = vpop.f32.mrb[0].mxu0
      %v1131 = vadd.f32 0.0, %v1130
      %v1132 = vpop.f32.mrb[0].mxu0
      %v1133 = vadd.f32 0.0, %v1132
      %1134 = vdwg.mxu0
      %1135 = vmatprep.subr.bf16.mxu0 %v967
      %1136 = vmatpush1.bf16.msra.mxu0 %v966
      %1137 = vmatprep.subr.bf16.mxu0 %v970
      %1138 = vmatpush1.bf16.msra.mxu0 %v969
      %1139 = vmatprep.subr.bf16.mxu0 %v973
      %1140 = vmatpush1.bf16.msra.mxu0 %v972
      %1141 = vmatprep.subr.bf16.mxu0 %v976
      %1142 = vmatpush1.bf16.msra.mxu0 %v975
      %1143 = vmatprep.subr.bf16.mxu0 %v979
      %1144 = vmatpush1.bf16.msra.mxu0 %v978
      %1145 = vmatprep.subr.bf16.mxu0 %v982
      %1146 = vmatpush1.bf16.msra.mxu0 %v981
      %1147 = vmatprep.subr.bf16.mxu0 %v985
      %1148 = vmatpush1.bf16.msra.mxu0 %v984
      %1149 = vmatprep.subr.bf16.mxu0 %v988
      %1150 = vmatpush1.bf16.msra.mxu0 %v987
      %1151 = vmatprep.subr.bf16.mxu0 0
      %1152 = vmatpush1.bf16.msra.mxu0 0
      %1153 = vmatprep.subr.bf16.mxu0 0
      %1154 = vmatpush1.bf16.msra.mxu0 0
      %1155 = vmatprep.subr.bf16.mxu0 0
      %1156 = vmatpush1.bf16.msra.mxu0 0
      %1157 = vmatprep.subr.bf16.mxu0 0
      %1158 = vmatpush1.bf16.msra.mxu0 0
      %1159 = vmatprep.subr.bf16.mxu0 0
      %1160 = vmatpush1.bf16.msra.mxu0 0
      %1161 = vmatprep.subr.bf16.mxu0 0
      %1162 = vmatpush1.bf16.msra.mxu0 0
      %1163 = vmatprep.subr.bf16.mxu0 0
      %1164 = vmatpush1.bf16.msra.mxu0 0
      %1165 = vmatprep.subr.bf16.mxu0 0
      %1166 = vmatpush1.bf16.msra.mxu0 0
      %1167 = vmatprep.mubr.bf16.mxu0 0
      %1168 = vmatmul.mubr.bf16.gmra.mrb[0].mxu0 %v656
      %v1169 = vpop.f32.mrb[0].mxu0
      %v1170 = vadd.f32 %v1097, %v1169
      %v1171 = vpop.f32.mrb[0].mxu0
      %v1172 = vadd.f32 %v1099, %v1171
      %v1173 = vpop.f32.mrb[0].mxu0
      %v1174 = vadd.f32 %v1101, %v1173
      %v1175 = vpop.f32.mrb[0].mxu0
      %v1176 = vadd.f32 %v1103, %v1175
      %1177 = vmatprep.mubr.bf16.mxu0 0
      %1178 = vmatmul.mubr.bf16.gmra.mrb[0].mxu0 %v659
      %v1179 = vpop.f32.mrb[0].mxu0
      %v1180 = vadd.f32 %v1107, %v1179
      %v1181 = vpop.f32.mrb[0].mxu0
      %v1182 = vadd.f32 %v1109, %v1181
      %v1183 = vpop.f32.mrb[0].mxu0
      %v1184 = vadd.f32 %v1111, %v1183
      %v1185 = vpop.f32.mrb[0].mxu0
      %v1186 = vadd.f32 %v1113, %v1185
      %1187 = vmatprep.mubr.bf16.mxu0 0
      %1188 = vmatmul.mubr.bf16.gmra.mrb[0].mxu0 %v662
      %v1189 = vpop.f32.mrb[0].mxu0
      %v1190 = vadd.f32 %v1117, %v1189
      %v1191 = vpop.f32.mrb[0].mxu0
      %v1192 = vadd.f32 %v1119, %v1191
      %v1193 = vpop.f32.mrb[0].mxu0
      %v1194 = vadd.f32 %v1121, %v1193
      %v1195 = vpop.f32.mrb[0].mxu0
      %v1196 = vadd.f32 %v1123, %v1195
      %1197 = vmatprep.mubr.bf16.mxu0 0
      %1198 = vmatmul.mubr.bf16.gmra.mrb[0].mxu0 %v665
      %v1199 = vpop.f32.mrb[0].mxu0
      %v1200 = vadd.f32 %v1127, %v1199
      %v1201 = vpop.f32.mrb[0].mxu0
      %v1202 = vadd.f32 %v1129, %v1201
      %v1203 = vpop.f32.mrb[0].mxu0
      %v1204 = vadd.f32 %v1131, %v1203
      %v1205 = vpop.f32.mrb[0].mxu0
      %v1206 = vadd.f32 %v1133, %v1205
      %1207 = vdwg.mxu0
      %1208 = vmatprep.subr.bf16.mxu0 0
      %1209 = vmatpush1.bf16.msra.mxu0 %v920
      %1210 = vmatprep.subr.bf16.mxu0 0
      %1211 = vmatpush1.bf16.msra.mxu0 %v923
      %1212 = vmatprep.subr.bf16.mxu0 0
      %1213 = vmatpush1.bf16.msra.mxu0 %v926
      %1214 = vmatprep.subr.bf16.mxu0 0
      %1215 = vmatpush1.bf16.msra.mxu0 %v929
      %1216 = vmatprep.subr.bf16.mxu0 0
      %1217 = vmatpush1.bf16.msra.mxu0 %v932
      %1218 = vmatprep.subr.bf16.mxu0 0
      %1219 = vmatpush1.bf16.msra.mxu0 %v935
      %1220 = vmatprep.subr.bf16.mxu0 0
      %1221 = vmatpush1.bf16.msra.mxu0 %v938
      %1222 = vmatprep.subr.bf16.mxu0 0
      %1223 = vmatpush1.bf16.msra.mxu0 %v941
      %1224 = vmatprep.subr.bf16.mxu0 0
      %1225 = vmatpush1.bf16.msra.mxu0 %v944
      %1226 = vmatprep.subr.bf16.mxu0 0
      %1227 = vmatpush1.bf16.msra.mxu0 %v947
      %1228 = vmatprep.subr.bf16.mxu0 0
      %1229 = vmatpush1.bf16.msra.mxu0 %v950
      %1230 = vmatprep.subr.bf16.mxu0 0
      %1231 = vmatpush1.bf16.msra.mxu0 %v953
      %1232 = vmatprep.subr.bf16.mxu0 0
      %1233 = vmatpush1.bf16.msra.mxu0 %v956
      %1234 = vmatprep.subr.bf16.mxu0 0
      %1235 = vmatpush1.bf16.msra.mxu0 %v959
      %1236 = vmatprep.subr.bf16.mxu0 0
      %1237 = vmatpush1.bf16.msra.mxu0 %v962
      %1238 = vmatprep.subr.bf16.mxu0 0
      %1239 = vmatpush1.bf16.msra.mxu0 %v965
      %1240 = vmatprep.mubr.bf16.mxu0 %v655
      %1241 = vmatmul.mubr.bf16.gmra.mrb[0].mxu0 %v654
      %v1242 = vpop.f32.mrb[0].mxu0
      %v1243 = vadd.f32 0.0, %v1242
      %v1244 = vpop.f32.mrb[0].mxu0
      %v1245 = vpop.f32.mrb[0].mxu0
      %v1246 = vadd.f32 0.0, %v1245
      %v1247 = vpop.f32.mrb[0].mxu0
      %1248 = vmatprep.mubr.bf16.mxu0 %v658
      %1249 = vmatmul.mubr.bf16.gmra.mrb[0].mxu0 %v657
      %v1250 = vpop.f32.mrb[0].mxu0
      %v1251 = vadd.f32 0.0, %v1250
      %v1252 = vpop.f32.mrb[0].mxu0
      %v1253 = vpop.f32.mrb[0].mxu0
      %v1254 = vadd.f32 0.0, %v1253
      %v1255 = vpop.f32.mrb[0].mxu0
      %1256 = vmatprep.mubr.bf16.mxu0 %v661
      %1257 = vmatmul.mubr.bf16.gmra.mrb[0].mxu0 %v660
      %v1258 = vpop.f32.mrb[0].mxu0
      %v1259 = vadd.f32 0.0, %v1258
      %v1260 = vpop.f32.mrb[0].mxu0
      %v1261 = vpop.f32.mrb[0].mxu0
      %v1262 = vadd.f32 0.0, %v1261
      %v1263 = vpop.f32.mrb[0].mxu0
      %1264 = vmatprep.mubr.bf16.mxu0 %v664
      %1265 = vmatmul.mubr.bf16.gmra.mrb[0].mxu0 %v663
      %v1266 = vpop.f32.mrb[0].mxu0
      %v1267 = vadd.f32 0.0, %v1266
      %v1268 = vpop.f32.mrb[0].mxu0
      %v1269 = vpop.f32.mrb[0].mxu0
      %v1270 = vadd.f32 0.0, %v1269
      %v1271 = vpop.f32.mrb[0].mxu0
      %1272 = vdwg.mxu0
      %1273 = vmatprep.subr.bf16.mxu0 0
      %1274 = vmatpush1.bf16.msra.mxu0 %v968
      %1275 = vmatprep.subr.bf16.mxu0 0
      %1276 = vmatpush1.bf16.msra.mxu0 %v971
      %1277 = vmatprep.subr.bf16.mxu0 0
      %1278 = vmatpush1.bf16.msra.mxu0 %v974
      %1279 = vmatprep.subr.bf16.mxu0 0
      %1280 = vmatpush1.bf16.msra.mxu0 %v977
      %1281 = vmatprep.subr.bf16.mxu0 0
      %1282 = vmatpush1.bf16.msra.mxu0 %v980
      %1283 = vmatprep.subr.bf16.mxu0 0
      %1284 = vmatpush1.bf16.msra.mxu0 %v983
      %1285 = vmatprep.subr.bf16.mxu0 0
      %1286 = vmatpush1.bf16.msra.mxu0 %v986
      %1287 = vmatprep.subr.bf16.mxu0 0
      %1288 = vmatpush1.bf16.msra.mxu0 %v989
      %1289 = vmatprep.subr.bf16.mxu0 0
      %1290 = vmatpush1.bf16.msra.mxu0 0
      %1291 = vmatprep.subr.bf16.mxu0 0
      %1292 = vmatpush1.bf16.msra.mxu0 0
      %1293 = vmatprep.subr.bf16.mxu0 0
      %1294 = vmatpush1.bf16.msra.mxu0 0
      %1295 = vmatprep.subr.bf16.mxu0 0
      %1296 = vmatpush1.bf16.msra.mxu0 0
      %1297 = vmatprep.subr.bf16.mxu0 0
      %1298 = vmatpush1.bf16.msra.mxu0 0
      %1299 = vmatprep.subr.bf16.mxu0 0
      %1300 = vmatpush1.bf16.msra.mxu0 0
      %1301 = vmatprep.subr.bf16.mxu0 0
      %1302 = vmatpush1.bf16.msra.mxu0 0
      %1303 = vmatprep.subr.bf16.mxu0 0
      %1304 = vmatpush1.bf16.msra.mxu0 0
      %1305 = vmatprep.mubr.bf16.mxu0 0
      %1306 = vmatmul.mubr.bf16.gmra.mrb[0].mxu0 %v656
      %v1307 = vpop.f32.mrb[0].mxu0
      %v1308 = vadd.f32 %v1243, %v1307
      %v1309 = vpop.f32.mrb[0].mxu0
      %v1310 = vpop.f32.mrb[0].mxu0
      %v1311 = vadd.f32 %v1246, %v1310
      %v1312 = vpop.f32.mrb[0].mxu0
      %1313 = vmatprep.mubr.bf16.mxu0 0
      %1314 = vmatmul.mubr.bf16.gmra.mrb[0].mxu0 %v659
      %v1315 = vpop.f32.mrb[0].mxu0
      %v1316 = vadd.f32 %v1251, %v1315
      %v1317 = vpop.f32.mrb[0].mxu0
      %v1318 = vpop.f32.mrb[0].mxu0
      %v1319 = vadd.f32 %v1254, %v1318
      %v1320 = vpop.f32.mrb[0].mxu0
      %1321 = vmatprep.mubr.bf16.mxu0 0
      %1322 = vmatmul.mubr.bf16.gmra.mrb[0].mxu0 %v662
      %v1323 = vpop.f32.mrb[0].mxu0
      %v1324 = vadd.f32 %v1259, %v1323
      %v1325 = vpop.f32.mrb[0].mxu0
      %v1326 = vpop.f32.mrb[0].mxu0
      %v1327 = vadd.f32 %v1262, %v1326
      %v1328 = vpop.f32.mrb[0].mxu0
      %1329 = vmatprep.mubr.bf16.mxu0 0
      %1330 = vmatmul.mubr.bf16.gmra.mrb[0].mxu0 %v665
      %v1331 = vpop.f32.mrb[0].mxu0
      %v1332 = vadd.f32 %v1267, %v1331
      %v1333 = vpop.f32.mrb[0].mxu0
      %v1334 = vpop.f32.mrb[0].mxu0
      %v1335 = vadd.f32 %v1270, %v1334
      %v1336 = vpop.f32.mrb[0].mxu0
      %1337 = vdwg.mxu0
      %v1354 = vunpack.c.l.b16 %v170
      %v1355 = vunpack.c.h.b16 %v170
      %v1356 = vunpack.c.l.b16 %v171
      %v1357 = vunpack.c.l.b16 %v174
      %v1358 = vunpack.c.h.b16 %v174
      %v1359 = vunpack.c.l.b16 %v175
      %v1360 = vunpack.c.l.b16 %v178
      %v1361 = vunpack.c.h.b16 %v178
      %v1362 = vunpack.c.l.b16 %v179
      %v1363 = vunpack.c.l.b16 %v182
      %v1364 = vunpack.c.h.b16 %v182
      %v1365 = vunpack.c.l.b16 %v183
      %v1366 = vunpack.c.l.b16 %v186
      %v1367 = vunpack.c.h.b16 %v186
      %v1368 = vunpack.c.l.b16 %v187
      %v1369 = vunpack.c.l.b16 %v190
      %v1370 = vunpack.c.h.b16 %v190
      %v1371 = vunpack.c.l.b16 %v191
      %v1372 = vunpack.c.l.b16 %v194
      %v1373 = vunpack.c.h.b16 %v194
      %v1374 = vunpack.c.l.b16 %v195
      %v1375 = vunpack.c.l.b16 %v198
      %v1376 = vunpack.c.h.b16 %v198
      %v1377 = vunpack.c.l.b16 %v199
      %v1378 = vpack.c.b16 %v1357, %v1354
      %v1379 = vpack.c.b16 %v1358, %v1355
      %v1380 = vpack.c.b16 %v1359, %v1356
      %v1381 = vpack.c.b16 %v1363, %v1360
      %v1382 = vpack.c.b16 %v1364, %v1361
      %v1383 = vpack.c.b16 %v1365, %v1362
      %v1384 = vpack.c.b16 %v1369, %v1366
      %v1385 = vpack.c.b16 %v1370, %v1367
      %v1386 = vpack.c.b16 %v1371, %v1368
      %v1387 = vpack.c.b16 %v1375, %v1372
      %v1388 = vpack.c.b16 %v1376, %v1373
      %v1389 = vpack.c.b16 %v1377, %v1374
      %v1498 = vunpack.c.l.b16 %v210
      %v1499 = vunpack.c.h.b16 %v210
      %v1500 = vunpack.c.l.b16 %v211
      %v1501 = vunpack.c.l.b16 %v212
      %v1502 = vunpack.c.h.b16 %v212
      %v1503 = vunpack.c.l.b16 %v213
      %v1504 = vunpack.c.l.b16 %v214
      %v1505 = vunpack.c.h.b16 %v214
      %v1506 = vunpack.c.l.b16 %v215
      %v1507 = vunpack.c.l.b16 %v216
      %v1508 = vunpack.c.h.b16 %v216
      %v1509 = vunpack.c.l.b16 %v217
      %v1510 = vunpack.c.l.b16 %v218
      %v1511 = vunpack.c.h.b16 %v218
      %v1512 = vunpack.c.l.b16 %v219
      %v1513 = vunpack.c.l.b16 %v220
      %v1514 = vunpack.c.h.b16 %v220
      %v1515 = vunpack.c.l.b16 %v221
      %v1516 = vunpack.c.l.b16 %v222
      %v1517 = vunpack.c.h.b16 %v222
      %v1518 = vunpack.c.l.b16 %v223
      %v1519 = vunpack.c.l.b16 %v224
      %v1520 = vunpack.c.h.b16 %v224
      %v1521 = vunpack.c.l.b16 %v225
      %v1522 = vunpack.c.l.b16 %v226
      %v1523 = vunpack.c.h.b16 %v226
      %v1524 = vunpack.c.l.b16 %v227
      %v1525 = vunpack.c.l.b16 %v228
      %v1526 = vunpack.c.h.b16 %v228
      %v1527 = vunpack.c.l.b16 %v229
      %v1528 = vunpack.c.l.b16 %v230
      %v1529 = vunpack.c.h.b16 %v230
      %v1530 = vunpack.c.l.b16 %v231
      %v1531 = vunpack.c.l.b16 %v232
      %v1532 = vunpack.c.h.b16 %v232
      %v1533 = vunpack.c.l.b16 %v233
      %v1534 = vunpack.c.l.b16 %v234
      %v1535 = vunpack.c.h.b16 %v234
      %v1536 = vunpack.c.l.b16 %v235
      %v1537 = vunpack.c.l.b16 %v236
      %v1538 = vunpack.c.h.b16 %v236
      %v1539 = vunpack.c.l.b16 %v237
      %v1540 = vunpack.c.l.b16 %v238
      %v1541 = vunpack.c.h.b16 %v238
      %v1542 = vunpack.c.l.b16 %v239
      %v1543 = vunpack.c.l.b16 %v240
      %v1544 = vunpack.c.h.b16 %v240
      %v1545 = vunpack.c.l.b16 %v241
      %v1546 = vunpack.c.l.b16 %v242
      %v1547 = vunpack.c.h.b16 %v242
      %v1548 = vunpack.c.l.b16 %v243
      %v1549 = vunpack.c.l.b16 %v244
      %v1550 = vunpack.c.h.b16 %v244
      %v1551 = vunpack.c.l.b16 %v245
      %v1552 = vunpack.c.l.b16 %v246
      %v1553 = vunpack.c.h.b16 %v246
      %v1554 = vunpack.c.l.b16 %v247
      %v1555 = vunpack.c.l.b16 %v248
      %v1556 = vunpack.c.h.b16 %v248
      %v1557 = vunpack.c.l.b16 %v249
      %v1558 = vunpack.c.l.b16 %v250
      %v1559 = vunpack.c.h.b16 %v250
      %v1560 = vunpack.c.l.b16 %v251
      %v1561 = vunpack.c.l.b16 %v252
      %v1562 = vunpack.c.h.b16 %v252
      %v1563 = vunpack.c.l.b16 %v253
      %v1564 = vunpack.c.l.b16 %v254
      %v1565 = vunpack.c.h.b16 %v254
      %v1566 = vunpack.c.l.b16 %v255
      %v1567 = vunpack.c.l.b16 %v256
      %v1568 = vunpack.c.h.b16 %v256
      %v1569 = vunpack.c.l.b16 %v257
      %v1570 = vunpack.c.l.b16 %v258
      %v1571 = vunpack.c.h.b16 %v258
      %v1572 = vunpack.c.l.b16 %v259
      %v1573 = vunpack.c.l.b16 %v260
      %v1574 = vunpack.c.h.b16 %v260
      %v1575 = vunpack.c.l.b16 %v261
      %v1576 = vunpack.c.l.b16 %v262
      %v1577 = vunpack.c.h.b16 %v262
      %v1578 = vunpack.c.l.b16 %v263
      %v1579 = vunpack.c.l.b16 %v264
      %v1580 = vunpack.c.h.b16 %v264
      %v1581 = vunpack.c.l.b16 %v265
      %v1582 = vunpack.c.l.b16 %v266
      %v1583 = vunpack.c.h.b16 %v266
      %v1584 = vunpack.c.l.b16 %v267
      %v1585 = vunpack.c.l.b16 %v268
      %v1586 = vunpack.c.h.b16 %v268
      %v1587 = vunpack.c.l.b16 %v269
      %v1588 = vunpack.c.l.b16 %v270
      %v1589 = vunpack.c.h.b16 %v270
      %v1590 = vunpack.c.l.b16 %v271
      %v1591 = vunpack.c.l.b16 %v272
      %v1592 = vunpack.c.h.b16 %v272
      %v1593 = vunpack.c.l.b16 %v273
      %v1594 = vunpack.c.l.b16 %v274
      %v1595 = vunpack.c.h.b16 %v274
      %v1596 = vunpack.c.l.b16 %v275
      %v1597 = vunpack.c.l.b16 %v276
      %v1598 = vunpack.c.h.b16 %v276
      %v1599 = vunpack.c.l.b16 %v277
      %v1600 = vunpack.c.l.b16 %v278
      %v1601 = vunpack.c.h.b16 %v278
      %v1602 = vunpack.c.l.b16 %v279
      %v1603 = vunpack.c.l.b16 %v280
      %v1604 = vunpack.c.h.b16 %v280
      %v1605 = vunpack.c.l.b16 %v281
      %v1606 = vunpack.c.l.b16 %v282
      %v1607 = vunpack.c.h.b16 %v282
      %v1608 = vunpack.c.l.b16 %v283
      %v1609 = vunpack.c.l.b16 %v284
      %v1610 = vunpack.c.h.b16 %v284
      %v1611 = vunpack.c.l.b16 %v285
      %v1612 = vunpack.c.l.b16 %v286
      %v1613 = vunpack.c.h.b16 %v286
      %v1614 = vunpack.c.l.b16 %v287
      %v1615 = vunpack.c.l.b16 %v288
      %v1616 = vunpack.c.h.b16 %v288
      %v1617 = vunpack.c.l.b16 %v289
      %v1618 = vunpack.c.l.b16 %v290
      %v1619 = vunpack.c.h.b16 %v290
      %v1620 = vunpack.c.l.b16 %v291
      %v1621 = vunpack.c.l.b16 %v292
      %v1622 = vunpack.c.h.b16 %v292
      %v1623 = vunpack.c.l.b16 %v293
      %v1624 = vunpack.c.l.b16 %v294
      %v1625 = vunpack.c.h.b16 %v294
      %v1626 = vunpack.c.l.b16 %v295
      %v1627 = vunpack.c.l.b16 %v296
      %v1628 = vunpack.c.h.b16 %v296
      %v1629 = vunpack.c.l.b16 %v297
      %v1630 = vunpack.c.l.b16 %v298
      %v1631 = vunpack.c.h.b16 %v298
      %v1632 = vunpack.c.l.b16 %v299
      %v1633 = vunpack.c.l.b16 %v300
      %v1634 = vunpack.c.h.b16 %v300
      %v1635 = vunpack.c.l.b16 %v301
      %v1636 = vunpack.c.l.b16 %v302
      %v1637 = vunpack.c.h.b16 %v302
      %v1638 = vunpack.c.l.b16 %v303
      %v1639 = vunpack.c.l.b16 %v304
      %v1640 = vunpack.c.h.b16 %v304
      %v1641 = vunpack.c.l.b16 %v305
      %v1642 = vpack.c.b16 %v1501, %v1498
      %v1643 = vpack.c.b16 %v1502, %v1499
      %v1644 = vpack.c.b16 %v1503, %v1500
      %v1645 = vpack.c.b16 %v1507, %v1504
      %v1646 = vpack.c.b16 %v1508, %v1505
      %v1647 = vpack.c.b16 %v1509, %v1506
      %v1648 = vpack.c.b16 %v1513, %v1510
      %v1649 = vpack.c.b16 %v1514, %v1511
      %v1650 = vpack.c.b16 %v1515, %v1512
      %v1651 = vpack.c.b16 %v1519, %v1516
      %v1652 = vpack.c.b16 %v1520, %v1517
      %v1653 = vpack.c.b16 %v1521, %v1518
      %v1654 = vpack.c.b16 %v1525, %v1522
      %v1655 = vpack.c.b16 %v1526, %v1523
      %v1656 = vpack.c.b16 %v1527, %v1524
      %v1657 = vpack.c.b16 %v1531, %v1528
      %v1658 = vpack.c.b16 %v1532, %v1529
      %v1659 = vpack.c.b16 %v1533, %v1530
      %v1660 = vpack.c.b16 %v1537, %v1534
      %v1661 = vpack.c.b16 %v1538, %v1535
      %v1662 = vpack.c.b16 %v1539, %v1536
      %v1663 = vpack.c.b16 %v1543, %v1540
      %v1664 = vpack.c.b16 %v1544, %v1541
      %v1665 = vpack.c.b16 %v1545, %v1542
      %v1666 = vpack.c.b16 %v1549, %v1546
      %v1667 = vpack.c.b16 %v1550, %v1547
      %v1668 = vpack.c.b16 %v1551, %v1548
      %v1669 = vpack.c.b16 %v1555, %v1552
      %v1670 = vpack.c.b16 %v1556, %v1553
      %v1671 = vpack.c.b16 %v1557, %v1554
      %v1672 = vpack.c.b16 %v1561, %v1558
      %v1673 = vpack.c.b16 %v1562, %v1559
      %v1674 = vpack.c.b16 %v1563, %v1560
      %v1675 = vpack.c.b16 %v1567, %v1564
      %v1676 = vpack.c.b16 %v1568, %v1565
      %v1677 = vpack.c.b16 %v1569, %v1566
      %v1678 = vpack.c.b16 %v1573, %v1570
      %v1679 = vpack.c.b16 %v1574, %v1571
      %v1680 = vpack.c.b16 %v1575, %v1572
      %v1681 = vpack.c.b16 %v1579, %v1576
      %v1682 = vpack.c.b16 %v1580, %v1577
      %v1683 = vpack.c.b16 %v1581, %v1578
      %v1684 = vpack.c.b16 %v1585, %v1582
      %v1685 = vpack.c.b16 %v1586, %v1583
      %v1686 = vpack.c.b16 %v1587, %v1584
      %v1687 = vpack.c.b16 %v1591, %v1588
      %v1688 = vpack.c.b16 %v1592, %v1589
      %v1689 = vpack.c.b16 %v1593, %v1590
      %v1690 = vpack.c.b16 %v1597, %v1594
      %v1691 = vpack.c.b16 %v1598, %v1595
      %v1692 = vpack.c.b16 %v1599, %v1596
      %v1693 = vpack.c.b16 %v1603, %v1600
      %v1694 = vpack.c.b16 %v1604, %v1601
      %v1695 = vpack.c.b16 %v1605, %v1602
      %v1696 = vpack.c.b16 %v1609, %v1606
      %v1697 = vpack.c.b16 %v1610, %v1607
      %v1698 = vpack.c.b16 %v1611, %v1608
      %v1699 = vpack.c.b16 %v1615, %v1612
      %v1700 = vpack.c.b16 %v1616, %v1613
      %v1701 = vpack.c.b16 %v1617, %v1614
      %v1702 = vpack.c.b16 %v1621, %v1618
      %v1703 = vpack.c.b16 %v1622, %v1619
      %v1704 = vpack.c.b16 %v1623, %v1620
      %v1705 = vpack.c.b16 %v1627, %v1624
      %v1706 = vpack.c.b16 %v1628, %v1625
      %v1707 = vpack.c.b16 %v1629, %v1626
      %v1708 = vpack.c.b16 %v1633, %v1630
      %v1709 = vpack.c.b16 %v1634, %v1631
      %v1710 = vpack.c.b16 %v1635, %v1632
      %v1711 = vpack.c.b16 %v1639, %v1636
      %v1712 = vpack.c.b16 %v1640, %v1637
      %v1713 = vpack.c.b16 %v1641, %v1638
      %1786 = vmatprep.subr.bf16.mxu0 %v1643
      %1787 = vmatpush1.bf16.msra.mxu0 %v1642
      %1788 = vmatprep.subr.bf16.mxu0 %v1646
      %1789 = vmatpush1.bf16.msra.mxu0 %v1645
      %1790 = vmatprep.subr.bf16.mxu0 %v1649
      %1791 = vmatpush1.bf16.msra.mxu0 %v1648
      %1792 = vmatprep.subr.bf16.mxu0 %v1652
      %1793 = vmatpush1.bf16.msra.mxu0 %v1651
      %1794 = vmatprep.subr.bf16.mxu0 %v1655
      %1795 = vmatpush1.bf16.msra.mxu0 %v1654
      %1796 = vmatprep.subr.bf16.mxu0 %v1658
      %1797 = vmatpush1.bf16.msra.mxu0 %v1657
      %1798 = vmatprep.subr.bf16.mxu0 %v1661
      %1799 = vmatpush1.bf16.msra.mxu0 %v1660
      %1800 = vmatprep.subr.bf16.mxu0 %v1664
      %1801 = vmatpush1.bf16.msra.mxu0 %v1663
      %1802 = vmatprep.subr.bf16.mxu0 %v1667
      %1803 = vmatpush1.bf16.msra.mxu0 %v1666
      %1804 = vmatprep.subr.bf16.mxu0 %v1670
      %1805 = vmatpush1.bf16.msra.mxu0 %v1669
      %1806 = vmatprep.subr.bf16.mxu0 %v1673
      %1807 = vmatpush1.bf16.msra.mxu0 %v1672
      %1808 = vmatprep.subr.bf16.mxu0 %v1676
      %1809 = vmatpush1.bf16.msra.mxu0 %v1675
      %1810 = vmatprep.subr.bf16.mxu0 %v1679
      %1811 = vmatpush1.bf16.msra.mxu0 %v1678
      %1812 = vmatprep.subr.bf16.mxu0 %v1682
      %1813 = vmatpush1.bf16.msra.mxu0 %v1681
      %1814 = vmatprep.subr.bf16.mxu0 %v1685
      %1815 = vmatpush1.bf16.msra.mxu0 %v1684
      %1816 = vmatprep.subr.bf16.mxu0 %v1688
      %1817 = vmatpush1.bf16.msra.mxu0 %v1687
      %1818 = vmatprep.mubr.bf16.mxu0 %v1379
      %1819 = vmatmul.mubr.bf16.gmra.mrb[0].mxu0 %v1378
      %v1820 = vpop.f32.mrb[0].mxu0
      %v1821 = vadd.f32 %v1170, %v1820
      %v1822 = vpop.f32.mrb[0].mxu0
      %v1823 = vadd.f32 %v1172, %v1822
      %v1824 = vpop.f32.mrb[0].mxu0
      %v1825 = vadd.f32 %v1174, %v1824
      %v1826 = vpop.f32.mrb[0].mxu0
      %v1827 = vadd.f32 %v1176, %v1826
      %1828 = vmatprep.mubr.bf16.mxu0 %v1382
      %1829 = vmatmul.mubr.bf16.gmra.mrb[0].mxu0 %v1381
      %v1830 = vpop.f32.mrb[0].mxu0
      %v1831 = vadd.f32 %v1180, %v1830
      %v1832 = vpop.f32.mrb[0].mxu0
      %v1833 = vadd.f32 %v1182, %v1832
      %v1834 = vpop.f32.mrb[0].mxu0
      %v1835 = vadd.f32 %v1184, %v1834
      %v1836 = vpop.f32.mrb[0].mxu0
      %v1837 = vadd.f32 %v1186, %v1836
      %1838 = vmatprep.mubr.bf16.mxu0 %v1385
      %1839 = vmatmul.mubr.bf16.gmra.mrb[0].mxu0 %v1384
      %v1840 = vpop.f32.mrb[0].mxu0
      %v1841 = vadd.f32 %v1190, %v1840
      %v1842 = vpop.f32.mrb[0].mxu0
      %v1843 = vadd.f32 %v1192, %v1842
      %v1844 = vpop.f32.mrb[0].mxu0
      %v1845 = vadd.f32 %v1194, %v1844
      %v1846 = vpop.f32.mrb[0].mxu0
      %v1847 = vadd.f32 %v1196, %v1846
      %1848 = vmatprep.mubr.bf16.mxu0 %v1388
      %1849 = vmatmul.mubr.bf16.gmra.mrb[0].mxu0 %v1387
      %v1850 = vpop.f32.mrb[0].mxu0
      %v1851 = vadd.f32 %v1200, %v1850
      %v1852 = vpop.f32.mrb[0].mxu0
      %v1853 = vadd.f32 %v1202, %v1852
      %v1854 = vpop.f32.mrb[0].mxu0
      %v1855 = vadd.f32 %v1204, %v1854
      %v1856 = vpop.f32.mrb[0].mxu0
      %v1857 = vadd.f32 %v1206, %v1856
      %1858 = vdwg.mxu0
      %1859 = vmatprep.subr.bf16.mxu0 %v1691
      %1860 = vmatpush1.bf16.msra.mxu0 %v1690
      %1861 = vmatprep.subr.bf16.mxu0 %v1694
      %1862 = vmatpush1.bf16.msra.mxu0 %v1693
      %1863 = vmatprep.subr.bf16.mxu0 %v1697
      %1864 = vmatpush1.bf16.msra.mxu0 %v1696
      %1865 = vmatprep.subr.bf16.mxu0 %v1700
      %1866 = vmatpush1.bf16.msra.mxu0 %v1699
      %1867 = vmatprep.subr.bf16.mxu0 %v1703
      %1868 = vmatpush1.bf16.msra.mxu0 %v1702
      %1869 = vmatprep.subr.bf16.mxu0 %v1706
      %1870 = vmatpush1.bf16.msra.mxu0 %v1705
      %1871 = vmatprep.subr.bf16.mxu0 %v1709
      %1872 = vmatpush1.bf16.msra.mxu0 %v1708
      %1873 = vmatprep.subr.bf16.mxu0 %v1712
      %1874 = vmatpush1.bf16.msra.mxu0 %v1711
      %1875 = vmatprep.subr.bf16.mxu0 0
      %1876 = vmatpush1.bf16.msra.mxu0 0
      %1877 = vmatprep.subr.bf16.mxu0 0
      %1878 = vmatpush1.bf16.msra.mxu0 0
      %1879 = vmatprep.subr.bf16.mxu0 0
      %1880 = vmatpush1.bf16.msra.mxu0 0
      %1881 = vmatprep.subr.bf16.mxu0 0
      %1882 = vmatpush1.bf16.msra.mxu0 0
      %1883 = vmatprep.subr.bf16.mxu0 0
      %1884 = vmatpush1.bf16.msra.mxu0 0
      %1885 = vmatprep.subr.bf16.mxu0 0
      %1886 = vmatpush1.bf16.msra.mxu0 0
      %1887 = vmatprep.subr.bf16.mxu0 0
      %1888 = vmatpush1.bf16.msra.mxu0 0
      %1889 = vmatprep.subr.bf16.mxu0 0
      %1890 = vmatpush1.bf16.msra.mxu0 0
      %1891 = vmatprep.mubr.bf16.mxu0 0
      %1892 = vmatmul.mubr.bf16.gmra.mrb[0].mxu0 %v1380
      %v1893 = vpop.f32.mrb[0].mxu0
      %v1894 = vadd.f32 %v1821, %v1893
      %v1895 = vpop.f32.mrb[0].mxu0
      %v1896 = vadd.f32 %v1823, %v1895
      %v1897 = vpop.f32.mrb[0].mxu0
      %v1898 = vadd.f32 %v1825, %v1897
      %v1899 = vpop.f32.mrb[0].mxu0
      %v1900 = vadd.f32 %v1827, %v1899
      %1901 = vmatprep.mubr.bf16.mxu0 0
      %1902 = vmatmul.mubr.bf16.gmra.mrb[0].mxu0 %v1383
      %v1903 = vpop.f32.mrb[0].mxu0
      %v1904 = vadd.f32 %v1831, %v1903
      %v1905 = vpop.f32.mrb[0].mxu0
      %v1906 = vadd.f32 %v1833, %v1905
      %v1907 = vpop.f32.mrb[0].mxu0
      %v1908 = vadd.f32 %v1835, %v1907
      %v1909 = vpop.f32.mrb[0].mxu0
      %v1910 = vadd.f32 %v1837, %v1909
      %1911 = vmatprep.mubr.bf16.mxu0 0
      %1912 = vmatmul.mubr.bf16.gmra.mrb[0].mxu0 %v1386
      %v1913 = vpop.f32.mrb[0].mxu0
      %v1914 = vadd.f32 %v1841, %v1913
      %v1915 = vpop.f32.mrb[0].mxu0
      %v1916 = vadd.f32 %v1843, %v1915
      %v1917 = vpop.f32.mrb[0].mxu0
      %v1918 = vadd.f32 %v1845, %v1917
      %v1919 = vpop.f32.mrb[0].mxu0
      %v1920 = vadd.f32 %v1847, %v1919
      %1921 = vmatprep.mubr.bf16.mxu0 0
      %1922 = vmatmul.mubr.bf16.gmra.mrb[0].mxu0 %v1389
      %v1923 = vpop.f32.mrb[0].mxu0
      %v1924 = vadd.f32 %v1851, %v1923
      %v1925 = vpop.f32.mrb[0].mxu0
      %v1926 = vadd.f32 %v1853, %v1925
      %v1927 = vpop.f32.mrb[0].mxu0
      %v1928 = vadd.f32 %v1855, %v1927
      %v1929 = vpop.f32.mrb[0].mxu0
      %v1930 = vadd.f32 %v1857, %v1929
      %1931 = vdwg.mxu0
      %1932 = vmatprep.subr.bf16.mxu0 0
      %1933 = vmatpush1.bf16.msra.mxu0 %v1644
      %1934 = vmatprep.subr.bf16.mxu0 0
      %1935 = vmatpush1.bf16.msra.mxu0 %v1647
      %1936 = vmatprep.subr.bf16.mxu0 0
      %1937 = vmatpush1.bf16.msra.mxu0 %v1650
      %1938 = vmatprep.subr.bf16.mxu0 0
      %1939 = vmatpush1.bf16.msra.mxu0 %v1653
      %1940 = vmatprep.subr.bf16.mxu0 0
      %1941 = vmatpush1.bf16.msra.mxu0 %v1656
      %1942 = vmatprep.subr.bf16.mxu0 0
      %1943 = vmatpush1.bf16.msra.mxu0 %v1659
      %1944 = vmatprep.subr.bf16.mxu0 0
      %1945 = vmatpush1.bf16.msra.mxu0 %v1662
      %1946 = vmatprep.subr.bf16.mxu0 0
      %1947 = vmatpush1.bf16.msra.mxu0 %v1665
      %1948 = vmatprep.subr.bf16.mxu0 0
      %1949 = vmatpush1.bf16.msra.mxu0 %v1668
      %1950 = vmatprep.subr.bf16.mxu0 0
      %1951 = vmatpush1.bf16.msra.mxu0 %v1671
      %1952 = vmatprep.subr.bf16.mxu0 0
      %1953 = vmatpush1.bf16.msra.mxu0 %v1674
      %1954 = vmatprep.subr.bf16.mxu0 0
      %1955 = vmatpush1.bf16.msra.mxu0 %v1677
      %1956 = vmatprep.subr.bf16.mxu0 0
      %1957 = vmatpush1.bf16.msra.mxu0 %v1680
      %1958 = vmatprep.subr.bf16.mxu0 0
      %1959 = vmatpush1.bf16.msra.mxu0 %v1683
      %1960 = vmatprep.subr.bf16.mxu0 0
      %1961 = vmatpush1.bf16.msra.mxu0 %v1686
      %1962 = vmatprep.subr.bf16.mxu0 0
      %1963 = vmatpush1.bf16.msra.mxu0 %v1689
      %1964 = vmatprep.mubr.bf16.mxu0 %v1379
      %1965 = vmatmul.mubr.bf16.gmra.mrb[0].mxu0 %v1378
      %v1966 = vpop.f32.mrb[0].mxu0
      %v1967 = vadd.f32 %v1308, %v1966
      %v1968 = vpop.f32.mrb[0].mxu0
      %v1969 = vpop.f32.mrb[0].mxu0
      %v1970 = vadd.f32 %v1311, %v1969
      %v1971 = vpop.f32.mrb[0].mxu0
      %1972 = vmatprep.mubr.bf16.mxu0 %v1382
      %1973 = vmatmul.mubr.bf16.gmra.mrb[0].mxu0 %v1381
      %v1974 = vpop.f32.mrb[0].mxu0
      %v1975 = vadd.f32 %v1316, %v1974
      %v1976 = vpop.f32.mrb[0].mxu0
      %v1977 = vpop.f32.mrb[0].mxu0
      %v1978 = vadd.f32 %v1319, %v1977
      %v1979 = vpop.f32.mrb[0].mxu0
      %1980 = vmatprep.mubr.bf16.mxu0 %v1385
      %1981 = vmatmul.mubr.bf16.gmra.mrb[0].mxu0 %v1384
      %v1982 = vpop.f32.mrb[0].mxu0
      %v1983 = vadd.f32 %v1324, %v1982
      %v1984 = vpop.f32.mrb[0].mxu0
      %v1985 = vpop.f32.mrb[0].mxu0
      %v1986 = vadd.f32 %v1327, %v1985
      %v1987 = vpop.f32.mrb[0].mxu0
      %1988 = vmatprep.mubr.bf16.mxu0 %v1388
      %1989 = vmatmul.mubr.bf16.gmra.mrb[0].mxu0 %v1387
      %v1990 = vpop.f32.mrb[0].mxu0
      %v1991 = vadd.f32 %v1332, %v1990
      %v1992 = vpop.f32.mrb[0].mxu0
      %v1993 = vpop.f32.mrb[0].mxu0
      %v1994 = vadd.f32 %v1335, %v1993
      %v1995 = vpop.f32.mrb[0].mxu0
      %1996 = vdwg.mxu0
      %1997 = vmatprep.subr.bf16.mxu0 0
      %1998 = vmatpush1.bf16.msra.mxu0 %v1692
      %1999 = vmatprep.subr.bf16.mxu0 0
      %2000 = vmatpush1.bf16.msra.mxu0 %v1695
      %2001 = vmatprep.subr.bf16.mxu0 0
      %2002 = vmatpush1.bf16.msra.mxu0 %v1698
      %2003 = vmatprep.subr.bf16.mxu0 0
      %2004 = vmatpush1.bf16.msra.mxu0 %v1701
      %2005 = vmatprep.subr.bf16.mxu0 0
      %2006 = vmatpush1.bf16.msra.mxu0 %v1704
      %2007 = vmatprep.subr.bf16.mxu0 0
      %2008 = vmatpush1.bf16.msra.mxu0 %v1707
      %2009 = vmatprep.subr.bf16.mxu0 0
      %2010 = vmatpush1.bf16.msra.mxu0 %v1710
      %2011 = vmatprep.subr.bf16.mxu0 0
      %2012 = vmatpush1.bf16.msra.mxu0 %v1713
      %2013 = vmatprep.subr.bf16.mxu0 0
      %2014 = vmatpush1.bf16.msra.mxu0 0
      %2015 = vmatprep.subr.bf16.mxu0 0
      %2016 = vmatpush1.bf16.msra.mxu0 0
      %2017 = vmatprep.subr.bf16.mxu0 0
      %2018 = vmatpush1.bf16.msra.mxu0 0
      %2019 = vmatprep.subr.bf16.mxu0 0
      %2020 = vmatpush1.bf16.msra.mxu0 0
      %2021 = vmatprep.subr.bf16.mxu0 0
      %2022 = vmatpush1.bf16.msra.mxu0 0
      %2023 = vmatprep.subr.bf16.mxu0 0
      %2024 = vmatpush1.bf16.msra.mxu0 0
      %2025 = vmatprep.subr.bf16.mxu0 0
      %2026 = vmatpush1.bf16.msra.mxu0 0
      %2027 = vmatprep.subr.bf16.mxu0 0
      %2028 = vmatpush1.bf16.msra.mxu0 0
      %2029 = vmatprep.mubr.bf16.mxu0 0
      %2030 = vmatmul.mubr.bf16.gmra.mrb[0].mxu0 %v1380
      %v2031 = vpop.f32.mrb[0].mxu0
      %v2032 = vadd.f32 %v1967, %v2031
      %v2033 = vpop.f32.mrb[0].mxu0
      %v2034 = vpop.f32.mrb[0].mxu0
      %v2035 = vadd.f32 %v1970, %v2034
      %v2036 = vpop.f32.mrb[0].mxu0
      %2037 = vmatprep.mubr.bf16.mxu0 0
      %2038 = vmatmul.mubr.bf16.gmra.mrb[0].mxu0 %v1383
      %v2039 = vpop.f32.mrb[0].mxu0
      %v2040 = vadd.f32 %v1975, %v2039
      %v2041 = vpop.f32.mrb[0].mxu0
      %v2042 = vpop.f32.mrb[0].mxu0
      %v2043 = vadd.f32 %v1978, %v2042
      %v2044 = vpop.f32.mrb[0].mxu0
      %2045 = vmatprep.mubr.bf16.mxu0 0
      %2046 = vmatmul.mubr.bf16.gmra.mrb[0].mxu0 %v1386
      %v2047 = vpop.f32.mrb[0].mxu0
      %v2048 = vadd.f32 %v1983, %v2047
      %v2049 = vpop.f32.mrb[0].mxu0
      %v2050 = vpop.f32.mrb[0].mxu0
      %v2051 = vadd.f32 %v1986, %v2050
      %v2052 = vpop.f32.mrb[0].mxu0
      %2053 = vmatprep.mubr.bf16.mxu0 0
      %2054 = vmatmul.mubr.bf16.gmra.mrb[0].mxu0 %v1389
      %v2055 = vpop.f32.mrb[0].mxu0
      %v2056 = vadd.f32 %v1991, %v2055
      %v2057 = vpop.f32.mrb[0].mxu0
      %v2058 = vpop.f32.mrb[0].mxu0
      %v2059 = vadd.f32 %v1994, %v2058
      %v2060 = vpop.f32.mrb[0].mxu0
      %2061 = vdwg.mxu0
      %vm2078 = vcmask 1042432
      %vm2079 = vcmask 1046532
      %vm2080 = vmor %vm2078, %vm2079
      %v2081 = vrot.slane %v170, 5
      %v2082 = vrot.slane %v2081, 4
      %v2083 = vrot.slane %v172, 5
      %v2084 = vsel %vm2080, %v2082, %v2083
      %v2085 = vrot.slane %v171, 5
      %v2086 = vrot.slane %v2085, 4
      %v2087 = vrot.slane %v173, 5
      %v2088 = vsel %vm2080, %v2086, %v2087
      %v2089 = vrot.slane %v174, 5
      %v2090 = vrot.slane %v2089, 4
      %v2091 = vrot.slane %v176, 5
      %v2092 = vsel %vm2080, %v2090, %v2091
      %v2093 = vrot.slane %v175, 5
      %v2094 = vrot.slane %v2093, 4
      %v2095 = vrot.slane %v177, 5
      %v2096 = vsel %vm2080, %v2094, %v2095
      %v2097 = vrot.slane %v178, 5
      %v2098 = vrot.slane %v2097, 4
      %v2099 = vrot.slane %v180, 5
      %v2100 = vsel %vm2080, %v2098, %v2099
      %v2101 = vrot.slane %v179, 5
      %v2102 = vrot.slane %v2101, 4
      %v2103 = vrot.slane %v181, 5
      %v2104 = vsel %vm2080, %v2102, %v2103
      %v2105 = vrot.slane %v182, 5
      %v2106 = vrot.slane %v2105, 4
      %v2107 = vrot.slane %v184, 5
      %v2108 = vsel %vm2080, %v2106, %v2107
      %v2109 = vrot.slane %v183, 5
      %v2110 = vrot.slane %v2109, 4
      %v2111 = vrot.slane %v185, 5
      %v2112 = vsel %vm2080, %v2110, %v2111
      %v2113 = vrot.slane %v186, 5
      %v2114 = vrot.slane %v2113, 4
      %v2115 = vrot.slane %v188, 5
      %v2116 = vsel %vm2080, %v2114, %v2115
      %v2117 = vrot.slane %v187, 5
      %v2118 = vrot.slane %v2117, 4
      %v2119 = vrot.slane %v189, 5
      %v2120 = vsel %vm2080, %v2118, %v2119
      %v2121 = vrot.slane %v190, 5
      %v2122 = vrot.slane %v2121, 4
      %v2123 = vrot.slane %v192, 5
      %v2124 = vsel %vm2080, %v2122, %v2123
      %v2125 = vrot.slane %v191, 5
      %v2126 = vrot.slane %v2125, 4
      %v2127 = vrot.slane %v193, 5
      %v2128 = vsel %vm2080, %v2126, %v2127
      %v2129 = vrot.slane %v194, 5
      %v2130 = vrot.slane %v2129, 4
      %v2131 = vrot.slane %v196, 5
      %v2132 = vsel %vm2080, %v2130, %v2131
      %v2133 = vrot.slane %v195, 5
      %v2134 = vrot.slane %v2133, 4
      %v2135 = vrot.slane %v197, 5
      %v2136 = vsel %vm2080, %v2134, %v2135
      %v2137 = vrot.slane %v198, 5
      %v2138 = vrot.slane %v2137, 4
      %v2139 = vrot.slane %v200, 5
      %v2140 = vsel %vm2080, %v2138, %v2139
      %v2141 = vrot.slane %v199, 5
      %v2142 = vrot.slane %v2141, 4
      %v2143 = vrot.slane %v201, 5
      %v2144 = vsel %vm2080, %v2142, %v2143
      %s2145 = scalar_lea.vmem %s1, 1152
      %v2146 = vld [vmem:[%s2145] sm:$0xff]
      %v2147 = vld [vmem:[%s2145 + $0x8] sm:$0xf]
      %v2148 = vld [vmem:[%s2145 + $0xc] sm:$0xff]
      %v2149 = vld [vmem:[%s2145 + $0x14] sm:$0xf]
      %v2150 = vld [vmem:[%s2145 + $0x18] sm:$0xff]
      %v2151 = vld [vmem:[%s2145 + $0x20] sm:$0xf]
      %v2152 = vld [vmem:[%s2145 + $0x24] sm:$0xff]
      %v2153 = vld [vmem:[%s2145 + $0x2c] sm:$0xf]
      %v2154 = vld [vmem:[%s2145 + $0x30] sm:$0xff]
      %v2155 = vld [vmem:[%s2145 + $0x38] sm:$0xf]
      %v2156 = vld [vmem:[%s2145 + $0x3c] sm:$0xff]
      %v2157 = vld [vmem:[%s2145 + $0x44] sm:$0xf]
      %v2158 = vld [vmem:[%s2145 + $0x48] sm:$0xff]
      %v2159 = vld [vmem:[%s2145 + $0x50] sm:$0xf]
      %v2160 = vld [vmem:[%s2145 + $0x54] sm:$0xff]
      %v2161 = vld [vmem:[%s2145 + $0x5c] sm:$0xf]
      %v2162 = vld [vmem:[%s2145 + $0x60] sm:$0xff]
      %v2163 = vld [vmem:[%s2145 + $0x68] sm:$0xf]
      %v2164 = vld [vmem:[%s2145 + $0x6c] sm:$0xff]
      %v2165 = vld [vmem:[%s2145 + $0x74] sm:$0xf]
      %v2166 = vld [vmem:[%s2145 + $0x78] sm:$0xff]
      %v2167 = vld [vmem:[%s2145 + $0x80] sm:$0xf]
      %v2168 = vld [vmem:[%s2145 + $0x84] sm:$0xff]
      %v2169 = vld [vmem:[%s2145 + $0x8c] sm:$0xf]
      %v2170 = vld [vmem:[%s2145 + $0x90] sm:$0xff]
      %v2171 = vld [vmem:[%s2145 + $0x98] sm:$0xf]
      %v2172 = vld [vmem:[%s2145 + $0x9c] sm:$0xff]
      %v2173 = vld [vmem:[%s2145 + $0xa4] sm:$0xf]
      %v2174 = vld [vmem:[%s2145 + $0xa8] sm:$0xff]
      %v2175 = vld [vmem:[%s2145 + $0xb0] sm:$0xf]
      %v2176 = vld [vmem:[%s2145 + $0xb4] sm:$0xff]
      %v2177 = vld [vmem:[%s2145 + $0xbc] sm:$0xf]
      %v2178 = vld [vmem:[%s2145 + $0xc0] sm:$0xff]
      %v2179 = vld [vmem:[%s2145 + $0xc8] sm:$0xf]
      %v2180 = vld [vmem:[%s2145 + $0xcc] sm:$0xff]
      %v2181 = vld [vmem:[%s2145 + $0xd4] sm:$0xf]
      %v2182 = vld [vmem:[%s2145 + $0xd8] sm:$0xff]
      %v2183 = vld [vmem:[%s2145 + $0xe0] sm:$0xf]
      %v2184 = vld [vmem:[%s2145 + $0xe4] sm:$0xff]
      %v2185 = vld [vmem:[%s2145 + $0xec] sm:$0xf]
      %v2186 = vld [vmem:[%s2145 + $0xf0] sm:$0xff]
      %v2187 = vld [vmem:[%s2145 + $0xf8] sm:$0xf]
      %v2188 = vld [vmem:[%s2145 + $0xfc] sm:$0xff]
      %v2189 = vld [vmem:[%s2145 + $0x104] sm:$0xf]
      %v2190 = vld [vmem:[%s2145 + $0x108] sm:$0xff]
      %v2191 = vld [vmem:[%s2145 + $0x110] sm:$0xf]
      %v2192 = vld [vmem:[%s2145 + $0x114] sm:$0xff]
      %v2193 = vld [vmem:[%s2145 + $0x11c] sm:$0xf]
      %v2194 = vld [vmem:[%s2145 + $0x120] sm:$0xff]
      %v2195 = vld [vmem:[%s2145 + $0x128] sm:$0xf]
      %v2196 = vld [vmem:[%s2145 + $0x12c] sm:$0xff]
      %v2197 = vld [vmem:[%s2145 + $0x134] sm:$0xf]
      %v2198 = vld [vmem:[%s2145 + $0x138] sm:$0xff]
      %v2199 = vld [vmem:[%s2145 + $0x140] sm:$0xf]
      %v2200 = vld [vmem:[%s2145 + $0x144] sm:$0xff]
      %v2201 = vld [vmem:[%s2145 + $0x14c] sm:$0xf]
      %v2202 = vld [vmem:[%s2145 + $0x150] sm:$0xff]
      %v2203 = vld [vmem:[%s2145 + $0x158] sm:$0xf]
      %v2204 = vld [vmem:[%s2145 + $0x15c] sm:$0xff]
      %v2205 = vld [vmem:[%s2145 + $0x164] sm:$0xf]
      %v2206 = vld [vmem:[%s2145 + $0x168] sm:$0xff]
      %v2207 = vld [vmem:[%s2145 + $0x170] sm:$0xf]
      %v2208 = vld [vmem:[%s2145 + $0x174] sm:$0xff]
      %v2209 = vld [vmem:[%s2145 + $0x17c] sm:$0xf]
      %v2210 = vld [vmem:[%s2145 + $0x180] sm:$0xff]
      %v2211 = vld [vmem:[%s2145 + $0x188] sm:$0xf]
      %v2212 = vld [vmem:[%s2145 + $0x18c] sm:$0xff]
      %v2213 = vld [vmem:[%s2145 + $0x194] sm:$0xf]
      %v2214 = vld [vmem:[%s2145 + $0x198] sm:$0xff]
      %v2215 = vld [vmem:[%s2145 + $0x1a0] sm:$0xf]
      %v2216 = vld [vmem:[%s2145 + $0x1a4] sm:$0xff]
      %v2217 = vld [vmem:[%s2145 + $0x1ac] sm:$0xf]
      %v2218 = vld [vmem:[%s2145 + $0x1b0] sm:$0xff]
      %v2219 = vld [vmem:[%s2145 + $0x1b8] sm:$0xf]
      %v2220 = vld [vmem:[%s2145 + $0x1bc] sm:$0xff]
      %v2221 = vld [vmem:[%s2145 + $0x1c4] sm:$0xf]
      %v2222 = vld [vmem:[%s2145 + $0x1c8] sm:$0xff]
      %v2223 = vld [vmem:[%s2145 + $0x1d0] sm:$0xf]
      %v2224 = vld [vmem:[%s2145 + $0x1d4] sm:$0xff]
      %v2225 = vld [vmem:[%s2145 + $0x1dc] sm:$0xf]
      %v2226 = vld [vmem:[%s2145 + $0x1e0] sm:$0xff]
      %v2227 = vld [vmem:[%s2145 + $0x1e8] sm:$0xf]
      %v2228 = vld [vmem:[%s2145 + $0x1ec] sm:$0xff]
      %v2229 = vld [vmem:[%s2145 + $0x1f4] sm:$0xf]
      %v2230 = vld [vmem:[%s2145 + $0x1f8] sm:$0xff]
      %v2231 = vld [vmem:[%s2145 + $0x200] sm:$0xf]
      %v2232 = vld [vmem:[%s2145 + $0x204] sm:$0xff]
      %v2233 = vld [vmem:[%s2145 + $0x20c] sm:$0xf]
      %v2234 = vld [vmem:[%s2145 + $0x210] sm:$0xff]
      %v2235 = vld [vmem:[%s2145 + $0x218] sm:$0xf]
      %v2236 = vld [vmem:[%s2145 + $0x21c] sm:$0xff]
      %v2237 = vld [vmem:[%s2145 + $0x224] sm:$0xf]
      %v2238 = vld [vmem:[%s2145 + $0x228] sm:$0xff]
      %v2239 = vld [vmem:[%s2145 + $0x230] sm:$0xf]
      %v2240 = vld [vmem:[%s2145 + $0x234] sm:$0xff]
      %v2241 = vld [vmem:[%s2145 + $0x23c] sm:$0xf]
      %v2242 = vunpack.c.l.b16 %v2084
      %v2243 = vunpack.c.h.b16 %v2084
      %v2244 = vunpack.c.l.b16 %v2088
      %v2245 = vunpack.c.l.b16 %v2092
      %v2246 = vunpack.c.h.b16 %v2092
      %v2247 = vunpack.c.l.b16 %v2096
      %v2248 = vunpack.c.l.b16 %v2100
      %v2249 = vunpack.c.h.b16 %v2100
      %v2250 = vunpack.c.l.b16 %v2104
      %v2251 = vunpack.c.l.b16 %v2108
      %v2252 = vunpack.c.h.b16 %v2108
      %v2253 = vunpack.c.l.b16 %v2112
      %v2254 = vunpack.c.l.b16 %v2116
      %v2255 = vunpack.c.h.b16 %v2116
      %v2256 = vunpack.c.l.b16 %v2120
      %v2257 = vunpack.c.l.b16 %v2124
      %v2258 = vunpack.c.h.b16 %v2124
      %v2259 = vunpack.c.l.b16 %v2128
      %v2260 = vunpack.c.l.b16 %v2132
      %v2261 = vunpack.c.h.b16 %v2132
      %v2262 = vunpack.c.l.b16 %v2136
      %v2263 = vunpack.c.l.b16 %v2140
      %v2264 = vunpack.c.h.b16 %v2140
      %v2265 = vunpack.c.l.b16 %v2144
      %v2266 = vpack.c.b16 %v2245, %v2242
      %v2267 = vpack.c.b16 %v2246, %v2243
      %v2268 = vpack.c.b16 %v2247, %v2244
      %v2269 = vpack.c.b16 %v2251, %v2248
      %v2270 = vpack.c.b16 %v2252, %v2249
      %v2271 = vpack.c.b16 %v2253, %v2250
      %v2272 = vpack.c.b16 %v2257, %v2254
      %v2273 = vpack.c.b16 %v2258, %v2255
      %v2274 = vpack.c.b16 %v2259, %v2256
      %v2275 = vpack.c.b16 %v2263, %v2260
      %v2276 = vpack.c.b16 %v2264, %v2261
      %v2277 = vpack.c.b16 %v2265, %v2262
      %v2386 = vunpack.c.l.b16 %v2146
      %v2387 = vunpack.c.h.b16 %v2146
      %v2388 = vunpack.c.l.b16 %v2147
      %v2389 = vunpack.c.l.b16 %v2148
      %v2390 = vunpack.c.h.b16 %v2148
      %v2391 = vunpack.c.l.b16 %v2149
      %v2392 = vunpack.c.l.b16 %v2150
      %v2393 = vunpack.c.h.b16 %v2150
      %v2394 = vunpack.c.l.b16 %v2151
      %v2395 = vunpack.c.l.b16 %v2152
      %v2396 = vunpack.c.h.b16 %v2152
      %v2397 = vunpack.c.l.b16 %v2153
      %v2398 = vunpack.c.l.b16 %v2154
      %v2399 = vunpack.c.h.b16 %v2154
      %v2400 = vunpack.c.l.b16 %v2155
      %v2401 = vunpack.c.l.b16 %v2156
      %v2402 = vunpack.c.h.b16 %v2156
      %v2403 = vunpack.c.l.b16 %v2157
      %v2404 = vunpack.c.l.b16 %v2158
      %v2405 = vunpack.c.h.b16 %v2158
      %v2406 = vunpack.c.l.b16 %v2159
      %v2407 = vunpack.c.l.b16 %v2160
      %v2408 = vunpack.c.h.b16 %v2160
      %v2409 = vunpack.c.l.b16 %v2161
      %v2410 = vunpack.c.l.b16 %v2162
      %v2411 = vunpack.c.h.b16 %v2162
      %v2412 = vunpack.c.l.b16 %v2163
      %v2413 = vunpack.c.l.b16 %v2164
      %v2414 = vunpack.c.h.b16 %v2164
      %v2415 = vunpack.c.l.b16 %v2165
      %v2416 = vunpack.c.l.b16 %v2166
      %v2417 = vunpack.c.h.b16 %v2166
      %v2418 = vunpack.c.l.b16 %v2167
      %v2419 = vunpack.c.l.b16 %v2168
      %v2420 = vunpack.c.h.b16 %v2168
      %v2421 = vunpack.c.l.b16 %v2169
      %v2422 = vunpack.c.l.b16 %v2170
      %v2423 = vunpack.c.h.b16 %v2170
      %v2424 = vunpack.c.l.b16 %v2171
      %v2425 = vunpack.c.l.b16 %v2172
      %v2426 = vunpack.c.h.b16 %v2172
      %v2427 = vunpack.c.l.b16 %v2173
      %v2428 = vunpack.c.l.b16 %v2174
      %v2429 = vunpack.c.h.b16 %v2174
      %v2430 = vunpack.c.l.b16 %v2175
      %v2431 = vunpack.c.l.b16 %v2176
      %v2432 = vunpack.c.h.b16 %v2176
      %v2433 = vunpack.c.l.b16 %v2177
      %v2434 = vunpack.c.l.b16 %v2178
      %v2435 = vunpack.c.h.b16 %v2178
      %v2436 = vunpack.c.l.b16 %v2179
      %v2437 = vunpack.c.l.b16 %v2180
      %v2438 = vunpack.c.h.b16 %v2180
      %v2439 = vunpack.c.l.b16 %v2181
      %v2440 = vunpack.c.l.b16 %v2182
      %v2441 = vunpack.c.h.b16 %v2182
      %v2442 = vunpack.c.l.b16 %v2183
      %v2443 = vunpack.c.l.b16 %v2184
      %v2444 = vunpack.c.h.b16 %v2184
      %v2445 = vunpack.c.l.b16 %v2185
      %v2446 = vunpack.c.l.b16 %v2186
      %v2447 = vunpack.c.h.b16 %v2186
      %v2448 = vunpack.c.l.b16 %v2187
      %v2449 = vunpack.c.l.b16 %v2188
      %v2450 = vunpack.c.h.b16 %v2188
      %v2451 = vunpack.c.l.b16 %v2189
      %v2452 = vunpack.c.l.b16 %v2190
      %v2453 = vunpack.c.h.b16 %v2190
      %v2454 = vunpack.c.l.b16 %v2191
      %v2455 = vunpack.c.l.b16 %v2192
      %v2456 = vunpack.c.h.b16 %v2192
      %v2457 = vunpack.c.l.b16 %v2193
      %v2458 = vunpack.c.l.b16 %v2194
      %v2459 = vunpack.c.h.b16 %v2194
      %v2460 = vunpack.c.l.b16 %v2195
      %v2461 = vunpack.c.l.b16 %v2196
      %v2462 = vunpack.c.h.b16 %v2196
      %v2463 = vunpack.c.l.b16 %v2197
      %v2464 = vunpack.c.l.b16 %v2198
      %v2465 = vunpack.c.h.b16 %v2198
      %v2466 = vunpack.c.l.b16 %v2199
      %v2467 = vunpack.c.l.b16 %v2200
      %v2468 = vunpack.c.h.b16 %v2200
      %v2469 = vunpack.c.l.b16 %v2201
      %v2470 = vunpack.c.l.b16 %v2202
      %v2471 = vunpack.c.h.b16 %v2202
      %v2472 = vunpack.c.l.b16 %v2203
      %v2473 = vunpack.c.l.b16 %v2204
      %v2474 = vunpack.c.h.b16 %v2204
      %v2475 = vunpack.c.l.b16 %v2205
      %v2476 = vunpack.c.l.b16 %v2206
      %v2477 = vunpack.c.h.b16 %v2206
      %v2478 = vunpack.c.l.b16 %v2207
      %v2479 = vunpack.c.l.b16 %v2208
      %v2480 = vunpack.c.h.b16 %v2208
      %v2481 = vunpack.c.l.b16 %v2209
      %v2482 = vunpack.c.l.b16 %v2210
      %v2483 = vunpack.c.h.b16 %v2210
      %v2484 = vunpack.c.l.b16 %v2211
      %v2485 = vunpack.c.l.b16 %v2212
      %v2486 = vunpack.c.h.b16 %v2212
      %v2487 = vunpack.c.l.b16 %v2213
      %v2488 = vunpack.c.l.b16 %v2214
      %v2489 = vunpack.c.h.b16 %v2214
      %v2490 = vunpack.c.l.b16 %v2215
      %v2491 = vunpack.c.l.b16 %v2216
      %v2492 = vunpack.c.h.b16 %v2216
      %v2493 = vunpack.c.l.b16 %v2217
      %v2494 = vunpack.c.l.b16 %v2218
      %v2495 = vunpack.c.h.b16 %v2218
      %v2496 = vunpack.c.l.b16 %v2219
      %v2497 = vunpack.c.l.b16 %v2220
      %v2498 = vunpack.c.h.b16 %v2220
      %v2499 = vunpack.c.l.b16 %v2221
      %v2500 = vunpack.c.l.b16 %v2222
      %v2501 = vunpack.c.h.b16 %v2222
      %v2502 = vunpack.c.l.b16 %v2223
      %v2503 = vunpack.c.l.b16 %v2224
      %v2504 = vunpack.c.h.b16 %v2224
      %v2505 = vunpack.c.l.b16 %v2225
      %v2506 = vunpack.c.l.b16 %v2226
      %v2507 = vunpack.c.h.b16 %v2226
      %v2508 = vunpack.c.l.b16 %v2227
      %v2509 = vunpack.c.l.b16 %v2228
      %v2510 = vunpack.c.h.b16 %v2228
      %v2511 = vunpack.c.l.b16 %v2229
      %v2512 = vunpack.c.l.b16 %v2230
      %v2513 = vunpack.c.h.b16 %v2230
      %v2514 = vunpack.c.l.b16 %v2231
      %v2515 = vunpack.c.l.b16 %v2232
      %v2516 = vunpack.c.h.b16 %v2232
      %v2517 = vunpack.c.l.b16 %v2233
      %v2518 = vunpack.c.l.b16 %v2234
      %v2519 = vunpack.c.h.b16 %v2234
      %v2520 = vunpack.c.l.b16 %v2235
      %v2521 = vunpack.c.l.b16 %v2236
      %v2522 = vunpack.c.h.b16 %v2236
      %v2523 = vunpack.c.l.b16 %v2237
      %v2524 = vunpack.c.l.b16 %v2238
      %v2525 = vunpack.c.h.b16 %v2238
      %v2526 = vunpack.c.l.b16 %v2239
      %v2527 = vunpack.c.l.b16 %v2240
      %v2528 = vunpack.c.h.b16 %v2240
      %v2529 = vunpack.c.l.b16 %v2241
      %v2530 = vpack.c.b16 %v2389, %v2386
      %v2531 = vpack.c.b16 %v2390, %v2387
      %v2532 = vpack.c.b16 %v2391, %v2388
      %v2533 = vpack.c.b16 %v2395, %v2392
      %v2534 = vpack.c.b16 %v2396, %v2393
      %v2535 = vpack.c.b16 %v2397, %v2394
      %v2536 = vpack.c.b16 %v2401, %v2398
      %v2537 = vpack.c.b16 %v2402, %v2399
      %v2538 = vpack.c.b16 %v2403, %v2400
      %v2539 = vpack.c.b16 %v2407, %v2404
      %v2540 = vpack.c.b16 %v2408, %v2405
      %v2541 = vpack.c.b16 %v2409, %v2406
      %v2542 = vpack.c.b16 %v2413, %v2410
      %v2543 = vpack.c.b16 %v2414, %v2411
      %v2544 = vpack.c.b16 %v2415, %v2412
      %v2545 = vpack.c.b16 %v2419, %v2416
      %v2546 = vpack.c.b16 %v2420, %v2417
      %v2547 = vpack.c.b16 %v2421, %v2418
      %v2548 = vpack.c.b16 %v2425, %v2422
      %v2549 = vpack.c.b16 %v2426, %v2423
      %v2550 = vpack.c.b16 %v2427, %v2424
      %v2551 = vpack.c.b16 %v2431, %v2428
      %v2552 = vpack.c.b16 %v2432, %v2429
      %v2553 = vpack.c.b16 %v2433, %v2430
      %v2554 = vpack.c.b16 %v2437, %v2434
      %v2555 = vpack.c.b16 %v2438, %v2435
      %v2556 = vpack.c.b16 %v2439, %v2436
      %v2557 = vpack.c.b16 %v2443, %v2440
      %v2558 = vpack.c.b16 %v2444, %v2441
      %v2559 = vpack.c.b16 %v2445, %v2442
      %v2560 = vpack.c.b16 %v2449, %v2446
      %v2561 = vpack.c.b16 %v2450, %v2447
      %v2562 = vpack.c.b16 %v2451, %v2448
      %v2563 = vpack.c.b16 %v2455, %v2452
      %v2564 = vpack.c.b16 %v2456, %v2453
      %v2565 = vpack.c.b16 %v2457, %v2454
      %v2566 = vpack.c.b16 %v2461, %v2458
      %v2567 = vpack.c.b16 %v2462, %v2459
      %v2568 = vpack.c.b16 %v2463, %v2460
      %v2569 = vpack.c.b16 %v2467, %v2464
      %v2570 = vpack.c.b16 %v2468, %v2465
      %v2571 = vpack.c.b16 %v2469, %v2466
      %v2572 = vpack.c.b16 %v2473, %v2470
      %v2573 = vpack.c.b16 %v2474, %v2471
      %v2574 = vpack.c.b16 %v2475, %v2472
      %v2575 = vpack.c.b16 %v2479, %v2476
      %v2576 = vpack.c.b16 %v2480, %v2477
      %v2577 = vpack.c.b16 %v2481, %v2478
      %v2578 = vpack.c.b16 %v2485, %v2482
      %v2579 = vpack.c.b16 %v2486, %v2483
      %v2580 = vpack.c.b16 %v2487, %v2484
      %v2581 = vpack.c.b16 %v2491, %v2488
      %v2582 = vpack.c.b16 %v2492, %v2489
      %v2583 = vpack.c.b16 %v2493, %v2490
      %v2584 = vpack.c.b16 %v2497, %v2494
      %v2585 = vpack.c.b16 %v2498, %v2495
      %v2586 = vpack.c.b16 %v2499, %v2496
      %v2587 = vpack.c.b16 %v2503, %v2500
      %v2588 = vpack.c.b16 %v2504, %v2501
      %v2589 = vpack.c.b16 %v2505, %v2502
      %v2590 = vpack.c.b16 %v2509, %v2506
      %v2591 = vpack.c.b16 %v2510, %v2507
      %v2592 = vpack.c.b16 %v2511, %v2508
      %v2593 = vpack.c.b16 %v2515, %v2512
      %v2594 = vpack.c.b16 %v2516, %v2513
      %v2595 = vpack.c.b16 %v2517, %v2514
      %v2596 = vpack.c.b16 %v2521, %v2518
      %v2597 = vpack.c.b16 %v2522, %v2519
      %v2598 = vpack.c.b16 %v2523, %v2520
      %v2599 = vpack.c.b16 %v2527, %v2524
      %v2600 = vpack.c.b16 %v2528, %v2525
      %v2601 = vpack.c.b16 %v2529, %v2526
      %2674 = vmatprep.subr.bf16.mxu0 %v2531
      %2675 = vmatpush1.bf16.msra.mxu0 %v2530
      %2676 = vmatprep.subr.bf16.mxu0 %v2534
      %2677 = vmatpush1.bf16.msra.mxu0 %v2533
      %2678 = vmatprep.subr.bf16.mxu0 %v2537
      %2679 = vmatpush1.bf16.msra.mxu0 %v2536
      %2680 = vmatprep.subr.bf16.mxu0 %v2540
      %2681 = vmatpush1.bf16.msra.mxu0 %v2539
      %2682 = vmatprep.subr.bf16.mxu0 %v2543
      %2683 = vmatpush1.bf16.msra.mxu0 %v2542
      %2684 = vmatprep.subr.bf16.mxu0 %v2546
      %2685 = vmatpush1.bf16.msra.mxu0 %v2545
      %2686 = vmatprep.subr.bf16.mxu0 %v2549
      %2687 = vmatpush1.bf16.msra.mxu0 %v2548
      %2688 = vmatprep.subr.bf16.mxu0 %v2552
      %2689 = vmatpush1.bf16.msra.mxu0 %v2551
      %2690 = vmatprep.subr.bf16.mxu0 %v2555
      %2691 = vmatpush1.bf16.msra.mxu0 %v2554
      %2692 = vmatprep.subr.bf16.mxu0 %v2558
      %2693 = vmatpush1.bf16.msra.mxu0 %v2557
      %2694 = vmatprep.subr.bf16.mxu0 %v2561
      %2695 = vmatpush1.bf16.msra.mxu0 %v2560
      %2696 = vmatprep.subr.bf16.mxu0 %v2564
      %2697 = vmatpush1.bf16.msra.mxu0 %v2563
      %2698 = vmatprep.subr.bf16.mxu0 %v2567
      %2699 = vmatpush1.bf16.msra.mxu0 %v2566
      %2700 = vmatprep.subr.bf16.mxu0 %v2570
      %2701 = vmatpush1.bf16.msra.mxu0 %v2569
      %2702 = vmatprep.subr.bf16.mxu0 %v2573
      %2703 = vmatpush1.bf16.msra.mxu0 %v2572
      %2704 = vmatprep.subr.bf16.mxu0 %v2576
      %2705 = vmatpush1.bf16.msra.mxu0 %v2575
      %2706 = vmatprep.mubr.bf16.mxu0 %v2267
      %2707 = vmatmul.mubr.bf16.gmra.mrb[0].mxu0 %v2266
      %v2708 = vpop.f32.mrb[0].mxu0
      %v2709 = vadd.f32 0.0, %v2708
      %v2710 = vpop.f32.mrb[0].mxu0
      %v2711 = vadd.f32 0.0, %v2710
      %v2712 = vpop.f32.mrb[0].mxu0
      %v2713 = vadd.f32 0.0, %v2712
      %v2714 = vpop.f32.mrb[0].mxu0
      %v2715 = vadd.f32 0.0, %v2714
      %2716 = vmatprep.mubr.bf16.mxu0 %v2270
      %2717 = vmatmul.mubr.bf16.gmra.mrb[0].mxu0 %v2269
      %v2718 = vpop.f32.mrb[0].mxu0
      %v2719 = vadd.f32 0.0, %v2718
      %v2720 = vpop.f32.mrb[0].mxu0
      %v2721 = vadd.f32 0.0, %v2720
      %v2722 = vpop.f32.mrb[0].mxu0
      %v2723 = vadd.f32 0.0, %v2722
      %v2724 = vpop.f32.mrb[0].mxu0
      %v2725 = vadd.f32 0.0, %v2724
      %2726 = vmatprep.mubr.bf16.mxu0 %v2273
      %2727 = vmatmul.mubr.bf16.gmra.mrb[0].mxu0 %v2272
      %v2728 = vpop.f32.mrb[0].mxu0
      %v2729 = vadd.f32 0.0, %v2728
      %v2730 = vpop.f32.mrb[0].mxu0
      %v2731 = vadd.f32 0.0, %v2730
      %v2732 = vpop.f32.mrb[0].mxu0
      %v2733 = vadd.f32 0.0, %v2732
      %v2734 = vpop.f32.mrb[0].mxu0
      %v2735 = vadd.f32 0.0, %v2734
      %2736 = vmatprep.mubr.bf16.mxu0 %v2276
      %2737 = vmatmul.mubr.bf16.gmra.mrb[0].mxu0 %v2275
      %v2738 = vpop.f32.mrb[0].mxu0
      %v2739 = vadd.f32 0.0, %v2738
      %v2740 = vpop.f32.mrb[0].mxu0
      %v2741 = vadd.f32 0.0, %v2740
      %v2742 = vpop.f32.mrb[0].mxu0
      %v2743 = vadd.f32 0.0, %v2742
      %v2744 = vpop.f32.mrb[0].mxu0
      %v2745 = vadd.f32 0.0, %v2744
      %2746 = vdwg.mxu0
      %2747 = vmatprep.subr.bf16.mxu0 %v2579
      %2748 = vmatpush1.bf16.msra.mxu0 %v2578
      %2749 = vmatprep.subr.bf16.mxu0 %v2582
      %2750 = vmatpush1.bf16.msra.mxu0 %v2581
      %2751 = vmatprep.subr.bf16.mxu0 %v2585
      %2752 = vmatpush1.bf16.msra.mxu0 %v2584
      %2753 = vmatprep.subr.bf16.mxu0 %v2588
      %2754 = vmatpush1.bf16.msra.mxu0 %v2587
      %2755 = vmatprep.subr.bf16.mxu0 %v2591
      %2756 = vmatpush1.bf16.msra.mxu0 %v2590
      %2757 = vmatprep.subr.bf16.mxu0 %v2594
      %2758 = vmatpush1.bf16.msra.mxu0 %v2593
      %2759 = vmatprep.subr.bf16.mxu0 %v2597
      %2760 = vmatpush1.bf16.msra.mxu0 %v2596
      %2761 = vmatprep.subr.bf16.mxu0 %v2600
      %2762 = vmatpush1.bf16.msra.mxu0 %v2599
      %2763 = vmatprep.subr.bf16.mxu0 0
      %2764 = vmatpush1.bf16.msra.mxu0 0
      %2765 = vmatprep.subr.bf16.mxu0 0
      %2766 = vmatpush1.bf16.msra.mxu0 0
      %2767 = vmatprep.subr.bf16.mxu0 0
      %2768 = vmatpush1.bf16.msra.mxu0 0
      %2769 = vmatprep.subr.bf16.mxu0 0
      %2770 = vmatpush1.bf16.msra.mxu0 0
      %2771 = vmatprep.subr.bf16.mxu0 0
      %2772 = vmatpush1.bf16.msra.mxu0 0
      %2773 = vmatprep.subr.bf16.mxu0 0
      %2774 = vmatpush1.bf16.msra.mxu0 0
      %2775 = vmatprep.subr.bf16.mxu0 0
      %2776 = vmatpush1.bf16.msra.mxu0 0
      %2777 = vmatprep.subr.bf16.mxu0 0
      %2778 = vmatpush1.bf16.msra.mxu0 0
      %2779 = vmatprep.mubr.bf16.mxu0 0
      %2780 = vmatmul.mubr.bf16.gmra.mrb[0].mxu0 %v2268
      %v2781 = vpop.f32.mrb[0].mxu0
      %v2782 = vadd.f32 %v2709, %v2781
      %v2783 = vpop.f32.mrb[0].mxu0
      %v2784 = vadd.f32 %v2711, %v2783
      %v2785 = vpop.f32.mrb[0].mxu0
      %v2786 = vadd.f32 %v2713, %v2785
      %v2787 = vpop.f32.mrb[0].mxu0
      %v2788 = vadd.f32 %v2715, %v2787
      %2789 = vmatprep.mubr.bf16.mxu0 0
      %2790 = vmatmul.mubr.bf16.gmra.mrb[0].mxu0 %v2271
      %v2791 = vpop.f32.mrb[0].mxu0
      %v2792 = vadd.f32 %v2719, %v2791
      %v2793 = vpop.f32.mrb[0].mxu0
      %v2794 = vadd.f32 %v2721, %v2793
      %v2795 = vpop.f32.mrb[0].mxu0
      %v2796 = vadd.f32 %v2723, %v2795
      %v2797 = vpop.f32.mrb[0].mxu0
      %v2798 = vadd.f32 %v2725, %v2797
      %2799 = vmatprep.mubr.bf16.mxu0 0
      %2800 = vmatmul.mubr.bf16.gmra.mrb[0].mxu0 %v2274
      %v2801 = vpop.f32.mrb[0].mxu0
      %v2802 = vadd.f32 %v2729, %v2801
      %v2803 = vpop.f32.mrb[0].mxu0
      %v2804 = vadd.f32 %v2731, %v2803
      %v2805 = vpop.f32.mrb[0].mxu0
      %v2806 = vadd.f32 %v2733, %v2805
      %v2807 = vpop.f32.mrb[0].mxu0
      %v2808 = vadd.f32 %v2735, %v2807
      %2809 = vmatprep.mubr.bf16.mxu0 0
      %2810 = vmatmul.mubr.bf16.gmra.mrb[0].mxu0 %v2277
      %v2811 = vpop.f32.mrb[0].mxu0
      %v2812 = vadd.f32 %v2739, %v2811
      %v2813 = vpop.f32.mrb[0].mxu0
      %v2814 = vadd.f32 %v2741, %v2813
      %v2815 = vpop.f32.mrb[0].mxu0
      %v2816 = vadd.f32 %v2743, %v2815
      %v2817 = vpop.f32.mrb[0].mxu0
      %v2818 = vadd.f32 %v2745, %v2817
      %2819 = vdwg.mxu0
      %2820 = vmatprep.subr.bf16.mxu0 0
      %2821 = vmatpush1.bf16.msra.mxu0 %v2532
      %2822 = vmatprep.subr.bf16.mxu0 0
      %2823 = vmatpush1.bf16.msra.mxu0 %v2535
      %2824 = vmatprep.subr.bf16.mxu0 0
      %2825 = vmatpush1.bf16.msra.mxu0 %v2538
      %2826 = vmatprep.subr.bf16.mxu0 0
      %2827 = vmatpush1.bf16.msra.mxu0 %v2541
      %2828 = vmatprep.subr.bf16.mxu0 0
      %2829 = vmatpush1.bf16.msra.mxu0 %v2544
      %2830 = vmatprep.subr.bf16.mxu0 0
      %2831 = vmatpush1.bf16.msra.mxu0 %v2547
      %2832 = vmatprep.subr.bf16.mxu0 0
      %2833 = vmatpush1.bf16.msra.mxu0 %v2550
      %2834 = vmatprep.subr.bf16.mxu0 0
      %2835 = vmatpush1.bf16.msra.mxu0 %v2553
      %2836 = vmatprep.subr.bf16.mxu0 0
      %2837 = vmatpush1.bf16.msra.mxu0 %v2556
      %2838 = vmatprep.subr.bf16.mxu0 0
      %2839 = vmatpush1.bf16.msra.mxu0 %v2559
      %2840 = vmatprep.subr.bf16.mxu0 0
      %2841 = vmatpush1.bf16.msra.mxu0 %v2562
      %2842 = vmatprep.subr.bf16.mxu0 0
      %2843 = vmatpush1.bf16.msra.mxu0 %v2565
      %2844 = vmatprep.subr.bf16.mxu0 0
      %2845 = vmatpush1.bf16.msra.mxu0 %v2568
      %2846 = vmatprep.subr.bf16.mxu0 0
      %2847 = vmatpush1.bf16.msra.mxu0 %v2571
      %2848 = vmatprep.subr.bf16.mxu0 0
      %2849 = vmatpush1.bf16.msra.mxu0 %v2574
      %2850 = vmatprep.subr.bf16.mxu0 0
      %2851 = vmatpush1.bf16.msra.mxu0 %v2577
      %2852 = vmatprep.mubr.bf16.mxu0 %v2267
      %2853 = vmatmul.mubr.bf16.gmra.mrb[0].mxu0 %v2266
      %v2854 = vpop.f32.mrb[0].mxu0
      %v2855 = vadd.f32 0.0, %v2854
      %v2856 = vpop.f32.mrb[0].mxu0
      %v2857 = vpop.f32.mrb[0].mxu0
      %v2858 = vadd.f32 0.0, %v2857
      %v2859 = vpop.f32.mrb[0].mxu0
      %2860 = vmatprep.mubr.bf16.mxu0 %v2270
      %2861 = vmatmul.mubr.bf16.gmra.mrb[0].mxu0 %v2269
      %v2862 = vpop.f32.mrb[0].mxu0
      %v2863 = vadd.f32 0.0, %v2862
      %v2864 = vpop.f32.mrb[0].mxu0
      %v2865 = vpop.f32.mrb[0].mxu0
      %v2866 = vadd.f32 0.0, %v2865
      %v2867 = vpop.f32.mrb[0].mxu0
      %2868 = vmatprep.mubr.bf16.mxu0 %v2273
      %2869 = vmatmul.mubr.bf16.gmra.mrb[0].mxu0 %v2272
      %v2870 = vpop.f32.mrb[0].mxu0
      %v2871 = vadd.f32 0.0, %v2870
      %v2872 = vpop.f32.mrb[0].mxu0
      %v2873 = vpop.f32.mrb[0].mxu0
      %v2874 = vadd.f32 0.0, %v2873
      %v2875 = vpop.f32.mrb[0].mxu0
      %2876 = vmatprep.mubr.bf16.mxu0 %v2276
      %2877 = vmatmul.mubr.bf16.gmra.mrb[0].mxu0 %v2275
      %v2878 = vpop.f32.mrb[0].mxu0
      %v2879 = vadd.f32 0.0, %v2878
      %v2880 = vpop.f32.mrb[0].mxu0
      %v2881 = vpop.f32.mrb[0].mxu0
      %v2882 = vadd.f32 0.0, %v2881
      %v2883 = vpop.f32.mrb[0].mxu0
      %2884 = vdwg.mxu0
      %2885 = vmatprep.subr.bf16.mxu0 0
      %2886 = vmatpush1.bf16.msra.mxu0 %v2580
      %2887 = vmatprep.subr.bf16.mxu0 0
      %2888 = vmatpush1.bf16.msra.mxu0 %v2583
      %2889 = vmatprep.subr.bf16.mxu0 0
      %2890 = vmatpush1.bf16.msra.mxu0 %v2586
      %2891 = vmatprep.subr.bf16.mxu0 0
      %2892 = vmatpush1.bf16.msra.mxu0 %v2589
      %2893 = vmatprep.subr.bf16.mxu0 0
      %2894 = vmatpush1.bf16.msra.mxu0 %v2592
      %2895 = vmatprep.subr.bf16.mxu0 0
      %2896 = vmatpush1.bf16.msra.mxu0 %v2595
      %2897 = vmatprep.subr.bf16.mxu0 0
      %2898 = vmatpush1.bf16.msra.mxu0 %v2598
      %2899 = vmatprep.subr.bf16.mxu0 0
      %2900 = vmatpush1.bf16.msra.mxu0 %v2601
      %2901 = vmatprep.subr.bf16.mxu0 0
      %2902 = vmatpush1.bf16.msra.mxu0 0
      %2903 = vmatprep.subr.bf16.mxu0 0
      %2904 = vmatpush1.bf16.msra.mxu0 0
      %2905 = vmatprep.subr.bf16.mxu0 0
      %2906 = vmatpush1.bf16.msra.mxu0 0
      %2907 = vmatprep.subr.bf16.mxu0 0
      %2908 = vmatpush1.bf16.msra.mxu0 0
      %2909 = vmatprep.subr.bf16.mxu0 0
      %2910 = vmatpush1.bf16.msra.mxu0 0
      %2911 = vmatprep.subr.bf16.mxu0 0
      %2912 = vmatpush1.bf16.msra.mxu0 0
      %2913 = vmatprep.subr.bf16.mxu0 0
      %2914 = vmatpush1.bf16.msra.mxu0 0
      %2915 = vmatprep.subr.bf16.mxu0 0
      %2916 = vmatpush1.bf16.msra.mxu0 0
      %2917 = vmatprep.mubr.bf16.mxu0 0
      %2918 = vmatmul.mubr.bf16.gmra.mrb[0].mxu0 %v2268
      %v2919 = vpop.f32.mrb[0].mxu0
      %v2920 = vadd.f32 %v2855, %v2919
      %v2921 = vpop.f32.mrb[0].mxu0
      %v2922 = vpop.f32.mrb[0].mxu0
      %v2923 = vadd.f32 %v2858, %v2922
      %v2924 = vpop.f32.mrb[0].mxu0
      %2925 = vmatprep.mubr.bf16.mxu0 0
      %2926 = vmatmul.mubr.bf16.gmra.mrb[0].mxu0 %v2271
      %v2927 = vpop.f32.mrb[0].mxu0
      %v2928 = vadd.f32 %v2863, %v2927
      %v2929 = vpop.f32.mrb[0].mxu0
      %v2930 = vpop.f32.mrb[0].mxu0
      %v2931 = vadd.f32 %v2866, %v2930
      %v2932 = vpop.f32.mrb[0].mxu0
      %2933 = vmatprep.mubr.bf16.mxu0 0
      %2934 = vmatmul.mubr.bf16.gmra.mrb[0].mxu0 %v2274
      %v2935 = vpop.f32.mrb[0].mxu0
      %v2936 = vadd.f32 %v2871, %v2935
      %v2937 = vpop.f32.mrb[0].mxu0
      %v2938 = vpop.f32.mrb[0].mxu0
      %v2939 = vadd.f32 %v2874, %v2938
      %v2940 = vpop.f32.mrb[0].mxu0
      %2941 = vmatprep.mubr.bf16.mxu0 0
      %2942 = vmatmul.mubr.bf16.gmra.mrb[0].mxu0 %v2277
      %v2943 = vpop.f32.mrb[0].mxu0
      %v2944 = vadd.f32 %v2879, %v2943
      %v2945 = vpop.f32.mrb[0].mxu0
      %v2946 = vpop.f32.mrb[0].mxu0
      %v2947 = vadd.f32 %v2882, %v2946
      %v2948 = vpop.f32.mrb[0].mxu0
      %2949 = vdwg.mxu0
      %v2950 = vadd.f32 %v1894, %v2782
      %v2951 = vadd.f32 %v1896, %v2784
      %v2952 = vadd.f32 %v2032, %v2920
      %v2953 = vadd.f32 %v1898, %v2786
      %v2954 = vadd.f32 %v1900, %v2788
      %v2955 = vadd.f32 %v2035, %v2923
      %v2956 = vadd.f32 %v1904, %v2792
      %v2957 = vadd.f32 %v1906, %v2794
      %v2958 = vadd.f32 %v2040, %v2928
      %v2959 = vadd.f32 %v1908, %v2796
      %v2960 = vadd.f32 %v1910, %v2798
      %v2961 = vadd.f32 %v2043, %v2931
      %v2962 = vadd.f32 %v1914, %v2802
      %v2963 = vadd.f32 %v1916, %v2804
      %v2964 = vadd.f32 %v2048, %v2936
      %v2965 = vadd.f32 %v1918, %v2806
      %v2966 = vadd.f32 %v1920, %v2808
      %v2967 = vadd.f32 %v2051, %v2939
      %v2968 = vadd.f32 %v1924, %v2812
      %v2969 = vadd.f32 %v1926, %v2814
      %v2970 = vadd.f32 %v2056, %v2944
      %v2971 = vadd.f32 %v1928, %v2816
      %v2972 = vadd.f32 %v1930, %v2818
      %v2973 = vadd.f32 %v2059, %v2947
      %s2974 = scalar_lea.vmem %s1, 1728
      %v2975 = vld [vmem:[%s2974] sm:$0xff]
      %v2976 = vld [vmem:[%s2974 + $0x8] sm:$0xf]
      %v2977 = vld [vmem:[%s2974 + $0xc] sm:$0xff]
      %v2978 = vld [vmem:[%s2974 + $0x14] sm:$0xf]
      %v2979 = vld [vmem:[%s2974 + $0x18] sm:$0xff]
      %v2980 = vld [vmem:[%s2974 + $0x20] sm:$0xf]
      %v2981 = vld [vmem:[%s2974 + $0x24] sm:$0xff]
      %v2982 = vld [vmem:[%s2974 + $0x2c] sm:$0xf]
      %v2983 = vld [vmem:[%s2974 + $0x30] sm:$0xff]
      %v2984 = vld [vmem:[%s2974 + $0x38] sm:$0xf]
      %v2985 = vld [vmem:[%s2974 + $0x3c] sm:$0xff]
      %v2986 = vld [vmem:[%s2974 + $0x44] sm:$0xf]
      %v2987 = vld [vmem:[%s2974 + $0x48] sm:$0xff]
      %v2988 = vld [vmem:[%s2974 + $0x50] sm:$0xf]
      %v2989 = vld [vmem:[%s2974 + $0x54] sm:$0xff]
      %v2990 = vld [vmem:[%s2974 + $0x5c] sm:$0xf]
      %v2991 = vld [vmem:[%s2974 + $0x60] sm:$0xff]
      %v2992 = vld [vmem:[%s2974 + $0x68] sm:$0xf]
      %v2993 = vld [vmem:[%s2974 + $0x6c] sm:$0xff]
      %v2994 = vld [vmem:[%s2974 + $0x74] sm:$0xf]
      %v2995 = vld [vmem:[%s2974 + $0x78] sm:$0xff]
      %v2996 = vld [vmem:[%s2974 + $0x80] sm:$0xf]
      %v2997 = vld [vmem:[%s2974 + $0x84] sm:$0xff]
      %v2998 = vld [vmem:[%s2974 + $0x8c] sm:$0xf]
      %v2999 = vld [vmem:[%s2974 + $0x90] sm:$0xff]
      %v3000 = vld [vmem:[%s2974 + $0x98] sm:$0xf]
      %v3001 = vld [vmem:[%s2974 + $0x9c] sm:$0xff]
      %v3002 = vld [vmem:[%s2974 + $0xa4] sm:$0xf]
      %v3003 = vld [vmem:[%s2974 + $0xa8] sm:$0xff]
      %v3004 = vld [vmem:[%s2974 + $0xb0] sm:$0xf]
      %v3005 = vld [vmem:[%s2974 + $0xb4] sm:$0xff]
      %v3006 = vld [vmem:[%s2974 + $0xbc] sm:$0xf]
      %v3007 = vld [vmem:[%s2974 + $0xc0] sm:$0xff]
      %v3008 = vld [vmem:[%s2974 + $0xc8] sm:$0xf]
      %v3009 = vld [vmem:[%s2974 + $0xcc] sm:$0xff]
      %v3010 = vld [vmem:[%s2974 + $0xd4] sm:$0xf]
      %v3011 = vld [vmem:[%s2974 + $0xd8] sm:$0xff]
      %v3012 = vld [vmem:[%s2974 + $0xe0] sm:$0xf]
      %v3013 = vld [vmem:[%s2974 + $0xe4] sm:$0xff]
      %v3014 = vld [vmem:[%s2974 + $0xec] sm:$0xf]
      %v3015 = vld [vmem:[%s2974 + $0xf0] sm:$0xff]
      %v3016 = vld [vmem:[%s2974 + $0xf8] sm:$0xf]
      %v3017 = vld [vmem:[%s2974 + $0xfc] sm:$0xff]
      %v3018 = vld [vmem:[%s2974 + $0x104] sm:$0xf]
      %v3019 = vld [vmem:[%s2974 + $0x108] sm:$0xff]
      %v3020 = vld [vmem:[%s2974 + $0x110] sm:$0xf]
      %v3021 = vld [vmem:[%s2974 + $0x114] sm:$0xff]
      %v3022 = vld [vmem:[%s2974 + $0x11c] sm:$0xf]
      %v3023 = vld [vmem:[%s2974 + $0x120] sm:$0xff]
      %v3024 = vld [vmem:[%s2974 + $0x128] sm:$0xf]
      %v3025 = vld [vmem:[%s2974 + $0x12c] sm:$0xff]
      %v3026 = vld [vmem:[%s2974 + $0x134] sm:$0xf]
      %v3027 = vld [vmem:[%s2974 + $0x138] sm:$0xff]
      %v3028 = vld [vmem:[%s2974 + $0x140] sm:$0xf]
      %v3029 = vld [vmem:[%s2974 + $0x144] sm:$0xff]
      %v3030 = vld [vmem:[%s2974 + $0x14c] sm:$0xf]
      %v3031 = vld [vmem:[%s2974 + $0x150] sm:$0xff]
      %v3032 = vld [vmem:[%s2974 + $0x158] sm:$0xf]
      %v3033 = vld [vmem:[%s2974 + $0x15c] sm:$0xff]
      %v3034 = vld [vmem:[%s2974 + $0x164] sm:$0xf]
      %v3035 = vld [vmem:[%s2974 + $0x168] sm:$0xff]
      %v3036 = vld [vmem:[%s2974 + $0x170] sm:$0xf]
      %v3037 = vld [vmem:[%s2974 + $0x174] sm:$0xff]
      %v3038 = vld [vmem:[%s2974 + $0x17c] sm:$0xf]
      %v3039 = vld [vmem:[%s2974 + $0x180] sm:$0xff]
      %v3040 = vld [vmem:[%s2974 + $0x188] sm:$0xf]
      %v3041 = vld [vmem:[%s2974 + $0x18c] sm:$0xff]
      %v3042 = vld [vmem:[%s2974 + $0x194] sm:$0xf]
      %v3043 = vld [vmem:[%s2974 + $0x198] sm:$0xff]
      %v3044 = vld [vmem:[%s2974 + $0x1a0] sm:$0xf]
      %v3045 = vld [vmem:[%s2974 + $0x1a4] sm:$0xff]
      %v3046 = vld [vmem:[%s2974 + $0x1ac] sm:$0xf]
      %v3047 = vld [vmem:[%s2974 + $0x1b0] sm:$0xff]
      %v3048 = vld [vmem:[%s2974 + $0x1b8] sm:$0xf]
      %v3049 = vld [vmem:[%s2974 + $0x1bc] sm:$0xff]
      %v3050 = vld [vmem:[%s2974 + $0x1c4] sm:$0xf]
      %v3051 = vld [vmem:[%s2974 + $0x1c8] sm:$0xff]
      %v3052 = vld [vmem:[%s2974 + $0x1d0] sm:$0xf]
      %v3053 = vld [vmem:[%s2974 + $0x1d4] sm:$0xff]
      %v3054 = vld [vmem:[%s2974 + $0x1dc] sm:$0xf]
      %v3055 = vld [vmem:[%s2974 + $0x1e0] sm:$0xff]
      %v3056 = vld [vmem:[%s2974 + $0x1e8] sm:$0xf]
      %v3057 = vld [vmem:[%s2974 + $0x1ec] sm:$0xff]
      %v3058 = vld [vmem:[%s2974 + $0x1f4] sm:$0xf]
      %v3059 = vld [vmem:[%s2974 + $0x1f8] sm:$0xff]
      %v3060 = vld [vmem:[%s2974 + $0x200] sm:$0xf]
      %v3061 = vld [vmem:[%s2974 + $0x204] sm:$0xff]
      %v3062 = vld [vmem:[%s2974 + $0x20c] sm:$0xf]
      %v3063 = vld [vmem:[%s2974 + $0x210] sm:$0xff]
      %v3064 = vld [vmem:[%s2974 + $0x218] sm:$0xf]
      %v3065 = vld [vmem:[%s2974 + $0x21c] sm:$0xff]
      %v3066 = vld [vmem:[%s2974 + $0x224] sm:$0xf]
      %v3067 = vld [vmem:[%s2974 + $0x228] sm:$0xff]
      %v3068 = vld [vmem:[%s2974 + $0x230] sm:$0xf]
      %v3069 = vld [vmem:[%s2974 + $0x234] sm:$0xff]
      %v3070 = vld [vmem:[%s2974 + $0x23c] sm:$0xf]
      %v3073 = vunpack.c.l.b16 %v202
      %v3074 = vunpack.c.h.b16 %v202
      %v3075 = vunpack.c.l.b16 %v203
      %v3076 = vpack.c.b16 %v1360, %v1357
      %v3077 = vpack.c.b16 %v1361, %v1358
      %v3078 = vpack.c.b16 %v1362, %v1359
      %v3079 = vpack.c.b16 %v1366, %v1363
      %v3080 = vpack.c.b16 %v1367, %v1364
      %v3081 = vpack.c.b16 %v1368, %v1365
      %v3082 = vpack.c.b16 %v1372, %v1369
      %v3083 = vpack.c.b16 %v1373, %v1370
      %v3084 = vpack.c.b16 %v1374, %v1371
      %v3085 = vpack.c.b16 %v3073, %v1375
      %v3086 = vpack.c.b16 %v3074, %v1376
      %v3087 = vpack.c.b16 %v3075, %v1377
      %v3196 = vunpack.c.l.b16 %v2975
      %v3197 = vunpack.c.h.b16 %v2975
      %v3198 = vunpack.c.l.b16 %v2976
      %v3199 = vunpack.c.l.b16 %v2977
      %v3200 = vunpack.c.h.b16 %v2977
      %v3201 = vunpack.c.l.b16 %v2978
      %v3202 = vunpack.c.l.b16 %v2979
      %v3203 = vunpack.c.h.b16 %v2979
      %v3204 = vunpack.c.l.b16 %v2980
      %v3205 = vunpack.c.l.b16 %v2981
      %v3206 = vunpack.c.h.b16 %v2981
      %v3207 = vunpack.c.l.b16 %v2982
      %v3208 = vunpack.c.l.b16 %v2983
      %v3209 = vunpack.c.h.b16 %v2983
      %v3210 = vunpack.c.l.b16 %v2984
      %v3211 = vunpack.c.l.b16 %v2985
      %v3212 = vunpack.c.h.b16 %v2985
      %v3213 = vunpack.c.l.b16 %v2986
      %v3214 = vunpack.c.l.b16 %v2987
      %v3215 = vunpack.c.h.b16 %v2987
      %v3216 = vunpack.c.l.b16 %v2988
      %v3217 = vunpack.c.l.b16 %v2989
      %v3218 = vunpack.c.h.b16 %v2989
      %v3219 = vunpack.c.l.b16 %v2990
      %v3220 = vunpack.c.l.b16 %v2991
      %v3221 = vunpack.c.h.b16 %v2991
      %v3222 = vunpack.c.l.b16 %v2992
      %v3223 = vunpack.c.l.b16 %v2993
      %v3224 = vunpack.c.h.b16 %v2993
      %v3225 = vunpack.c.l.b16 %v2994
      %v3226 = vunpack.c.l.b16 %v2995
      %v3227 = vunpack.c.h.b16 %v2995
      %v3228 = vunpack.c.l.b16 %v2996
      %v3229 = vunpack.c.l.b16 %v2997
      %v3230 = vunpack.c.h.b16 %v2997
      %v3231 = vunpack.c.l.b16 %v2998
      %v3232 = vunpack.c.l.b16 %v2999
      %v3233 = vunpack.c.h.b16 %v2999
      %v3234 = vunpack.c.l.b16 %v3000
      %v3235 = vunpack.c.l.b16 %v3001
      %v3236 = vunpack.c.h.b16 %v3001
      %v3237 = vunpack.c.l.b16 %v3002
      %v3238 = vunpack.c.l.b16 %v3003
      %v3239 = vunpack.c.h.b16 %v3003
      %v3240 = vunpack.c.l.b16 %v3004
      %v3241 = vunpack.c.l.b16 %v3005
      %v3242 = vunpack.c.h.b16 %v3005
      %v3243 = vunpack.c.l.b16 %v3006
      %v3244 = vunpack.c.l.b16 %v3007
      %v3245 = vunpack.c.h.b16 %v3007
      %v3246 = vunpack.c.l.b16 %v3008
      %v3247 = vunpack.c.l.b16 %v3009
      %v3248 = vunpack.c.h.b16 %v3009
      %v3249 = vunpack.c.l.b16 %v3010
      %v3250 = vunpack.c.l.b16 %v3011
      %v3251 = vunpack.c.h.b16 %v3011
      %v3252 = vunpack.c.l.b16 %v3012
      %v3253 = vunpack.c.l.b16 %v3013
      %v3254 = vunpack.c.h.b16 %v3013
      %v3255 = vunpack.c.l.b16 %v3014
      %v3256 = vunpack.c.l.b16 %v3015
      %v3257 = vunpack.c.h.b16 %v3015
      %v3258 = vunpack.c.l.b16 %v3016
      %v3259 = vunpack.c.l.b16 %v3017
      %v3260 = vunpack.c.h.b16 %v3017
      %v3261 = vunpack.c.l.b16 %v3018
      %v3262 = vunpack.c.l.b16 %v3019
      %v3263 = vunpack.c.h.b16 %v3019
      %v3264 = vunpack.c.l.b16 %v3020
      %v3265 = vunpack.c.l.b16 %v3021
      %v3266 = vunpack.c.h.b16 %v3021
      %v3267 = vunpack.c.l.b16 %v3022
      %v3268 = vunpack.c.l.b16 %v3023
      %v3269 = vunpack.c.h.b16 %v3023
      %v3270 = vunpack.c.l.b16 %v3024
      %v3271 = vunpack.c.l.b16 %v3025
      %v3272 = vunpack.c.h.b16 %v3025
      %v3273 = vunpack.c.l.b16 %v3026
      %v3274 = vunpack.c.l.b16 %v3027
      %v3275 = vunpack.c.h.b16 %v3027
      %v3276 = vunpack.c.l.b16 %v3028
      %v3277 = vunpack.c.l.b16 %v3029
      %v3278 = vunpack.c.h.b16 %v3029
      %v3279 = vunpack.c.l.b16 %v3030
      %v3280 = vunpack.c.l.b16 %v3031
      %v3281 = vunpack.c.h.b16 %v3031
      %v3282 = vunpack.c.l.b16 %v3032
      %v3283 = vunpack.c.l.b16 %v3033
      %v3284 = vunpack.c.h.b16 %v3033
      %v3285 = vunpack.c.l.b16 %v3034
      %v3286 = vunpack.c.l.b16 %v3035
      %v3287 = vunpack.c.h.b16 %v3035
      %v3288 = vunpack.c.l.b16 %v3036
      %v3289 = vunpack.c.l.b16 %v3037
      %v3290 = vunpack.c.h.b16 %v3037
      %v3291 = vunpack.c.l.b16 %v3038
      %v3292 = vunpack.c.l.b16 %v3039
      %v3293 = vunpack.c.h.b16 %v3039
      %v3294 = vunpack.c.l.b16 %v3040
      %v3295 = vunpack.c.l.b16 %v3041
      %v3296 = vunpack.c.h.b16 %v3041
      %v3297 = vunpack.c.l.b16 %v3042
      %v3298 = vunpack.c.l.b16 %v3043
      %v3299 = vunpack.c.h.b16 %v3043
      %v3300 = vunpack.c.l.b16 %v3044
      %v3301 = vunpack.c.l.b16 %v3045
      %v3302 = vunpack.c.h.b16 %v3045
      %v3303 = vunpack.c.l.b16 %v3046
      %v3304 = vunpack.c.l.b16 %v3047
      %v3305 = vunpack.c.h.b16 %v3047
      %v3306 = vunpack.c.l.b16 %v3048
      %v3307 = vunpack.c.l.b16 %v3049
      %v3308 = vunpack.c.h.b16 %v3049
      %v3309 = vunpack.c.l.b16 %v3050
      %v3310 = vunpack.c.l.b16 %v3051
      %v3311 = vunpack.c.h.b16 %v3051
      %v3312 = vunpack.c.l.b16 %v3052
      %v3313 = vunpack.c.l.b16 %v3053
      %v3314 = vunpack.c.h.b16 %v3053
      %v3315 = vunpack.c.l.b16 %v3054
      %v3316 = vunpack.c.l.b16 %v3055
      %v3317 = vunpack.c.h.b16 %v3055
      %v3318 = vunpack.c.l.b16 %v3056
      %v3319 = vunpack.c.l.b16 %v3057
      %v3320 = vunpack.c.h.b16 %v3057
      %v3321 = vunpack.c.l.b16 %v3058
      %v3322 = vunpack.c.l.b16 %v3059
      %v3323 = vunpack.c.h.b16 %v3059
      %v3324 = vunpack.c.l.b16 %v3060
      %v3325 = vunpack.c.l.b16 %v3061
      %v3326 = vunpack.c.h.b16 %v3061
      %v3327 = vunpack.c.l.b16 %v3062
      %v3328 = vunpack.c.l.b16 %v3063
      %v3329 = vunpack.c.h.b16 %v3063
      %v3330 = vunpack.c.l.b16 %v3064
      %v3331 = vunpack.c.l.b16 %v3065
      %v3332 = vunpack.c.h.b16 %v3065
      %v3333 = vunpack.c.l.b16 %v3066
      %v3334 = vunpack.c.l.b16 %v3067
      %v3335 = vunpack.c.h.b16 %v3067
      %v3336 = vunpack.c.l.b16 %v3068
      %v3337 = vunpack.c.l.b16 %v3069
      %v3338 = vunpack.c.h.b16 %v3069
      %v3339 = vunpack.c.l.b16 %v3070
      %v3340 = vpack.c.b16 %v3199, %v3196
      %v3341 = vpack.c.b16 %v3200, %v3197
      %v3342 = vpack.c.b16 %v3201, %v3198
      %v3343 = vpack.c.b16 %v3205, %v3202
      %v3344 = vpack.c.b16 %v3206, %v3203
      %v3345 = vpack.c.b16 %v3207, %v3204
      %v3346 = vpack.c.b16 %v3211, %v3208
      %v3347 = vpack.c.b16 %v3212, %v3209
      %v3348 = vpack.c.b16 %v3213, %v3210
      %v3349 = vpack.c.b16 %v3217, %v3214
      %v3350 = vpack.c.b16 %v3218, %v3215
      %v3351 = vpack.c.b16 %v3219, %v3216
      %v3352 = vpack.c.b16 %v3223, %v3220
      %v3353 = vpack.c.b16 %v3224, %v3221
      %v3354 = vpack.c.b16 %v3225, %v3222
      %v3355 = vpack.c.b16 %v3229, %v3226
      %v3356 = vpack.c.b16 %v3230, %v3227
      %v3357 = vpack.c.b16 %v3231, %v3228
      %v3358 = vpack.c.b16 %v3235, %v3232
      %v3359 = vpack.c.b16 %v3236, %v3233
      %v3360 = vpack.c.b16 %v3237, %v3234
      %v3361 = vpack.c.b16 %v3241, %v3238
      %v3362 = vpack.c.b16 %v3242, %v3239
      %v3363 = vpack.c.b16 %v3243, %v3240
      %v3364 = vpack.c.b16 %v3247, %v3244
      %v3365 = vpack.c.b16 %v3248, %v3245
      %v3366 = vpack.c.b16 %v3249, %v3246
      %v3367 = vpack.c.b16 %v3253, %v3250
      %v3368 = vpack.c.b16 %v3254, %v3251
      %v3369 = vpack.c.b16 %v3255, %v3252
      %v3370 = vpack.c.b16 %v3259, %v3256
      %v3371 = vpack.c.b16 %v3260, %v3257
      %v3372 = vpack.c.b16 %v3261, %v3258
      %v3373 = vpack.c.b16 %v3265, %v3262
      %v3374 = vpack.c.b16 %v3266, %v3263
      %v3375 = vpack.c.b16 %v3267, %v3264
      %v3376 = vpack.c.b16 %v3271, %v3268
      %v3377 = vpack.c.b16 %v3272, %v3269
      %v3378 = vpack.c.b16 %v3273, %v3270
      %v3379 = vpack.c.b16 %v3277, %v3274
      %v3380 = vpack.c.b16 %v3278, %v3275
      %v3381 = vpack.c.b16 %v3279, %v3276
      %v3382 = vpack.c.b16 %v3283, %v3280
      %v3383 = vpack.c.b16 %v3284, %v3281
      %v3384 = vpack.c.b16 %v3285, %v3282
      %v3385 = vpack.c.b16 %v3289, %v3286
      %v3386 = vpack.c.b16 %v3290, %v3287
      %v3387 = vpack.c.b16 %v3291, %v3288
      %v3388 = vpack.c.b16 %v3295, %v3292
      %v3389 = vpack.c.b16 %v3296, %v3293
      %v3390 = vpack.c.b16 %v3297, %v3294
      %v3391 = vpack.c.b16 %v3301, %v3298
      %v3392 = vpack.c.b16 %v3302, %v3299
      %v3393 = vpack.c.b16 %v3303, %v3300
      %v3394 = vpack.c.b16 %v3307, %v3304
      %v3395 = vpack.c.b16 %v3308, %v3305
      %v3396 = vpack.c.b16 %v3309, %v3306
      %v3397 = vpack.c.b16 %v3313, %v3310
      %v3398 = vpack.c.b16 %v3314, %v3311
      %v3399 = vpack.c.b16 %v3315, %v3312
      %v3400 = vpack.c.b16 %v3319, %v3316
      %v3401 = vpack.c.b16 %v3320, %v3317
      %v3402 = vpack.c.b16 %v3321, %v3318
      %v3403 = vpack.c.b16 %v3325, %v3322
      %v3404 = vpack.c.b16 %v3326, %v3323
      %v3405 = vpack.c.b16 %v3327, %v3324
      %v3406 = vpack.c.b16 %v3331, %v3328
      %v3407 = vpack.c.b16 %v3332, %v3329
      %v3408 = vpack.c.b16 %v3333, %v3330
      %v3409 = vpack.c.b16 %v3337, %v3334
      %v3410 = vpack.c.b16 %v3338, %v3335
      %v3411 = vpack.c.b16 %v3339, %v3336
      %3484 = vmatprep.subr.bf16.mxu0 %v3341
      %3485 = vmatpush1.bf16.msra.mxu0 %v3340
      %3486 = vmatprep.subr.bf16.mxu0 %v3344
      %3487 = vmatpush1.bf16.msra.mxu0 %v3343
      %3488 = vmatprep.subr.bf16.mxu0 %v3347
      %3489 = vmatpush1.bf16.msra.mxu0 %v3346
      %3490 = vmatprep.subr.bf16.mxu0 %v3350
      %3491 = vmatpush1.bf16.msra.mxu0 %v3349
      %3492 = vmatprep.subr.bf16.mxu0 %v3353
      %3493 = vmatpush1.bf16.msra.mxu0 %v3352
      %3494 = vmatprep.subr.bf16.mxu0 %v3356
      %3495 = vmatpush1.bf16.msra.mxu0 %v3355
      %3496 = vmatprep.subr.bf16.mxu0 %v3359
      %3497 = vmatpush1.bf16.msra.mxu0 %v3358
      %3498 = vmatprep.subr.bf16.mxu0 %v3362
      %3499 = vmatpush1.bf16.msra.mxu0 %v3361
      %3500 = vmatprep.subr.bf16.mxu0 %v3365
      %3501 = vmatpush1.bf16.msra.mxu0 %v3364
      %3502 = vmatprep.subr.bf16.mxu0 %v3368
      %3503 = vmatpush1.bf16.msra.mxu0 %v3367
      %3504 = vmatprep.subr.bf16.mxu0 %v3371
      %3505 = vmatpush1.bf16.msra.mxu0 %v3370
      %3506 = vmatprep.subr.bf16.mxu0 %v3374
      %3507 = vmatpush1.bf16.msra.mxu0 %v3373
      %3508 = vmatprep.subr.bf16.mxu0 %v3377
      %3509 = vmatpush1.bf16.msra.mxu0 %v3376
      %3510 = vmatprep.subr.bf16.mxu0 %v3380
      %3511 = vmatpush1.bf16.msra.mxu0 %v3379
      %3512 = vmatprep.subr.bf16.mxu0 %v3383
      %3513 = vmatpush1.bf16.msra.mxu0 %v3382
      %3514 = vmatprep.subr.bf16.mxu0 %v3386
      %3515 = vmatpush1.bf16.msra.mxu0 %v3385
      %3516 = vmatprep.mubr.bf16.mxu0 %v3077
      %3517 = vmatmul.mubr.bf16.gmra.mrb[0].mxu0 %v3076
      %v3518 = vpop.f32.mrb[0].mxu0
      %v3519 = vadd.f32 0.0, %v3518
      %v3520 = vpop.f32.mrb[0].mxu0
      %v3521 = vadd.f32 0.0, %v3520
      %v3522 = vpop.f32.mrb[0].mxu0
      %v3523 = vadd.f32 0.0, %v3522
      %v3524 = vpop.f32.mrb[0].mxu0
      %v3525 = vadd.f32 0.0, %v3524
      %3526 = vmatprep.mubr.bf16.mxu0 %v3080
      %3527 = vmatmul.mubr.bf16.gmra.mrb[0].mxu0 %v3079
      %v3528 = vpop.f32.mrb[0].mxu0
      %v3529 = vadd.f32 0.0, %v3528
      %v3530 = vpop.f32.mrb[0].mxu0
      %v3531 = vadd.f32 0.0, %v3530
      %v3532 = vpop.f32.mrb[0].mxu0
      %v3533 = vadd.f32 0.0, %v3532
      %v3534 = vpop.f32.mrb[0].mxu0
      %v3535 = vadd.f32 0.0, %v3534
      %3536 = vmatprep.mubr.bf16.mxu0 %v3083
      %3537 = vmatmul.mubr.bf16.gmra.mrb[0].mxu0 %v3082
      %v3538 = vpop.f32.mrb[0].mxu0
      %v3539 = vadd.f32 0.0, %v3538
      %v3540 = vpop.f32.mrb[0].mxu0
      %v3541 = vadd.f32 0.0, %v3540
      %v3542 = vpop.f32.mrb[0].mxu0
      %v3543 = vadd.f32 0.0, %v3542
      %v3544 = vpop.f32.mrb[0].mxu0
      %v3545 = vadd.f32 0.0, %v3544
      %3546 = vmatprep.mubr.bf16.mxu0 %v3086
      %3547 = vmatmul.mubr.bf16.gmra.mrb[0].mxu0 %v3085
      %v3548 = vpop.f32.mrb[0].mxu0
      %v3549 = vadd.f32 0.0, %v3548
      %v3550 = vpop.f32.mrb[0].mxu0
      %v3551 = vadd.f32 0.0, %v3550
      %v3552 = vpop.f32.mrb[0].mxu0
      %v3553 = vadd.f32 0.0, %v3552
      %v3554 = vpop.f32.mrb[0].mxu0
      %v3555 = vadd.f32 0.0, %v3554
      %3556 = vdwg.mxu0
      %3557 = vmatprep.subr.bf16.mxu0 %v3389
      %3558 = vmatpush1.bf16.msra.mxu0 %v3388
      %3559 = vmatprep.subr.bf16.mxu0 %v3392
      %3560 = vmatpush1.bf16.msra.mxu0 %v3391
      %3561 = vmatprep.subr.bf16.mxu0 %v3395
      %3562 = vmatpush1.bf16.msra.mxu0 %v3394
      %3563 = vmatprep.subr.bf16.mxu0 %v3398
      %3564 = vmatpush1.bf16.msra.mxu0 %v3397
      %3565 = vmatprep.subr.bf16.mxu0 %v3401
      %3566 = vmatpush1.bf16.msra.mxu0 %v3400
      %3567 = vmatprep.subr.bf16.mxu0 %v3404
      %3568 = vmatpush1.bf16.msra.mxu0 %v3403
      %3569 = vmatprep.subr.bf16.mxu0 %v3407
      %3570 = vmatpush1.bf16.msra.mxu0 %v3406
      %3571 = vmatprep.subr.bf16.mxu0 %v3410
      %3572 = vmatpush1.bf16.msra.mxu0 %v3409
      %3573 = vmatprep.subr.bf16.mxu0 0
      %3574 = vmatpush1.bf16.msra.mxu0 0
      %3575 = vmatprep.subr.bf16.mxu0 0
      %3576 = vmatpush1.bf16.msra.mxu0 0
      %3577 = vmatprep.subr.bf16.mxu0 0
      %3578 = vmatpush1.bf16.msra.mxu0 0
      %3579 = vmatprep.subr.bf16.mxu0 0
      %3580 = vmatpush1.bf16.msra.mxu0 0
      %3581 = vmatprep.subr.bf16.mxu0 0
      %3582 = vmatpush1.bf16.msra.mxu0 0
      %3583 = vmatprep.subr.bf16.mxu0 0
      %3584 = vmatpush1.bf16.msra.mxu0 0
      %3585 = vmatprep.subr.bf16.mxu0 0
      %3586 = vmatpush1.bf16.msra.mxu0 0
      %3587 = vmatprep.subr.bf16.mxu0 0
      %3588 = vmatpush1.bf16.msra.mxu0 0
      %3589 = vmatprep.mubr.bf16.mxu0 0
      %3590 = vmatmul.mubr.bf16.gmra.mrb[0].mxu0 %v3078
      %v3591 = vpop.f32.mrb[0].mxu0
      %v3592 = vadd.f32 %v3519, %v3591
      %v3593 = vpop.f32.mrb[0].mxu0
      %v3594 = vadd.f32 %v3521, %v3593
      %v3595 = vpop.f32.mrb[0].mxu0
      %v3596 = vadd.f32 %v3523, %v3595
      %v3597 = vpop.f32.mrb[0].mxu0
      %v3598 = vadd.f32 %v3525, %v3597
      %3599 = vmatprep.mubr.bf16.mxu0 0
      %3600 = vmatmul.mubr.bf16.gmra.mrb[0].mxu0 %v3081
      %v3601 = vpop.f32.mrb[0].mxu0
      %v3602 = vadd.f32 %v3529, %v3601
      %v3603 = vpop.f32.mrb[0].mxu0
      %v3604 = vadd.f32 %v3531, %v3603
      %v3605 = vpop.f32.mrb[0].mxu0
      %v3606 = vadd.f32 %v3533, %v3605
      %v3607 = vpop.f32.mrb[0].mxu0
      %v3608 = vadd.f32 %v3535, %v3607
      %3609 = vmatprep.mubr.bf16.mxu0 0
      %3610 = vmatmul.mubr.bf16.gmra.mrb[0].mxu0 %v3084
      %v3611 = vpop.f32.mrb[0].mxu0
      %v3612 = vadd.f32 %v3539, %v3611
      %v3613 = vpop.f32.mrb[0].mxu0
      %v3614 = vadd.f32 %v3541, %v3613
      %v3615 = vpop.f32.mrb[0].mxu0
      %v3616 = vadd.f32 %v3543, %v3615
      %v3617 = vpop.f32.mrb[0].mxu0
      %v3618 = vadd.f32 %v3545, %v3617
      %3619 = vmatprep.mubr.bf16.mxu0 0
      %3620 = vmatmul.mubr.bf16.gmra.mrb[0].mxu0 %v3087
      %v3621 = vpop.f32.mrb[0].mxu0
      %v3622 = vadd.f32 %v3549, %v3621
      %v3623 = vpop.f32.mrb[0].mxu0
      %v3624 = vadd.f32 %v3551, %v3623
      %v3625 = vpop.f32.mrb[0].mxu0
      %v3626 = vadd.f32 %v3553, %v3625
      %v3627 = vpop.f32.mrb[0].mxu0
      %v3628 = vadd.f32 %v3555, %v3627
      %3629 = vdwg.mxu0
      %3630 = vmatprep.subr.bf16.mxu0 0
      %3631 = vmatpush1.bf16.msra.mxu0 %v3342
      %3632 = vmatprep.subr.bf16.mxu0 0
      %3633 = vmatpush1.bf16.msra.mxu0 %v3345
      %3634 = vmatprep.subr.bf16.mxu0 0
      %3635 = vmatpush1.bf16.msra.mxu0 %v3348
      %3636 = vmatprep.subr.bf16.mxu0 0
      %3637 = vmatpush1.bf16.msra.mxu0 %v3351
      %3638 = vmatprep.subr.bf16.mxu0 0
      %3639 = vmatpush1.bf16.msra.mxu0 %v3354
      %3640 = vmatprep.subr.bf16.mxu0 0
      %3641 = vmatpush1.bf16.msra.mxu0 %v3357
      %3642 = vmatprep.subr.bf16.mxu0 0
      %3643 = vmatpush1.bf16.msra.mxu0 %v3360
      %3644 = vmatprep.subr.bf16.mxu0 0
      %3645 = vmatpush1.bf16.msra.mxu0 %v3363
      %3646 = vmatprep.subr.bf16.mxu0 0
      %3647 = vmatpush1.bf16.msra.mxu0 %v3366
      %3648 = vmatprep.subr.bf16.mxu0 0
      %3649 = vmatpush1.bf16.msra.mxu0 %v3369
      %3650 = vmatprep.subr.bf16.mxu0 0
      %3651 = vmatpush1.bf16.msra.mxu0 %v3372
      %3652 = vmatprep.subr.bf16.mxu0 0
      %3653 = vmatpush1.bf16.msra.mxu0 %v3375
      %3654 = vmatprep.subr.bf16.mxu0 0
      %3655 = vmatpush1.bf16.msra.mxu0 %v3378
      %3656 = vmatprep.subr.bf16.mxu0 0
      %3657 = vmatpush1.bf16.msra.mxu0 %v3381
      %3658 = vmatprep.subr.bf16.mxu0 0
      %3659 = vmatpush1.bf16.msra.mxu0 %v3384
      %3660 = vmatprep.subr.bf16.mxu0 0
      %3661 = vmatpush1.bf16.msra.mxu0 %v3387
      %3662 = vmatprep.mubr.bf16.mxu0 %v3077
      %3663 = vmatmul.mubr.bf16.gmra.mrb[0].mxu0 %v3076
      %v3664 = vpop.f32.mrb[0].mxu0
      %v3665 = vadd.f32 0.0, %v3664
      %v3666 = vpop.f32.mrb[0].mxu0
      %v3667 = vpop.f32.mrb[0].mxu0
      %v3668 = vadd.f32 0.0, %v3667
      %v3669 = vpop.f32.mrb[0].mxu0
      %3670 = vmatprep.mubr.bf16.mxu0 %v3080
      %3671 = vmatmul.mubr.bf16.gmra.mrb[0].mxu0 %v3079
      %v3672 = vpop.f32.mrb[0].mxu0
      %v3673 = vadd.f32 0.0, %v3672
      %v3674 = vpop.f32.mrb[0].mxu0
      %v3675 = vpop.f32.mrb[0].mxu0
      %v3676 = vadd.f32 0.0, %v3675
      %v3677 = vpop.f32.mrb[0].mxu0
      %3678 = vmatprep.mubr.bf16.mxu0 %v3083
      %3679 = vmatmul.mubr.bf16.gmra.mrb[0].mxu0 %v3082
      %v3680 = vpop.f32.mrb[0].mxu0
      %v3681 = vadd.f32 0.0, %v3680
      %v3682 = vpop.f32.mrb[0].mxu0
      %v3683 = vpop.f32.mrb[0].mxu0
      %v3684 = vadd.f32 0.0, %v3683
      %v3685 = vpop.f32.mrb[0].mxu0
      %3686 = vmatprep.mubr.bf16.mxu0 %v3086
      %3687 = vmatmul.mubr.bf16.gmra.mrb[0].mxu0 %v3085
      %v3688 = vpop.f32.mrb[0].mxu0
      %v3689 = vadd.f32 0.0, %v3688
      %v3690 = vpop.f32.mrb[0].mxu0
      %v3691 = vpop.f32.mrb[0].mxu0
      %v3692 = vadd.f32 0.0, %v3691
      %v3693 = vpop.f32.mrb[0].mxu0
      %3694 = vdwg.mxu0
      %3695 = vmatprep.subr.bf16.mxu0 0
      %3696 = vmatpush1.bf16.msra.mxu0 %v3390
      %3697 = vmatprep.subr.bf16.mxu0 0
      %3698 = vmatpush1.bf16.msra.mxu0 %v3393
      %3699 = vmatprep.subr.bf16.mxu0 0
      %3700 = vmatpush1.bf16.msra.mxu0 %v3396
      %3701 = vmatprep.subr.bf16.mxu0 0
      %3702 = vmatpush1.bf16.msra.mxu0 %v3399
      %3703 = vmatprep.subr.bf16.mxu0 0
      %3704 = vmatpush1.bf16.msra.mxu0 %v3402
      %3705 = vmatprep.subr.bf16.mxu0 0
      %3706 = vmatpush1.bf16.msra.mxu0 %v3405
      %3707 = vmatprep.subr.bf16.mxu0 0
      %3708 = vmatpush1.bf16.msra.mxu0 %v3408
      %3709 = vmatprep.subr.bf16.mxu0 0
      %3710 = vmatpush1.bf16.msra.mxu0 %v3411
      %3711 = vmatprep.subr.bf16.mxu0 0
      %3712 = vmatpush1.bf16.msra.mxu0 0
      %3713 = vmatprep.subr.bf16.mxu0 0
      %3714 = vmatpush1.bf16.msra.mxu0 0
      %3715 = vmatprep.subr.bf16.mxu0 0
      %3716 = vmatpush1.bf16.msra.mxu0 0
      %3717 = vmatprep.subr.bf16.mxu0 0
      %3718 = vmatpush1.bf16.msra.mxu0 0
      %3719 = vmatprep.subr.bf16.mxu0 0
      %3720 = vmatpush1.bf16.msra.mxu0 0
      %3721 = vmatprep.subr.bf16.mxu0 0
      %3722 = vmatpush1.bf16.msra.mxu0 0
      %3723 = vmatprep.subr.bf16.mxu0 0
      %3724 = vmatpush1.bf16.msra.mxu0 0
      %3725 = vmatprep.subr.bf16.mxu0 0
      %3726 = vmatpush1.bf16.msra.mxu0 0
      %3727 = vmatprep.mubr.bf16.mxu0 0
      %3728 = vmatmul.mubr.bf16.gmra.mrb[0].mxu0 %v3078
      %v3729 = vpop.f32.mrb[0].mxu0
      %v3730 = vadd.f32 %v3665, %v3729
      %v3731 = vpop.f32.mrb[0].mxu0
      %v3732 = vpop.f32.mrb[0].mxu0
      %v3733 = vadd.f32 %v3668, %v3732
      %v3734 = vpop.f32.mrb[0].mxu0
      %3735 = vmatprep.mubr.bf16.mxu0 0
      %3736 = vmatmul.mubr.bf16.gmra.mrb[0].mxu0 %v3081
      %v3737 = vpop.f32.mrb[0].mxu0
      %v3738 = vadd.f32 %v3673, %v3737
      %v3739 = vpop.f32.mrb[0].mxu0
      %v3740 = vpop.f32.mrb[0].mxu0
      %v3741 = vadd.f32 %v3676, %v3740
      %v3742 = vpop.f32.mrb[0].mxu0
      %3743 = vmatprep.mubr.bf16.mxu0 0
      %3744 = vmatmul.mubr.bf16.gmra.mrb[0].mxu0 %v3084
      %v3745 = vpop.f32.mrb[0].mxu0
      %v3746 = vadd.f32 %v3681, %v3745
      %v3747 = vpop.f32.mrb[0].mxu0
      %v3748 = vpop.f32.mrb[0].mxu0
      %v3749 = vadd.f32 %v3684, %v3748
      %v3750 = vpop.f32.mrb[0].mxu0
      %3751 = vmatprep.mubr.bf16.mxu0 0
      %3752 = vmatmul.mubr.bf16.gmra.mrb[0].mxu0 %v3087
      %v3753 = vpop.f32.mrb[0].mxu0
      %v3754 = vadd.f32 %v3689, %v3753
      %v3755 = vpop.f32.mrb[0].mxu0
      %v3756 = vpop.f32.mrb[0].mxu0
      %v3757 = vadd.f32 %v3692, %v3756
      %v3758 = vpop.f32.mrb[0].mxu0
      %3759 = vdwg.mxu0
      %v3760 = vadd.f32 %v2950, %v3592
      %v3761 = vadd.f32 %v2951, %v3594
      %v3762 = vadd.f32 %v2952, %v3730
      %v3763 = vadd.f32 %v2953, %v3596
      %v3764 = vadd.f32 %v2954, %v3598
      %v3765 = vadd.f32 %v2955, %v3733
      %v3766 = vadd.f32 %v2956, %v3602
      %v3767 = vadd.f32 %v2957, %v3604
      %v3768 = vadd.f32 %v2958, %v3738
      %v3769 = vadd.f32 %v2959, %v3606
      %v3770 = vadd.f32 %v2960, %v3608
      %v3771 = vadd.f32 %v2961, %v3741
      %v3772 = vadd.f32 %v2962, %v3612
      %v3773 = vadd.f32 %v2963, %v3614
      %v3774 = vadd.f32 %v2964, %v3746
      %v3775 = vadd.f32 %v2965, %v3616
      %v3776 = vadd.f32 %v2966, %v3618
      %v3777 = vadd.f32 %v2967, %v3749
      %v3778 = vadd.f32 %v2968, %v3622
      %v3779 = vadd.f32 %v2969, %v3624
      %v3780 = vadd.f32 %v2970, %v3754
      %v3781 = vadd.f32 %v2971, %v3626
      %v3782 = vadd.f32 %v2972, %v3628
      %v3783 = vadd.f32 %v2973, %v3757
      %v3785 = vshrl.u32 %v202, 16
      %v3787 = vrot.slane %v3785, 4
      %v3788 = vshll.u32 %v202, 16
      %v3790 = vrot.slane %v3788, 5
      %v3791 = vor.u32 %v3787, %v3790
      %v3792 = vrot.slane %v3791, 4
      %v3794 = vshll.u32 %v204, 16
      %v3796 = vrot.slane %v3794, 5
      %v3797 = vsel %vm308, %v3792, %v3796
      %v3799 = vshrl.u32 %v203, 16
      %v3801 = vrot.slane %v3799, 4
      %v3802 = vshll.u32 %v203, 16
      %v3804 = vrot.slane %v3802, 5
      %v3805 = vor.u32 %v3801, %v3804
      %v3806 = vrot.slane %v3805, 4
      %v3808 = vshll.u32 %v205, 16
      %v3810 = vrot.slane %v3808, 5
      %v3811 = vsel %vm308, %v3806, %v3810
      %s3812 = scalar_lea.vmem %s1, 2304
      %v3813 = vld [vmem:[%s3812] sm:$0xff]
      %v3814 = vld [vmem:[%s3812 + $0x8] sm:$0xf]
      %v3815 = vld [vmem:[%s3812 + $0xc] sm:$0xff]
      %v3816 = vld [vmem:[%s3812 + $0x14] sm:$0xf]
      %v3817 = vld [vmem:[%s3812 + $0x18] sm:$0xff]
      %v3818 = vld [vmem:[%s3812 + $0x20] sm:$0xf]
      %v3819 = vld [vmem:[%s3812 + $0x24] sm:$0xff]
      %v3820 = vld [vmem:[%s3812 + $0x2c] sm:$0xf]
      %v3821 = vld [vmem:[%s3812 + $0x30] sm:$0xff]
      %v3822 = vld [vmem:[%s3812 + $0x38] sm:$0xf]
      %v3823 = vld [vmem:[%s3812 + $0x3c] sm:$0xff]
      %v3824 = vld [vmem:[%s3812 + $0x44] sm:$0xf]
      %v3825 = vld [vmem:[%s3812 + $0x48] sm:$0xff]
      %v3826 = vld [vmem:[%s3812 + $0x50] sm:$0xf]
      %v3827 = vld [vmem:[%s3812 + $0x54] sm:$0xff]
      %v3828 = vld [vmem:[%s3812 + $0x5c] sm:$0xf]
      %v3829 = vld [vmem:[%s3812 + $0x60] sm:$0xff]
      %v3830 = vld [vmem:[%s3812 + $0x68] sm:$0xf]
      %v3831 = vld [vmem:[%s3812 + $0x6c] sm:$0xff]
      %v3832 = vld [vmem:[%s3812 + $0x74] sm:$0xf]
      %v3833 = vld [vmem:[%s3812 + $0x78] sm:$0xff]
      %v3834 = vld [vmem:[%s3812 + $0x80] sm:$0xf]
      %v3835 = vld [vmem:[%s3812 + $0x84] sm:$0xff]
      %v3836 = vld [vmem:[%s3812 + $0x8c] sm:$0xf]
      %v3837 = vld [vmem:[%s3812 + $0x90] sm:$0xff]
      %v3838 = vld [vmem:[%s3812 + $0x98] sm:$0xf]
      %v3839 = vld [vmem:[%s3812 + $0x9c] sm:$0xff]
      %v3840 = vld [vmem:[%s3812 + $0xa4] sm:$0xf]
      %v3841 = vld [vmem:[%s3812 + $0xa8] sm:$0xff]
      %v3842 = vld [vmem:[%s3812 + $0xb0] sm:$0xf]
      %v3843 = vld [vmem:[%s3812 + $0xb4] sm:$0xff]
      %v3844 = vld [vmem:[%s3812 + $0xbc] sm:$0xf]
      %v3845 = vld [vmem:[%s3812 + $0xc0] sm:$0xff]
      %v3846 = vld [vmem:[%s3812 + $0xc8] sm:$0xf]
      %v3847 = vld [vmem:[%s3812 + $0xcc] sm:$0xff]
      %v3848 = vld [vmem:[%s3812 + $0xd4] sm:$0xf]
      %v3849 = vld [vmem:[%s3812 + $0xd8] sm:$0xff]
      %v3850 = vld [vmem:[%s3812 + $0xe0] sm:$0xf]
      %v3851 = vld [vmem:[%s3812 + $0xe4] sm:$0xff]
      %v3852 = vld [vmem:[%s3812 + $0xec] sm:$0xf]
      %v3853 = vld [vmem:[%s3812 + $0xf0] sm:$0xff]
      %v3854 = vld [vmem:[%s3812 + $0xf8] sm:$0xf]
      %v3855 = vld [vmem:[%s3812 + $0xfc] sm:$0xff]
      %v3856 = vld [vmem:[%s3812 + $0x104] sm:$0xf]
      %v3857 = vld [vmem:[%s3812 + $0x108] sm:$0xff]
      %v3858 = vld [vmem:[%s3812 + $0x110] sm:$0xf]
      %v3859 = vld [vmem:[%s3812 + $0x114] sm:$0xff]
      %v3860 = vld [vmem:[%s3812 + $0x11c] sm:$0xf]
      %v3861 = vld [vmem:[%s3812 + $0x120] sm:$0xff]
      %v3862 = vld [vmem:[%s3812 + $0x128] sm:$0xf]
      %v3863 = vld [vmem:[%s3812 + $0x12c] sm:$0xff]
      %v3864 = vld [vmem:[%s3812 + $0x134] sm:$0xf]
      %v3865 = vld [vmem:[%s3812 + $0x138] sm:$0xff]
      %v3866 = vld [vmem:[%s3812 + $0x140] sm:$0xf]
      %v3867 = vld [vmem:[%s3812 + $0x144] sm:$0xff]
      %v3868 = vld [vmem:[%s3812 + $0x14c] sm:$0xf]
      %v3869 = vld [vmem:[%s3812 + $0x150] sm:$0xff]
      %v3870 = vld [vmem:[%s3812 + $0x158] sm:$0xf]
      %v3871 = vld [vmem:[%s3812 + $0x15c] sm:$0xff]
      %v3872 = vld [vmem:[%s3812 + $0x164] sm:$0xf]
      %v3873 = vld [vmem:[%s3812 + $0x168] sm:$0xff]
      %v3874 = vld [vmem:[%s3812 + $0x170] sm:$0xf]
      %v3875 = vld [vmem:[%s3812 + $0x174] sm:$0xff]
      %v3876 = vld [vmem:[%s3812 + $0x17c] sm:$0xf]
      %v3877 = vld [vmem:[%s3812 + $0x180] sm:$0xff]
      %v3878 = vld [vmem:[%s3812 + $0x188] sm:$0xf]
      %v3879 = vld [vmem:[%s3812 + $0x18c] sm:$0xff]
      %v3880 = vld [vmem:[%s3812 + $0x194] sm:$0xf]
      %v3881 = vld [vmem:[%s3812 + $0x198] sm:$0xff]
      %v3882 = vld [vmem:[%s3812 + $0x1a0] sm:$0xf]
      %v3883 = vld [vmem:[%s3812 + $0x1a4] sm:$0xff]
      %v3884 = vld [vmem:[%s3812 + $0x1ac] sm:$0xf]
      %v3885 = vld [vmem:[%s3812 + $0x1b0] sm:$0xff]
      %v3886 = vld [vmem:[%s3812 + $0x1b8] sm:$0xf]
      %v3887 = vld [vmem:[%s3812 + $0x1bc] sm:$0xff]
      %v3888 = vld [vmem:[%s3812 + $0x1c4] sm:$0xf]
      %v3889 = vld [vmem:[%s3812 + $0x1c8] sm:$0xff]
      %v3890 = vld [vmem:[%s3812 + $0x1d0] sm:$0xf]
      %v3891 = vld [vmem:[%s3812 + $0x1d4] sm:$0xff]
      %v3892 = vld [vmem:[%s3812 + $0x1dc] sm:$0xf]
      %v3893 = vld [vmem:[%s3812 + $0x1e0] sm:$0xff]
      %v3894 = vld [vmem:[%s3812 + $0x1e8] sm:$0xf]
      %v3895 = vld [vmem:[%s3812 + $0x1ec] sm:$0xff]
      %v3896 = vld [vmem:[%s3812 + $0x1f4] sm:$0xf]
      %v3897 = vld [vmem:[%s3812 + $0x1f8] sm:$0xff]
      %v3898 = vld [vmem:[%s3812 + $0x200] sm:$0xf]
      %v3899 = vld [vmem:[%s3812 + $0x204] sm:$0xff]
      %v3900 = vld [vmem:[%s3812 + $0x20c] sm:$0xf]
      %v3901 = vld [vmem:[%s3812 + $0x210] sm:$0xff]
      %v3902 = vld [vmem:[%s3812 + $0x218] sm:$0xf]
      %v3903 = vld [vmem:[%s3812 + $0x21c] sm:$0xff]
      %v3904 = vld [vmem:[%s3812 + $0x224] sm:$0xf]
      %v3905 = vld [vmem:[%s3812 + $0x228] sm:$0xff]
      %v3906 = vld [vmem:[%s3812 + $0x230] sm:$0xf]
      %v3907 = vld [vmem:[%s3812 + $0x234] sm:$0xff]
      %v3908 = vld [vmem:[%s3812 + $0x23c] sm:$0xf]
      %v3909 = vunpack.c.l.b16 %v3797
      %v3910 = vunpack.c.h.b16 %v3797
      %v3911 = vunpack.c.l.b16 %v3811
      %v3912 = vpack.c.b16 %v636, %v633
      %v3913 = vpack.c.b16 %v637, %v634
      %v3914 = vpack.c.b16 %v638, %v635
      %v3915 = vpack.c.b16 %v642, %v639
      %v3916 = vpack.c.b16 %v643, %v640
      %v3917 = vpack.c.b16 %v644, %v641
      %v3918 = vpack.c.b16 %v648, %v645
      %v3919 = vpack.c.b16 %v649, %v646
      %v3920 = vpack.c.b16 %v650, %v647
      %v3921 = vpack.c.b16 %v3909, %v651
      %v3922 = vpack.c.b16 %v3910, %v652
      %v3923 = vpack.c.b16 %v3911, %v653
      %v4032 = vunpack.c.l.b16 %v3813
      %v4033 = vunpack.c.h.b16 %v3813
      %v4034 = vunpack.c.l.b16 %v3814
      %v4035 = vunpack.c.l.b16 %v3815
      %v4036 = vunpack.c.h.b16 %v3815
      %v4037 = vunpack.c.l.b16 %v3816
      %v4038 = vunpack.c.l.b16 %v3817
      %v4039 = vunpack.c.h.b16 %v3817
      %v4040 = vunpack.c.l.b16 %v3818
      %v4041 = vunpack.c.l.b16 %v3819
      %v4042 = vunpack.c.h.b16 %v3819
      %v4043 = vunpack.c.l.b16 %v3820
      %v4044 = vunpack.c.l.b16 %v3821
      %v4045 = vunpack.c.h.b16 %v3821
      %v4046 = vunpack.c.l.b16 %v3822
      %v4047 = vunpack.c.l.b16 %v3823
      %v4048 = vunpack.c.h.b16 %v3823
      %v4049 = vunpack.c.l.b16 %v3824
      %v4050 = vunpack.c.l.b16 %v3825
      %v4051 = vunpack.c.h.b16 %v3825
      %v4052 = vunpack.c.l.b16 %v3826
      %v4053 = vunpack.c.l.b16 %v3827
      %v4054 = vunpack.c.h.b16 %v3827
      %v4055 = vunpack.c.l.b16 %v3828
      %v4056 = vunpack.c.l.b16 %v3829
      %v4057 = vunpack.c.h.b16 %v3829
      %v4058 = vunpack.c.l.b16 %v3830
      %v4059 = vunpack.c.l.b16 %v3831
      %v4060 = vunpack.c.h.b16 %v3831
      %v4061 = vunpack.c.l.b16 %v3832
      %v4062 = vunpack.c.l.b16 %v3833
      %v4063 = vunpack.c.h.b16 %v3833
      %v4064 = vunpack.c.l.b16 %v3834
      %v4065 = vunpack.c.l.b16 %v3835
      %v4066 = vunpack.c.h.b16 %v3835
      %v4067 = vunpack.c.l.b16 %v3836
      %v4068 = vunpack.c.l.b16 %v3837
      %v4069 = vunpack.c.h.b16 %v3837
      %v4070 = vunpack.c.l.b16 %v3838
      %v4071 = vunpack.c.l.b16 %v3839
      %v4072 = vunpack.c.h.b16 %v3839
      %v4073 = vunpack.c.l.b16 %v3840
      %v4074 = vunpack.c.l.b16 %v3841
      %v4075 = vunpack.c.h.b16 %v3841
      %v4076 = vunpack.c.l.b16 %v3842
      %v4077 = vunpack.c.l.b16 %v3843
      %v4078 = vunpack.c.h.b16 %v3843
      %v4079 = vunpack.c.l.b16 %v3844
      %v4080 = vunpack.c.l.b16 %v3845
      %v4081 = vunpack.c.h.b16 %v3845
      %v4082 = vunpack.c.l.b16 %v3846
      %v4083 = vunpack.c.l.b16 %v3847
      %v4084 = vunpack.c.h.b16 %v3847
      %v4085 = vunpack.c.l.b16 %v3848
      %v4086 = vunpack.c.l.b16 %v3849
      %v4087 = vunpack.c.h.b16 %v3849
      %v4088 = vunpack.c.l.b16 %v3850
      %v4089 = vunpack.c.l.b16 %v3851
      %v4090 = vunpack.c.h.b16 %v3851
      %v4091 = vunpack.c.l.b16 %v3852
      %v4092 = vunpack.c.l.b16 %v3853
      %v4093 = vunpack.c.h.b16 %v3853
      %v4094 = vunpack.c.l.b16 %v3854
      %v4095 = vunpack.c.l.b16 %v3855
      %v4096 = vunpack.c.h.b16 %v3855
      %v4097 = vunpack.c.l.b16 %v3856
      %v4098 = vunpack.c.l.b16 %v3857
      %v4099 = vunpack.c.h.b16 %v3857
      %v4100 = vunpack.c.l.b16 %v3858
      %v4101 = vunpack.c.l.b16 %v3859
      %v4102 = vunpack.c.h.b16 %v3859
      %v4103 = vunpack.c.l.b16 %v3860
      %v4104 = vunpack.c.l.b16 %v3861
      %v4105 = vunpack.c.h.b16 %v3861
      %v4106 = vunpack.c.l.b16 %v3862
      %v4107 = vunpack.c.l.b16 %v3863
      %v4108 = vunpack.c.h.b16 %v3863
      %v4109 = vunpack.c.l.b16 %v3864
      %v4110 = vunpack.c.l.b16 %v3865
      %v4111 = vunpack.c.h.b16 %v3865
      %v4112 = vunpack.c.l.b16 %v3866
      %v4113 = vunpack.c.l.b16 %v3867
      %v4114 = vunpack.c.h.b16 %v3867
      %v4115 = vunpack.c.l.b16 %v3868
      %v4116 = vunpack.c.l.b16 %v3869
      %v4117 = vunpack.c.h.b16 %v3869
      %v4118 = vunpack.c.l.b16 %v3870
      %v4119 = vunpack.c.l.b16 %v3871
      %v4120 = vunpack.c.h.b16 %v3871
      %v4121 = vunpack.c.l.b16 %v3872
      %v4122 = vunpack.c.l.b16 %v3873
      %v4123 = vunpack.c.h.b16 %v3873
      %v4124 = vunpack.c.l.b16 %v3874
      %v4125 = vunpack.c.l.b16 %v3875
      %v4126 = vunpack.c.h.b16 %v3875
      %v4127 = vunpack.c.l.b16 %v3876
      %v4128 = vunpack.c.l.b16 %v3877
      %v4129 = vunpack.c.h.b16 %v3877
      %v4130 = vunpack.c.l.b16 %v3878
      %v4131 = vunpack.c.l.b16 %v3879
      %v4132 = vunpack.c.h.b16 %v3879
      %v4133 = vunpack.c.l.b16 %v3880
      %v4134 = vunpack.c.l.b16 %v3881
      %v4135 = vunpack.c.h.b16 %v3881
      %v4136 = vunpack.c.l.b16 %v3882
      %v4137 = vunpack.c.l.b16 %v3883
      %v4138 = vunpack.c.h.b16 %v3883
      %v4139 = vunpack.c.l.b16 %v3884
      %v4140 = vunpack.c.l.b16 %v3885
      %v4141 = vunpack.c.h.b16 %v3885
      %v4142 = vunpack.c.l.b16 %v3886
      %v4143 = vunpack.c.l.b16 %v3887
      %v4144 = vunpack.c.h.b16 %v3887
      %v4145 = vunpack.c.l.b16 %v3888
      %v4146 = vunpack.c.l.b16 %v3889
      %v4147 = vunpack.c.h.b16 %v3889
      %v4148 = vunpack.c.l.b16 %v3890
      %v4149 = vunpack.c.l.b16 %v3891
      %v4150 = vunpack.c.h.b16 %v3891
      %v4151 = vunpack.c.l.b16 %v3892
      %v4152 = vunpack.c.l.b16 %v3893
      %v4153 = vunpack.c.h.b16 %v3893
      %v4154 = vunpack.c.l.b16 %v3894
      %v4155 = vunpack.c.l.b16 %v3895
      %v4156 = vunpack.c.h.b16 %v3895
      %v4157 = vunpack.c.l.b16 %v3896
      %v4158 = vunpack.c.l.b16 %v3897
      %v4159 = vunpack.c.h.b16 %v3897
      %v4160 = vunpack.c.l.b16 %v3898
      %v4161 = vunpack.c.l.b16 %v3899
      %v4162 = vunpack.c.h.b16 %v3899
      %v4163 = vunpack.c.l.b16 %v3900
      %v4164 = vunpack.c.l.b16 %v3901
      %v4165 = vunpack.c.h.b16 %v3901
      %v4166 = vunpack.c.l.b16 %v3902
      %v4167 = vunpack.c.l.b16 %v3903
      %v4168 = vunpack.c.h.b16 %v3903
      %v4169 = vunpack.c.l.b16 %v3904
      %v4170 = vunpack.c.l.b16 %v3905
      %v4171 = vunpack.c.h.b16 %v3905
      %v4172 = vunpack.c.l.b16 %v3906
      %v4173 = vunpack.c.l.b16 %v3907
      %v4174 = vunpack.c.h.b16 %v3907
      %v4175 = vunpack.c.l.b16 %v3908
      %v4176 = vpack.c.b16 %v4035, %v4032
      %v4177 = vpack.c.b16 %v4036, %v4033
      %v4178 = vpack.c.b16 %v4037, %v4034
      %v4179 = vpack.c.b16 %v4041, %v4038
      %v4180 = vpack.c.b16 %v4042, %v4039
      %v4181 = vpack.c.b16 %v4043, %v4040
      %v4182 = vpack.c.b16 %v4047, %v4044
      %v4183 = vpack.c.b16 %v4048, %v4045
      %v4184 = vpack.c.b16 %v4049, %v4046
      %v4185 = vpack.c.b16 %v4053, %v4050
      %v4186 = vpack.c.b16 %v4054, %v4051
      %v4187 = vpack.c.b16 %v4055, %v4052
      %v4188 = vpack.c.b16 %v4059, %v4056
      %v4189 = vpack.c.b16 %v4060, %v4057
      %v4190 = vpack.c.b16 %v4061, %v4058
      %v4191 = vpack.c.b16 %v4065, %v4062
      %v4192 = vpack.c.b16 %v4066, %v4063
      %v4193 = vpack.c.b16 %v4067, %v4064
      %v4194 = vpack.c.b16 %v4071, %v4068
      %v4195 = vpack.c.b16 %v4072, %v4069
      %v4196 = vpack.c.b16 %v4073, %v4070
      %v4197 = vpack.c.b16 %v4077, %v4074
      %v4198 = vpack.c.b16 %v4078, %v4075
      %v4199 = vpack.c.b16 %v4079, %v4076
      %v4200 = vpack.c.b16 %v4083, %v4080
      %v4201 = vpack.c.b16 %v4084, %v4081
      %v4202 = vpack.c.b16 %v4085, %v4082
      %v4203 = vpack.c.b16 %v4089, %v4086
      %v4204 = vpack.c.b16 %v4090, %v4087
      %v4205 = vpack.c.b16 %v4091, %v4088
      %v4206 = vpack.c.b16 %v4095, %v4092
      %v4207 = vpack.c.b16 %v4096, %v4093
      %v4208 = vpack.c.b16 %v4097, %v4094
      %v4209 = vpack.c.b16 %v4101, %v4098
      %v4210 = vpack.c.b16 %v4102, %v4099
      %v4211 = vpack.c.b16 %v4103, %v4100
      %v4212 = vpack.c.b16 %v4107, %v4104
      %v4213 = vpack.c.b16 %v4108, %v4105
      %v4214 = vpack.c.b16 %v4109, %v4106
      %v4215 = vpack.c.b16 %v4113, %v4110
      %v4216 = vpack.c.b16 %v4114, %v4111
      %v4217 = vpack.c.b16 %v4115, %v4112
      %v4218 = vpack.c.b16 %v4119, %v4116
      %v4219 = vpack.c.b16 %v4120, %v4117
      %v4220 = vpack.c.b16 %v4121, %v4118
      %v4221 = vpack.c.b16 %v4125, %v4122
      %v4222 = vpack.c.b16 %v4126, %v4123
      %v4223 = vpack.c.b16 %v4127, %v4124
      %v4224 = vpack.c.b16 %v4131, %v4128
      %v4225 = vpack.c.b16 %v4132, %v4129
      %v4226 = vpack.c.b16 %v4133, %v4130
      %v4227 = vpack.c.b16 %v4137, %v4134
      %v4228 = vpack.c.b16 %v4138, %v4135
      %v4229 = vpack.c.b16 %v4139, %v4136
      %v4230 = vpack.c.b16 %v4143, %v4140
      %v4231 = vpack.c.b16 %v4144, %v4141
      %v4232 = vpack.c.b16 %v4145, %v4142
      %v4233 = vpack.c.b16 %v4149, %v4146
      %v4234 = vpack.c.b16 %v4150, %v4147
      %v4235 = vpack.c.b16 %v4151, %v4148
      %v4236 = vpack.c.b16 %v4155, %v4152
      %v4237 = vpack.c.b16 %v4156, %v4153
      %v4238 = vpack.c.b16 %v4157, %v4154
      %v4239 = vpack.c.b16 %v4161, %v4158
      %v4240 = vpack.c.b16 %v4162, %v4159
      %v4241 = vpack.c.b16 %v4163, %v4160
      %v4242 = vpack.c.b16 %v4167, %v4164
      %v4243 = vpack.c.b16 %v4168, %v4165
      %v4244 = vpack.c.b16 %v4169, %v4166
      %v4245 = vpack.c.b16 %v4173, %v4170
      %v4246 = vpack.c.b16 %v4174, %v4171
      %v4247 = vpack.c.b16 %v4175, %v4172
      %4320 = vmatprep.subr.bf16.mxu0 %v4177
      %4321 = vmatpush1.bf16.msra.mxu0 %v4176
      %4322 = vmatprep.subr.bf16.mxu0 %v4180
      %4323 = vmatpush1.bf16.msra.mxu0 %v4179
      %4324 = vmatprep.subr.bf16.mxu0 %v4183
      %4325 = vmatpush1.bf16.msra.mxu0 %v4182
      %4326 = vmatprep.subr.bf16.mxu0 %v4186
      %4327 = vmatpush1.bf16.msra.mxu0 %v4185
      %4328 = vmatprep.subr.bf16.mxu0 %v4189
      %4329 = vmatpush1.bf16.msra.mxu0 %v4188
      %4330 = vmatprep.subr.bf16.mxu0 %v4192
      %4331 = vmatpush1.bf16.msra.mxu0 %v4191
      %4332 = vmatprep.subr.bf16.mxu0 %v4195
      %4333 = vmatpush1.bf16.msra.mxu0 %v4194
      %4334 = vmatprep.subr.bf16.mxu0 %v4198
      %4335 = vmatpush1.bf16.msra.mxu0 %v4197
      %4336 = vmatprep.subr.bf16.mxu0 %v4201
      %4337 = vmatpush1.bf16.msra.mxu0 %v4200
      %4338 = vmatprep.subr.bf16.mxu0 %v4204
      %4339 = vmatpush1.bf16.msra.mxu0 %v4203
      %4340 = vmatprep.subr.bf16.mxu0 %v4207
      %4341 = vmatpush1.bf16.msra.mxu0 %v4206
      %4342 = vmatprep.subr.bf16.mxu0 %v4210
      %4343 = vmatpush1.bf16.msra.mxu0 %v4209
      %4344 = vmatprep.subr.bf16.mxu0 %v4213
      %4345 = vmatpush1.bf16.msra.mxu0 %v4212
      %4346 = vmatprep.subr.bf16.mxu0 %v4216
      %4347 = vmatpush1.bf16.msra.mxu0 %v4215
      %4348 = vmatprep.subr.bf16.mxu0 %v4219
      %4349 = vmatpush1.bf16.msra.mxu0 %v4218
      %4350 = vmatprep.subr.bf16.mxu0 %v4222
      %4351 = vmatpush1.bf16.msra.mxu0 %v4221
      %4352 = vmatprep.mubr.bf16.mxu0 %v3913
      %4353 = vmatmul.mubr.bf16.gmra.mrb[0].mxu0 %v3912
      %v4354 = vpop.f32.mrb[0].mxu0
      %v4355 = vadd.f32 0.0, %v4354
      %v4356 = vpop.f32.mrb[0].mxu0
      %v4357 = vadd.f32 0.0, %v4356
      %v4358 = vpop.f32.mrb[0].mxu0
      %v4359 = vadd.f32 0.0, %v4358
      %v4360 = vpop.f32.mrb[0].mxu0
      %v4361 = vadd.f32 0.0, %v4360
      %4362 = vmatprep.mubr.bf16.mxu0 %v3916
      %4363 = vmatmul.mubr.bf16.gmra.mrb[0].mxu0 %v3915
      %v4364 = vpop.f32.mrb[0].mxu0
      %v4365 = vadd.f32 0.0, %v4364
      %v4366 = vpop.f32.mrb[0].mxu0
      %v4367 = vadd.f32 0.0, %v4366
      %v4368 = vpop.f32.mrb[0].mxu0
      %v4369 = vadd.f32 0.0, %v4368
      %v4370 = vpop.f32.mrb[0].mxu0
      %v4371 = vadd.f32 0.0, %v4370
      %4372 = vmatprep.mubr.bf16.mxu0 %v3919
      %4373 = vmatmul.mubr.bf16.gmra.mrb[0].mxu0 %v3918
      %v4374 = vpop.f32.mrb[0].mxu0
      %v4375 = vadd.f32 0.0, %v4374
      %v4376 = vpop.f32.mrb[0].mxu0
      %v4377 = vadd.f32 0.0, %v4376
      %v4378 = vpop.f32.mrb[0].mxu0
      %v4379 = vadd.f32 0.0, %v4378
      %v4380 = vpop.f32.mrb[0].mxu0
      %v4381 = vadd.f32 0.0, %v4380
      %4382 = vmatprep.mubr.bf16.mxu0 %v3922
      %4383 = vmatmul.mubr.bf16.gmra.mrb[0].mxu0 %v3921
      %v4384 = vpop.f32.mrb[0].mxu0
      %v4385 = vadd.f32 0.0, %v4384
      %v4386 = vpop.f32.mrb[0].mxu0
      %v4387 = vadd.f32 0.0, %v4386
      %v4388 = vpop.f32.mrb[0].mxu0
      %v4389 = vadd.f32 0.0, %v4388
      %v4390 = vpop.f32.mrb[0].mxu0
      %v4391 = vadd.f32 0.0, %v4390
      %4392 = vdwg.mxu0
      %4393 = vmatprep.subr.bf16.mxu0 %v4225
      %4394 = vmatpush1.bf16.msra.mxu0 %v4224
      %4395 = vmatprep.subr.bf16.mxu0 %v4228
      %4396 = vmatpush1.bf16.msra.mxu0 %v4227
      %4397 = vmatprep.subr.bf16.mxu0 %v4231
      %4398 = vmatpush1.bf16.msra.mxu0 %v4230
      %4399 = vmatprep.subr.bf16.mxu0 %v4234
      %4400 = vmatpush1.bf16.msra.mxu0 %v4233
      %4401 = vmatprep.subr.bf16.mxu0 %v4237
      %4402 = vmatpush1.bf16.msra.mxu0 %v4236
      %4403 = vmatprep.subr.bf16.mxu0 %v4240
      %4404 = vmatpush1.bf16.msra.mxu0 %v4239
      %4405 = vmatprep.subr.bf16.mxu0 %v4243
      %4406 = vmatpush1.bf16.msra.mxu0 %v4242
      %4407 = vmatprep.subr.bf16.mxu0 %v4246
      %4408 = vmatpush1.bf16.msra.mxu0 %v4245
      %4409 = vmatprep.subr.bf16.mxu0 0
      %4410 = vmatpush1.bf16.msra.mxu0 0
      %4411 = vmatprep.subr.bf16.mxu0 0
      %4412 = vmatpush1.bf16.msra.mxu0 0
      %4413 = vmatprep.subr.bf16.mxu0 0
      %4414 = vmatpush1.bf16.msra.mxu0 0
      %4415 = vmatprep.subr.bf16.mxu0 0
      %4416 = vmatpush1.bf16.msra.mxu0 0
      %4417 = vmatprep.subr.bf16.mxu0 0
      %4418 = vmatpush1.bf16.msra.mxu0 0
      %4419 = vmatprep.subr.bf16.mxu0 0
      %4420 = vmatpush1.bf16.msra.mxu0 0
      %4421 = vmatprep.subr.bf16.mxu0 0
      %4422 = vmatpush1.bf16.msra.mxu0 0
      %4423 = vmatprep.subr.bf16.mxu0 0
      %4424 = vmatpush1.bf16.msra.mxu0 0
      %4425 = vmatprep.mubr.bf16.mxu0 0
      %4426 = vmatmul.mubr.bf16.gmra.mrb[0].mxu0 %v3914
      %v4427 = vpop.f32.mrb[0].mxu0
      %v4428 = vadd.f32 %v4355, %v4427
      %v4429 = vpop.f32.mrb[0].mxu0
      %v4430 = vadd.f32 %v4357, %v4429
      %v4431 = vpop.f32.mrb[0].mxu0
      %v4432 = vadd.f32 %v4359, %v4431
      %v4433 = vpop.f32.mrb[0].mxu0
      %v4434 = vadd.f32 %v4361, %v4433
      %4435 = vmatprep.mubr.bf16.mxu0 0
      %4436 = vmatmul.mubr.bf16.gmra.mrb[0].mxu0 %v3917
      %v4437 = vpop.f32.mrb[0].mxu0
      %v4438 = vadd.f32 %v4365, %v4437
      %v4439 = vpop.f32.mrb[0].mxu0
      %v4440 = vadd.f32 %v4367, %v4439
      %v4441 = vpop.f32.mrb[0].mxu0
      %v4442 = vadd.f32 %v4369, %v4441
      %v4443 = vpop.f32.mrb[0].mxu0
      %v4444 = vadd.f32 %v4371, %v4443
      %4445 = vmatprep.mubr.bf16.mxu0 0
      %4446 = vmatmul.mubr.bf16.gmra.mrb[0].mxu0 %v3920
      %v4447 = vpop.f32.mrb[0].mxu0
      %v4448 = vadd.f32 %v4375, %v4447
      %v4449 = vpop.f32.mrb[0].mxu0
      %v4450 = vadd.f32 %v4377, %v4449
      %v4451 = vpop.f32.mrb[0].mxu0
      %v4452 = vadd.f32 %v4379, %v4451
      %v4453 = vpop.f32.mrb[0].mxu0
      %v4454 = vadd.f32 %v4381, %v4453
      %4455 = vmatprep.mubr.bf16.mxu0 0
      %4456 = vmatmul.mubr.bf16.gmra.mrb[0].mxu0 %v3923
      %v4457 = vpop.f32.mrb[0].mxu0
      %v4458 = vadd.f32 %v4385, %v4457
      %v4459 = vpop.f32.mrb[0].mxu0
      %v4460 = vadd.f32 %v4387, %v4459
      %v4461 = vpop.f32.mrb[0].mxu0
      %v4462 = vadd.f32 %v4389, %v4461
      %v4463 = vpop.f32.mrb[0].mxu0
      %v4464 = vadd.f32 %v4391, %v4463
      %4465 = vdwg.mxu0
      %4466 = vmatprep.subr.bf16.mxu0 0
      %4467 = vmatpush1.bf16.msra.mxu0 %v4178
      %4468 = vmatprep.subr.bf16.mxu0 0
      %4469 = vmatpush1.bf16.msra.mxu0 %v4181
      %4470 = vmatprep.subr.bf16.mxu0 0
      %4471 = vmatpush1.bf16.msra.mxu0 %v4184
      %4472 = vmatprep.subr.bf16.mxu0 0
      %4473 = vmatpush1.bf16.msra.mxu0 %v4187
      %4474 = vmatprep.subr.bf16.mxu0 0
      %4475 = vmatpush1.bf16.msra.mxu0 %v4190
      %4476 = vmatprep.subr.bf16.mxu0 0
      %4477 = vmatpush1.bf16.msra.mxu0 %v4193
      %4478 = vmatprep.subr.bf16.mxu0 0
      %4479 = vmatpush1.bf16.msra.mxu0 %v4196
      %4480 = vmatprep.subr.bf16.mxu0 0
      %4481 = vmatpush1.bf16.msra.mxu0 %v4199
      %4482 = vmatprep.subr.bf16.mxu0 0
      %4483 = vmatpush1.bf16.msra.mxu0 %v4202
      %4484 = vmatprep.subr.bf16.mxu0 0
      %4485 = vmatpush1.bf16.msra.mxu0 %v4205
      %4486 = vmatprep.subr.bf16.mxu0 0
      %4487 = vmatpush1.bf16.msra.mxu0 %v4208
      %4488 = vmatprep.subr.bf16.mxu0 0
      %4489 = vmatpush1.bf16.msra.mxu0 %v4211
      %4490 = vmatprep.subr.bf16.mxu0 0
      %4491 = vmatpush1.bf16.msra.mxu0 %v4214
      %4492 = vmatprep.subr.bf16.mxu0 0
      %4493 = vmatpush1.bf16.msra.mxu0 %v4217
      %4494 = vmatprep.subr.bf16.mxu0 0
      %4495 = vmatpush1.bf16.msra.mxu0 %v4220
      %4496 = vmatprep.subr.bf16.mxu0 0
      %4497 = vmatpush1.bf16.msra.mxu0 %v4223
      %4498 = vmatprep.mubr.bf16.mxu0 %v3913
      %4499 = vmatmul.mubr.bf16.gmra.mrb[0].mxu0 %v3912
      %v4500 = vpop.f32.mrb[0].mxu0
      %v4501 = vadd.f32 0.0, %v4500
      %v4502 = vpop.f32.mrb[0].mxu0
      %v4503 = vpop.f32.mrb[0].mxu0
      %v4504 = vadd.f32 0.0, %v4503
      %v4505 = vpop.f32.mrb[0].mxu0
      %4506 = vmatprep.mubr.bf16.mxu0 %v3916
      %4507 = vmatmul.mubr.bf16.gmra.mrb[0].mxu0 %v3915
      %v4508 = vpop.f32.mrb[0].mxu0
      %v4509 = vadd.f32 0.0, %v4508
      %v4510 = vpop.f32.mrb[0].mxu0
      %v4511 = vpop.f32.mrb[0].mxu0
      %v4512 = vadd.f32 0.0, %v4511
      %v4513 = vpop.f32.mrb[0].mxu0
      %4514 = vmatprep.mubr.bf16.mxu0 %v3919
      %4515 = vmatmul.mubr.bf16.gmra.mrb[0].mxu0 %v3918
      %v4516 = vpop.f32.mrb[0].mxu0
      %v4517 = vadd.f32 0.0, %v4516
      %v4518 = vpop.f32.mrb[0].mxu0
      %v4519 = vpop.f32.mrb[0].mxu0
      %v4520 = vadd.f32 0.0, %v4519
      %v4521 = vpop.f32.mrb[0].mxu0
      %4522 = vmatprep.mubr.bf16.mxu0 %v3922
      %4523 = vmatmul.mubr.bf16.gmra.mrb[0].mxu0 %v3921
      %v4524 = vpop.f32.mrb[0].mxu0
      %v4525 = vadd.f32 0.0, %v4524
      %v4526 = vpop.f32.mrb[0].mxu0
      %v4527 = vpop.f32.mrb[0].mxu0
      %v4528 = vadd.f32 0.0, %v4527
      %v4529 = vpop.f32.mrb[0].mxu0
      %4530 = vdwg.mxu0
      %4531 = vmatprep.subr.bf16.mxu0 0
      %4532 = vmatpush1.bf16.msra.mxu0 %v4226
      %4533 = vmatprep.subr.bf16.mxu0 0
      %4534 = vmatpush1.bf16.msra.mxu0 %v4229
      %4535 = vmatprep.subr.bf16.mxu0 0
      %4536 = vmatpush1.bf16.msra.mxu0 %v4232
      %4537 = vmatprep.subr.bf16.mxu0 0
      %4538 = vmatpush1.bf16.msra.mxu0 %v4235
      %4539 = vmatprep.subr.bf16.mxu0 0
      %4540 = vmatpush1.bf16.msra.mxu0 %v4238
      %4541 = vmatprep.subr.bf16.mxu0 0
      %4542 = vmatpush1.bf16.msra.mxu0 %v4241
      %4543 = vmatprep.subr.bf16.mxu0 0
      %4544 = vmatpush1.bf16.msra.mxu0 %v4244
      %4545 = vmatprep.subr.bf16.mxu0 0
      %4546 = vmatpush1.bf16.msra.mxu0 %v4247
      %4547 = vmatprep.subr.bf16.mxu0 0
      %4548 = vmatpush1.bf16.msra.mxu0 0
      %4549 = vmatprep.subr.bf16.mxu0 0
      %4550 = vmatpush1.bf16.msra.mxu0 0
      %4551 = vmatprep.subr.bf16.mxu0 0
      %4552 = vmatpush1.bf16.msra.mxu0 0
      %4553 = vmatprep.subr.bf16.mxu0 0
      %4554 = vmatpush1.bf16.msra.mxu0 0
      %4555 = vmatprep.subr.bf16.mxu0 0
      %4556 = vmatpush1.bf16.msra.mxu0 0
      %4557 = vmatprep.subr.bf16.mxu0 0
      %4558 = vmatpush1.bf16.msra.mxu0 0
      %4559 = vmatprep.subr.bf16.mxu0 0
      %4560 = vmatpush1.bf16.msra.mxu0 0
      %4561 = vmatprep.subr.bf16.mxu0 0
      %4562 = vmatpush1.bf16.msra.mxu0 0
      %4563 = vmatprep.mubr.bf16.mxu0 0
      %4564 = vmatmul.mubr.bf16.gmra.mrb[0].mxu0 %v3914
      %v4565 = vpop.f32.mrb[0].mxu0
      %v4566 = vadd.f32 %v4501, %v4565
      %v4567 = vpop.f32.mrb[0].mxu0
      %v4568 = vpop.f32.mrb[0].mxu0
      %v4569 = vadd.f32 %v4504, %v4568
      %v4570 = vpop.f32.mrb[0].mxu0
      %4571 = vmatprep.mubr.bf16.mxu0 0
      %4572 = vmatmul.mubr.bf16.gmra.mrb[0].mxu0 %v3917
      %v4573 = vpop.f32.mrb[0].mxu0
      %v4574 = vadd.f32 %v4509, %v4573
      %v4575 = vpop.f32.mrb[0].mxu0
      %v4576 = vpop.f32.mrb[0].mxu0
      %v4577 = vadd.f32 %v4512, %v4576
      %v4578 = vpop.f32.mrb[0].mxu0
      %4579 = vmatprep.mubr.bf16.mxu0 0
      %4580 = vmatmul.mubr.bf16.gmra.mrb[0].mxu0 %v3920
      %v4581 = vpop.f32.mrb[0].mxu0
      %v4582 = vadd.f32 %v4517, %v4581
      %v4583 = vpop.f32.mrb[0].mxu0
      %v4584 = vpop.f32.mrb[0].mxu0
      %v4585 = vadd.f32 %v4520, %v4584
      %v4586 = vpop.f32.mrb[0].mxu0
      %4587 = vmatprep.mubr.bf16.mxu0 0
      %4588 = vmatmul.mubr.bf16.gmra.mrb[0].mxu0 %v3923
      %v4589 = vpop.f32.mrb[0].mxu0
      %v4590 = vadd.f32 %v4525, %v4589
      %v4591 = vpop.f32.mrb[0].mxu0
      %v4592 = vpop.f32.mrb[0].mxu0
      %v4593 = vadd.f32 %v4528, %v4592
      %v4594 = vpop.f32.mrb[0].mxu0
      %4595 = vdwg.mxu0
      %v4596 = vadd.f32 %v3760, %v4428
      %v4597 = vadd.f32 %v3761, %v4430
      %v4598 = vadd.f32 %v3762, %v4566
      %v4599 = vadd.f32 %v3763, %v4432
      %v4600 = vadd.f32 %v3764, %v4434
      %v4601 = vadd.f32 %v3765, %v4569
      %v4602 = vadd.f32 %v3766, %v4438
      %v4603 = vadd.f32 %v3767, %v4440
      %v4604 = vadd.f32 %v3768, %v4574
      %v4605 = vadd.f32 %v3769, %v4442
      %v4606 = vadd.f32 %v3770, %v4444
      %v4607 = vadd.f32 %v3771, %v4577
      %v4608 = vadd.f32 %v3772, %v4448
      %v4609 = vadd.f32 %v3773, %v4450
      %v4610 = vadd.f32 %v3774, %v4582
      %v4611 = vadd.f32 %v3775, %v4452
      %v4612 = vadd.f32 %v3776, %v4454
      %v4613 = vadd.f32 %v3777, %v4585
      %v4614 = vadd.f32 %v3778, %v4458
      %v4615 = vadd.f32 %v3779, %v4460
      %v4616 = vadd.f32 %v3780, %v4590
      %v4617 = vadd.f32 %v3781, %v4462
      %v4618 = vadd.f32 %v3782, %v4464
      %v4619 = vadd.f32 %v3783, %v4593
      %v4622 = vrot.slane %v202, 5
      %v4623 = vrot.slane %v4622, 4
      %v4624 = vrot.slane %v204, 5
      %v4625 = vsel %vm2080, %v4623, %v4624
      %v4626 = vrot.slane %v203, 5
      %v4627 = vrot.slane %v4626, 4
      %v4628 = vrot.slane %v205, 5
      %v4629 = vsel %vm2080, %v4627, %v4628
      %s4630 = scalar_lea.vmem %s1, 2880
      %v4631 = vld [vmem:[%s4630] sm:$0xff]
      %v4632 = vld [vmem:[%s4630 + $0x8] sm:$0xf]
      %v4633 = vld [vmem:[%s4630 + $0xc] sm:$0xff]
      %v4634 = vld [vmem:[%s4630 + $0x14] sm:$0xf]
      %v4635 = vld [vmem:[%s4630 + $0x18] sm:$0xff]
      %v4636 = vld [vmem:[%s4630 + $0x20] sm:$0xf]
      %v4637 = vld [vmem:[%s4630 + $0x24] sm:$0xff]
      %v4638 = vld [vmem:[%s4630 + $0x2c] sm:$0xf]
      %v4639 = vld [vmem:[%s4630 + $0x30] sm:$0xff]
      %v4640 = vld [vmem:[%s4630 + $0x38] sm:$0xf]
      %v4641 = vld [vmem:[%s4630 + $0x3c] sm:$0xff]
      %v4642 = vld [vmem:[%s4630 + $0x44] sm:$0xf]
      %v4643 = vld [vmem:[%s4630 + $0x48] sm:$0xff]
      %v4644 = vld [vmem:[%s4630 + $0x50] sm:$0xf]
      %v4645 = vld [vmem:[%s4630 + $0x54] sm:$0xff]
      %v4646 = vld [vmem:[%s4630 + $0x5c] sm:$0xf]
      %v4647 = vld [vmem:[%s4630 + $0x60] sm:$0xff]
      %v4648 = vld [vmem:[%s4630 + $0x68] sm:$0xf]
      %v4649 = vld [vmem:[%s4630 + $0x6c] sm:$0xff]
      %v4650 = vld [vmem:[%s4630 + $0x74] sm:$0xf]
      %v4651 = vld [vmem:[%s4630 + $0x78] sm:$0xff]
      %v4652 = vld [vmem:[%s4630 + $0x80] sm:$0xf]
      %v4653 = vld [vmem:[%s4630 + $0x84] sm:$0xff]
      %v4654 = vld [vmem:[%s4630 + $0x8c] sm:$0xf]
      %v4655 = vld [vmem:[%s4630 + $0x90] sm:$0xff]
      %v4656 = vld [vmem:[%s4630 + $0x98] sm:$0xf]
      %v4657 = vld [vmem:[%s4630 + $0x9c] sm:$0xff]
      %v4658 = vld [vmem:[%s4630 + $0xa4] sm:$0xf]
      %v4659 = vld [vmem:[%s4630 + $0xa8] sm:$0xff]
      %v4660 = vld [vmem:[%s4630 + $0xb0] sm:$0xf]
      %v4661 = vld [vmem:[%s4630 + $0xb4] sm:$0xff]
      %v4662 = vld [vmem:[%s4630 + $0xbc] sm:$0xf]
      %v4663 = vld [vmem:[%s4630 + $0xc0] sm:$0xff]
      %v4664 = vld [vmem:[%s4630 + $0xc8] sm:$0xf]
      %v4665 = vld [vmem:[%s4630 + $0xcc] sm:$0xff]
      %v4666 = vld [vmem:[%s4630 + $0xd4] sm:$0xf]
      %v4667 = vld [vmem:[%s4630 + $0xd8] sm:$0xff]
      %v4668 = vld [vmem:[%s4630 + $0xe0] sm:$0xf]
      %v4669 = vld [vmem:[%s4630 + $0xe4] sm:$0xff]
      %v4670 = vld [vmem:[%s4630 + $0xec] sm:$0xf]
      %v4671 = vld [vmem:[%s4630 + $0xf0] sm:$0xff]
      %v4672 = vld [vmem:[%s4630 + $0xf8] sm:$0xf]
      %v4673 = vld [vmem:[%s4630 + $0xfc] sm:$0xff]
      %v4674 = vld [vmem:[%s4630 + $0x104] sm:$0xf]
      %v4675 = vld [vmem:[%s4630 + $0x108] sm:$0xff]
      %v4676 = vld [vmem:[%s4630 + $0x110] sm:$0xf]
      %v4677 = vld [vmem:[%s4630 + $0x114] sm:$0xff]
      %v4678 = vld [vmem:[%s4630 + $0x11c] sm:$0xf]
      %v4679 = vld [vmem:[%s4630 + $0x120] sm:$0xff]
      %v4680 = vld [vmem:[%s4630 + $0x128] sm:$0xf]
      %v4681 = vld [vmem:[%s4630 + $0x12c] sm:$0xff]
      %v4682 = vld [vmem:[%s4630 + $0x134] sm:$0xf]
      %v4683 = vld [vmem:[%s4630 + $0x138] sm:$0xff]
      %v4684 = vld [vmem:[%s4630 + $0x140] sm:$0xf]
      %v4685 = vld [vmem:[%s4630 + $0x144] sm:$0xff]
      %v4686 = vld [vmem:[%s4630 + $0x14c] sm:$0xf]
      %v4687 = vld [vmem:[%s4630 + $0x150] sm:$0xff]
      %v4688 = vld [vmem:[%s4630 + $0x158] sm:$0xf]
      %v4689 = vld [vmem:[%s4630 + $0x15c] sm:$0xff]
      %v4690 = vld [vmem:[%s4630 + $0x164] sm:$0xf]
      %v4691 = vld [vmem:[%s4630 + $0x168] sm:$0xff]
      %v4692 = vld [vmem:[%s4630 + $0x170] sm:$0xf]
      %v4693 = vld [vmem:[%s4630 + $0x174] sm:$0xff]
      %v4694 = vld [vmem:[%s4630 + $0x17c] sm:$0xf]
      %v4695 = vld [vmem:[%s4630 + $0x180] sm:$0xff]
      %v4696 = vld [vmem:[%s4630 + $0x188] sm:$0xf]
      %v4697 = vld [vmem:[%s4630 + $0x18c] sm:$0xff]
      %v4698 = vld [vmem:[%s4630 + $0x194] sm:$0xf]
      %v4699 = vld [vmem:[%s4630 + $0x198] sm:$0xff]
      %v4700 = vld [vmem:[%s4630 + $0x1a0] sm:$0xf]
      %v4701 = vld [vmem:[%s4630 + $0x1a4] sm:$0xff]
      %v4702 = vld [vmem:[%s4630 + $0x1ac] sm:$0xf]
      %v4703 = vld [vmem:[%s4630 + $0x1b0] sm:$0xff]
      %v4704 = vld [vmem:[%s4630 + $0x1b8] sm:$0xf]
      %v4705 = vld [vmem:[%s4630 + $0x1bc] sm:$0xff]
      %v4706 = vld [vmem:[%s4630 + $0x1c4] sm:$0xf]
      %v4707 = vld [vmem:[%s4630 + $0x1c8] sm:$0xff]
      %v4708 = vld [vmem:[%s4630 + $0x1d0] sm:$0xf]
      %v4709 = vld [vmem:[%s4630 + $0x1d4] sm:$0xff]
      %v4710 = vld [vmem:[%s4630 + $0x1dc] sm:$0xf]
      %v4711 = vld [vmem:[%s4630 + $0x1e0] sm:$0xff]
      %v4712 = vld [vmem:[%s4630 + $0x1e8] sm:$0xf]
      %v4713 = vld [vmem:[%s4630 + $0x1ec] sm:$0xff]
      %v4714 = vld [vmem:[%s4630 + $0x1f4] sm:$0xf]
      %v4715 = vld [vmem:[%s4630 + $0x1f8] sm:$0xff]
      %v4716 = vld [vmem:[%s4630 + $0x200] sm:$0xf]
      %v4717 = vld [vmem:[%s4630 + $0x204] sm:$0xff]
      %v4718 = vld [vmem:[%s4630 + $0x20c] sm:$0xf]
      %v4719 = vld [vmem:[%s4630 + $0x210] sm:$0xff]
      %v4720 = vld [vmem:[%s4630 + $0x218] sm:$0xf]
      %v4721 = vld [vmem:[%s4630 + $0x21c] sm:$0xff]
      %v4722 = vld [vmem:[%s4630 + $0x224] sm:$0xf]
      %v4723 = vld [vmem:[%s4630 + $0x228] sm:$0xff]
      %v4724 = vld [vmem:[%s4630 + $0x230] sm:$0xf]
      %v4725 = vld [vmem:[%s4630 + $0x234] sm:$0xff]
      %v4726 = vld [vmem:[%s4630 + $0x23c] sm:$0xf]
      %v4727 = vunpack.c.l.b16 %v4625
      %v4728 = vunpack.c.h.b16 %v4625
      %v4729 = vunpack.c.l.b16 %v4629
      %v4730 = vpack.c.b16 %v2248, %v2245
      %v4731 = vpack.c.b16 %v2249, %v2246
      %v4732 = vpack.c.b16 %v2250, %v2247
      %v4733 = vpack.c.b16 %v2254, %v2251
      %v4734 = vpack.c.b16 %v2255, %v2252
      %v4735 = vpack.c.b16 %v2256, %v2253
      %v4736 = vpack.c.b16 %v2260, %v2257
      %v4737 = vpack.c.b16 %v2261, %v2258
      %v4738 = vpack.c.b16 %v2262, %v2259
      %v4739 = vpack.c.b16 %v4727, %v2263
      %v4740 = vpack.c.b16 %v4728, %v2264
      %v4741 = vpack.c.b16 %v4729, %v2265
      %v4850 = vunpack.c.l.b16 %v4631
      %v4851 = vunpack.c.h.b16 %v4631
      %v4852 = vunpack.c.l.b16 %v4632
      %v4853 = vunpack.c.l.b16 %v4633
      %v4854 = vunpack.c.h.b16 %v4633
      %v4855 = vunpack.c.l.b16 %v4634
      %v4856 = vunpack.c.l.b16 %v4635
      %v4857 = vunpack.c.h.b16 %v4635
      %v4858 = vunpack.c.l.b16 %v4636
      %v4859 = vunpack.c.l.b16 %v4637
      %v4860 = vunpack.c.h.b16 %v4637
      %v4861 = vunpack.c.l.b16 %v4638
      %v4862 = vunpack.c.l.b16 %v4639
      %v4863 = vunpack.c.h.b16 %v4639
      %v4864 = vunpack.c.l.b16 %v4640
      %v4865 = vunpack.c.l.b16 %v4641
      %v4866 = vunpack.c.h.b16 %v4641
      %v4867 = vunpack.c.l.b16 %v4642
      %v4868 = vunpack.c.l.b16 %v4643
      %v4869 = vunpack.c.h.b16 %v4643
      %v4870 = vunpack.c.l.b16 %v4644
      %v4871 = vunpack.c.l.b16 %v4645
      %v4872 = vunpack.c.h.b16 %v4645
      %v4873 = vunpack.c.l.b16 %v4646
      %v4874 = vunpack.c.l.b16 %v4647
      %v4875 = vunpack.c.h.b16 %v4647
      %v4876 = vunpack.c.l.b16 %v4648
      %v4877 = vunpack.c.l.b16 %v4649
      %v4878 = vunpack.c.h.b16 %v4649
      %v4879 = vunpack.c.l.b16 %v4650
      %v4880 = vunpack.c.l.b16 %v4651
      %v4881 = vunpack.c.h.b16 %v4651
      %v4882 = vunpack.c.l.b16 %v4652
      %v4883 = vunpack.c.l.b16 %v4653
      %v4884 = vunpack.c.h.b16 %v4653
      %v4885 = vunpack.c.l.b16 %v4654
      %v4886 = vunpack.c.l.b16 %v4655
      %v4887 = vunpack.c.h.b16 %v4655
      %v4888 = vunpack.c.l.b16 %v4656
      %v4889 = vunpack.c.l.b16 %v4657
      %v4890 = vunpack.c.h.b16 %v4657
      %v4891 = vunpack.c.l.b16 %v4658
      %v4892 = vunpack.c.l.b16 %v4659
      %v4893 = vunpack.c.h.b16 %v4659
      %v4894 = vunpack.c.l.b16 %v4660
      %v4895 = vunpack.c.l.b16 %v4661
      %v4896 = vunpack.c.h.b16 %v4661
      %v4897 = vunpack.c.l.b16 %v4662
      %v4898 = vunpack.c.l.b16 %v4663
      %v4899 = vunpack.c.h.b16 %v4663
      %v4900 = vunpack.c.l.b16 %v4664
      %v4901 = vunpack.c.l.b16 %v4665
      %v4902 = vunpack.c.h.b16 %v4665
      %v4903 = vunpack.c.l.b16 %v4666
      %v4904 = vunpack.c.l.b16 %v4667
      %v4905 = vunpack.c.h.b16 %v4667
      %v4906 = vunpack.c.l.b16 %v4668
      %v4907 = vunpack.c.l.b16 %v4669
      %v4908 = vunpack.c.h.b16 %v4669
      %v4909 = vunpack.c.l.b16 %v4670
      %v4910 = vunpack.c.l.b16 %v4671
      %v4911 = vunpack.c.h.b16 %v4671
      %v4912 = vunpack.c.l.b16 %v4672
      %v4913 = vunpack.c.l.b16 %v4673
      %v4914 = vunpack.c.h.b16 %v4673
      %v4915 = vunpack.c.l.b16 %v4674
      %v4916 = vunpack.c.l.b16 %v4675
      %v4917 = vunpack.c.h.b16 %v4675
      %v4918 = vunpack.c.l.b16 %v4676
      %v4919 = vunpack.c.l.b16 %v4677
      %v4920 = vunpack.c.h.b16 %v4677
      %v4921 = vunpack.c.l.b16 %v4678
      %v4922 = vunpack.c.l.b16 %v4679
      %v4923 = vunpack.c.h.b16 %v4679
      %v4924 = vunpack.c.l.b16 %v4680
      %v4925 = vunpack.c.l.b16 %v4681
      %v4926 = vunpack.c.h.b16 %v4681
      %v4927 = vunpack.c.l.b16 %v4682
      %v4928 = vunpack.c.l.b16 %v4683
      %v4929 = vunpack.c.h.b16 %v4683
      %v4930 = vunpack.c.l.b16 %v4684
      %v4931 = vunpack.c.l.b16 %v4685
      %v4932 = vunpack.c.h.b16 %v4685
      %v4933 = vunpack.c.l.b16 %v4686
      %v4934 = vunpack.c.l.b16 %v4687
      %v4935 = vunpack.c.h.b16 %v4687
      %v4936 = vunpack.c.l.b16 %v4688
      %v4937 = vunpack.c.l.b16 %v4689
      %v4938 = vunpack.c.h.b16 %v4689
      %v4939 = vunpack.c.l.b16 %v4690
      %v4940 = vunpack.c.l.b16 %v4691
      %v4941 = vunpack.c.h.b16 %v4691
      %v4942 = vunpack.c.l.b16 %v4692
      %v4943 = vunpack.c.l.b16 %v4693
      %v4944 = vunpack.c.h.b16 %v4693
      %v4945 = vunpack.c.l.b16 %v4694
      %v4946 = vunpack.c.l.b16 %v4695
      %v4947 = vunpack.c.h.b16 %v4695
      %v4948 = vunpack.c.l.b16 %v4696
      %v4949 = vunpack.c.l.b16 %v4697
      %v4950 = vunpack.c.h.b16 %v4697
      %v4951 = vunpack.c.l.b16 %v4698
      %v4952 = vunpack.c.l.b16 %v4699
      %v4953 = vunpack.c.h.b16 %v4699
      %v4954 = vunpack.c.l.b16 %v4700
      %v4955 = vunpack.c.l.b16 %v4701
      %v4956 = vunpack.c.h.b16 %v4701
      %v4957 = vunpack.c.l.b16 %v4702
      %v4958 = vunpack.c.l.b16 %v4703
      %v4959 = vunpack.c.h.b16 %v4703
      %v4960 = vunpack.c.l.b16 %v4704
      %v4961 = vunpack.c.l.b16 %v4705
      %v4962 = vunpack.c.h.b16 %v4705
      %v4963 = vunpack.c.l.b16 %v4706
      %v4964 = vunpack.c.l.b16 %v4707
      %v4965 = vunpack.c.h.b16 %v4707
      %v4966 = vunpack.c.l.b16 %v4708
      %v4967 = vunpack.c.l.b16 %v4709
      %v4968 = vunpack.c.h.b16 %v4709
      %v4969 = vunpack.c.l.b16 %v4710
      %v4970 = vunpack.c.l.b16 %v4711
      %v4971 = vunpack.c.h.b16 %v4711
      %v4972 = vunpack.c.l.b16 %v4712
      %v4973 = vunpack.c.l.b16 %v4713
      %v4974 = vunpack.c.h.b16 %v4713
      %v4975 = vunpack.c.l.b16 %v4714
      %v4976 = vunpack.c.l.b16 %v4715
      %v4977 = vunpack.c.h.b16 %v4715
      %v4978 = vunpack.c.l.b16 %v4716
      %v4979 = vunpack.c.l.b16 %v4717
      %v4980 = vunpack.c.h.b16 %v4717
      %v4981 = vunpack.c.l.b16 %v4718
      %v4982 = vunpack.c.l.b16 %v4719
      %v4983 = vunpack.c.h.b16 %v4719
      %v4984 = vunpack.c.l.b16 %v4720
      %v4985 = vunpack.c.l.b16 %v4721
      %v4986 = vunpack.c.h.b16 %v4721
      %v4987 = vunpack.c.l.b16 %v4722
      %v4988 = vunpack.c.l.b16 %v4723
      %v4989 = vunpack.c.h.b16 %v4723
      %v4990 = vunpack.c.l.b16 %v4724
      %v4991 = vunpack.c.l.b16 %v4725
      %v4992 = vunpack.c.h.b16 %v4725
      %v4993 = vunpack.c.l.b16 %v4726
      %v4994 = vpack.c.b16 %v4853, %v4850
      %v4995 = vpack.c.b16 %v4854, %v4851
      %v4996 = vpack.c.b16 %v4855, %v4852
      %v4997 = vpack.c.b16 %v4859, %v4856
      %v4998 = vpack.c.b16 %v4860, %v4857
      %v4999 = vpack.c.b16 %v4861, %v4858
      %v5000 = vpack.c.b16 %v4865, %v4862
      %v5001 = vpack.c.b16 %v4866, %v4863
      %v5002 = vpack.c.b16 %v4867, %v4864
      %v5003 = vpack.c.b16 %v4871, %v4868
      %v5004 = vpack.c.b16 %v4872, %v4869
      %v5005 = vpack.c.b16 %v4873, %v4870
      %v5006 = vpack.c.b16 %v4877, %v4874
      %v5007 = vpack.c.b16 %v4878, %v4875
      %v5008 = vpack.c.b16 %v4879, %v4876
      %v5009 = vpack.c.b16 %v4883, %v4880
      %v5010 = vpack.c.b16 %v4884, %v4881
      %v5011 = vpack.c.b16 %v4885, %v4882
      %v5012 = vpack.c.b16 %v4889, %v4886
      %v5013 = vpack.c.b16 %v4890, %v4887
      %v5014 = vpack.c.b16 %v4891, %v4888
      %v5015 = vpack.c.b16 %v4895, %v4892
      %v5016 = vpack.c.b16 %v4896, %v4893
      %v5017 = vpack.c.b16 %v4897, %v4894
      %v5018 = vpack.c.b16 %v4901, %v4898
      %v5019 = vpack.c.b16 %v4902, %v4899
      %v5020 = vpack.c.b16 %v4903, %v4900
      %v5021 = vpack.c.b16 %v4907, %v4904
      %v5022 = vpack.c.b16 %v4908, %v4905
      %v5023 = vpack.c.b16 %v4909, %v4906
      %v5024 = vpack.c.b16 %v4913, %v4910
      %v5025 = vpack.c.b16 %v4914, %v4911
      %v5026 = vpack.c.b16 %v4915, %v4912
      %v5027 = vpack.c.b16 %v4919, %v4916
      %v5028 = vpack.c.b16 %v4920, %v4917
      %v5029 = vpack.c.b16 %v4921, %v4918
      %v5030 = vpack.c.b16 %v4925, %v4922
      %v5031 = vpack.c.b16 %v4926, %v4923
      %v5032 = vpack.c.b16 %v4927, %v4924
      %v5033 = vpack.c.b16 %v4931, %v4928
      %v5034 = vpack.c.b16 %v4932, %v4929
      %v5035 = vpack.c.b16 %v4933, %v4930
      %v5036 = vpack.c.b16 %v4937, %v4934
      %v5037 = vpack.c.b16 %v4938, %v4935
      %v5038 = vpack.c.b16 %v4939, %v4936
      %v5039 = vpack.c.b16 %v4943, %v4940
      %v5040 = vpack.c.b16 %v4944, %v4941
      %v5041 = vpack.c.b16 %v4945, %v4942
      %v5042 = vpack.c.b16 %v4949, %v4946
      %v5043 = vpack.c.b16 %v4950, %v4947
      %v5044 = vpack.c.b16 %v4951, %v4948
      %v5045 = vpack.c.b16 %v4955, %v4952
      %v5046 = vpack.c.b16 %v4956, %v4953
      %v5047 = vpack.c.b16 %v4957, %v4954
      %v5048 = vpack.c.b16 %v4961, %v4958
      %v5049 = vpack.c.b16 %v4962, %v4959
      %v5050 = vpack.c.b16 %v4963, %v4960
      %v5051 = vpack.c.b16 %v4967, %v4964
      %v5052 = vpack.c.b16 %v4968, %v4965
      %v5053 = vpack.c.b16 %v4969, %v4966
      %v5054 = vpack.c.b16 %v4973, %v4970
      %v5055 = vpack.c.b16 %v4974, %v4971
      %v5056 = vpack.c.b16 %v4975, %v4972
      %v5057 = vpack.c.b16 %v4979, %v4976
      %v5058 = vpack.c.b16 %v4980, %v4977
      %v5059 = vpack.c.b16 %v4981, %v4978
      %v5060 = vpack.c.b16 %v4985, %v4982
      %v5061 = vpack.c.b16 %v4986, %v4983
      %v5062 = vpack.c.b16 %v4987, %v4984
      %v5063 = vpack.c.b16 %v4991, %v4988
      %v5064 = vpack.c.b16 %v4992, %v4989
      %v5065 = vpack.c.b16 %v4993, %v4990
      %5138 = vmatprep.subr.bf16.mxu0 %v4995
      %5139 = vmatpush1.bf16.msra.mxu0 %v4994
      %5140 = vmatprep.subr.bf16.mxu0 %v4998
      %5141 = vmatpush1.bf16.msra.mxu0 %v4997
      %5142 = vmatprep.subr.bf16.mxu0 %v5001
      %5143 = vmatpush1.bf16.msra.mxu0 %v5000
      %5144 = vmatprep.subr.bf16.mxu0 %v5004
      %5145 = vmatpush1.bf16.msra.mxu0 %v5003
      %5146 = vmatprep.subr.bf16.mxu0 %v5007
      %5147 = vmatpush1.bf16.msra.mxu0 %v5006
      %5148 = vmatprep.subr.bf16.mxu0 %v5010
      %5149 = vmatpush1.bf16.msra.mxu0 %v5009
      %5150 = vmatprep.subr.bf16.mxu0 %v5013
      %5151 = vmatpush1.bf16.msra.mxu0 %v5012
      %5152 = vmatprep.subr.bf16.mxu0 %v5016
      %5153 = vmatpush1.bf16.msra.mxu0 %v5015
      %5154 = vmatprep.subr.bf16.mxu0 %v5019
      %5155 = vmatpush1.bf16.msra.mxu0 %v5018
      %5156 = vmatprep.subr.bf16.mxu0 %v5022
      %5157 = vmatpush1.bf16.msra.mxu0 %v5021
      %5158 = vmatprep.subr.bf16.mxu0 %v5025
      %5159 = vmatpush1.bf16.msra.mxu0 %v5024
      %5160 = vmatprep.subr.bf16.mxu0 %v5028
      %5161 = vmatpush1.bf16.msra.mxu0 %v5027
      %5162 = vmatprep.subr.bf16.mxu0 %v5031
      %5163 = vmatpush1.bf16.msra.mxu0 %v5030
      %5164 = vmatprep.subr.bf16.mxu0 %v5034
      %5165 = vmatpush1.bf16.msra.mxu0 %v5033
      %5166 = vmatprep.subr.bf16.mxu0 %v5037
      %5167 = vmatpush1.bf16.msra.mxu0 %v5036
      %5168 = vmatprep.subr.bf16.mxu0 %v5040
      %5169 = vmatpush1.bf16.msra.mxu0 %v5039
      %5170 = vmatprep.mubr.bf16.mxu0 %v4731
      %5171 = vmatmul.mubr.bf16.gmra.mrb[0].mxu0 %v4730
      %v5172 = vpop.f32.mrb[0].mxu0
      %v5173 = vadd.f32 0.0, %v5172
      %v5174 = vpop.f32.mrb[0].mxu0
      %v5175 = vadd.f32 0.0, %v5174
      %v5176 = vpop.f32.mrb[0].mxu0
      %v5177 = vadd.f32 0.0, %v5176
      %v5178 = vpop.f32.mrb[0].mxu0
      %v5179 = vadd.f32 0.0, %v5178
      %5180 = vmatprep.mubr.bf16.mxu0 %v4734
      %5181 = vmatmul.mubr.bf16.gmra.mrb[0].mxu0 %v4733
      %v5182 = vpop.f32.mrb[0].mxu0
      %v5183 = vadd.f32 0.0, %v5182
      %v5184 = vpop.f32.mrb[0].mxu0
      %v5185 = vadd.f32 0.0, %v5184
      %v5186 = vpop.f32.mrb[0].mxu0
      %v5187 = vadd.f32 0.0, %v5186
      %v5188 = vpop.f32.mrb[0].mxu0
      %v5189 = vadd.f32 0.0, %v5188
      %5190 = vmatprep.mubr.bf16.mxu0 %v4737
      %5191 = vmatmul.mubr.bf16.gmra.mrb[0].mxu0 %v4736
      %v5192 = vpop.f32.mrb[0].mxu0
      %v5193 = vadd.f32 0.0, %v5192
      %v5194 = vpop.f32.mrb[0].mxu0
      %v5195 = vadd.f32 0.0, %v5194
      %v5196 = vpop.f32.mrb[0].mxu0
      %v5197 = vadd.f32 0.0, %v5196
      %v5198 = vpop.f32.mrb[0].mxu0
      %v5199 = vadd.f32 0.0, %v5198
      %5200 = vmatprep.mubr.bf16.mxu0 %v4740
      %5201 = vmatmul.mubr.bf16.gmra.mrb[0].mxu0 %v4739
      %v5202 = vpop.f32.mrb[0].mxu0
      %v5203 = vadd.f32 0.0, %v5202
      %v5204 = vpop.f32.mrb[0].mxu0
      %v5205 = vadd.f32 0.0, %v5204
      %v5206 = vpop.f32.mrb[0].mxu0
      %v5207 = vadd.f32 0.0, %v5206
      %v5208 = vpop.f32.mrb[0].mxu0
      %v5209 = vadd.f32 0.0, %v5208
      %5210 = vdwg.mxu0
      %5211 = vmatprep.subr.bf16.mxu0 %v5043
      %5212 = vmatpush1.bf16.msra.mxu0 %v5042
      %5213 = vmatprep.subr.bf16.mxu0 %v5046
      %5214 = vmatpush1.bf16.msra.mxu0 %v5045
      %5215 = vmatprep.subr.bf16.mxu0 %v5049
      %5216 = vmatpush1.bf16.msra.mxu0 %v5048
      %5217 = vmatprep.subr.bf16.mxu0 %v5052
      %5218 = vmatpush1.bf16.msra.mxu0 %v5051
      %5219 = vmatprep.subr.bf16.mxu0 %v5055
      %5220 = vmatpush1.bf16.msra.mxu0 %v5054
      %5221 = vmatprep.subr.bf16.mxu0 %v5058
      %5222 = vmatpush1.bf16.msra.mxu0 %v5057
      %5223 = vmatprep.subr.bf16.mxu0 %v5061
      %5224 = vmatpush1.bf16.msra.mxu0 %v5060
      %5225 = vmatprep.subr.bf16.mxu0 %v5064
      %5226 = vmatpush1.bf16.msra.mxu0 %v5063
      %5227 = vmatprep.subr.bf16.mxu0 0
      %5228 = vmatpush1.bf16.msra.mxu0 0
      %5229 = vmatprep.subr.bf16.mxu0 0
      %5230 = vmatpush1.bf16.msra.mxu0 0
      %5231 = vmatprep.subr.bf16.mxu0 0
      %5232 = vmatpush1.bf16.msra.mxu0 0
      %5233 = vmatprep.subr.bf16.mxu0 0
      %5234 = vmatpush1.bf16.msra.mxu0 0
      %5235 = vmatprep.subr.bf16.mxu0 0
      %5236 = vmatpush1.bf16.msra.mxu0 0
      %5237 = vmatprep.subr.bf16.mxu0 0
      %5238 = vmatpush1.bf16.msra.mxu0 0
      %5239 = vmatprep.subr.bf16.mxu0 0
      %5240 = vmatpush1.bf16.msra.mxu0 0
      %5241 = vmatprep.subr.bf16.mxu0 0
      %5242 = vmatpush1.bf16.msra.mxu0 0
      %5243 = vmatprep.mubr.bf16.mxu0 0
      %5244 = vmatmul.mubr.bf16.gmra.mrb[0].mxu0 %v4732
      %v5245 = vpop.f32.mrb[0].mxu0
      %v5246 = vadd.f32 %v5173, %v5245
      %v5247 = vpop.f32.mrb[0].mxu0
      %v5248 = vadd.f32 %v5175, %v5247
      %v5249 = vpop.f32.mrb[0].mxu0
      %v5250 = vadd.f32 %v5177, %v5249
      %v5251 = vpop.f32.mrb[0].mxu0
      %v5252 = vadd.f32 %v5179, %v5251
      %5253 = vmatprep.mubr.bf16.mxu0 0
      %5254 = vmatmul.mubr.bf16.gmra.mrb[0].mxu0 %v4735
      %v5255 = vpop.f32.mrb[0].mxu0
      %v5256 = vadd.f32 %v5183, %v5255
      %v5257 = vpop.f32.mrb[0].mxu0
      %v5258 = vadd.f32 %v5185, %v5257
      %v5259 = vpop.f32.mrb[0].mxu0
      %v5260 = vadd.f32 %v5187, %v5259
      %v5261 = vpop.f32.mrb[0].mxu0
      %v5262 = vadd.f32 %v5189, %v5261
      %5263 = vmatprep.mubr.bf16.mxu0 0
      %5264 = vmatmul.mubr.bf16.gmra.mrb[0].mxu0 %v4738
      %v5265 = vpop.f32.mrb[0].mxu0
      %v5266 = vadd.f32 %v5193, %v5265
      %v5267 = vpop.f32.mrb[0].mxu0
      %v5268 = vadd.f32 %v5195, %v5267
      %v5269 = vpop.f32.mrb[0].mxu0
      %v5270 = vadd.f32 %v5197, %v5269
      %v5271 = vpop.f32.mrb[0].mxu0
      %v5272 = vadd.f32 %v5199, %v5271
      %5273 = vmatprep.mubr.bf16.mxu0 0
      %5274 = vmatmul.mubr.bf16.gmra.mrb[0].mxu0 %v4741
      %v5275 = vpop.f32.mrb[0].mxu0
      %v5276 = vadd.f32 %v5203, %v5275
      %v5277 = vpop.f32.mrb[0].mxu0
      %v5278 = vadd.f32 %v5205, %v5277
      %v5279 = vpop.f32.mrb[0].mxu0
      %v5280 = vadd.f32 %v5207, %v5279
      %v5281 = vpop.f32.mrb[0].mxu0
      %v5282 = vadd.f32 %v5209, %v5281
      %5283 = vdwg.mxu0
      %5284 = vmatprep.subr.bf16.mxu0 0
      %5285 = vmatpush1.bf16.msra.mxu0 %v4996
      %5286 = vmatprep.subr.bf16.mxu0 0
      %5287 = vmatpush1.bf16.msra.mxu0 %v4999
      %5288 = vmatprep.subr.bf16.mxu0 0
      %5289 = vmatpush1.bf16.msra.mxu0 %v5002
      %5290 = vmatprep.subr.bf16.mxu0 0
      %5291 = vmatpush1.bf16.msra.mxu0 %v5005
      %5292 = vmatprep.subr.bf16.mxu0 0
      %5293 = vmatpush1.bf16.msra.mxu0 %v5008
      %5294 = vmatprep.subr.bf16.mxu0 0
      %5295 = vmatpush1.bf16.msra.mxu0 %v5011
      %5296 = vmatprep.subr.bf16.mxu0 0
      %5297 = vmatpush1.bf16.msra.mxu0 %v5014
      %5298 = vmatprep.subr.bf16.mxu0 0
      %5299 = vmatpush1.bf16.msra.mxu0 %v5017
      %5300 = vmatprep.subr.bf16.mxu0 0
      %5301 = vmatpush1.bf16.msra.mxu0 %v5020
      %5302 = vmatprep.subr.bf16.mxu0 0
      %5303 = vmatpush1.bf16.msra.mxu0 %v5023
      %5304 = vmatprep.subr.bf16.mxu0 0
      %5305 = vmatpush1.bf16.msra.mxu0 %v5026
      %5306 = vmatprep.subr.bf16.mxu0 0
      %5307 = vmatpush1.bf16.msra.mxu0 %v5029
      %5308 = vmatprep.subr.bf16.mxu0 0
      %5309 = vmatpush1.bf16.msra.mxu0 %v5032
      %5310 = vmatprep.subr.bf16.mxu0 0
      %5311 = vmatpush1.bf16.msra.mxu0 %v5035
      %5312 = vmatprep.subr.bf16.mxu0 0
      %5313 = vmatpush1.bf16.msra.mxu0 %v5038
      %5314 = vmatprep.subr.bf16.mxu0 0
      %5315 = vmatpush1.bf16.msra.mxu0 %v5041
      %5316 = vmatprep.mubr.bf16.mxu0 %v4731
      %5317 = vmatmul.mubr.bf16.gmra.mrb[0].mxu0 %v4730
      %v5318 = vpop.f32.mrb[0].mxu0
      %v5319 = vadd.f32 0.0, %v5318
      %v5320 = vpop.f32.mrb[0].mxu0
      %v5321 = vpop.f32.mrb[0].mxu0
      %v5322 = vadd.f32 0.0, %v5321
      %v5323 = vpop.f32.mrb[0].mxu0
      %5324 = vmatprep.mubr.bf16.mxu0 %v4734
      %5325 = vmatmul.mubr.bf16.gmra.mrb[0].mxu0 %v4733
      %v5326 = vpop.f32.mrb[0].mxu0
      %v5327 = vadd.f32 0.0, %v5326
      %v5328 = vpop.f32.mrb[0].mxu0
      %v5329 = vpop.f32.mrb[0].mxu0
      %v5330 = vadd.f32 0.0, %v5329
      %v5331 = vpop.f32.mrb[0].mxu0
      %5332 = vmatprep.mubr.bf16.mxu0 %v4737
      %5333 = vmatmul.mubr.bf16.gmra.mrb[0].mxu0 %v4736
      %v5334 = vpop.f32.mrb[0].mxu0
      %v5335 = vadd.f32 0.0, %v5334
      %v5336 = vpop.f32.mrb[0].mxu0
      %v5337 = vpop.f32.mrb[0].mxu0
      %v5338 = vadd.f32 0.0, %v5337
      %v5339 = vpop.f32.mrb[0].mxu0
      %5340 = vmatprep.mubr.bf16.mxu0 %v4740
      %5341 = vmatmul.mubr.bf16.gmra.mrb[0].mxu0 %v4739
      %v5342 = vpop.f32.mrb[0].mxu0
      %v5343 = vadd.f32 0.0, %v5342
      %v5344 = vpop.f32.mrb[0].mxu0
      %v5345 = vpop.f32.mrb[0].mxu0
      %v5346 = vadd.f32 0.0, %v5345
      %v5347 = vpop.f32.mrb[0].mxu0
      %5348 = vdwg.mxu0
      %5349 = vmatprep.subr.bf16.mxu0 0
      %5350 = vmatpush1.bf16.msra.mxu0 %v5044
      %5351 = vmatprep.subr.bf16.mxu0 0
      %5352 = vmatpush1.bf16.msra.mxu0 %v5047
      %5353 = vmatprep.subr.bf16.mxu0 0
      %5354 = vmatpush1.bf16.msra.mxu0 %v5050
      %5355 = vmatprep.subr.bf16.mxu0 0
      %5356 = vmatpush1.bf16.msra.mxu0 %v5053
      %5357 = vmatprep.subr.bf16.mxu0 0
      %5358 = vmatpush1.bf16.msra.mxu0 %v5056
      %5359 = vmatprep.subr.bf16.mxu0 0
      %5360 = vmatpush1.bf16.msra.mxu0 %v5059
      %5361 = vmatprep.subr.bf16.mxu0 0
      %5362 = vmatpush1.bf16.msra.mxu0 %v5062
      %5363 = vmatprep.subr.bf16.mxu0 0
      %5364 = vmatpush1.bf16.msra.mxu0 %v5065
      %5365 = vmatprep.subr.bf16.mxu0 0
      %5366 = vmatpush1.bf16.msra.mxu0 0
      %5367 = vmatprep.subr.bf16.mxu0 0
      %5368 = vmatpush1.bf16.msra.mxu0 0
      %5369 = vmatprep.subr.bf16.mxu0 0
      %5370 = vmatpush1.bf16.msra.mxu0 0
      %5371 = vmatprep.subr.bf16.mxu0 0
      %5372 = vmatpush1.bf16.msra.mxu0 0
      %5373 = vmatprep.subr.bf16.mxu0 0
      %5374 = vmatpush1.bf16.msra.mxu0 0
      %5375 = vmatprep.subr.bf16.mxu0 0
      %5376 = vmatpush1.bf16.msra.mxu0 0
      %5377 = vmatprep.subr.bf16.mxu0 0
      %5378 = vmatpush1.bf16.msra.mxu0 0
      %5379 = vmatprep.subr.bf16.mxu0 0
      %5380 = vmatpush1.bf16.msra.mxu0 0
      %5381 = vmatprep.mubr.bf16.mxu0 0
      %5382 = vmatmul.mubr.bf16.gmra.mrb[0].mxu0 %v4732
      %v5383 = vpop.f32.mrb[0].mxu0
      %v5384 = vadd.f32 %v5319, %v5383
      %v5385 = vpop.f32.mrb[0].mxu0
      %v5386 = vpop.f32.mrb[0].mxu0
      %v5387 = vadd.f32 %v5322, %v5386
      %v5388 = vpop.f32.mrb[0].mxu0
      %5389 = vmatprep.mubr.bf16.mxu0 0
      %5390 = vmatmul.mubr.bf16.gmra.mrb[0].mxu0 %v4735
      %v5391 = vpop.f32.mrb[0].mxu0
      %v5392 = vadd.f32 %v5327, %v5391
      %v5393 = vpop.f32.mrb[0].mxu0
      %v5394 = vpop.f32.mrb[0].mxu0
      %v5395 = vadd.f32 %v5330, %v5394
      %v5396 = vpop.f32.mrb[0].mxu0
      %5397 = vmatprep.mubr.bf16.mxu0 0
      %5398 = vmatmul.mubr.bf16.gmra.mrb[0].mxu0 %v4738
      %v5399 = vpop.f32.mrb[0].mxu0
      %v5400 = vadd.f32 %v5335, %v5399
      %v5401 = vpop.f32.mrb[0].mxu0
      %v5402 = vpop.f32.mrb[0].mxu0
      %v5403 = vadd.f32 %v5338, %v5402
      %v5404 = vpop.f32.mrb[0].mxu0
      %5405 = vmatprep.mubr.bf16.mxu0 0
      %5406 = vmatmul.mubr.bf16.gmra.mrb[0].mxu0 %v4741
      %v5407 = vpop.f32.mrb[0].mxu0
      %v5408 = vadd.f32 %v5343, %v5407
      %v5409 = vpop.f32.mrb[0].mxu0
      %v5410 = vpop.f32.mrb[0].mxu0
      %v5411 = vadd.f32 %v5346, %v5410
      %v5412 = vpop.f32.mrb[0].mxu0
      %5413 = vdwg.mxu0
      %v5414 = vadd.f32 %v4596, %v5246
      %v5415 = vadd.f32 %v4597, %v5248
      %v5416 = vadd.f32 %v4598, %v5384
      %v5417 = vadd.f32 %v4599, %v5250
      %v5418 = vadd.f32 %v4600, %v5252
      %v5419 = vadd.f32 %v4601, %v5387
      %v5420 = vadd.f32 %v4602, %v5256
      %v5421 = vadd.f32 %v4603, %v5258
      %v5422 = vadd.f32 %v4604, %v5392
      %v5423 = vadd.f32 %v4605, %v5260
      %v5424 = vadd.f32 %v4606, %v5262
      %v5425 = vadd.f32 %v4607, %v5395
      %v5426 = vadd.f32 %v4608, %v5266
      %v5427 = vadd.f32 %v4609, %v5268
      %v5428 = vadd.f32 %v4610, %v5400
      %v5429 = vadd.f32 %v4611, %v5270
      %v5430 = vadd.f32 %v4612, %v5272
      %v5431 = vadd.f32 %v4613, %v5403
      %v5432 = vadd.f32 %v4614, %v5276
      %v5433 = vadd.f32 %v4615, %v5278
      %v5434 = vadd.f32 %v4616, %v5408
      %v5435 = vadd.f32 %v4617, %v5280
      %v5436 = vadd.f32 %v4618, %v5282
      %v5437 = vadd.f32 %v4619, %v5411
      %s5438 = scalar_lea.vmem %s1, 3456
      %v5439 = vld [vmem:[%s5438] sm:$0xff]
      %v5440 = vld [vmem:[%s5438 + $0x8] sm:$0xf]
      %v5441 = vld [vmem:[%s5438 + $0xc] sm:$0xff]
      %v5442 = vld [vmem:[%s5438 + $0x14] sm:$0xf]
      %v5443 = vld [vmem:[%s5438 + $0x18] sm:$0xff]
      %v5444 = vld [vmem:[%s5438 + $0x20] sm:$0xf]
      %v5445 = vld [vmem:[%s5438 + $0x24] sm:$0xff]
      %v5446 = vld [vmem:[%s5438 + $0x2c] sm:$0xf]
      %v5447 = vld [vmem:[%s5438 + $0x30] sm:$0xff]
      %v5448 = vld [vmem:[%s5438 + $0x38] sm:$0xf]
      %v5449 = vld [vmem:[%s5438 + $0x3c] sm:$0xff]
      %v5450 = vld [vmem:[%s5438 + $0x44] sm:$0xf]
      %v5451 = vld [vmem:[%s5438 + $0x48] sm:$0xff]
      %v5452 = vld [vmem:[%s5438 + $0x50] sm:$0xf]
      %v5453 = vld [vmem:[%s5438 + $0x54] sm:$0xff]
      %v5454 = vld [vmem:[%s5438 + $0x5c] sm:$0xf]
      %v5455 = vld [vmem:[%s5438 + $0x60] sm:$0xff]
      %v5456 = vld [vmem:[%s5438 + $0x68] sm:$0xf]
      %v5457 = vld [vmem:[%s5438 + $0x6c] sm:$0xff]
      %v5458 = vld [vmem:[%s5438 + $0x74] sm:$0xf]
      %v5459 = vld [vmem:[%s5438 + $0x78] sm:$0xff]
      %v5460 = vld [vmem:[%s5438 + $0x80] sm:$0xf]
      %v5461 = vld [vmem:[%s5438 + $0x84] sm:$0xff]
      %v5462 = vld [vmem:[%s5438 + $0x8c] sm:$0xf]
      %v5463 = vld [vmem:[%s5438 + $0x90] sm:$0xff]
      %v5464 = vld [vmem:[%s5438 + $0x98] sm:$0xf]
      %v5465 = vld [vmem:[%s5438 + $0x9c] sm:$0xff]
      %v5466 = vld [vmem:[%s5438 + $0xa4] sm:$0xf]
      %v5467 = vld [vmem:[%s5438 + $0xa8] sm:$0xff]
      %v5468 = vld [vmem:[%s5438 + $0xb0] sm:$0xf]
      %v5469 = vld [vmem:[%s5438 + $0xb4] sm:$0xff]
      %v5470 = vld [vmem:[%s5438 + $0xbc] sm:$0xf]
      %v5471 = vld [vmem:[%s5438 + $0xc0] sm:$0xff]
      %v5472 = vld [vmem:[%s5438 + $0xc8] sm:$0xf]
      %v5473 = vld [vmem:[%s5438 + $0xcc] sm:$0xff]
      %v5474 = vld [vmem:[%s5438 + $0xd4] sm:$0xf]
      %v5475 = vld [vmem:[%s5438 + $0xd8] sm:$0xff]
      %v5476 = vld [vmem:[%s5438 + $0xe0] sm:$0xf]
      %v5477 = vld [vmem:[%s5438 + $0xe4] sm:$0xff]
      %v5478 = vld [vmem:[%s5438 + $0xec] sm:$0xf]
      %v5479 = vld [vmem:[%s5438 + $0xf0] sm:$0xff]
      %v5480 = vld [vmem:[%s5438 + $0xf8] sm:$0xf]
      %v5481 = vld [vmem:[%s5438 + $0xfc] sm:$0xff]
      %v5482 = vld [vmem:[%s5438 + $0x104] sm:$0xf]
      %v5483 = vld [vmem:[%s5438 + $0x108] sm:$0xff]
      %v5484 = vld [vmem:[%s5438 + $0x110] sm:$0xf]
      %v5485 = vld [vmem:[%s5438 + $0x114] sm:$0xff]
      %v5486 = vld [vmem:[%s5438 + $0x11c] sm:$0xf]
      %v5487 = vld [vmem:[%s5438 + $0x120] sm:$0xff]
      %v5488 = vld [vmem:[%s5438 + $0x128] sm:$0xf]
      %v5489 = vld [vmem:[%s5438 + $0x12c] sm:$0xff]
      %v5490 = vld [vmem:[%s5438 + $0x134] sm:$0xf]
      %v5491 = vld [vmem:[%s5438 + $0x138] sm:$0xff]
      %v5492 = vld [vmem:[%s5438 + $0x140] sm:$0xf]
      %v5493 = vld [vmem:[%s5438 + $0x144] sm:$0xff]
      %v5494 = vld [vmem:[%s5438 + $0x14c] sm:$0xf]
      %v5495 = vld [vmem:[%s5438 + $0x150] sm:$0xff]
      %v5496 = vld [vmem:[%s5438 + $0x158] sm:$0xf]
      %v5497 = vld [vmem:[%s5438 + $0x15c] sm:$0xff]
      %v5498 = vld [vmem:[%s5438 + $0x164] sm:$0xf]
      %v5499 = vld [vmem:[%s5438 + $0x168] sm:$0xff]
      %v5500 = vld [vmem:[%s5438 + $0x170] sm:$0xf]
      %v5501 = vld [vmem:[%s5438 + $0x174] sm:$0xff]
      %v5502 = vld [vmem:[%s5438 + $0x17c] sm:$0xf]
      %v5503 = vld [vmem:[%s5438 + $0x180] sm:$0xff]
      %v5504 = vld [vmem:[%s5438 + $0x188] sm:$0xf]
      %v5505 = vld [vmem:[%s5438 + $0x18c] sm:$0xff]
      %v5506 = vld [vmem:[%s5438 + $0x194] sm:$0xf]
      %v5507 = vld [vmem:[%s5438 + $0x198] sm:$0xff]
      %v5508 = vld [vmem:[%s5438 + $0x1a0] sm:$0xf]
      %v5509 = vld [vmem:[%s5438 + $0x1a4] sm:$0xff]
      %v5510 = vld [vmem:[%s5438 + $0x1ac] sm:$0xf]
      %v5511 = vld [vmem:[%s5438 + $0x1b0] sm:$0xff]
      %v5512 = vld [vmem:[%s5438 + $0x1b8] sm:$0xf]
      %v5513 = vld [vmem:[%s5438 + $0x1bc] sm:$0xff]
      %v5514 = vld [vmem:[%s5438 + $0x1c4] sm:$0xf]
      %v5515 = vld [vmem:[%s5438 + $0x1c8] sm:$0xff]
      %v5516 = vld [vmem:[%s5438 + $0x1d0] sm:$0xf]
      %v5517 = vld [vmem:[%s5438 + $0x1d4] sm:$0xff]
      %v5518 = vld [vmem:[%s5438 + $0x1dc] sm:$0xf]
      %v5519 = vld [vmem:[%s5438 + $0x1e0] sm:$0xff]
      %v5520 = vld [vmem:[%s5438 + $0x1e8] sm:$0xf]
      %v5521 = vld [vmem:[%s5438 + $0x1ec] sm:$0xff]
      %v5522 = vld [vmem:[%s5438 + $0x1f4] sm:$0xf]
      %v5523 = vld [vmem:[%s5438 + $0x1f8] sm:$0xff]
      %v5524 = vld [vmem:[%s5438 + $0x200] sm:$0xf]
      %v5525 = vld [vmem:[%s5438 + $0x204] sm:$0xff]
      %v5526 = vld [vmem:[%s5438 + $0x20c] sm:$0xf]
      %v5527 = vld [vmem:[%s5438 + $0x210] sm:$0xff]
      %v5528 = vld [vmem:[%s5438 + $0x218] sm:$0xf]
      %v5529 = vld [vmem:[%s5438 + $0x21c] sm:$0xff]
      %v5530 = vld [vmem:[%s5438 + $0x224] sm:$0xf]
      %v5531 = vld [vmem:[%s5438 + $0x228] sm:$0xff]
      %v5532 = vld [vmem:[%s5438 + $0x230] sm:$0xf]
      %v5533 = vld [vmem:[%s5438 + $0x234] sm:$0xff]
      %v5534 = vld [vmem:[%s5438 + $0x23c] sm:$0xf]
      %v5537 = vunpack.c.l.b16 %v206
      %v5538 = vunpack.c.h.b16 %v206
      %v5539 = vunpack.c.l.b16 %v207
      %v5540 = vpack.c.b16 %v5537, %v3073
      %v5541 = vpack.c.b16 %v5538, %v3074
      %v5542 = vpack.c.b16 %v5539, %v3075
      %v5642 = vunpack.c.l.b16 %v5439
      %v5643 = vunpack.c.h.b16 %v5439
      %v5644 = vunpack.c.l.b16 %v5440
      %v5645 = vunpack.c.l.b16 %v5441
      %v5646 = vunpack.c.h.b16 %v5441
      %v5647 = vunpack.c.l.b16 %v5442
      %v5648 = vunpack.c.l.b16 %v5443
      %v5649 = vunpack.c.h.b16 %v5443
      %v5650 = vunpack.c.l.b16 %v5444
      %v5651 = vunpack.c.l.b16 %v5445
      %v5652 = vunpack.c.h.b16 %v5445
      %v5653 = vunpack.c.l.b16 %v5446
      %v5654 = vunpack.c.l.b16 %v5447
      %v5655 = vunpack.c.h.b16 %v5447
      %v5656 = vunpack.c.l.b16 %v5448
      %v5657 = vunpack.c.l.b16 %v5449
      %v5658 = vunpack.c.h.b16 %v5449
      %v5659 = vunpack.c.l.b16 %v5450
      %v5660 = vunpack.c.l.b16 %v5451
      %v5661 = vunpack.c.h.b16 %v5451
      %v5662 = vunpack.c.l.b16 %v5452
      %v5663 = vunpack.c.l.b16 %v5453
      %v5664 = vunpack.c.h.b16 %v5453
      %v5665 = vunpack.c.l.b16 %v5454
      %v5666 = vunpack.c.l.b16 %v5455
      %v5667 = vunpack.c.h.b16 %v5455
      %v5668 = vunpack.c.l.b16 %v5456
      %v5669 = vunpack.c.l.b16 %v5457
      %v5670 = vunpack.c.h.b16 %v5457
      %v5671 = vunpack.c.l.b16 %v5458
      %v5672 = vunpack.c.l.b16 %v5459
      %v5673 = vunpack.c.h.b16 %v5459
      %v5674 = vunpack.c.l.b16 %v5460
      %v5675 = vunpack.c.l.b16 %v5461
      %v5676 = vunpack.c.h.b16 %v5461
      %v5677 = vunpack.c.l.b16 %v5462
      %v5678 = vunpack.c.l.b16 %v5463
      %v5679 = vunpack.c.h.b16 %v5463
      %v5680 = vunpack.c.l.b16 %v5464
      %v5681 = vunpack.c.l.b16 %v5465
      %v5682 = vunpack.c.h.b16 %v5465
      %v5683 = vunpack.c.l.b16 %v5466
      %v5684 = vunpack.c.l.b16 %v5467
      %v5685 = vunpack.c.h.b16 %v5467
      %v5686 = vunpack.c.l.b16 %v5468
      %v5687 = vunpack.c.l.b16 %v5469
      %v5688 = vunpack.c.h.b16 %v5469
      %v5689 = vunpack.c.l.b16 %v5470
      %v5690 = vunpack.c.l.b16 %v5471
      %v5691 = vunpack.c.h.b16 %v5471
      %v5692 = vunpack.c.l.b16 %v5472
      %v5693 = vunpack.c.l.b16 %v5473
      %v5694 = vunpack.c.h.b16 %v5473
      %v5695 = vunpack.c.l.b16 %v5474
      %v5696 = vunpack.c.l.b16 %v5475
      %v5697 = vunpack.c.h.b16 %v5475
      %v5698 = vunpack.c.l.b16 %v5476
      %v5699 = vunpack.c.l.b16 %v5477
      %v5700 = vunpack.c.h.b16 %v5477
      %v5701 = vunpack.c.l.b16 %v5478
      %v5702 = vunpack.c.l.b16 %v5479
      %v5703 = vunpack.c.h.b16 %v5479
      %v5704 = vunpack.c.l.b16 %v5480
      %v5705 = vunpack.c.l.b16 %v5481
      %v5706 = vunpack.c.h.b16 %v5481
      %v5707 = vunpack.c.l.b16 %v5482
      %v5708 = vunpack.c.l.b16 %v5483
      %v5709 = vunpack.c.h.b16 %v5483
      %v5710 = vunpack.c.l.b16 %v5484
      %v5711 = vunpack.c.l.b16 %v5485
      %v5712 = vunpack.c.h.b16 %v5485
      %v5713 = vunpack.c.l.b16 %v5486
      %v5714 = vunpack.c.l.b16 %v5487
      %v5715 = vunpack.c.h.b16 %v5487
      %v5716 = vunpack.c.l.b16 %v5488
      %v5717 = vunpack.c.l.b16 %v5489
      %v5718 = vunpack.c.h.b16 %v5489
      %v5719 = vunpack.c.l.b16 %v5490
      %v5720 = vunpack.c.l.b16 %v5491
      %v5721 = vunpack.c.h.b16 %v5491
      %v5722 = vunpack.c.l.b16 %v5492
      %v5723 = vunpack.c.l.b16 %v5493
      %v5724 = vunpack.c.h.b16 %v5493
      %v5725 = vunpack.c.l.b16 %v5494
      %v5726 = vunpack.c.l.b16 %v5495
      %v5727 = vunpack.c.h.b16 %v5495
      %v5728 = vunpack.c.l.b16 %v5496
      %v5729 = vunpack.c.l.b16 %v5497
      %v5730 = vunpack.c.h.b16 %v5497
      %v5731 = vunpack.c.l.b16 %v5498
      %v5732 = vunpack.c.l.b16 %v5499
      %v5733 = vunpack.c.h.b16 %v5499
      %v5734 = vunpack.c.l.b16 %v5500
      %v5735 = vunpack.c.l.b16 %v5501
      %v5736 = vunpack.c.h.b16 %v5501
      %v5737 = vunpack.c.l.b16 %v5502
      %v5738 = vunpack.c.l.b16 %v5503
      %v5739 = vunpack.c.h.b16 %v5503
      %v5740 = vunpack.c.l.b16 %v5504
      %v5741 = vunpack.c.l.b16 %v5505
      %v5742 = vunpack.c.h.b16 %v5505
      %v5743 = vunpack.c.l.b16 %v5506
      %v5744 = vunpack.c.l.b16 %v5507
      %v5745 = vunpack.c.h.b16 %v5507
      %v5746 = vunpack.c.l.b16 %v5508
      %v5747 = vunpack.c.l.b16 %v5509
      %v5748 = vunpack.c.h.b16 %v5509
      %v5749 = vunpack.c.l.b16 %v5510
      %v5750 = vunpack.c.l.b16 %v5511
      %v5751 = vunpack.c.h.b16 %v5511
      %v5752 = vunpack.c.l.b16 %v5512
      %v5753 = vunpack.c.l.b16 %v5513
      %v5754 = vunpack.c.h.b16 %v5513
      %v5755 = vunpack.c.l.b16 %v5514
      %v5756 = vunpack.c.l.b16 %v5515
      %v5757 = vunpack.c.h.b16 %v5515
      %v5758 = vunpack.c.l.b16 %v5516
      %v5759 = vunpack.c.l.b16 %v5517
      %v5760 = vunpack.c.h.b16 %v5517
      %v5761 = vunpack.c.l.b16 %v5518
      %v5762 = vunpack.c.l.b16 %v5519
      %v5763 = vunpack.c.h.b16 %v5519
      %v5764 = vunpack.c.l.b16 %v5520
      %v5765 = vunpack.c.l.b16 %v5521
      %v5766 = vunpack.c.h.b16 %v5521
      %v5767 = vunpack.c.l.b16 %v5522
      %v5768 = vunpack.c.l.b16 %v5523
      %v5769 = vunpack.c.h.b16 %v5523
      %v5770 = vunpack.c.l.b16 %v5524
      %v5771 = vunpack.c.l.b16 %v5525
      %v5772 = vunpack.c.h.b16 %v5525
      %v5773 = vunpack.c.l.b16 %v5526
      %v5774 = vunpack.c.l.b16 %v5527
      %v5775 = vunpack.c.h.b16 %v5527
      %v5776 = vunpack.c.l.b16 %v5528
      %v5777 = vunpack.c.l.b16 %v5529
      %v5778 = vunpack.c.h.b16 %v5529
      %v5779 = vunpack.c.l.b16 %v5530
      %v5780 = vunpack.c.l.b16 %v5531
      %v5781 = vunpack.c.h.b16 %v5531
      %v5782 = vunpack.c.l.b16 %v5532
      %v5783 = vunpack.c.l.b16 %v5533
      %v5784 = vunpack.c.h.b16 %v5533
      %v5785 = vunpack.c.l.b16 %v5534
      %v5786 = vpack.c.b16 %v5645, %v5642
      %v5787 = vpack.c.b16 %v5646, %v5643
      %v5788 = vpack.c.b16 %v5647, %v5644
      %v5789 = vpack.c.b16 %v5651, %v5648
      %v5790 = vpack.c.b16 %v5652, %v5649
      %v5791 = vpack.c.b16 %v5653, %v5650
      %v5792 = vpack.c.b16 %v5657, %v5654
      %v5793 = vpack.c.b16 %v5658, %v5655
      %v5794 = vpack.c.b16 %v5659, %v5656
      %v5795 = vpack.c.b16 %v5663, %v5660
      %v5796 = vpack.c.b16 %v5664, %v5661
      %v5797 = vpack.c.b16 %v5665, %v5662
      %v5798 = vpack.c.b16 %v5669, %v5666
      %v5799 = vpack.c.b16 %v5670, %v5667
      %v5800 = vpack.c.b16 %v5671, %v5668
      %v5801 = vpack.c.b16 %v5675, %v5672
      %v5802 = vpack.c.b16 %v5676, %v5673
      %v5803 = vpack.c.b16 %v5677, %v5674
      %v5804 = vpack.c.b16 %v5681, %v5678
      %v5805 = vpack.c.b16 %v5682, %v5679
      %v5806 = vpack.c.b16 %v5683, %v5680
      %v5807 = vpack.c.b16 %v5687, %v5684
      %v5808 = vpack.c.b16 %v5688, %v5685
      %v5809 = vpack.c.b16 %v5689, %v5686
      %v5810 = vpack.c.b16 %v5693, %v5690
      %v5811 = vpack.c.b16 %v5694, %v5691
      %v5812 = vpack.c.b16 %v5695, %v5692
      %v5813 = vpack.c.b16 %v5699, %v5696
      %v5814 = vpack.c.b16 %v5700, %v5697
      %v5815 = vpack.c.b16 %v5701, %v5698
      %v5816 = vpack.c.b16 %v5705, %v5702
      %v5817 = vpack.c.b16 %v5706, %v5703
      %v5818 = vpack.c.b16 %v5707, %v5704
      %v5819 = vpack.c.b16 %v5711, %v5708
      %v5820 = vpack.c.b16 %v5712, %v5709
      %v5821 = vpack.c.b16 %v5713, %v5710
      %v5822 = vpack.c.b16 %v5717, %v5714
      %v5823 = vpack.c.b16 %v5718, %v5715
      %v5824 = vpack.c.b16 %v5719, %v5716
      %v5825 = vpack.c.b16 %v5723, %v5720
      %v5826 = vpack.c.b16 %v5724, %v5721
      %v5827 = vpack.c.b16 %v5725, %v5722
      %v5828 = vpack.c.b16 %v5729, %v5726
      %v5829 = vpack.c.b16 %v5730, %v5727
      %v5830 = vpack.c.b16 %v5731, %v5728
      %v5831 = vpack.c.b16 %v5735, %v5732
      %v5832 = vpack.c.b16 %v5736, %v5733
      %v5833 = vpack.c.b16 %v5737, %v5734
      %v5834 = vpack.c.b16 %v5741, %v5738
      %v5835 = vpack.c.b16 %v5742, %v5739
      %v5836 = vpack.c.b16 %v5743, %v5740
      %v5837 = vpack.c.b16 %v5747, %v5744
      %v5838 = vpack.c.b16 %v5748, %v5745
      %v5839 = vpack.c.b16 %v5749, %v5746
      %v5840 = vpack.c.b16 %v5753, %v5750
      %v5841 = vpack.c.b16 %v5754, %v5751
      %v5842 = vpack.c.b16 %v5755, %v5752
      %v5843 = vpack.c.b16 %v5759, %v5756
      %v5844 = vpack.c.b16 %v5760, %v5757
      %v5845 = vpack.c.b16 %v5761, %v5758
      %v5846 = vpack.c.b16 %v5765, %v5762
      %v5847 = vpack.c.b16 %v5766, %v5763
      %v5848 = vpack.c.b16 %v5767, %v5764
      %v5849 = vpack.c.b16 %v5771, %v5768
      %v5850 = vpack.c.b16 %v5772, %v5769
      %v5851 = vpack.c.b16 %v5773, %v5770
      %v5852 = vpack.c.b16 %v5777, %v5774
      %v5853 = vpack.c.b16 %v5778, %v5775
      %v5854 = vpack.c.b16 %v5779, %v5776
      %v5855 = vpack.c.b16 %v5783, %v5780
      %v5856 = vpack.c.b16 %v5784, %v5781
      %v5857 = vpack.c.b16 %v5785, %v5782
      %5930 = vmatprep.subr.bf16.mxu0 %v5787
      %5931 = vmatpush1.bf16.msra.mxu0 %v5786
      %5932 = vmatprep.subr.bf16.mxu0 %v5790
      %5933 = vmatpush1.bf16.msra.mxu0 %v5789
      %5934 = vmatprep.subr.bf16.mxu0 %v5793
      %5935 = vmatpush1.bf16.msra.mxu0 %v5792
      %5936 = vmatprep.subr.bf16.mxu0 %v5796
      %5937 = vmatpush1.bf16.msra.mxu0 %v5795
      %5938 = vmatprep.subr.bf16.mxu0 %v5799
      %5939 = vmatpush1.bf16.msra.mxu0 %v5798
      %5940 = vmatprep.subr.bf16.mxu0 %v5802
      %5941 = vmatpush1.bf16.msra.mxu0 %v5801
      %5942 = vmatprep.subr.bf16.mxu0 %v5805
      %5943 = vmatpush1.bf16.msra.mxu0 %v5804
      %5944 = vmatprep.subr.bf16.mxu0 %v5808
      %5945 = vmatpush1.bf16.msra.mxu0 %v5807
      %5946 = vmatprep.subr.bf16.mxu0 %v5811
      %5947 = vmatpush1.bf16.msra.mxu0 %v5810
      %5948 = vmatprep.subr.bf16.mxu0 %v5814
      %5949 = vmatpush1.bf16.msra.mxu0 %v5813
      %5950 = vmatprep.subr.bf16.mxu0 %v5817
      %5951 = vmatpush1.bf16.msra.mxu0 %v5816
      %5952 = vmatprep.subr.bf16.mxu0 %v5820
      %5953 = vmatpush1.bf16.msra.mxu0 %v5819
      %5954 = vmatprep.subr.bf16.mxu0 %v5823
      %5955 = vmatpush1.bf16.msra.mxu0 %v5822
      %5956 = vmatprep.subr.bf16.mxu0 %v5826
      %5957 = vmatpush1.bf16.msra.mxu0 %v5825
      %5958 = vmatprep.subr.bf16.mxu0 %v5829
      %5959 = vmatpush1.bf16.msra.mxu0 %v5828
      %5960 = vmatprep.subr.bf16.mxu0 %v5832
      %5961 = vmatpush1.bf16.msra.mxu0 %v5831
      %5962 = vmatprep.mubr.bf16.mxu0 %v1382
      %5963 = vmatmul.mubr.bf16.gmra.mrb[0].mxu0 %v1381
      %v5964 = vpop.f32.mrb[0].mxu0
      %v5965 = vadd.f32 0.0, %v5964
      %v5966 = vpop.f32.mrb[0].mxu0
      %v5967 = vadd.f32 0.0, %v5966
      %v5968 = vpop.f32.mrb[0].mxu0
      %v5969 = vadd.f32 0.0, %v5968
      %v5970 = vpop.f32.mrb[0].mxu0
      %v5971 = vadd.f32 0.0, %v5970
      %5972 = vmatprep.mubr.bf16.mxu0 %v1385
      %5973 = vmatmul.mubr.bf16.gmra.mrb[0].mxu0 %v1384
      %v5974 = vpop.f32.mrb[0].mxu0
      %v5975 = vadd.f32 0.0, %v5974
      %v5976 = vpop.f32.mrb[0].mxu0
      %v5977 = vadd.f32 0.0, %v5976
      %v5978 = vpop.f32.mrb[0].mxu0
      %v5979 = vadd.f32 0.0, %v5978
      %v5980 = vpop.f32.mrb[0].mxu0
      %v5981 = vadd.f32 0.0, %v5980
      %5982 = vmatprep.mubr.bf16.mxu0 %v1388
      %5983 = vmatmul.mubr.bf16.gmra.mrb[0].mxu0 %v1387
      %v5984 = vpop.f32.mrb[0].mxu0
      %v5985 = vadd.f32 0.0, %v5984
      %v5986 = vpop.f32.mrb[0].mxu0
      %v5987 = vadd.f32 0.0, %v5986
      %v5988 = vpop.f32.mrb[0].mxu0
      %v5989 = vadd.f32 0.0, %v5988
      %v5990 = vpop.f32.mrb[0].mxu0
      %v5991 = vadd.f32 0.0, %v5990
      %5992 = vmatprep.mubr.bf16.mxu0 %v5541
      %5993 = vmatmul.mubr.bf16.gmra.mrb[0].mxu0 %v5540
      %v5994 = vpop.f32.mrb[0].mxu0
      %v5995 = vadd.f32 0.0, %v5994
      %v5996 = vpop.f32.mrb[0].mxu0
      %v5997 = vadd.f32 0.0, %v5996
      %v5998 = vpop.f32.mrb[0].mxu0
      %v5999 = vadd.f32 0.0, %v5998
      %v6000 = vpop.f32.mrb[0].mxu0
      %v6001 = vadd.f32 0.0, %v6000
      %6002 = vdwg.mxu0
      %6003 = vmatprep.subr.bf16.mxu0 %v5835
      %6004 = vmatpush1.bf16.msra.mxu0 %v5834
      %6005 = vmatprep.subr.bf16.mxu0 %v5838
      %6006 = vmatpush1.bf16.msra.mxu0 %v5837
      %6007 = vmatprep.subr.bf16.mxu0 %v5841
      %6008 = vmatpush1.bf16.msra.mxu0 %v5840
      %6009 = vmatprep.subr.bf16.mxu0 %v5844
      %6010 = vmatpush1.bf16.msra.mxu0 %v5843
      %6011 = vmatprep.subr.bf16.mxu0 %v5847
      %6012 = vmatpush1.bf16.msra.mxu0 %v5846
      %6013 = vmatprep.subr.bf16.mxu0 %v5850
      %6014 = vmatpush1.bf16.msra.mxu0 %v5849
      %6015 = vmatprep.subr.bf16.mxu0 %v5853
      %6016 = vmatpush1.bf16.msra.mxu0 %v5852
      %6017 = vmatprep.subr.bf16.mxu0 %v5856
      %6018 = vmatpush1.bf16.msra.mxu0 %v5855
      %6019 = vmatprep.subr.bf16.mxu0 0
      %6020 = vmatpush1.bf16.msra.mxu0 0
      %6021 = vmatprep.subr.bf16.mxu0 0
      %6022 = vmatpush1.bf16.msra.mxu0 0
      %6023 = vmatprep.subr.bf16.mxu0 0
      %6024 = vmatpush1.bf16.msra.mxu0 0
      %6025 = vmatprep.subr.bf16.mxu0 0
      %6026 = vmatpush1.bf16.msra.mxu0 0
      %6027 = vmatprep.subr.bf16.mxu0 0
      %6028 = vmatpush1.bf16.msra.mxu0 0
      %6029 = vmatprep.subr.bf16.mxu0 0
      %6030 = vmatpush1.bf16.msra.mxu0 0
      %6031 = vmatprep.subr.bf16.mxu0 0
      %6032 = vmatpush1.bf16.msra.mxu0 0
      %6033 = vmatprep.subr.bf16.mxu0 0
      %6034 = vmatpush1.bf16.msra.mxu0 0
      %6035 = vmatprep.mubr.bf16.mxu0 0
      %6036 = vmatmul.mubr.bf16.gmra.mrb[0].mxu0 %v1383
      %v6037 = vpop.f32.mrb[0].mxu0
      %v6038 = vadd.f32 %v5965, %v6037
      %v6039 = vpop.f32.mrb[0].mxu0
      %v6040 = vadd.f32 %v5967, %v6039
      %v6041 = vpop.f32.mrb[0].mxu0
      %v6042 = vadd.f32 %v5969, %v6041
      %v6043 = vpop.f32.mrb[0].mxu0
      %v6044 = vadd.f32 %v5971, %v6043
      %6045 = vmatprep.mubr.bf16.mxu0 0
      %6046 = vmatmul.mubr.bf16.gmra.mrb[0].mxu0 %v1386
      %v6047 = vpop.f32.mrb[0].mxu0
      %v6048 = vadd.f32 %v5975, %v6047
      %v6049 = vpop.f32.mrb[0].mxu0
      %v6050 = vadd.f32 %v5977, %v6049
      %v6051 = vpop.f32.mrb[0].mxu0
      %v6052 = vadd.f32 %v5979, %v6051
      %v6053 = vpop.f32.mrb[0].mxu0
      %v6054 = vadd.f32 %v5981, %v6053
      %6055 = vmatprep.mubr.bf16.mxu0 0
      %6056 = vmatmul.mubr.bf16.gmra.mrb[0].mxu0 %v1389
      %v6057 = vpop.f32.mrb[0].mxu0
      %v6058 = vadd.f32 %v5985, %v6057
      %v6059 = vpop.f32.mrb[0].mxu0
      %v6060 = vadd.f32 %v5987, %v6059
      %v6061 = vpop.f32.mrb[0].mxu0
      %v6062 = vadd.f32 %v5989, %v6061
      %v6063 = vpop.f32.mrb[0].mxu0
      %v6064 = vadd.f32 %v5991, %v6063
      %6065 = vmatprep.mubr.bf16.mxu0 0
      %6066 = vmatmul.mubr.bf16.gmra.mrb[0].mxu0 %v5542
      %v6067 = vpop.f32.mrb[0].mxu0
      %v6068 = vadd.f32 %v5995, %v6067
      %v6069 = vpop.f32.mrb[0].mxu0
      %v6070 = vadd.f32 %v5997, %v6069
      %v6071 = vpop.f32.mrb[0].mxu0
      %v6072 = vadd.f32 %v5999, %v6071
      %v6073 = vpop.f32.mrb[0].mxu0
      %v6074 = vadd.f32 %v6001, %v6073
      %6075 = vdwg.mxu0
      %6076 = vmatprep.subr.bf16.mxu0 0
      %6077 = vmatpush1.bf16.msra.mxu0 %v5788
      %6078 = vmatprep.subr.bf16.mxu0 0
      %6079 = vmatpush1.bf16.msra.mxu0 %v5791
      %6080 = vmatprep.subr.bf16.mxu0 0
      %6081 = vmatpush1.bf16.msra.mxu0 %v5794
      %6082 = vmatprep.subr.bf16.mxu0 0
      %6083 = vmatpush1.bf16.msra.mxu0 %v5797
      %6084 = vmatprep.subr.bf16.mxu0 0
      %6085 = vmatpush1.bf16.msra.mxu0 %v5800
      %6086 = vmatprep.subr.bf16.mxu0 0
      %6087 = vmatpush1.bf16.msra.mxu0 %v5803
      %6088 = vmatprep.subr.bf16.mxu0 0
      %6089 = vmatpush1.bf16.msra.mxu0 %v5806
      %6090 = vmatprep.subr.bf16.mxu0 0
      %6091 = vmatpush1.bf16.msra.mxu0 %v5809
      %6092 = vmatprep.subr.bf16.mxu0 0
      %6093 = vmatpush1.bf16.msra.mxu0 %v5812
      %6094 = vmatprep.subr.bf16.mxu0 0
      %6095 = vmatpush1.bf16.msra.mxu0 %v5815
      %6096 = vmatprep.subr.bf16.mxu0 0
      %6097 = vmatpush1.bf16.msra.mxu0 %v5818
      %6098 = vmatprep.subr.bf16.mxu0 0
      %6099 = vmatpush1.bf16.msra.mxu0 %v5821
      %6100 = vmatprep.subr.bf16.mxu0 0
      %6101 = vmatpush1.bf16.msra.mxu0 %v5824
      %6102 = vmatprep.subr.bf16.mxu0 0
      %6103 = vmatpush1.bf16.msra.mxu0 %v5827
      %6104 = vmatprep.subr.bf16.mxu0 0
      %6105 = vmatpush1.bf16.msra.mxu0 %v5830
      %6106 = vmatprep.subr.bf16.mxu0 0
      %6107 = vmatpush1.bf16.msra.mxu0 %v5833
      %6108 = vmatprep.mubr.bf16.mxu0 %v1382
      %6109 = vmatmul.mubr.bf16.gmra.mrb[0].mxu0 %v1381
      %v6110 = vpop.f32.mrb[0].mxu0
      %v6111 = vadd.f32 0.0, %v6110
      %v6112 = vpop.f32.mrb[0].mxu0
      %v6113 = vpop.f32.mrb[0].mxu0
      %v6114 = vadd.f32 0.0, %v6113
      %v6115 = vpop.f32.mrb[0].mxu0
      %6116 = vmatprep.mubr.bf16.mxu0 %v1385
      %6117 = vmatmul.mubr.bf16.gmra.mrb[0].mxu0 %v1384
      %v6118 = vpop.f32.mrb[0].mxu0
      %v6119 = vadd.f32 0.0, %v6118
      %v6120 = vpop.f32.mrb[0].mxu0
      %v6121 = vpop.f32.mrb[0].mxu0
      %v6122 = vadd.f32 0.0, %v6121
      %v6123 = vpop.f32.mrb[0].mxu0
      %6124 = vmatprep.mubr.bf16.mxu0 %v1388
      %6125 = vmatmul.mubr.bf16.gmra.mrb[0].mxu0 %v1387
      %v6126 = vpop.f32.mrb[0].mxu0
      %v6127 = vadd.f32 0.0, %v6126
      %v6128 = vpop.f32.mrb[0].mxu0
      %v6129 = vpop.f32.mrb[0].mxu0
      %v6130 = vadd.f32 0.0, %v6129
      %v6131 = vpop.f32.mrb[0].mxu0
      %6132 = vmatprep.mubr.bf16.mxu0 %v5541
      %6133 = vmatmul.mubr.bf16.gmra.mrb[0].mxu0 %v5540
      %v6134 = vpop.f32.mrb[0].mxu0
      %v6135 = vadd.f32 0.0, %v6134
      %v6136 = vpop.f32.mrb[0].mxu0
      %v6137 = vpop.f32.mrb[0].mxu0
      %v6138 = vadd.f32 0.0, %v6137
      %v6139 = vpop.f32.mrb[0].mxu0
      %6140 = vdwg.mxu0
      %6141 = vmatprep.subr.bf16.mxu0 0
      %6142 = vmatpush1.bf16.msra.mxu0 %v5836
      %6143 = vmatprep.subr.bf16.mxu0 0
      %6144 = vmatpush1.bf16.msra.mxu0 %v5839
      %6145 = vmatprep.subr.bf16.mxu0 0
      %6146 = vmatpush1.bf16.msra.mxu0 %v5842
      %6147 = vmatprep.subr.bf16.mxu0 0
      %6148 = vmatpush1.bf16.msra.mxu0 %v5845
      %6149 = vmatprep.subr.bf16.mxu0 0
      %6150 = vmatpush1.bf16.msra.mxu0 %v5848
      %6151 = vmatprep.subr.bf16.mxu0 0
      %6152 = vmatpush1.bf16.msra.mxu0 %v5851
      %6153 = vmatprep.subr.bf16.mxu0 0
      %6154 = vmatpush1.bf16.msra.mxu0 %v5854
      %6155 = vmatprep.subr.bf16.mxu0 0
      %6156 = vmatpush1.bf16.msra.mxu0 %v5857
      %6157 = vmatprep.subr.bf16.mxu0 0
      %6158 = vmatpush1.bf16.msra.mxu0 0
      %6159 = vmatprep.subr.bf16.mxu0 0
      %6160 = vmatpush1.bf16.msra.mxu0 0
      %6161 = vmatprep.subr.bf16.mxu0 0
      %6162 = vmatpush1.bf16.msra.mxu0 0
      %6163 = vmatprep.subr.bf16.mxu0 0
      %6164 = vmatpush1.bf16.msra.mxu0 0
      %6165 = vmatprep.subr.bf16.mxu0 0
      %6166 = vmatpush1.bf16.msra.mxu0 0
      %6167 = vmatprep.subr.bf16.mxu0 0
      %6168 = vmatpush1.bf16.msra.mxu0 0
      %6169 = vmatprep.subr.bf16.mxu0 0
      %6170 = vmatpush1.bf16.msra.mxu0 0
      %6171 = vmatprep.subr.bf16.mxu0 0
      %6172 = vmatpush1.bf16.msra.mxu0 0
      %6173 = vmatprep.mubr.bf16.mxu0 0
      %6174 = vmatmul.mubr.bf16.gmra.mrb[0].mxu0 %v1383
      %v6175 = vpop.f32.mrb[0].mxu0
      %v6176 = vadd.f32 %v6111, %v6175
      %v6177 = vpop.f32.mrb[0].mxu0
      %v6178 = vpop.f32.mrb[0].mxu0
      %v6179 = vadd.f32 %v6114, %v6178
      %v6180 = vpop.f32.mrb[0].mxu0
      %6181 = vmatprep.mubr.bf16.mxu0 0
      %6182 = vmatmul.mubr.bf16.gmra.mrb[0].mxu0 %v1386
      %v6183 = vpop.f32.mrb[0].mxu0
      %v6184 = vadd.f32 %v6119, %v6183
      %v6185 = vpop.f32.mrb[0].mxu0
      %v6186 = vpop.f32.mrb[0].mxu0
      %v6187 = vadd.f32 %v6122, %v6186
      %v6188 = vpop.f32.mrb[0].mxu0
      %6189 = vmatprep.mubr.bf16.mxu0 0
      %6190 = vmatmul.mubr.bf16.gmra.mrb[0].mxu0 %v1389
      %v6191 = vpop.f32.mrb[0].mxu0
      %v6192 = vadd.f32 %v6127, %v6191
      %v6193 = vpop.f32.mrb[0].mxu0
      %v6194 = vpop.f32.mrb[0].mxu0
      %v6195 = vadd.f32 %v6130, %v6194
      %v6196 = vpop.f32.mrb[0].mxu0
      %6197 = vmatprep.mubr.bf16.mxu0 0
      %6198 = vmatmul.mubr.bf16.gmra.mrb[0].mxu0 %v5542
      %v6199 = vpop.f32.mrb[0].mxu0
      %v6200 = vadd.f32 %v6135, %v6199
      %v6201 = vpop.f32.mrb[0].mxu0
      %v6202 = vpop.f32.mrb[0].mxu0
      %v6203 = vadd.f32 %v6138, %v6202
      %v6204 = vpop.f32.mrb[0].mxu0
      %6205 = vdwg.mxu0
      %v6206 = vadd.f32 %v5414, %v6038
      %v6207 = vadd.f32 %v5415, %v6040
      %v6208 = vadd.f32 %v5416, %v6176
      %v6209 = vadd.f32 %v5417, %v6042
      %v6210 = vadd.f32 %v5418, %v6044
      %v6211 = vadd.f32 %v5419, %v6179
      %v6212 = vadd.f32 %v5420, %v6048
      %v6213 = vadd.f32 %v5421, %v6050
      %v6214 = vadd.f32 %v5422, %v6184
      %v6215 = vadd.f32 %v5423, %v6052
      %v6216 = vadd.f32 %v5424, %v6054
      %v6217 = vadd.f32 %v5425, %v6187
      %v6218 = vadd.f32 %v5426, %v6058
      %v6219 = vadd.f32 %v5427, %v6060
      %v6220 = vadd.f32 %v5428, %v6192
      %v6221 = vadd.f32 %v5429, %v6062
      %v6222 = vadd.f32 %v5430, %v6064
      %v6223 = vadd.f32 %v5431, %v6195
      %v6224 = vadd.f32 %v5432, %v6068
      %v6225 = vadd.f32 %v5433, %v6070
      %v6226 = vadd.f32 %v5434, %v6200
      %v6227 = vadd.f32 %v5435, %v6072
      %v6228 = vadd.f32 %v5436, %v6074
      %v6229 = vadd.f32 %v5437, %v6203
      %v6231 = vshrl.u32 %v206, 16
      %v6233 = vrot.slane %v6231, 4
      %v6234 = vshll.u32 %v206, 16
      %v6236 = vrot.slane %v6234, 5
      %v6237 = vor.u32 %v6233, %v6236
      %v6238 = vrot.slane %v6237, 4
      %v6240 = vshll.u32 %v208, 16
      %v6242 = vrot.slane %v6240, 5
      %v6243 = vsel %vm308, %v6238, %v6242
      %v6245 = vshrl.u32 %v207, 16
      %v6247 = vrot.slane %v6245, 4
      %v6248 = vshll.u32 %v207, 16
      %v6250 = vrot.slane %v6248, 5
      %v6251 = vor.u32 %v6247, %v6250
      %v6252 = vrot.slane %v6251, 4
      %v6254 = vshll.u32 %v209, 16
      %v6256 = vrot.slane %v6254, 5
      %v6257 = vsel %vm308, %v6252, %v6256
      %s6258 = scalar_lea.vmem %s1, 4032
      %v6259 = vld [vmem:[%s6258] sm:$0xff]
      %v6260 = vld [vmem:[%s6258 + $0x8] sm:$0xf]
      %v6261 = vld [vmem:[%s6258 + $0xc] sm:$0xff]
      %v6262 = vld [vmem:[%s6258 + $0x14] sm:$0xf]
      %v6263 = vld [vmem:[%s6258 + $0x18] sm:$0xff]
      %v6264 = vld [vmem:[%s6258 + $0x20] sm:$0xf]
      %v6265 = vld [vmem:[%s6258 + $0x24] sm:$0xff]
      %v6266 = vld [vmem:[%s6258 + $0x2c] sm:$0xf]
      %v6267 = vld [vmem:[%s6258 + $0x30] sm:$0xff]
      %v6268 = vld [vmem:[%s6258 + $0x38] sm:$0xf]
      %v6269 = vld [vmem:[%s6258 + $0x3c] sm:$0xff]
      %v6270 = vld [vmem:[%s6258 + $0x44] sm:$0xf]
      %v6271 = vld [vmem:[%s6258 + $0x48] sm:$0xff]
      %v6272 = vld [vmem:[%s6258 + $0x50] sm:$0xf]
      %v6273 = vld [vmem:[%s6258 + $0x54] sm:$0xff]
      %v6274 = vld [vmem:[%s6258 + $0x5c] sm:$0xf]
      %v6275 = vld [vmem:[%s6258 + $0x60] sm:$0xff]
      %v6276 = vld [vmem:[%s6258 + $0x68] sm:$0xf]
      %v6277 = vld [vmem:[%s6258 + $0x6c] sm:$0xff]
      %v6278 = vld [vmem:[%s6258 + $0x74] sm:$0xf]
      %v6279 = vld [vmem:[%s6258 + $0x78] sm:$0xff]
      %v6280 = vld [vmem:[%s6258 + $0x80] sm:$0xf]
      %v6281 = vld [vmem:[%s6258 + $0x84] sm:$0xff]
      %v6282 = vld [vmem:[%s6258 + $0x8c] sm:$0xf]
      %v6283 = vld [vmem:[%s6258 + $0x90] sm:$0xff]
      %v6284 = vld [vmem:[%s6258 + $0x98] sm:$0xf]
      %v6285 = vld [vmem:[%s6258 + $0x9c] sm:$0xff]
      %v6286 = vld [vmem:[%s6258 + $0xa4] sm:$0xf]
      %v6287 = vld [vmem:[%s6258 + $0xa8] sm:$0xff]
      %v6288 = vld [vmem:[%s6258 + $0xb0] sm:$0xf]
      %v6289 = vld [vmem:[%s6258 + $0xb4] sm:$0xff]
      %v6290 = vld [vmem:[%s6258 + $0xbc] sm:$0xf]
      %v6291 = vld [vmem:[%s6258 + $0xc0] sm:$0xff]
      %v6292 = vld [vmem:[%s6258 + $0xc8] sm:$0xf]
      %v6293 = vld [vmem:[%s6258 + $0xcc] sm:$0xff]
      %v6294 = vld [vmem:[%s6258 + $0xd4] sm:$0xf]
      %v6295 = vld [vmem:[%s6258 + $0xd8] sm:$0xff]
      %v6296 = vld [vmem:[%s6258 + $0xe0] sm:$0xf]
      %v6297 = vld [vmem:[%s6258 + $0xe4] sm:$0xff]
      %v6298 = vld [vmem:[%s6258 + $0xec] sm:$0xf]
      %v6299 = vld [vmem:[%s6258 + $0xf0] sm:$0xff]
      %v6300 = vld [vmem:[%s6258 + $0xf8] sm:$0xf]
      %v6301 = vld [vmem:[%s6258 + $0xfc] sm:$0xff]
      %v6302 = vld [vmem:[%s6258 + $0x104] sm:$0xf]
      %v6303 = vld [vmem:[%s6258 + $0x108] sm:$0xff]
      %v6304 = vld [vmem:[%s6258 + $0x110] sm:$0xf]
      %v6305 = vld [vmem:[%s6258 + $0x114] sm:$0xff]
      %v6306 = vld [vmem:[%s6258 + $0x11c] sm:$0xf]
      %v6307 = vld [vmem:[%s6258 + $0x120] sm:$0xff]
      %v6308 = vld [vmem:[%s6258 + $0x128] sm:$0xf]
      %v6309 = vld [vmem:[%s6258 + $0x12c] sm:$0xff]
      %v6310 = vld [vmem:[%s6258 + $0x134] sm:$0xf]
      %v6311 = vld [vmem:[%s6258 + $0x138] sm:$0xff]
      %v6312 = vld [vmem:[%s6258 + $0x140] sm:$0xf]
      %v6313 = vld [vmem:[%s6258 + $0x144] sm:$0xff]
      %v6314 = vld [vmem:[%s6258 + $0x14c] sm:$0xf]
      %v6315 = vld [vmem:[%s6258 + $0x150] sm:$0xff]
      %v6316 = vld [vmem:[%s6258 + $0x158] sm:$0xf]
      %v6317 = vld [vmem:[%s6258 + $0x15c] sm:$0xff]
      %v6318 = vld [vmem:[%s6258 + $0x164] sm:$0xf]
      %v6319 = vld [vmem:[%s6258 + $0x168] sm:$0xff]
      %v6320 = vld [vmem:[%s6258 + $0x170] sm:$0xf]
      %v6321 = vld [vmem:[%s6258 + $0x174] sm:$0xff]
      %v6322 = vld [vmem:[%s6258 + $0x17c] sm:$0xf]
      %v6323 = vld [vmem:[%s6258 + $0x180] sm:$0xff]
      %v6324 = vld [vmem:[%s6258 + $0x188] sm:$0xf]
      %v6325 = vld [vmem:[%s6258 + $0x18c] sm:$0xff]
      %v6326 = vld [vmem:[%s6258 + $0x194] sm:$0xf]
      %v6327 = vld [vmem:[%s6258 + $0x198] sm:$0xff]
      %v6328 = vld [vmem:[%s6258 + $0x1a0] sm:$0xf]
      %v6329 = vld [vmem:[%s6258 + $0x1a4] sm:$0xff]
      %v6330 = vld [vmem:[%s6258 + $0x1ac] sm:$0xf]
      %v6331 = vld [vmem:[%s6258 + $0x1b0] sm:$0xff]
      %v6332 = vld [vmem:[%s6258 + $0x1b8] sm:$0xf]
      %v6333 = vld [vmem:[%s6258 + $0x1bc] sm:$0xff]
      %v6334 = vld [vmem:[%s6258 + $0x1c4] sm:$0xf]
      %v6335 = vld [vmem:[%s6258 + $0x1c8] sm:$0xff]
      %v6336 = vld [vmem:[%s6258 + $0x1d0] sm:$0xf]
      %v6337 = vld [vmem:[%s6258 + $0x1d4] sm:$0xff]
      %v6338 = vld [vmem:[%s6258 + $0x1dc] sm:$0xf]
      %v6339 = vld [vmem:[%s6258 + $0x1e0] sm:$0xff]
      %v6340 = vld [vmem:[%s6258 + $0x1e8] sm:$0xf]
      %v6341 = vld [vmem:[%s6258 + $0x1ec] sm:$0xff]
      %v6342 = vld [vmem:[%s6258 + $0x1f4] sm:$0xf]
      %v6343 = vld [vmem:[%s6258 + $0x1f8] sm:$0xff]
      %v6344 = vld [vmem:[%s6258 + $0x200] sm:$0xf]
      %v6345 = vld [vmem:[%s6258 + $0x204] sm:$0xff]
      %v6346 = vld [vmem:[%s6258 + $0x20c] sm:$0xf]
      %v6347 = vld [vmem:[%s6258 + $0x210] sm:$0xff]
      %v6348 = vld [vmem:[%s6258 + $0x218] sm:$0xf]
      %v6349 = vld [vmem:[%s6258 + $0x21c] sm:$0xff]
      %v6350 = vld [vmem:[%s6258 + $0x224] sm:$0xf]
      %v6351 = vld [vmem:[%s6258 + $0x228] sm:$0xff]
      %v6352 = vld [vmem:[%s6258 + $0x230] sm:$0xf]
      %v6353 = vld [vmem:[%s6258 + $0x234] sm:$0xff]
      %v6354 = vld [vmem:[%s6258 + $0x23c] sm:$0xf]
      %v6355 = vunpack.c.l.b16 %v6243
      %v6356 = vunpack.c.h.b16 %v6243
      %v6357 = vunpack.c.l.b16 %v6257
      %v6358 = vpack.c.b16 %v6355, %v3909
      %v6359 = vpack.c.b16 %v6356, %v3910
      %v6360 = vpack.c.b16 %v6357, %v3911
      %v6460 = vunpack.c.l.b16 %v6259
      %v6461 = vunpack.c.h.b16 %v6259
      %v6462 = vunpack.c.l.b16 %v6260
      %v6463 = vunpack.c.l.b16 %v6261
      %v6464 = vunpack.c.h.b16 %v6261
      %v6465 = vunpack.c.l.b16 %v6262
      %v6466 = vunpack.c.l.b16 %v6263
      %v6467 = vunpack.c.h.b16 %v6263
      %v6468 = vunpack.c.l.b16 %v6264
      %v6469 = vunpack.c.l.b16 %v6265
      %v6470 = vunpack.c.h.b16 %v6265
      %v6471 = vunpack.c.l.b16 %v6266
      %v6472 = vunpack.c.l.b16 %v6267
      %v6473 = vunpack.c.h.b16 %v6267
      %v6474 = vunpack.c.l.b16 %v6268
      %v6475 = vunpack.c.l.b16 %v6269
      %v6476 = vunpack.c.h.b16 %v6269
      %v6477 = vunpack.c.l.b16 %v6270
      %v6478 = vunpack.c.l.b16 %v6271
      %v6479 = vunpack.c.h.b16 %v6271
      %v6480 = vunpack.c.l.b16 %v6272
      %v6481 = vunpack.c.l.b16 %v6273
      %v6482 = vunpack.c.h.b16 %v6273
      %v6483 = vunpack.c.l.b16 %v6274
      %v6484 = vunpack.c.l.b16 %v6275
      %v6485 = vunpack.c.h.b16 %v6275
      %v6486 = vunpack.c.l.b16 %v6276
      %v6487 = vunpack.c.l.b16 %v6277
      %v6488 = vunpack.c.h.b16 %v6277
      %v6489 = vunpack.c.l.b16 %v6278
      %v6490 = vunpack.c.l.b16 %v6279
      %v6491 = vunpack.c.h.b16 %v6279
      %v6492 = vunpack.c.l.b16 %v6280
      %v6493 = vunpack.c.l.b16 %v6281
      %v6494 = vunpack.c.h.b16 %v6281
      %v6495 = vunpack.c.l.b16 %v6282
      %v6496 = vunpack.c.l.b16 %v6283
      %v6497 = vunpack.c.h.b16 %v6283
      %v6498 = vunpack.c.l.b16 %v6284
      %v6499 = vunpack.c.l.b16 %v6285
      %v6500 = vunpack.c.h.b16 %v6285
      %v6501 = vunpack.c.l.b16 %v6286
      %v6502 = vunpack.c.l.b16 %v6287
      %v6503 = vunpack.c.h.b16 %v6287
      %v6504 = vunpack.c.l.b16 %v6288
      %v6505 = vunpack.c.l.b16 %v6289
      %v6506 = vunpack.c.h.b16 %v6289
      %v6507 = vunpack.c.l.b16 %v6290
      %v6508 = vunpack.c.l.b16 %v6291
      %v6509 = vunpack.c.h.b16 %v6291
      %v6510 = vunpack.c.l.b16 %v6292
      %v6511 = vunpack.c.l.b16 %v6293
      %v6512 = vunpack.c.h.b16 %v6293
      %v6513 = vunpack.c.l.b16 %v6294
      %v6514 = vunpack.c.l.b16 %v6295
      %v6515 = vunpack.c.h.b16 %v6295
      %v6516 = vunpack.c.l.b16 %v6296
      %v6517 = vunpack.c.l.b16 %v6297
      %v6518 = vunpack.c.h.b16 %v6297
      %v6519 = vunpack.c.l.b16 %v6298
      %v6520 = vunpack.c.l.b16 %v6299
      %v6521 = vunpack.c.h.b16 %v6299
      %v6522 = vunpack.c.l.b16 %v6300
      %v6523 = vunpack.c.l.b16 %v6301
      %v6524 = vunpack.c.h.b16 %v6301
      %v6525 = vunpack.c.l.b16 %v6302
      %v6526 = vunpack.c.l.b16 %v6303
      %v6527 = vunpack.c.h.b16 %v6303
      %v6528 = vunpack.c.l.b16 %v6304
      %v6529 = vunpack.c.l.b16 %v6305
      %v6530 = vunpack.c.h.b16 %v6305
      %v6531 = vunpack.c.l.b16 %v6306
      %v6532 = vunpack.c.l.b16 %v6307
      %v6533 = vunpack.c.h.b16 %v6307
      %v6534 = vunpack.c.l.b16 %v6308
      %v6535 = vunpack.c.l.b16 %v6309
      %v6536 = vunpack.c.h.b16 %v6309
      %v6537 = vunpack.c.l.b16 %v6310
      %v6538 = vunpack.c.l.b16 %v6311
      %v6539 = vunpack.c.h.b16 %v6311
      %v6540 = vunpack.c.l.b16 %v6312
      %v6541 = vunpack.c.l.b16 %v6313
      %v6542 = vunpack.c.h.b16 %v6313
      %v6543 = vunpack.c.l.b16 %v6314
      %v6544 = vunpack.c.l.b16 %v6315
      %v6545 = vunpack.c.h.b16 %v6315
      %v6546 = vunpack.c.l.b16 %v6316
      %v6547 = vunpack.c.l.b16 %v6317
      %v6548 = vunpack.c.h.b16 %v6317
      %v6549 = vunpack.c.l.b16 %v6318
      %v6550 = vunpack.c.l.b16 %v6319
      %v6551 = vunpack.c.h.b16 %v6319
      %v6552 = vunpack.c.l.b16 %v6320
      %v6553 = vunpack.c.l.b16 %v6321
      %v6554 = vunpack.c.h.b16 %v6321
      %v6555 = vunpack.c.l.b16 %v6322
      %v6556 = vunpack.c.l.b16 %v6323
      %v6557 = vunpack.c.h.b16 %v6323
      %v6558 = vunpack.c.l.b16 %v6324
      %v6559 = vunpack.c.l.b16 %v6325
      %v6560 = vunpack.c.h.b16 %v6325
      %v6561 = vunpack.c.l.b16 %v6326
      %v6562 = vunpack.c.l.b16 %v6327
      %v6563 = vunpack.c.h.b16 %v6327
      %v6564 = vunpack.c.l.b16 %v6328
      %v6565 = vunpack.c.l.b16 %v6329
      %v6566 = vunpack.c.h.b16 %v6329
      %v6567 = vunpack.c.l.b16 %v6330
      %v6568 = vunpack.c.l.b16 %v6331
      %v6569 = vunpack.c.h.b16 %v6331
      %v6570 = vunpack.c.l.b16 %v6332
      %v6571 = vunpack.c.l.b16 %v6333
      %v6572 = vunpack.c.h.b16 %v6333
      %v6573 = vunpack.c.l.b16 %v6334
      %v6574 = vunpack.c.l.b16 %v6335
      %v6575 = vunpack.c.h.b16 %v6335
      %v6576 = vunpack.c.l.b16 %v6336
      %v6577 = vunpack.c.l.b16 %v6337
      %v6578 = vunpack.c.h.b16 %v6337
      %v6579 = vunpack.c.l.b16 %v6338
      %v6580 = vunpack.c.l.b16 %v6339
      %v6581 = vunpack.c.h.b16 %v6339
      %v6582 = vunpack.c.l.b16 %v6340
      %v6583 = vunpack.c.l.b16 %v6341
      %v6584 = vunpack.c.h.b16 %v6341
      %v6585 = vunpack.c.l.b16 %v6342
      %v6586 = vunpack.c.l.b16 %v6343
      %v6587 = vunpack.c.h.b16 %v6343
      %v6588 = vunpack.c.l.b16 %v6344
      %v6589 = vunpack.c.l.b16 %v6345
      %v6590 = vunpack.c.h.b16 %v6345
      %v6591 = vunpack.c.l.b16 %v6346
      %v6592 = vunpack.c.l.b16 %v6347
      %v6593 = vunpack.c.h.b16 %v6347
      %v6594 = vunpack.c.l.b16 %v6348
      %v6595 = vunpack.c.l.b16 %v6349
      %v6596 = vunpack.c.h.b16 %v6349
      %v6597 = vunpack.c.l.b16 %v6350
      %v6598 = vunpack.c.l.b16 %v6351
      %v6599 = vunpack.c.h.b16 %v6351
      %v6600 = vunpack.c.l.b16 %v6352
      %v6601 = vunpack.c.l.b16 %v6353
      %v6602 = vunpack.c.h.b16 %v6353
      %v6603 = vunpack.c.l.b16 %v6354
      %v6604 = vpack.c.b16 %v6463, %v6460
      %v6605 = vpack.c.b16 %v6464, %v6461
      %v6606 = vpack.c.b16 %v6465, %v6462
      %v6607 = vpack.c.b16 %v6469, %v6466
      %v6608 = vpack.c.b16 %v6470, %v6467
      %v6609 = vpack.c.b16 %v6471, %v6468
      %v6610 = vpack.c.b16 %v6475, %v6472
      %v6611 = vpack.c.b16 %v6476, %v6473
      %v6612 = vpack.c.b16 %v6477, %v6474
      %v6613 = vpack.c.b16 %v6481, %v6478
      %v6614 = vpack.c.b16 %v6482, %v6479
      %v6615 = vpack.c.b16 %v6483, %v6480
      %v6616 = vpack.c.b16 %v6487, %v6484
      %v6617 = vpack.c.b16 %v6488, %v6485
      %v6618 = vpack.c.b16 %v6489, %v6486
      %v6619 = vpack.c.b16 %v6493, %v6490
      %v6620 = vpack.c.b16 %v6494, %v6491
      %v6621 = vpack.c.b16 %v6495, %v6492
      %v6622 = vpack.c.b16 %v6499, %v6496
      %v6623 = vpack.c.b16 %v6500, %v6497
      %v6624 = vpack.c.b16 %v6501, %v6498
      %v6625 = vpack.c.b16 %v6505, %v6502
      %v6626 = vpack.c.b16 %v6506, %v6503
      %v6627 = vpack.c.b16 %v6507, %v6504
      %v6628 = vpack.c.b16 %v6511, %v6508
      %v6629 = vpack.c.b16 %v6512, %v6509
      %v6630 = vpack.c.b16 %v6513, %v6510
      %v6631 = vpack.c.b16 %v6517, %v6514
      %v6632 = vpack.c.b16 %v6518, %v6515
      %v6633 = vpack.c.b16 %v6519, %v6516
      %v6634 = vpack.c.b16 %v6523, %v6520
      %v6635 = vpack.c.b16 %v6524, %v6521
      %v6636 = vpack.c.b16 %v6525, %v6522
      %v6637 = vpack.c.b16 %v6529, %v6526
      %v6638 = vpack.c.b16 %v6530, %v6527
      %v6639 = vpack.c.b16 %v6531, %v6528
      %v6640 = vpack.c.b16 %v6535, %v6532
      %v6641 = vpack.c.b16 %v6536, %v6533
      %v6642 = vpack.c.b16 %v6537, %v6534
      %v6643 = vpack.c.b16 %v6541, %v6538
      %v6644 = vpack.c.b16 %v6542, %v6539
      %v6645 = vpack.c.b16 %v6543, %v6540
      %v6646 = vpack.c.b16 %v6547, %v6544
      %v6647 = vpack.c.b16 %v6548, %v6545
      %v6648 = vpack.c.b16 %v6549, %v6546
      %v6649 = vpack.c.b16 %v6553, %v6550
      %v6650 = vpack.c.b16 %v6554, %v6551
      %v6651 = vpack.c.b16 %v6555, %v6552
      %v6652 = vpack.c.b16 %v6559, %v6556
      %v6653 = vpack.c.b16 %v6560, %v6557
      %v6654 = vpack.c.b16 %v6561, %v6558
      %v6655 = vpack.c.b16 %v6565, %v6562
      %v6656 = vpack.c.b16 %v6566, %v6563
      %v6657 = vpack.c.b16 %v6567, %v6564
      %v6658 = vpack.c.b16 %v6571, %v6568
      %v6659 = vpack.c.b16 %v6572, %v6569
      %v6660 = vpack.c.b16 %v6573, %v6570
      %v6661 = vpack.c.b16 %v6577, %v6574
      %v6662 = vpack.c.b16 %v6578, %v6575
      %v6663 = vpack.c.b16 %v6579, %v6576
      %v6664 = vpack.c.b16 %v6583, %v6580
      %v6665 = vpack.c.b16 %v6584, %v6581
      %v6666 = vpack.c.b16 %v6585, %v6582
      %v6667 = vpack.c.b16 %v6589, %v6586
      %v6668 = vpack.c.b16 %v6590, %v6587
      %v6669 = vpack.c.b16 %v6591, %v6588
      %v6670 = vpack.c.b16 %v6595, %v6592
      %v6671 = vpack.c.b16 %v6596, %v6593
      %v6672 = vpack.c.b16 %v6597, %v6594
      %v6673 = vpack.c.b16 %v6601, %v6598
      %v6674 = vpack.c.b16 %v6602, %v6599
      %v6675 = vpack.c.b16 %v6603, %v6600
      %6748 = vmatprep.subr.bf16.mxu0 %v6605
      %6749 = vmatpush1.bf16.msra.mxu0 %v6604
      %6750 = vmatprep.subr.bf16.mxu0 %v6608
      %6751 = vmatpush1.bf16.msra.mxu0 %v6607
      %6752 = vmatprep.subr.bf16.mxu0 %v6611
      %6753 = vmatpush1.bf16.msra.mxu0 %v6610
      %6754 = vmatprep.subr.bf16.mxu0 %v6614
      %6755 = vmatpush1.bf16.msra.mxu0 %v6613
      %6756 = vmatprep.subr.bf16.mxu0 %v6617
      %6757 = vmatpush1.bf16.msra.mxu0 %v6616
      %6758 = vmatprep.subr.bf16.mxu0 %v6620
      %6759 = vmatpush1.bf16.msra.mxu0 %v6619
      %6760 = vmatprep.subr.bf16.mxu0 %v6623
      %6761 = vmatpush1.bf16.msra.mxu0 %v6622
      %6762 = vmatprep.subr.bf16.mxu0 %v6626
      %6763 = vmatpush1.bf16.msra.mxu0 %v6625
      %6764 = vmatprep.subr.bf16.mxu0 %v6629
      %6765 = vmatpush1.bf16.msra.mxu0 %v6628
      %6766 = vmatprep.subr.bf16.mxu0 %v6632
      %6767 = vmatpush1.bf16.msra.mxu0 %v6631
      %6768 = vmatprep.subr.bf16.mxu0 %v6635
      %6769 = vmatpush1.bf16.msra.mxu0 %v6634
      %6770 = vmatprep.subr.bf16.mxu0 %v6638
      %6771 = vmatpush1.bf16.msra.mxu0 %v6637
      %6772 = vmatprep.subr.bf16.mxu0 %v6641
      %6773 = vmatpush1.bf16.msra.mxu0 %v6640
      %6774 = vmatprep.subr.bf16.mxu0 %v6644
      %6775 = vmatpush1.bf16.msra.mxu0 %v6643
      %6776 = vmatprep.subr.bf16.mxu0 %v6647
      %6777 = vmatpush1.bf16.msra.mxu0 %v6646
      %6778 = vmatprep.subr.bf16.mxu0 %v6650
      %6779 = vmatpush1.bf16.msra.mxu0 %v6649
      %6780 = vmatprep.mubr.bf16.mxu0 %v658
      %6781 = vmatmul.mubr.bf16.gmra.mrb[0].mxu0 %v657
      %v6782 = vpop.f32.mrb[0].mxu0
      %v6783 = vadd.f32 0.0, %v6782
      %v6784 = vpop.f32.mrb[0].mxu0
      %v6785 = vadd.f32 0.0, %v6784
      %v6786 = vpop.f32.mrb[0].mxu0
      %v6787 = vadd.f32 0.0, %v6786
      %v6788 = vpop.f32.mrb[0].mxu0
      %v6789 = vadd.f32 0.0, %v6788
      %6790 = vmatprep.mubr.bf16.mxu0 %v661
      %6791 = vmatmul.mubr.bf16.gmra.mrb[0].mxu0 %v660
      %v6792 = vpop.f32.mrb[0].mxu0
      %v6793 = vadd.f32 0.0, %v6792
      %v6794 = vpop.f32.mrb[0].mxu0
      %v6795 = vadd.f32 0.0, %v6794
      %v6796 = vpop.f32.mrb[0].mxu0
      %v6797 = vadd.f32 0.0, %v6796
      %v6798 = vpop.f32.mrb[0].mxu0
      %v6799 = vadd.f32 0.0, %v6798
      %6800 = vmatprep.mubr.bf16.mxu0 %v664
      %6801 = vmatmul.mubr.bf16.gmra.mrb[0].mxu0 %v663
      %v6802 = vpop.f32.mrb[0].mxu0
      %v6803 = vadd.f32 0.0, %v6802
      %v6804 = vpop.f32.mrb[0].mxu0
      %v6805 = vadd.f32 0.0, %v6804
      %v6806 = vpop.f32.mrb[0].mxu0
      %v6807 = vadd.f32 0.0, %v6806
      %v6808 = vpop.f32.mrb[0].mxu0
      %v6809 = vadd.f32 0.0, %v6808
      %6810 = vmatprep.mubr.bf16.mxu0 %v6359
      %6811 = vmatmul.mubr.bf16.gmra.mrb[0].mxu0 %v6358
      %v6812 = vpop.f32.mrb[0].mxu0
      %v6813 = vadd.f32 0.0, %v6812
      %v6814 = vpop.f32.mrb[0].mxu0
      %v6815 = vadd.f32 0.0, %v6814
      %v6816 = vpop.f32.mrb[0].mxu0
      %v6817 = vadd.f32 0.0, %v6816
      %v6818 = vpop.f32.mrb[0].mxu0
      %v6819 = vadd.f32 0.0, %v6818
      %6820 = vdwg.mxu0
      %6821 = vmatprep.subr.bf16.mxu0 %v6653
      %6822 = vmatpush1.bf16.msra.mxu0 %v6652
      %6823 = vmatprep.subr.bf16.mxu0 %v6656
      %6824 = vmatpush1.bf16.msra.mxu0 %v6655
      %6825 = vmatprep.subr.bf16.mxu0 %v6659
      %6826 = vmatpush1.bf16.msra.mxu0 %v6658
      %6827 = vmatprep.subr.bf16.mxu0 %v6662
      %6828 = vmatpush1.bf16.msra.mxu0 %v6661
      %6829 = vmatprep.subr.bf16.mxu0 %v6665
      %6830 = vmatpush1.bf16.msra.mxu0 %v6664
      %6831 = vmatprep.subr.bf16.mxu0 %v6668
      %6832 = vmatpush1.bf16.msra.mxu0 %v6667
      %6833 = vmatprep.subr.bf16.mxu0 %v6671
      %6834 = vmatpush1.bf16.msra.mxu0 %v6670
      %6835 = vmatprep.subr.bf16.mxu0 %v6674
      %6836 = vmatpush1.bf16.msra.mxu0 %v6673
      %6837 = vmatprep.subr.bf16.mxu0 0
      %6838 = vmatpush1.bf16.msra.mxu0 0
      %6839 = vmatprep.subr.bf16.mxu0 0
      %6840 = vmatpush1.bf16.msra.mxu0 0
      %6841 = vmatprep.subr.bf16.mxu0 0
      %6842 = vmatpush1.bf16.msra.mxu0 0
      %6843 = vmatprep.subr.bf16.mxu0 0
      %6844 = vmatpush1.bf16.msra.mxu0 0
      %6845 = vmatprep.subr.bf16.mxu0 0
      %6846 = vmatpush1.bf16.msra.mxu0 0
      %6847 = vmatprep.subr.bf16.mxu0 0
      %6848 = vmatpush1.bf16.msra.mxu0 0
      %6849 = vmatprep.subr.bf16.mxu0 0
      %6850 = vmatpush1.bf16.msra.mxu0 0
      %6851 = vmatprep.subr.bf16.mxu0 0
      %6852 = vmatpush1.bf16.msra.mxu0 0
      %6853 = vmatprep.mubr.bf16.mxu0 0
      %6854 = vmatmul.mubr.bf16.gmra.mrb[0].mxu0 %v659
      %v6855 = vpop.f32.mrb[0].mxu0
      %v6856 = vadd.f32 %v6783, %v6855
      %v6857 = vpop.f32.mrb[0].mxu0
      %v6858 = vadd.f32 %v6785, %v6857
      %v6859 = vpop.f32.mrb[0].mxu0
      %v6860 = vadd.f32 %v6787, %v6859
      %v6861 = vpop.f32.mrb[0].mxu0
      %v6862 = vadd.f32 %v6789, %v6861
      %6863 = vmatprep.mubr.bf16.mxu0 0
      %6864 = vmatmul.mubr.bf16.gmra.mrb[0].mxu0 %v662
      %v6865 = vpop.f32.mrb[0].mxu0
      %v6866 = vadd.f32 %v6793, %v6865
      %v6867 = vpop.f32.mrb[0].mxu0
      %v6868 = vadd.f32 %v6795, %v6867
      %v6869 = vpop.f32.mrb[0].mxu0
      %v6870 = vadd.f32 %v6797, %v6869
      %v6871 = vpop.f32.mrb[0].mxu0
      %v6872 = vadd.f32 %v6799, %v6871
      %6873 = vmatprep.mubr.bf16.mxu0 0
      %6874 = vmatmul.mubr.bf16.gmra.mrb[0].mxu0 %v665
      %v6875 = vpop.f32.mrb[0].mxu0
      %v6876 = vadd.f32 %v6803, %v6875
      %v6877 = vpop.f32.mrb[0].mxu0
      %v6878 = vadd.f32 %v6805, %v6877
      %v6879 = vpop.f32.mrb[0].mxu0
      %v6880 = vadd.f32 %v6807, %v6879
      %v6881 = vpop.f32.mrb[0].mxu0
      %v6882 = vadd.f32 %v6809, %v6881
      %6883 = vmatprep.mubr.bf16.mxu0 0
      %6884 = vmatmul.mubr.bf16.gmra.mrb[0].mxu0 %v6360
      %v6885 = vpop.f32.mrb[0].mxu0
      %v6886 = vadd.f32 %v6813, %v6885
      %v6887 = vpop.f32.mrb[0].mxu0
      %v6888 = vadd.f32 %v6815, %v6887
      %v6889 = vpop.f32.mrb[0].mxu0
      %v6890 = vadd.f32 %v6817, %v6889
      %v6891 = vpop.f32.mrb[0].mxu0
      %v6892 = vadd.f32 %v6819, %v6891
      %6893 = vdwg.mxu0
      %6894 = vmatprep.subr.bf16.mxu0 0
      %6895 = vmatpush1.bf16.msra.mxu0 %v6606
      %6896 = vmatprep.subr.bf16.mxu0 0
      %6897 = vmatpush1.bf16.msra.mxu0 %v6609
      %6898 = vmatprep.subr.bf16.mxu0 0
      %6899 = vmatpush1.bf16.msra.mxu0 %v6612
      %6900 = vmatprep.subr.bf16.mxu0 0
      %6901 = vmatpush1.bf16.msra.mxu0 %v6615
      %6902 = vmatprep.subr.bf16.mxu0 0
      %6903 = vmatpush1.bf16.msra.mxu0 %v6618
      %6904 = vmatprep.subr.bf16.mxu0 0
      %6905 = vmatpush1.bf16.msra.mxu0 %v6621
      %6906 = vmatprep.subr.bf16.mxu0 0
      %6907 = vmatpush1.bf16.msra.mxu0 %v6624
      %6908 = vmatprep.subr.bf16.mxu0 0
      %6909 = vmatpush1.bf16.msra.mxu0 %v6627
      %6910 = vmatprep.subr.bf16.mxu0 0
      %6911 = vmatpush1.bf16.msra.mxu0 %v6630
      %6912 = vmatprep.subr.bf16.mxu0 0
      %6913 = vmatpush1.bf16.msra.mxu0 %v6633
      %6914 = vmatprep.subr.bf16.mxu0 0
      %6915 = vmatpush1.bf16.msra.mxu0 %v6636
      %6916 = vmatprep.subr.bf16.mxu0 0
      %6917 = vmatpush1.bf16.msra.mxu0 %v6639
      %6918 = vmatprep.subr.bf16.mxu0 0
      %6919 = vmatpush1.bf16.msra.mxu0 %v6642
      %6920 = vmatprep.subr.bf16.mxu0 0
      %6921 = vmatpush1.bf16.msra.mxu0 %v6645
      %6922 = vmatprep.subr.bf16.mxu0 0
      %6923 = vmatpush1.bf16.msra.mxu0 %v6648
      %6924 = vmatprep.subr.bf16.mxu0 0
      %6925 = vmatpush1.bf16.msra.mxu0 %v6651
      %6926 = vmatprep.mubr.bf16.mxu0 %v658
      %6927 = vmatmul.mubr.bf16.gmra.mrb[0].mxu0 %v657
      %v6928 = vpop.f32.mrb[0].mxu0
      %v6929 = vadd.f32 0.0, %v6928
      %v6930 = vpop.f32.mrb[0].mxu0
      %v6931 = vpop.f32.mrb[0].mxu0
      %v6932 = vadd.f32 0.0, %v6931
      %v6933 = vpop.f32.mrb[0].mxu0
      %6934 = vmatprep.mubr.bf16.mxu0 %v661
      %6935 = vmatmul.mubr.bf16.gmra.mrb[0].mxu0 %v660
      %v6936 = vpop.f32.mrb[0].mxu0
      %v6937 = vadd.f32 0.0, %v6936
      %v6938 = vpop.f32.mrb[0].mxu0
      %v6939 = vpop.f32.mrb[0].mxu0
      %v6940 = vadd.f32 0.0, %v6939
      %v6941 = vpop.f32.mrb[0].mxu0
      %6942 = vmatprep.mubr.bf16.mxu0 %v664
      %6943 = vmatmul.mubr.bf16.gmra.mrb[0].mxu0 %v663
      %v6944 = vpop.f32.mrb[0].mxu0
      %v6945 = vadd.f32 0.0, %v6944
      %v6946 = vpop.f32.mrb[0].mxu0
      %v6947 = vpop.f32.mrb[0].mxu0
      %v6948 = vadd.f32 0.0, %v6947
      %v6949 = vpop.f32.mrb[0].mxu0
      %6950 = vmatprep.mubr.bf16.mxu0 %v6359
      %6951 = vmatmul.mubr.bf16.gmra.mrb[0].mxu0 %v6358
      %v6952 = vpop.f32.mrb[0].mxu0
      %v6953 = vadd.f32 0.0, %v6952
      %v6954 = vpop.f32.mrb[0].mxu0
      %v6955 = vpop.f32.mrb[0].mxu0
      %v6956 = vadd.f32 0.0, %v6955
      %v6957 = vpop.f32.mrb[0].mxu0
      %6958 = vdwg.mxu0
      %6959 = vmatprep.subr.bf16.mxu0 0
      %6960 = vmatpush1.bf16.msra.mxu0 %v6654
      %6961 = vmatprep.subr.bf16.mxu0 0
      %6962 = vmatpush1.bf16.msra.mxu0 %v6657
      %6963 = vmatprep.subr.bf16.mxu0 0
      %6964 = vmatpush1.bf16.msra.mxu0 %v6660
      %6965 = vmatprep.subr.bf16.mxu0 0
      %6966 = vmatpush1.bf16.msra.mxu0 %v6663
      %6967 = vmatprep.subr.bf16.mxu0 0
      %6968 = vmatpush1.bf16.msra.mxu0 %v6666
      %6969 = vmatprep.subr.bf16.mxu0 0
      %6970 = vmatpush1.bf16.msra.mxu0 %v6669
      %6971 = vmatprep.subr.bf16.mxu0 0
      %6972 = vmatpush1.bf16.msra.mxu0 %v6672
      %6973 = vmatprep.subr.bf16.mxu0 0
      %6974 = vmatpush1.bf16.msra.mxu0 %v6675
      %6975 = vmatprep.subr.bf16.mxu0 0
      %6976 = vmatpush1.bf16.msra.mxu0 0
      %6977 = vmatprep.subr.bf16.mxu0 0
      %6978 = vmatpush1.bf16.msra.mxu0 0
      %6979 = vmatprep.subr.bf16.mxu0 0
      %6980 = vmatpush1.bf16.msra.mxu0 0
      %6981 = vmatprep.subr.bf16.mxu0 0
      %6982 = vmatpush1.bf16.msra.mxu0 0
      %6983 = vmatprep.subr.bf16.mxu0 0
      %6984 = vmatpush1.bf16.msra.mxu0 0
      %6985 = vmatprep.subr.bf16.mxu0 0
      %6986 = vmatpush1.bf16.msra.mxu0 0
      %6987 = vmatprep.subr.bf16.mxu0 0
      %6988 = vmatpush1.bf16.msra.mxu0 0
      %6989 = vmatprep.subr.bf16.mxu0 0
      %6990 = vmatpush1.bf16.msra.mxu0 0
      %6991 = vmatprep.mubr.bf16.mxu0 0
      %6992 = vmatmul.mubr.bf16.gmra.mrb[0].mxu0 %v659
      %v6993 = vpop.f32.mrb[0].mxu0
      %v6994 = vadd.f32 %v6929, %v6993
      %v6995 = vpop.f32.mrb[0].mxu0
      %v6996 = vpop.f32.mrb[0].mxu0
      %v6997 = vadd.f32 %v6932, %v6996
      %v6998 = vpop.f32.mrb[0].mxu0
      %6999 = vmatprep.mubr.bf16.mxu0 0
      %7000 = vmatmul.mubr.bf16.gmra.mrb[0].mxu0 %v662
      %v7001 = vpop.f32.mrb[0].mxu0
      %v7002 = vadd.f32 %v6937, %v7001
      %v7003 = vpop.f32.mrb[0].mxu0
      %v7004 = vpop.f32.mrb[0].mxu0
      %v7005 = vadd.f32 %v6940, %v7004
      %v7006 = vpop.f32.mrb[0].mxu0
      %7007 = vmatprep.mubr.bf16.mxu0 0
      %7008 = vmatmul.mubr.bf16.gmra.mrb[0].mxu0 %v665
      %v7009 = vpop.f32.mrb[0].mxu0
      %v7010 = vadd.f32 %v6945, %v7009
      %v7011 = vpop.f32.mrb[0].mxu0
      %v7012 = vpop.f32.mrb[0].mxu0
      %v7013 = vadd.f32 %v6948, %v7012
      %v7014 = vpop.f32.mrb[0].mxu0
      %7015 = vmatprep.mubr.bf16.mxu0 0
      %7016 = vmatmul.mubr.bf16.gmra.mrb[0].mxu0 %v6360
      %v7017 = vpop.f32.mrb[0].mxu0
      %v7018 = vadd.f32 %v6953, %v7017
      %v7019 = vpop.f32.mrb[0].mxu0
      %v7020 = vpop.f32.mrb[0].mxu0
      %v7021 = vadd.f32 %v6956, %v7020
      %v7022 = vpop.f32.mrb[0].mxu0
      %7023 = vdwg.mxu0
      %v7024 = vadd.f32 %v6206, %v6856
      %v7025 = vadd.f32 %v6207, %v6858
      %v7026 = vadd.f32 %v6208, %v6994
      %v7027 = vadd.f32 %v6209, %v6860
      %v7028 = vadd.f32 %v6210, %v6862
      %v7029 = vadd.f32 %v6211, %v6997
      %v7030 = vadd.f32 %v6212, %v6866
      %v7031 = vadd.f32 %v6213, %v6868
      %v7032 = vadd.f32 %v6214, %v7002
      %v7033 = vadd.f32 %v6215, %v6870
      %v7034 = vadd.f32 %v6216, %v6872
      %v7035 = vadd.f32 %v6217, %v7005
      %v7036 = vadd.f32 %v6218, %v6876
      %v7037 = vadd.f32 %v6219, %v6878
      %v7038 = vadd.f32 %v6220, %v7010
      %v7039 = vadd.f32 %v6221, %v6880
      %v7040 = vadd.f32 %v6222, %v6882
      %v7041 = vadd.f32 %v6223, %v7013
      %v7042 = vadd.f32 %v6224, %v6886
      %v7043 = vadd.f32 %v6225, %v6888
      %v7044 = vadd.f32 %v6226, %v7018
      %v7045 = vadd.f32 %v6227, %v6890
      %v7046 = vadd.f32 %v6228, %v6892
      %v7047 = vadd.f32 %v6229, %v7021
      %v7050 = vrot.slane %v206, 5
      %v7051 = vrot.slane %v7050, 4
      %v7052 = vrot.slane %v208, 5
      %v7053 = vsel %vm2080, %v7051, %v7052
      %v7054 = vrot.slane %v207, 5
      %v7055 = vrot.slane %v7054, 4
      %v7056 = vrot.slane %v209, 5
      %v7057 = vsel %vm2080, %v7055, %v7056
      %s7058 = scalar_lea.vmem %s1, 4608
      %v7059 = vld [vmem:[%s7058] sm:$0xff]
      %v7060 = vld [vmem:[%s7058 + $0x8] sm:$0xf]
      %v7061 = vld [vmem:[%s7058 + $0xc] sm:$0xff]
      %v7062 = vld [vmem:[%s7058 + $0x14] sm:$0xf]
      %v7063 = vld [vmem:[%s7058 + $0x18] sm:$0xff]
      %v7064 = vld [vmem:[%s7058 + $0x20] sm:$0xf]
      %v7065 = vld [vmem:[%s7058 + $0x24] sm:$0xff]
      %v7066 = vld [vmem:[%s7058 + $0x2c] sm:$0xf]
      %v7067 = vld [vmem:[%s7058 + $0x30] sm:$0xff]
      %v7068 = vld [vmem:[%s7058 + $0x38] sm:$0xf]
      %v7069 = vld [vmem:[%s7058 + $0x3c] sm:$0xff]
      %v7070 = vld [vmem:[%s7058 + $0x44] sm:$0xf]
      %v7071 = vld [vmem:[%s7058 + $0x48] sm:$0xff]
      %v7072 = vld [vmem:[%s7058 + $0x50] sm:$0xf]
      %v7073 = vld [vmem:[%s7058 + $0x54] sm:$0xff]
      %v7074 = vld [vmem:[%s7058 + $0x5c] sm:$0xf]
      %v7075 = vld [vmem:[%s7058 + $0x60] sm:$0xff]
      %v7076 = vld [vmem:[%s7058 + $0x68] sm:$0xf]
      %v7077 = vld [vmem:[%s7058 + $0x6c] sm:$0xff]
      %v7078 = vld [vmem:[%s7058 + $0x74] sm:$0xf]
      %v7079 = vld [vmem:[%s7058 + $0x78] sm:$0xff]
      %v7080 = vld [vmem:[%s7058 + $0x80] sm:$0xf]
      %v7081 = vld [vmem:[%s7058 + $0x84] sm:$0xff]
      %v7082 = vld [vmem:[%s7058 + $0x8c] sm:$0xf]
      %v7083 = vld [vmem:[%s7058 + $0x90] sm:$0xff]
      %v7084 = vld [vmem:[%s7058 + $0x98] sm:$0xf]
      %v7085 = vld [vmem:[%s7058 + $0x9c] sm:$0xff]
      %v7086 = vld [vmem:[%s7058 + $0xa4] sm:$0xf]
      %v7087 = vld [vmem:[%s7058 + $0xa8] sm:$0xff]
      %v7088 = vld [vmem:[%s7058 + $0xb0] sm:$0xf]
      %v7089 = vld [vmem:[%s7058 + $0xb4] sm:$0xff]
      %v7090 = vld [vmem:[%s7058 + $0xbc] sm:$0xf]
      %v7091 = vld [vmem:[%s7058 + $0xc0] sm:$0xff]
      %v7092 = vld [vmem:[%s7058 + $0xc8] sm:$0xf]
      %v7093 = vld [vmem:[%s7058 + $0xcc] sm:$0xff]
      %v7094 = vld [vmem:[%s7058 + $0xd4] sm:$0xf]
      %v7095 = vld [vmem:[%s7058 + $0xd8] sm:$0xff]
      %v7096 = vld [vmem:[%s7058 + $0xe0] sm:$0xf]
      %v7097 = vld [vmem:[%s7058 + $0xe4] sm:$0xff]
      %v7098 = vld [vmem:[%s7058 + $0xec] sm:$0xf]
      %v7099 = vld [vmem:[%s7058 + $0xf0] sm:$0xff]
      %v7100 = vld [vmem:[%s7058 + $0xf8] sm:$0xf]
      %v7101 = vld [vmem:[%s7058 + $0xfc] sm:$0xff]
      %v7102 = vld [vmem:[%s7058 + $0x104] sm:$0xf]
      %v7103 = vld [vmem:[%s7058 + $0x108] sm:$0xff]
      %v7104 = vld [vmem:[%s7058 + $0x110] sm:$0xf]
      %v7105 = vld [vmem:[%s7058 + $0x114] sm:$0xff]
      %v7106 = vld [vmem:[%s7058 + $0x11c] sm:$0xf]
      %v7107 = vld [vmem:[%s7058 + $0x120] sm:$0xff]
      %v7108 = vld [vmem:[%s7058 + $0x128] sm:$0xf]
      %v7109 = vld [vmem:[%s7058 + $0x12c] sm:$0xff]
      %v7110 = vld [vmem:[%s7058 + $0x134] sm:$0xf]
      %v7111 = vld [vmem:[%s7058 + $0x138] sm:$0xff]
      %v7112 = vld [vmem:[%s7058 + $0x140] sm:$0xf]
      %v7113 = vld [vmem:[%s7058 + $0x144] sm:$0xff]
      %v7114 = vld [vmem:[%s7058 + $0x14c] sm:$0xf]
      %v7115 = vld [vmem:[%s7058 + $0x150] sm:$0xff]
      %v7116 = vld [vmem:[%s7058 + $0x158] sm:$0xf]
      %v7117 = vld [vmem:[%s7058 + $0x15c] sm:$0xff]
      %v7118 = vld [vmem:[%s7058 + $0x164] sm:$0xf]
      %v7119 = vld [vmem:[%s7058 + $0x168] sm:$0xff]
      %v7120 = vld [vmem:[%s7058 + $0x170] sm:$0xf]
      %v7121 = vld [vmem:[%s7058 + $0x174] sm:$0xff]
      %v7122 = vld [vmem:[%s7058 + $0x17c] sm:$0xf]
      %v7123 = vld [vmem:[%s7058 + $0x180] sm:$0xff]
      %v7124 = vld [vmem:[%s7058 + $0x188] sm:$0xf]
      %v7125 = vld [vmem:[%s7058 + $0x18c] sm:$0xff]
      %v7126 = vld [vmem:[%s7058 + $0x194] sm:$0xf]
      %v7127 = vld [vmem:[%s7058 + $0x198] sm:$0xff]
      %v7128 = vld [vmem:[%s7058 + $0x1a0] sm:$0xf]
      %v7129 = vld [vmem:[%s7058 + $0x1a4] sm:$0xff]
      %v7130 = vld [vmem:[%s7058 + $0x1ac] sm:$0xf]
      %v7131 = vld [vmem:[%s7058 + $0x1b0] sm:$0xff]
      %v7132 = vld [vmem:[%s7058 + $0x1b8] sm:$0xf]
      %v7133 = vld [vmem:[%s7058 + $0x1bc] sm:$0xff]
      %v7134 = vld [vmem:[%s7058 + $0x1c4] sm:$0xf]
      %v7135 = vld [vmem:[%s7058 + $0x1c8] sm:$0xff]
      %v7136 = vld [vmem:[%s7058 + $0x1d0] sm:$0xf]
      %v7137 = vld [vmem:[%s7058 + $0x1d4] sm:$0xff]
      %v7138 = vld [vmem:[%s7058 + $0x1dc] sm:$0xf]
      %v7139 = vld [vmem:[%s7058 + $0x1e0] sm:$0xff]
      %v7140 = vld [vmem:[%s7058 + $0x1e8] sm:$0xf]
      %v7141 = vld [vmem:[%s7058 + $0x1ec] sm:$0xff]
      %v7142 = vld [vmem:[%s7058 + $0x1f4] sm:$0xf]
      %v7143 = vld [vmem:[%s7058 + $0x1f8] sm:$0xff]
      %v7144 = vld [vmem:[%s7058 + $0x200] sm:$0xf]
      %v7145 = vld [vmem:[%s7058 + $0x204] sm:$0xff]
      %v7146 = vld [vmem:[%s7058 + $0x20c] sm:$0xf]
      %v7147 = vld [vmem:[%s7058 + $0x210] sm:$0xff]
      %v7148 = vld [vmem:[%s7058 + $0x218] sm:$0xf]
      %v7149 = vld [vmem:[%s7058 + $0x21c] sm:$0xff]
      %v7150 = vld [vmem:[%s7058 + $0x224] sm:$0xf]
      %v7151 = vld [vmem:[%s7058 + $0x228] sm:$0xff]
      %v7152 = vld [vmem:[%s7058 + $0x230] sm:$0xf]
      %v7153 = vld [vmem:[%s7058 + $0x234] sm:$0xff]
      %v7154 = vld [vmem:[%s7058 + $0x23c] sm:$0xf]
      %v7155 = vunpack.c.l.b16 %v7053
      %v7156 = vunpack.c.h.b16 %v7053
      %v7157 = vunpack.c.l.b16 %v7057
      %v7158 = vpack.c.b16 %v7155, %v4727
      %v7159 = vpack.c.b16 %v7156, %v4728
      %v7160 = vpack.c.b16 %v7157, %v4729
      %v7260 = vunpack.c.l.b16 %v7059
      %v7261 = vunpack.c.h.b16 %v7059
      %v7262 = vunpack.c.l.b16 %v7060
      %v7263 = vunpack.c.l.b16 %v7061
      %v7264 = vunpack.c.h.b16 %v7061
      %v7265 = vunpack.c.l.b16 %v7062
      %v7266 = vunpack.c.l.b16 %v7063
      %v7267 = vunpack.c.h.b16 %v7063
      %v7268 = vunpack.c.l.b16 %v7064
      %v7269 = vunpack.c.l.b16 %v7065
      %v7270 = vunpack.c.h.b16 %v7065
      %v7271 = vunpack.c.l.b16 %v7066
      %v7272 = vunpack.c.l.b16 %v7067
      %v7273 = vunpack.c.h.b16 %v7067
      %v7274 = vunpack.c.l.b16 %v7068
      %v7275 = vunpack.c.l.b16 %v7069
      %v7276 = vunpack.c.h.b16 %v7069
      %v7277 = vunpack.c.l.b16 %v7070
      %v7278 = vunpack.c.l.b16 %v7071
      %v7279 = vunpack.c.h.b16 %v7071
      %v7280 = vunpack.c.l.b16 %v7072
      %v7281 = vunpack.c.l.b16 %v7073
      %v7282 = vunpack.c.h.b16 %v7073
      %v7283 = vunpack.c.l.b16 %v7074
      %v7284 = vunpack.c.l.b16 %v7075
      %v7285 = vunpack.c.h.b16 %v7075
      %v7286 = vunpack.c.l.b16 %v7076
      %v7287 = vunpack.c.l.b16 %v7077
      %v7288 = vunpack.c.h.b16 %v7077
      %v7289 = vunpack.c.l.b16 %v7078
      %v7290 = vunpack.c.l.b16 %v7079
      %v7291 = vunpack.c.h.b16 %v7079
      %v7292 = vunpack.c.l.b16 %v7080
      %v7293 = vunpack.c.l.b16 %v7081
      %v7294 = vunpack.c.h.b16 %v7081
      %v7295 = vunpack.c.l.b16 %v7082
      %v7296 = vunpack.c.l.b16 %v7083
      %v7297 = vunpack.c.h.b16 %v7083
      %v7298 = vunpack.c.l.b16 %v7084
      %v7299 = vunpack.c.l.b16 %v7085
      %v7300 = vunpack.c.h.b16 %v7085
      %v7301 = vunpack.c.l.b16 %v7086
      %v7302 = vunpack.c.l.b16 %v7087
      %v7303 = vunpack.c.h.b16 %v7087
      %v7304 = vunpack.c.l.b16 %v7088
      %v7305 = vunpack.c.l.b16 %v7089
      %v7306 = vunpack.c.h.b16 %v7089
      %v7307 = vunpack.c.l.b16 %v7090
      %v7308 = vunpack.c.l.b16 %v7091
      %v7309 = vunpack.c.h.b16 %v7091
      %v7310 = vunpack.c.l.b16 %v7092
      %v7311 = vunpack.c.l.b16 %v7093
      %v7312 = vunpack.c.h.b16 %v7093
      %v7313 = vunpack.c.l.b16 %v7094
      %v7314 = vunpack.c.l.b16 %v7095
      %v7315 = vunpack.c.h.b16 %v7095
      %v7316 = vunpack.c.l.b16 %v7096
      %v7317 = vunpack.c.l.b16 %v7097
      %v7318 = vunpack.c.h.b16 %v7097
      %v7319 = vunpack.c.l.b16 %v7098
      %v7320 = vunpack.c.l.b16 %v7099
      %v7321 = vunpack.c.h.b16 %v7099
      %v7322 = vunpack.c.l.b16 %v7100
      %v7323 = vunpack.c.l.b16 %v7101
      %v7324 = vunpack.c.h.b16 %v7101
      %v7325 = vunpack.c.l.b16 %v7102
      %v7326 = vunpack.c.l.b16 %v7103
      %v7327 = vunpack.c.h.b16 %v7103
      %v7328 = vunpack.c.l.b16 %v7104
      %v7329 = vunpack.c.l.b16 %v7105
      %v7330 = vunpack.c.h.b16 %v7105
      %v7331 = vunpack.c.l.b16 %v7106
      %v7332 = vunpack.c.l.b16 %v7107
      %v7333 = vunpack.c.h.b16 %v7107
      %v7334 = vunpack.c.l.b16 %v7108
      %v7335 = vunpack.c.l.b16 %v7109
      %v7336 = vunpack.c.h.b16 %v7109
      %v7337 = vunpack.c.l.b16 %v7110
      %v7338 = vunpack.c.l.b16 %v7111
      %v7339 = vunpack.c.h.b16 %v7111
      %v7340 = vunpack.c.l.b16 %v7112
      %v7341 = vunpack.c.l.b16 %v7113
      %v7342 = vunpack.c.h.b16 %v7113
      %v7343 = vunpack.c.l.b16 %v7114
      %v7344 = vunpack.c.l.b16 %v7115
      %v7345 = vunpack.c.h.b16 %v7115
      %v7346 = vunpack.c.l.b16 %v7116
      %v7347 = vunpack.c.l.b16 %v7117
      %v7348 = vunpack.c.h.b16 %v7117
      %v7349 = vunpack.c.l.b16 %v7118
      %v7350 = vunpack.c.l.b16 %v7119
      %v7351 = vunpack.c.h.b16 %v7119
      %v7352 = vunpack.c.l.b16 %v7120
      %v7353 = vunpack.c.l.b16 %v7121
      %v7354 = vunpack.c.h.b16 %v7121
      %v7355 = vunpack.c.l.b16 %v7122
      %v7356 = vunpack.c.l.b16 %v7123
      %v7357 = vunpack.c.h.b16 %v7123
      %v7358 = vunpack.c.l.b16 %v7124
      %v7359 = vunpack.c.l.b16 %v7125
      %v7360 = vunpack.c.h.b16 %v7125
      %v7361 = vunpack.c.l.b16 %v7126
      %v7362 = vunpack.c.l.b16 %v7127
      %v7363 = vunpack.c.h.b16 %v7127
      %v7364 = vunpack.c.l.b16 %v7128
      %v7365 = vunpack.c.l.b16 %v7129
      %v7366 = vunpack.c.h.b16 %v7129
      %v7367 = vunpack.c.l.b16 %v7130
      %v7368 = vunpack.c.l.b16 %v7131
      %v7369 = vunpack.c.h.b16 %v7131
      %v7370 = vunpack.c.l.b16 %v7132
      %v7371 = vunpack.c.l.b16 %v7133
      %v7372 = vunpack.c.h.b16 %v7133
      %v7373 = vunpack.c.l.b16 %v7134
      %v7374 = vunpack.c.l.b16 %v7135
      %v7375 = vunpack.c.h.b16 %v7135
      %v7376 = vunpack.c.l.b16 %v7136
      %v7377 = vunpack.c.l.b16 %v7137
      %v7378 = vunpack.c.h.b16 %v7137
      %v7379 = vunpack.c.l.b16 %v7138
      %v7380 = vunpack.c.l.b16 %v7139
      %v7381 = vunpack.c.h.b16 %v7139
      %v7382 = vunpack.c.l.b16 %v7140
      %v7383 = vunpack.c.l.b16 %v7141
      %v7384 = vunpack.c.h.b16 %v7141
      %v7385 = vunpack.c.l.b16 %v7142
      %v7386 = vunpack.c.l.b16 %v7143
      %v7387 = vunpack.c.h.b16 %v7143
      %v7388 = vunpack.c.l.b16 %v7144
      %v7389 = vunpack.c.l.b16 %v7145
      %v7390 = vunpack.c.h.b16 %v7145
      %v7391 = vunpack.c.l.b16 %v7146
      %v7392 = vunpack.c.l.b16 %v7147
      %v7393 = vunpack.c.h.b16 %v7147
      %v7394 = vunpack.c.l.b16 %v7148
      %v7395 = vunpack.c.l.b16 %v7149
      %v7396 = vunpack.c.h.b16 %v7149
      %v7397 = vunpack.c.l.b16 %v7150
      %v7398 = vunpack.c.l.b16 %v7151
      %v7399 = vunpack.c.h.b16 %v7151
      %v7400 = vunpack.c.l.b16 %v7152
      %v7401 = vunpack.c.l.b16 %v7153
      %v7402 = vunpack.c.h.b16 %v7153
      %v7403 = vunpack.c.l.b16 %v7154
      %v7404 = vpack.c.b16 %v7263, %v7260
      %v7405 = vpack.c.b16 %v7264, %v7261
      %v7406 = vpack.c.b16 %v7265, %v7262
      %v7407 = vpack.c.b16 %v7269, %v7266
      %v7408 = vpack.c.b16 %v7270, %v7267
      %v7409 = vpack.c.b16 %v7271, %v7268
      %v7410 = vpack.c.b16 %v7275, %v7272
      %v7411 = vpack.c.b16 %v7276, %v7273
      %v7412 = vpack.c.b16 %v7277, %v7274
      %v7413 = vpack.c.b16 %v7281, %v7278
      %v7414 = vpack.c.b16 %v7282, %v7279
      %v7415 = vpack.c.b16 %v7283, %v7280
      %v7416 = vpack.c.b16 %v7287, %v7284
      %v7417 = vpack.c.b16 %v7288, %v7285
      %v7418 = vpack.c.b16 %v7289, %v7286
      %v7419 = vpack.c.b16 %v7293, %v7290
      %v7420 = vpack.c.b16 %v7294, %v7291
      %v7421 = vpack.c.b16 %v7295, %v7292
      %v7422 = vpack.c.b16 %v7299, %v7296
      %v7423 = vpack.c.b16 %v7300, %v7297
      %v7424 = vpack.c.b16 %v7301, %v7298
      %v7425 = vpack.c.b16 %v7305, %v7302
      %v7426 = vpack.c.b16 %v7306, %v7303
      %v7427 = vpack.c.b16 %v7307, %v7304
      %v7428 = vpack.c.b16 %v7311, %v7308
      %v7429 = vpack.c.b16 %v7312, %v7309
      %v7430 = vpack.c.b16 %v7313, %v7310
      %v7431 = vpack.c.b16 %v7317, %v7314
      %v7432 = vpack.c.b16 %v7318, %v7315
      %v7433 = vpack.c.b16 %v7319, %v7316
      %v7434 = vpack.c.b16 %v7323, %v7320
      %v7435 = vpack.c.b16 %v7324, %v7321
      %v7436 = vpack.c.b16 %v7325, %v7322
      %v7437 = vpack.c.b16 %v7329, %v7326
      %v7438 = vpack.c.b16 %v7330, %v7327
      %v7439 = vpack.c.b16 %v7331, %v7328
      %v7440 = vpack.c.b16 %v7335, %v7332
      %v7441 = vpack.c.b16 %v7336, %v7333
      %v7442 = vpack.c.b16 %v7337, %v7334
      %v7443 = vpack.c.b16 %v7341, %v7338
      %v7444 = vpack.c.b16 %v7342, %v7339
      %v7445 = vpack.c.b16 %v7343, %v7340
      %v7446 = vpack.c.b16 %v7347, %v7344
      %v7447 = vpack.c.b16 %v7348, %v7345
      %v7448 = vpack.c.b16 %v7349, %v7346
      %v7449 = vpack.c.b16 %v7353, %v7350
      %v7450 = vpack.c.b16 %v7354, %v7351
      %v7451 = vpack.c.b16 %v7355, %v7352
      %v7452 = vpack.c.b16 %v7359, %v7356
      %v7453 = vpack.c.b16 %v7360, %v7357
      %v7454 = vpack.c.b16 %v7361, %v7358
      %v7455 = vpack.c.b16 %v7365, %v7362
      %v7456 = vpack.c.b16 %v7366, %v7363
      %v7457 = vpack.c.b16 %v7367, %v7364
      %v7458 = vpack.c.b16 %v7371, %v7368
      %v7459 = vpack.c.b16 %v7372, %v7369
      %v7460 = vpack.c.b16 %v7373, %v7370
      %v7461 = vpack.c.b16 %v7377, %v7374
      %v7462 = vpack.c.b16 %v7378, %v7375
      %v7463 = vpack.c.b16 %v7379, %v7376
      %v7464 = vpack.c.b16 %v7383, %v7380
      %v7465 = vpack.c.b16 %v7384, %v7381
      %v7466 = vpack.c.b16 %v7385, %v7382
      %v7467 = vpack.c.b16 %v7389, %v7386
      %v7468 = vpack.c.b16 %v7390, %v7387
      %v7469 = vpack.c.b16 %v7391, %v7388
      %v7470 = vpack.c.b16 %v7395, %v7392
      %v7471 = vpack.c.b16 %v7396, %v7393
      %v7472 = vpack.c.b16 %v7397, %v7394
      %v7473 = vpack.c.b16 %v7401, %v7398
      %v7474 = vpack.c.b16 %v7402, %v7399
      %v7475 = vpack.c.b16 %v7403, %v7400
      %7548 = vmatprep.subr.bf16.mxu0 %v7405
      %7549 = vmatpush1.bf16.msra.mxu0 %v7404
      %7550 = vmatprep.subr.bf16.mxu0 %v7408
      %7551 = vmatpush1.bf16.msra.mxu0 %v7407
      %7552 = vmatprep.subr.bf16.mxu0 %v7411
      %7553 = vmatpush1.bf16.msra.mxu0 %v7410
      %7554 = vmatprep.subr.bf16.mxu0 %v7414
      %7555 = vmatpush1.bf16.msra.mxu0 %v7413
      %7556 = vmatprep.subr.bf16.mxu0 %v7417
      %7557 = vmatpush1.bf16.msra.mxu0 %v7416
      %7558 = vmatprep.subr.bf16.mxu0 %v7420
      %7559 = vmatpush1.bf16.msra.mxu0 %v7419
      %7560 = vmatprep.subr.bf16.mxu0 %v7423
      %7561 = vmatpush1.bf16.msra.mxu0 %v7422
      %7562 = vmatprep.subr.bf16.mxu0 %v7426
      %7563 = vmatpush1.bf16.msra.mxu0 %v7425
      %7564 = vmatprep.subr.bf16.mxu0 %v7429
      %7565 = vmatpush1.bf16.msra.mxu0 %v7428
      %7566 = vmatprep.subr.bf16.mxu0 %v7432
      %7567 = vmatpush1.bf16.msra.mxu0 %v7431
      %7568 = vmatprep.subr.bf16.mxu0 %v7435
      %7569 = vmatpush1.bf16.msra.mxu0 %v7434
      %7570 = vmatprep.subr.bf16.mxu0 %v7438
      %7571 = vmatpush1.bf16.msra.mxu0 %v7437
      %7572 = vmatprep.subr.bf16.mxu0 %v7441
      %7573 = vmatpush1.bf16.msra.mxu0 %v7440
      %7574 = vmatprep.subr.bf16.mxu0 %v7444
      %7575 = vmatpush1.bf16.msra.mxu0 %v7443
      %7576 = vmatprep.subr.bf16.mxu0 %v7447
      %7577 = vmatpush1.bf16.msra.mxu0 %v7446
      %7578 = vmatprep.subr.bf16.mxu0 %v7450
      %7579 = vmatpush1.bf16.msra.mxu0 %v7449
      %7580 = vmatprep.mubr.bf16.mxu0 %v2270
      %7581 = vmatmul.mubr.bf16.gmra.mrb[0].mxu0 %v2269
      %v7582 = vpop.f32.mrb[0].mxu0
      %v7583 = vadd.f32 0.0, %v7582
      %v7584 = vpop.f32.mrb[0].mxu0
      %v7585 = vadd.f32 0.0, %v7584
      %v7586 = vpop.f32.mrb[0].mxu0
      %v7587 = vadd.f32 0.0, %v7586
      %v7588 = vpop.f32.mrb[0].mxu0
      %v7589 = vadd.f32 0.0, %v7588
      %7590 = vmatprep.mubr.bf16.mxu0 %v2273
      %7591 = vmatmul.mubr.bf16.gmra.mrb[0].mxu0 %v2272
      %v7592 = vpop.f32.mrb[0].mxu0
      %v7593 = vadd.f32 0.0, %v7592
      %v7594 = vpop.f32.mrb[0].mxu0
      %v7595 = vadd.f32 0.0, %v7594
      %v7596 = vpop.f32.mrb[0].mxu0
      %v7597 = vadd.f32 0.0, %v7596
      %v7598 = vpop.f32.mrb[0].mxu0
      %v7599 = vadd.f32 0.0, %v7598
      %7600 = vmatprep.mubr.bf16.mxu0 %v2276
      %7601 = vmatmul.mubr.bf16.gmra.mrb[0].mxu0 %v2275
      %v7602 = vpop.f32.mrb[0].mxu0
      %v7603 = vadd.f32 0.0, %v7602
      %v7604 = vpop.f32.mrb[0].mxu0
      %v7605 = vadd.f32 0.0, %v7604
      %v7606 = vpop.f32.mrb[0].mxu0
      %v7607 = vadd.f32 0.0, %v7606
      %v7608 = vpop.f32.mrb[0].mxu0
      %v7609 = vadd.f32 0.0, %v7608
      %7610 = vmatprep.mubr.bf16.mxu0 %v7159
      %7611 = vmatmul.mubr.bf16.gmra.mrb[0].mxu0 %v7158
      %v7612 = vpop.f32.mrb[0].mxu0
      %v7613 = vadd.f32 0.0, %v7612
      %v7614 = vpop.f32.mrb[0].mxu0
      %v7615 = vadd.f32 0.0, %v7614
      %v7616 = vpop.f32.mrb[0].mxu0
      %v7617 = vadd.f32 0.0, %v7616
      %v7618 = vpop.f32.mrb[0].mxu0
      %v7619 = vadd.f32 0.0, %v7618
      %7620 = vdwg.mxu0
      %7621 = vmatprep.subr.bf16.mxu0 %v7453
      %7622 = vmatpush1.bf16.msra.mxu0 %v7452
      %7623 = vmatprep.subr.bf16.mxu0 %v7456
      %7624 = vmatpush1.bf16.msra.mxu0 %v7455
      %7625 = vmatprep.subr.bf16.mxu0 %v7459
      %7626 = vmatpush1.bf16.msra.mxu0 %v7458
      %7627 = vmatprep.subr.bf16.mxu0 %v7462
      %7628 = vmatpush1.bf16.msra.mxu0 %v7461
      %7629 = vmatprep.subr.bf16.mxu0 %v7465
      %7630 = vmatpush1.bf16.msra.mxu0 %v7464
      %7631 = vmatprep.subr.bf16.mxu0 %v7468
      %7632 = vmatpush1.bf16.msra.mxu0 %v7467
      %7633 = vmatprep.subr.bf16.mxu0 %v7471
      %7634 = vmatpush1.bf16.msra.mxu0 %v7470
      %7635 = vmatprep.subr.bf16.mxu0 %v7474
      %7636 = vmatpush1.bf16.msra.mxu0 %v7473
      %7637 = vmatprep.subr.bf16.mxu0 0
      %7638 = vmatpush1.bf16.msra.mxu0 0
      %7639 = vmatprep.subr.bf16.mxu0 0
      %7640 = vmatpush1.bf16.msra.mxu0 0
      %7641 = vmatprep.subr.bf16.mxu0 0
      %7642 = vmatpush1.bf16.msra.mxu0 0
      %7643 = vmatprep.subr.bf16.mxu0 0
      %7644 = vmatpush1.bf16.msra.mxu0 0
      %7645 = vmatprep.subr.bf16.mxu0 0
      %7646 = vmatpush1.bf16.msra.mxu0 0
      %7647 = vmatprep.subr.bf16.mxu0 0
      %7648 = vmatpush1.bf16.msra.mxu0 0
      %7649 = vmatprep.subr.bf16.mxu0 0
      %7650 = vmatpush1.bf16.msra.mxu0 0
      %7651 = vmatprep.subr.bf16.mxu0 0
      %7652 = vmatpush1.bf16.msra.mxu0 0
      %7653 = vmatprep.mubr.bf16.mxu0 0
      %7654 = vmatmul.mubr.bf16.gmra.mrb[0].mxu0 %v2271
      %v7655 = vpop.f32.mrb[0].mxu0
      %v7656 = vadd.f32 %v7583, %v7655
      %v7657 = vpop.f32.mrb[0].mxu0
      %v7658 = vadd.f32 %v7585, %v7657
      %v7659 = vpop.f32.mrb[0].mxu0
      %v7660 = vadd.f32 %v7587, %v7659
      %v7661 = vpop.f32.mrb[0].mxu0
      %v7662 = vadd.f32 %v7589, %v7661
      %7663 = vmatprep.mubr.bf16.mxu0 0
      %7664 = vmatmul.mubr.bf16.gmra.mrb[0].mxu0 %v2274
      %v7665 = vpop.f32.mrb[0].mxu0
      %v7666 = vadd.f32 %v7593, %v7665
      %v7667 = vpop.f32.mrb[0].mxu0
      %v7668 = vadd.f32 %v7595, %v7667
      %v7669 = vpop.f32.mrb[0].mxu0
      %v7670 = vadd.f32 %v7597, %v7669
      %v7671 = vpop.f32.mrb[0].mxu0
      %v7672 = vadd.f32 %v7599, %v7671
      %7673 = vmatprep.mubr.bf16.mxu0 0
      %7674 = vmatmul.mubr.bf16.gmra.mrb[0].mxu0 %v2277
      %v7675 = vpop.f32.mrb[0].mxu0
      %v7676 = vadd.f32 %v7603, %v7675
      %v7677 = vpop.f32.mrb[0].mxu0
      %v7678 = vadd.f32 %v7605, %v7677
      %v7679 = vpop.f32.mrb[0].mxu0
      %v7680 = vadd.f32 %v7607, %v7679
      %v7681 = vpop.f32.mrb[0].mxu0
      %v7682 = vadd.f32 %v7609, %v7681
      %7683 = vmatprep.mubr.bf16.mxu0 0
      %7684 = vmatmul.mubr.bf16.gmra.mrb[0].mxu0 %v7160
      %v7685 = vpop.f32.mrb[0].mxu0
      %v7686 = vadd.f32 %v7613, %v7685
      %v7687 = vpop.f32.mrb[0].mxu0
      %v7688 = vadd.f32 %v7615, %v7687
      %v7689 = vpop.f32.mrb[0].mxu0
      %v7690 = vadd.f32 %v7617, %v7689
      %v7691 = vpop.f32.mrb[0].mxu0
      %v7692 = vadd.f32 %v7619, %v7691
      %7693 = vdwg.mxu0
      %7694 = vmatprep.subr.bf16.mxu0 0
      %7695 = vmatpush1.bf16.msra.mxu0 %v7406
      %7696 = vmatprep.subr.bf16.mxu0 0
      %7697 = vmatpush1.bf16.msra.mxu0 %v7409
      %7698 = vmatprep.subr.bf16.mxu0 0
      %7699 = vmatpush1.bf16.msra.mxu0 %v7412
      %7700 = vmatprep.subr.bf16.mxu0 0
      %7701 = vmatpush1.bf16.msra.mxu0 %v7415
      %7702 = vmatprep.subr.bf16.mxu0 0
      %7703 = vmatpush1.bf16.msra.mxu0 %v7418
      %7704 = vmatprep.subr.bf16.mxu0 0
      %7705 = vmatpush1.bf16.msra.mxu0 %v7421
      %7706 = vmatprep.subr.bf16.mxu0 0
      %7707 = vmatpush1.bf16.msra.mxu0 %v7424
      %7708 = vmatprep.subr.bf16.mxu0 0
      %7709 = vmatpush1.bf16.msra.mxu0 %v7427
      %7710 = vmatprep.subr.bf16.mxu0 0
      %7711 = vmatpush1.bf16.msra.mxu0 %v7430
      %7712 = vmatprep.subr.bf16.mxu0 0
      %7713 = vmatpush1.bf16.msra.mxu0 %v7433
      %7714 = vmatprep.subr.bf16.mxu0 0
      %7715 = vmatpush1.bf16.msra.mxu0 %v7436
      %7716 = vmatprep.subr.bf16.mxu0 0
      %7717 = vmatpush1.bf16.msra.mxu0 %v7439
      %7718 = vmatprep.subr.bf16.mxu0 0
      %7719 = vmatpush1.bf16.msra.mxu0 %v7442
      %7720 = vmatprep.subr.bf16.mxu0 0
      %7721 = vmatpush1.bf16.msra.mxu0 %v7445
      %7722 = vmatprep.subr.bf16.mxu0 0
      %7723 = vmatpush1.bf16.msra.mxu0 %v7448
      %7724 = vmatprep.subr.bf16.mxu0 0
      %7725 = vmatpush1.bf16.msra.mxu0 %v7451
      %7726 = vmatprep.mubr.bf16.mxu0 %v2270
      %7727 = vmatmul.mubr.bf16.gmra.mrb[0].mxu0 %v2269
      %v7728 = vpop.f32.mrb[0].mxu0
      %v7729 = vadd.f32 0.0, %v7728
      %v7730 = vpop.f32.mrb[0].mxu0
      %v7731 = vpop.f32.mrb[0].mxu0
      %v7732 = vadd.f32 0.0, %v7731
      %v7733 = vpop.f32.mrb[0].mxu0
      %7734 = vmatprep.mubr.bf16.mxu0 %v2273
      %7735 = vmatmul.mubr.bf16.gmra.mrb[0].mxu0 %v2272
      %v7736 = vpop.f32.mrb[0].mxu0
      %v7737 = vadd.f32 0.0, %v7736
      %v7738 = vpop.f32.mrb[0].mxu0
      %v7739 = vpop.f32.mrb[0].mxu0
      %v7740 = vadd.f32 0.0, %v7739
      %v7741 = vpop.f32.mrb[0].mxu0
      %7742 = vmatprep.mubr.bf16.mxu0 %v2276
      %7743 = vmatmul.mubr.bf16.gmra.mrb[0].mxu0 %v2275
      %v7744 = vpop.f32.mrb[0].mxu0
      %v7745 = vadd.f32 0.0, %v7744
      %v7746 = vpop.f32.mrb[0].mxu0
      %v7747 = vpop.f32.mrb[0].mxu0
      %v7748 = vadd.f32 0.0, %v7747
      %v7749 = vpop.f32.mrb[0].mxu0
      %7750 = vmatprep.mubr.bf16.mxu0 %v7159
      %7751 = vmatmul.mubr.bf16.gmra.mrb[0].mxu0 %v7158
      %v7752 = vpop.f32.mrb[0].mxu0
      %v7753 = vadd.f32 0.0, %v7752
      %v7754 = vpop.f32.mrb[0].mxu0
      %v7755 = vpop.f32.mrb[0].mxu0
      %v7756 = vadd.f32 0.0, %v7755
      %v7757 = vpop.f32.mrb[0].mxu0
      %7758 = vdwg.mxu0
      %7759 = vmatprep.subr.bf16.mxu0 0
      %7760 = vmatpush1.bf16.msra.mxu0 %v7454
      %7761 = vmatprep.subr.bf16.mxu0 0
      %7762 = vmatpush1.bf16.msra.mxu0 %v7457
      %7763 = vmatprep.subr.bf16.mxu0 0
      %7764 = vmatpush1.bf16.msra.mxu0 %v7460
      %7765 = vmatprep.subr.bf16.mxu0 0
      %7766 = vmatpush1.bf16.msra.mxu0 %v7463
      %7767 = vmatprep.subr.bf16.mxu0 0
      %7768 = vmatpush1.bf16.msra.mxu0 %v7466
      %7769 = vmatprep.subr.bf16.mxu0 0
      %7770 = vmatpush1.bf16.msra.mxu0 %v7469
      %7771 = vmatprep.subr.bf16.mxu0 0
      %7772 = vmatpush1.bf16.msra.mxu0 %v7472
      %7773 = vmatprep.subr.bf16.mxu0 0
      %7774 = vmatpush1.bf16.msra.mxu0 %v7475
      %7775 = vmatprep.subr.bf16.mxu0 0
      %7776 = vmatpush1.bf16.msra.mxu0 0
      %7777 = vmatprep.subr.bf16.mxu0 0
      %7778 = vmatpush1.bf16.msra.mxu0 0
      %7779 = vmatprep.subr.bf16.mxu0 0
      %7780 = vmatpush1.bf16.msra.mxu0 0
      %7781 = vmatprep.subr.bf16.mxu0 0
      %7782 = vmatpush1.bf16.msra.mxu0 0
      %7783 = vmatprep.subr.bf16.mxu0 0
      %7784 = vmatpush1.bf16.msra.mxu0 0
      %7785 = vmatprep.subr.bf16.mxu0 0
      %7786 = vmatpush1.bf16.msra.mxu0 0
      %7787 = vmatprep.subr.bf16.mxu0 0
      %7788 = vmatpush1.bf16.msra.mxu0 0
      %7789 = vmatprep.subr.bf16.mxu0 0
      %7790 = vmatpush1.bf16.msra.mxu0 0
      %7791 = vmatprep.mubr.bf16.mxu0 0
      %7792 = vmatmul.mubr.bf16.gmra.mrb[0].mxu0 %v2271
      %v7793 = vpop.f32.mrb[0].mxu0
      %v7794 = vadd.f32 %v7729, %v7793
      %v7795 = vpop.f32.mrb[0].mxu0
      %v7796 = vpop.f32.mrb[0].mxu0
      %v7797 = vadd.f32 %v7732, %v7796
      %v7798 = vpop.f32.mrb[0].mxu0
      %7799 = vmatprep.mubr.bf16.mxu0 0
      %7800 = vmatmul.mubr.bf16.gmra.mrb[0].mxu0 %v2274
      %v7801 = vpop.f32.mrb[0].mxu0
      %v7802 = vadd.f32 %v7737, %v7801
      %v7803 = vpop.f32.mrb[0].mxu0
      %v7804 = vpop.f32.mrb[0].mxu0
      %v7805 = vadd.f32 %v7740, %v7804
      %v7806 = vpop.f32.mrb[0].mxu0
      %7807 = vmatprep.mubr.bf16.mxu0 0
      %7808 = vmatmul.mubr.bf16.gmra.mrb[0].mxu0 %v2277
      %v7809 = vpop.f32.mrb[0].mxu0
      %v7810 = vadd.f32 %v7745, %v7809
      %v7811 = vpop.f32.mrb[0].mxu0
      %v7812 = vpop.f32.mrb[0].mxu0
      %v7813 = vadd.f32 %v7748, %v7812
      %v7814 = vpop.f32.mrb[0].mxu0
      %7815 = vmatprep.mubr.bf16.mxu0 0
      %7816 = vmatmul.mubr.bf16.gmra.mrb[0].mxu0 %v7160
      %v7817 = vpop.f32.mrb[0].mxu0
      %v7818 = vadd.f32 %v7753, %v7817
      %v7819 = vpop.f32.mrb[0].mxu0
      %v7820 = vpop.f32.mrb[0].mxu0
      %v7821 = vadd.f32 %v7756, %v7820
      %v7822 = vpop.f32.mrb[0].mxu0
      %7823 = vdwg.mxu0
      %v7824 = vadd.f32 %v7024, %v7656
      %v7825 = vadd.f32 %v7025, %v7658
      %v7826 = vadd.f32 %v7026, %v7794
      %v7827 = vadd.f32 %v7027, %v7660
      %v7828 = vadd.f32 %v7028, %v7662
      %v7829 = vadd.f32 %v7029, %v7797
      %v7830 = vadd.f32 %v7030, %v7666
      %v7831 = vadd.f32 %v7031, %v7668
      %v7832 = vadd.f32 %v7032, %v7802
      %v7833 = vadd.f32 %v7033, %v7670
      %v7834 = vadd.f32 %v7034, %v7672
      %v7835 = vadd.f32 %v7035, %v7805
      %v7836 = vadd.f32 %v7036, %v7676
      %v7837 = vadd.f32 %v7037, %v7678
      %v7838 = vadd.f32 %v7038, %v7810
      %v7839 = vadd.f32 %v7039, %v7680
      %v7840 = vadd.f32 %v7040, %v7682
      %v7841 = vadd.f32 %v7041, %v7813
      %v7842 = vadd.f32 %v7042, %v7686
      %v7843 = vadd.f32 %v7043, %v7688
      %v7844 = vadd.f32 %v7044, %v7818
      %v7845 = vadd.f32 %v7045, %v7690
      %v7846 = vadd.f32 %v7046, %v7692
      %v7847 = vadd.f32 %v7047, %v7821
      %v7848 = vld [vmem:[%s2] sm:$0x7]
      %v7850 = vlaneseq
      %v7851 = vshrl.u32 %v7850, 7
      %v7852 = vsub.s32 0, %v7851
      %v7853 = vrot.slane %v7848, %v7852
      %v7854 = vlaneseq
      %v7855 = vshrl.u32 %v7854, 7
      %v7856 = vsub.s32 1, %v7855
      %v7857 = vrot.slane %v7848, %v7856
      %v7858 = vlaneseq
      %v7859 = vshrl.u32 %v7858, 7
      %v7860 = vsub.s32 2, %v7859
      %v7861 = vrot.slane %v7848, %v7860
      %v7865 = vadd.f32 %v7824, %v7853
      %v7866 = vadd.f32 %v7825, %v7857
      %v7867 = vadd.f32 %v7826, %v7861
      %v7868 = vadd.f32 %v7827, %v7853
      %v7869 = vadd.f32 %v7828, %v7857
      %v7870 = vadd.f32 %v7829, %v7861
      %v7871 = vadd.f32 %v7830, %v7853
      %v7872 = vadd.f32 %v7831, %v7857
      %v7873 = vadd.f32 %v7832, %v7861
      %v7874 = vadd.f32 %v7833, %v7853
      %v7875 = vadd.f32 %v7834, %v7857
      %v7876 = vadd.f32 %v7835, %v7861
      %v7877 = vadd.f32 %v7836, %v7853
      %v7878 = vadd.f32 %v7837, %v7857
      %v7879 = vadd.f32 %v7838, %v7861
      %v7880 = vadd.f32 %v7839, %v7853
      %v7881 = vadd.f32 %v7840, %v7857
      %v7882 = vadd.f32 %v7841, %v7861
      %v7883 = vadd.f32 %v7842, %v7853
      %v7884 = vadd.f32 %v7843, %v7857
      %v7885 = vadd.f32 %v7844, %v7861
      %v7886 = vadd.f32 %v7845, %v7853
      %v7887 = vadd.f32 %v7846, %v7857
      %v7888 = vadd.f32 %v7847, %v7861
      %v7889 = vmax.f32 %v7865, 0.0
      %v7890 = vmax.f32 %v7866, 0.0
      %v7891 = vmax.f32 %v7867, 0.0
      %v7892 = vmax.f32 %v7868, 0.0
      %v7893 = vmax.f32 %v7869, 0.0
      %v7894 = vmax.f32 %v7870, 0.0
      %v7895 = vmax.f32 %v7871, 0.0
      %v7896 = vmax.f32 %v7872, 0.0
      %v7897 = vmax.f32 %v7873, 0.0
      %v7898 = vmax.f32 %v7874, 0.0
      %v7899 = vmax.f32 %v7875, 0.0
      %v7900 = vmax.f32 %v7876, 0.0
      %v7901 = vmax.f32 %v7877, 0.0
      %v7902 = vmax.f32 %v7878, 0.0
      %v7903 = vmax.f32 %v7879, 0.0
      %v7904 = vmax.f32 %v7880, 0.0
      %v7905 = vmax.f32 %v7881, 0.0
      %v7906 = vmax.f32 %v7882, 0.0
      %v7907 = vmax.f32 %v7883, 0.0
      %v7908 = vmax.f32 %v7884, 0.0
      %v7909 = vmax.f32 %v7885, 0.0
      %v7910 = vmax.f32 %v7886, 0.0
      %v7911 = vmax.f32 %v7887, 0.0
      %v7912 = vmax.f32 %v7888, 0.0
      %v7913 = vadd.f32 %v7889, %v7892
      %v7914 = vadd.f32 %v7913, %v7895
      %v7915 = vadd.f32 %v7914, %v7898
      %v7916 = vadd.f32 %v7915, %v7901
      %v7917 = vadd.f32 %v7916, %v7904
      %v7918 = vadd.f32 %v7917, %v7907
      %v7919 = vadd.f32 %v7918, %v7910
      %v7920 = vrot.slane %v7919, 4
      %v7921 = vadd.f32 %v7919, %v7920
      %v7922 = vrot.slane %v7921, 2
      %v7923 = vadd.f32 %v7921, %v7922
      %v7924 = vrot.slane %v7923, 1
      %v7925 = vadd.f32 %v7923, %v7924
      %v7926 = vadd.f32 %v7890, %v7893
      %v7927 = vadd.f32 %v7926, %v7896
      %v7928 = vadd.f32 %v7927, %v7899
      %v7929 = vadd.f32 %v7928, %v7902
      %v7930 = vadd.f32 %v7929, %v7905
      %v7931 = vadd.f32 %v7930, %v7908
      %v7932 = vadd.f32 %v7931, %v7911
      %v7933 = vrot.slane %v7932, 4
      %v7934 = vadd.f32 %v7932, %v7933
      %v7935 = vrot.slane %v7934, 2
      %v7936 = vadd.f32 %v7934, %v7935
      %v7937 = vrot.slane %v7936, 1
      %v7938 = vadd.f32 %v7936, %v7937
      %v7939 = vadd.f32 %v7891, %v7894
      %v7940 = vadd.f32 %v7939, %v7897
      %v7941 = vadd.f32 %v7940, %v7900
      %v7942 = vadd.f32 %v7941, %v7903
      %v7943 = vadd.f32 %v7942, %v7906
      %v7944 = vadd.f32 %v7943, %v7909
      %v7945 = vadd.f32 %v7944, %v7912
      %v7946 = vrot.slane %v7945, 4
      %v7947 = vadd.f32 %v7945, %v7946
      %v7948 = vrot.slane %v7947, 2
      %v7949 = vadd.f32 %v7947, %v7948
      %v7950 = vrot.slane %v7949, 1
      %v7951 = vadd.f32 %v7949, %v7950
      %v7952 = vrcp.pop 64.0
      %v7953 = vmul.f32 %v7925, %v7952
      %v7954 = vmul.f32 %v7938, %v7952
      %v7955 = vmul.f32 %v7951, %v7952
      %v7959 = vcombine.low %v7953, %v7954
      %v7961 = vunpack.c.l.s4 1966171168
      %v7962 = vunpack.c.0.s8 %v7961
      %v7963 = vlaneseq
      %v7964 = vshrl.u32 %v7963, 7
      %v7965 = vsub.s32 %v7962, %v7964
      %v7966 = vrot.slane %v7959, %v7965
      %v7968 = vunpack.c.l.s4 1966171168
      %v7969 = vunpack.c.0.s8 %v7968
      %v7970 = vlaneseq
      %v7971 = vshrl.u32 %v7970, 7
      %v7972 = vsub.s32 %v7969, %v7971
      %v7973 = vrot.slane %v7955, %v7972
      %v7974 = vcombine.low %v7966, %v7973
      %v7976 = vunpack.c.l.s4 1966171168
      %v7977 = vunpack.c.0.s8 %v7976
      %v7978 = vlaneseq
      %v7979 = vshrl.u32 %v7978, 7
      %v7980 = vsub.s32 %v7977, %v7979
      %v7981 = vrot.slane %v7974, %v7980
      %v7983 = vlaneseq
      %vm7984 = vcmp.ge.s32.totalorder %v7983, 0
      %vm7985 = vcmp.lt.s32.totalorder %v7983, 384
      %vm7986 = vmand %vm7984, %vm7985
      %7987 = vst.msk [vmem:[%s168] sm:$0x7] %vm7986, %v7981
      %p7988 = scmp.lt.s32.totalorder %s14, 3
      %s7989 = scalar_select %p7988, %s14, 3
      %s7990 = smul.addr %s7989, 3
      %s7991 = scalar_lea.vmem %s3, %s7990
      // Predicated region
      $region33: #{stn_forward.5} parent=31 // pred_check
        %p7992 = pneg %p100
      $region34: #{stn_forward.5} parent=31 // pred_check_branch
        %7994 = sbr.rel (%p7992) target = $region36
      $region35: #{stn_forward.5} parent=31 // pred_region
        _
      $region36: #{stn_forward.5} parent=31 // pred_fallthru
        _
    $region32: #{stn_forward.5} parent=5 // pred_fallthru
      _
    %p7995 = scmp.le.s32.totalorder 2, %s9
    // Predicated region
    $region37: #{stn_forward.5} parent=5 // pred_check
      %p7996 = pneg %p7995
    $region38: #{stn_forward.5} parent=5 // pred_check_branch
      %7998 = sbr.rel (%p7996) target = $region40
    $region39: #{stn_forward.5} parent=5 // pred_region
      %s7999 = ssub.s32 %s9, 2
      // Predicated region
      $region41: #{stn_forward.5} parent=39 // pred_check
        %p8000 = pneg %p106
      $region42: #{stn_forward.5} parent=39 // pred_check_branch
        %8002 = sbr.rel (%p8000) target = $region44
      $region43: #{stn_forward.5} parent=39 // pred_region
        %p8003 = scmp.lt.s32.totalorder %s15, 3
        %s8004 = scalar_select %p8003, %s15, 3
        %s8005 = smul.addr %s8004, 3
        %s8006 = scalar_lea.vmem %s3, %s8005
      $region44: #{stn_forward.5} parent=39 // pred_fallthru
        _
    $region40: #{stn_forward.5} parent=5 // pred_fallthru
      _
  $region6: #{stn_forward.5} parent=0 // loop_footer
    %s13 = sadd.s32 1, %s9
  $region7: #{stn_forward.5} parent=0 // loop_footer_branch
    %8 = sbr.rel target = $region3
  $region8: #{stn_forward.5} parent=0 // loop_exit
    _

</llo_original>
